<compile_context>
chip_gen: v6e
topology: v6e:2x2x1
jax: 0.10.0
libtpu: 0.0.40
codegen_flags: <defaults>
</compile_context>

<pallas_src>
import functools

import jax
import jax.numpy as jnp
from jax.experimental import pallas as pl
from jax.experimental.pallas import tpu as pltpu


# -----------------------------------------------------------------------------
# Stage 1: conv1/conv2/conv3 (+ folded BN, ReLU) and global max-pool over points
# -----------------------------------------------------------------------------
def _conv_pool_kernel(x_ref, w1_ref, b1_ref, w2_ref, b2_ref, w3_ref, b3_ref,
                      pooled_ref, *, n_valid, tile_n):
    """Grid step = (batch tile bi, point tile ni).

    x_ref      : (TB, TN, k)    bf16 point-major input tile
    wX_ref     : (Cin, Cout)    bf16 BN-folded conv weights (grid-invariant)
    bX_ref     : (1, Cout)      f32  BN-folded conv biases
    pooled_ref : (TB, 1, 1024)  f32  running max of the *raw* conv3 output;
                                     conv3 bias + ReLU applied in finalize.
    """
    ni = pl.program_id(1)
    last = pl.num_programs(1) - 1
    tb, tn, k = x_ref.shape

    # (TB, TN, k) -> (TB*TN, k): big-M matmuls for the MXU.
    x = x_ref[...].reshape(tb * tn, k)

    # conv1+bn1+relu -> (rows, 64); conv2+bn2+relu -> (rows, 128)
    h = jnp.maximum(
        jnp.dot(x, w1_ref[...], preferred_element_type=jnp.float32)
        + b1_ref[...], 0.0)
    h = jnp.maximum(
        jnp.dot(h.astype(jnp.bfloat16), w2_ref[...],
                preferred_element_type=jnp.float32) + b2_ref[...], 0.0)
    # conv3: raw matmul only; bias + ReLU are hoisted past the max-pool
    # (max_n relu(x W3 + b3) == relu(max_n(x W3) + b3)).
    h3 = jnp.dot(h.astype(jnp.bfloat16), w3_ref[...],
                 preferred_element_type=jnp.float32).reshape(tb, tn, 1024)

    @pl.when(ni == 0)
    def _():
        pooled_ref[...] = jnp.full_like(pooled_ref, -jnp.inf)

    def update(seg):
        tile_max = jnp.max(seg, axis=1, keepdims=True)        # (TB, 1, 1024)
        pooled_ref[...] = jnp.maximum(pooled_ref[...], tile_max)

    if (n_valid % tile_n) != 0:          # static: padded point rows exist
        @pl.when(ni < last)              # earlier tiles are fully valid
        def _():
            update(h3)

        @pl.when(ni == last)             # only the final tile needs the mask
        def _():
            row = jax.lax.broadcasted_iota(jnp.int32, (1, tn, 1), 1)
            valid = (ni * tile_n + row) < n_valid
            update(jnp.where(valid, h3, -jnp.inf))
    else:
        update(h3)

    @pl.when(ni == last)
    def _():
        # Deferred conv3 bias + ReLU, once per batch tile.
        pooled_ref[...] = jnp.maximum(pooled_ref[...] + b3_ref[...], 0.0)


# -----------------------------------------------------------------------------
# Stage 2: fc1/fc2/fc3 head on the pooled (B, 1024) features, single invocation
# -----------------------------------------------------------------------------
def _fc_head_kernel(g_ref, w4_ref, b4_ref, w5_ref, b5_ref, w6_ref, b6_ref,
                    out_ref):
    """g_ref: (B, 1024) f32 -> out_ref: (B, k*k) f32 (identity folded into b6)."""
    g = g_ref[...]
    h = jnp.maximum(
        jnp.dot(g.astype(jnp.bfloat16), w4_ref[...],
                preferred_element_type=jnp.float32) + b4_ref[...], 0.0)
    h = jnp.maximum(
        jnp.dot(h.astype(jnp.bfloat16), w5_ref[...],
                preferred_element_type=jnp.float32) + b5_ref[...], 0.0)
    out_ref[...] = (
        jnp.dot(h.astype(jnp.bfloat16), w6_ref[...],
                preferred_element_type=jnp.float32) + b6_ref[...])


# -----------------------------------------------------------------------------
# Wrapper
# -----------------------------------------------------------------------------
def _fold_bn(w, b, gamma, beta, mean, var, eps=1e-5):
    """Fold inference-mode BatchNorm1d into the preceding layer.

    w: (Cout, Cin) torch-style weight, b: (Cout,).
    Returns bf16 (Cin, Cout) weight and f32 (1, Cout) bias.
    """
    scale = gamma / jnp.sqrt(var + eps)                 # (Cout,)
    shift = beta - mean * scale                         # (Cout,)
    w_eff = (w * scale[:, None]).T                      # (Cin, Cout)
    b_eff = (b * scale + shift)[None, :]                # (1, Cout)
    return w_eff.astype(jnp.bfloat16), b_eff.astype(jnp.float32)


@functools.partial(jax.jit, static_argnames=("k", "tb", "tn"))
def stnkd_forward(x_bkn, params, k, tb=4, tn=256):
    """x_bkn: (B, k, N) float32 NCW input (PyTorch Conv1d layout). Returns (B, k, k)."""
    B, kk, N = x_bkn.shape
    assert kk == k
    (w1, b1), (w2, b2), (w3, b3), (w4, b4), (w5, b5), (w6, b6) = params

    # Fold the identity matrix into the fc3 bias.
    b6 = b6 + jnp.eye(k, dtype=jnp.float32).reshape(1, k * k)

    # Point-major, bf16 input (halves per-step HBM read; it is the matmul
    # operand dtype anyway).
    x_bnk = jnp.transpose(x_bkn, (0, 2, 1)).astype(jnp.bfloat16)   # (B, N, k)

    TB = min(tb, B)                                      # batch elems per step
    if B >= 2:
        TB = min(TB, max(1, B // 2))    # >=2 batch tiles -> both v7x TCs busy
    TN = min(tn, N)                                      # point-tile size
    B_pad = -(-B // TB) * TB
    N_pad = -(-N // TN) * TN
    if (B_pad, N_pad) != (B, N):
        x_bnk = jnp.pad(x_bnk, ((0, B_pad - B), (0, N_pad - N), (0, 0)))

    full = lambda a: pl.BlockSpec(a.shape, lambda bi, ni: (0,) * a.ndim)

    # Stage 1: conv stack + global max-pool -> (B_pad, 1, 1024) pooled features.
    pooled = pl.pallas_call(
        functools.partial(_conv_pool_kernel, n_valid=N, tile_n=TN),
        out_shape=jax.ShapeDtypeStruct((B_pad, 1, 1024), jnp.float32),
        grid=(B_pad // TB, N_pad // TN),
        in_specs=[
            pl.BlockSpec((TB, TN, k), lambda bi, ni: (bi, ni, 0)),
            full(w1), full(b1), full(w2), full(b2), full(w3), full(b3),
        ],
        out_specs=pl.BlockSpec((TB, 1, 1024), lambda bi, ni: (bi, 0, 0)),
        compiler_params=pltpu.CompilerParams(
            dimension_semantics=("parallel", "arbitrary")),
    )(x_bnk, w1, b1, w2, b2, w3, b3)

    pooled = pooled[:B, 0, :]                            # (B, 1024)

    # Stage 2: FC head once over the whole pooled matrix, explicit VMEM
    # placement (weights streamed exactly once, no per-step double-buffering).
    vmem = lambda: pl.BlockSpec(memory_space=pltpu.MemorySpace.VMEM)
    out_flat = pl.pallas_call(
        _fc_head_kernel,
        out_shape=jax.ShapeDtypeStruct((B, k * k), jnp.float32),
        in_specs=[vmem() for _ in range(7)],
        out_specs=vmem(),
    )(pooled, w4, b4, w5, b5, w6, b6)

    return out_flat.reshape(B, k, k)


def make_params(key, k):
    """Deterministic synthetic parameters matching STNkd(k).__init__ shapes,
    with inference-mode BatchNorm folded into each preceding layer (bf16 W)."""
    dims = [(k, 64), (64, 128), (128, 1024), (1024, 512), (512, 256), (256, k * k)]
    has_bn = [True, True, True, True, True, False]
    params = []
    for i, ((cin, cout), bn) in enumerate(zip(dims, has_bn)):
        kw, kb, kg, kbeta, km, kv = jax.random.split(jax.random.fold_in(key, i), 6)
        w = jax.random.normal(kw, (cout, cin), jnp.float32) * 0.05
        b = jax.random.normal(kb, (cout,), jnp.float32) * 0.05
        if bn:
            gamma = 1.0 + 0.1 * jax.random.normal(kg, (cout,), jnp.float32)
            beta = 0.1 * jax.random.normal(kbeta, (cout,), jnp.float32)
            mean = 0.1 * jax.random.normal(km, (cout,), jnp.float32)
            var = jnp.abs(jax.random.normal(kv, (cout,), jnp.float32)) + 0.5
        else:
            gamma = jnp.ones((cout,), jnp.float32)
            beta = jnp.zeros((cout,), jnp.float32)
            mean = jnp.zeros((cout,), jnp.float32)
            var = jnp.ones((cout,), jnp.float32) - 1e-5
        params.append(_fold_bn(w, b, gamma, beta, mean, var))
    return tuple(params)


def _reference(x_bkn, params, k):
    """Pure-JAX reference of the same BN-folded forward pass (bf16 W / f32 acc)."""
    x = jnp.transpose(x_bkn, (0, 2, 1))                 # (B, N, k)
    (w1, b1), (w2, b2), (w3, b3), (w4, b4), (w5, b5), (w6, b6) = params

    def lin(a, w, b):
        return jnp.dot(a.astype(jnp.bfloat16), w,
                       preferred_element_type=jnp.float32) + b

    h = jax.nn.relu(lin(x, w1, b1))
    h = jax.nn.relu(lin(h, w2, b2))
    h = jax.nn.relu(lin(h, w3, b3))
    g = jnp.max(h, axis=1)                              # (B, 1024)
    g = jax.nn.relu(lin(g, w4, b4))
    g = jax.nn.relu(lin(g, w5, b5))
    out = lin(g, w6, b6) + jnp.eye(k, dtype=jnp.float32).reshape(1, k * k)
    return out.reshape(-1, k, k)


if __name__ == "__main__":
    k = 64      # STNkd default
    B = 2       # batch
    N = 32      # number of points

    key = jax.random.PRNGKey(0)
    kx, kp = jax.random.split(key)
    x = jax.random.normal(kx, (B, k, N), jnp.float32)   # NCW, like PyTorch input
    params = make_params(kp, k)

    out = stnkd_forward(x, params, k=k)
    out = jax.block_until_ready(out)

    ref = _reference(x, params, k)
    assert out.shape == (B, k, k)
    max_err = float(jnp.max(jnp.abs(out - ref)))
    assert jnp.allclose(out, ref, atol=1e-2, rtol=1e-2), \
        f"mismatch vs reference, max abs err {max_err}"

    print("KERNEL_OK")
</pallas_src>

<mosaic_0001>
module attributes {stable_mosaic.version = 11 : i64} {
  func.func @_conv_pool_kernel(%arg0: i32, %arg1: i32, %arg2: memref<1x32x64xbf16, #tpu.memory_space<vmem>>, %arg3: memref<64x64xbf16, #tpu.memory_space<vmem>>, %arg4: memref<1x64xf32, #tpu.memory_space<vmem>>, %arg5: memref<64x128xbf16, #tpu.memory_space<vmem>>, %arg6: memref<1x128xf32, #tpu.memory_space<vmem>>, %arg7: memref<128x1024xbf16, #tpu.memory_space<vmem>>, %arg8: memref<1x1024xf32, #tpu.memory_space<vmem>>, %arg9: memref<1x1x1024xf32, #tpu.memory_space<vmem>>) attributes {dimension_semantics = [#tpu.dimension_semantics<parallel>, #tpu.dimension_semantics<arbitrary>], iteration_bounds = array<i64: 2, 1>, scalar_prefetch = 0 : i64, scratch_operands = 0 : i64, tpu.core_type = #tpu.core_type<tc>, window_params = [{transform_indices = @transform_0, window_bounds = array<i64: 1, 32, 64>}, {pipeline_mode = #tpu.pipeline_mode<synchronous>, transform_indices = @transform_1, window_bounds = array<i64: 64, 64>}, {pipeline_mode = #tpu.pipeline_mode<synchronous>, transform_indices = @transform_2, window_bounds = array<i64: 1, 64>}, {pipeline_mode = #tpu.pipeline_mode<synchronous>, transform_indices = @transform_3, window_bounds = array<i64: 64, 128>}, {pipeline_mode = #tpu.pipeline_mode<synchronous>, transform_indices = @transform_4, window_bounds = array<i64: 1, 128>}, {pipeline_mode = #tpu.pipeline_mode<synchronous>, transform_indices = @transform_5, window_bounds = array<i64: 128, 1024>}, {pipeline_mode = #tpu.pipeline_mode<synchronous>, transform_indices = @transform_6, window_bounds = array<i64: 1, 1024>}, {transform_indices = @transform_7, window_bounds = array<i64: 1, 1, 1024>}]} {
    %c0 = arith.constant 0 : index
    %c0_0 = arith.constant 0 : index
    %c0_1 = arith.constant 0 : index
    %0 = vector.load %arg2[%c0, %c0_0, %c0_1] : memref<1x32x64xbf16, #tpu.memory_space<vmem>>, vector<1x32x64xbf16>
    %1 = vector.shape_cast %0 : vector<1x32x64xbf16> to vector<32x64xbf16>
    %c0_2 = arith.constant 0 : index
    %c0_3 = arith.constant 0 : index
    %2 = vector.load %arg3[%c0_2, %c0_3] : memref<64x64xbf16, #tpu.memory_space<vmem>>, vector<64x64xbf16>
    %cst = arith.constant dense<0.000000e+00> : vector<32x64xf32>
    %3 = tpu.matmul %1, %2, %cst {dimension_numbers = #tpu.dot_dimension_numbers<[1], [0], [0], [1], [0, 0, 1, 1], [], []>} : vector<32x64xbf16>, vector<64x64xbf16>, vector<32x64xf32> -> vector<32x64xf32>
    %c0_4 = arith.constant 0 : index
    %c0_5 = arith.constant 0 : index
    %4 = vector.load %arg4[%c0_4, %c0_5] : memref<1x64xf32, #tpu.memory_space<vmem>>, vector<1x64xf32>
    %5 = vector.broadcast %4 : vector<1x64xf32> to vector<32x64xf32>
    %6 = arith.addf %3, %5 : vector<32x64xf32>
    %cst_6 = arith.constant 0.000000e+00 : f32
    %7 = vector.broadcast %cst_6 : f32 to vector<32x64xf32>
    %8 = arith.maximumf %6, %7 : vector<32x64xf32>
    %9 = arith.truncf %8 : vector<32x64xf32> to vector<32x64xbf16>
    %c0_7 = arith.constant 0 : index
    %c0_8 = arith.constant 0 : index
    %10 = vector.load %arg5[%c0_7, %c0_8] : memref<64x128xbf16, #tpu.memory_space<vmem>>, vector<64x128xbf16>
    %cst_9 = arith.constant dense<0.000000e+00> : vector<32x128xf32>
    %11 = tpu.matmul %9, %10, %cst_9 {dimension_numbers = #tpu.dot_dimension_numbers<[1], [0], [0], [1], [0, 0, 1, 1], [], []>} : vector<32x64xbf16>, vector<64x128xbf16>, vector<32x128xf32> -> vector<32x128xf32>
    %c0_10 = arith.constant 0 : index
    %c0_11 = arith.constant 0 : index
    %12 = vector.load %arg6[%c0_10, %c0_11] : memref<1x128xf32, #tpu.memory_space<vmem>>, vector<1x128xf32>
    %13 = vector.broadcast %12 : vector<1x128xf32> to vector<32x128xf32>
    %14 = arith.addf %11, %13 : vector<32x128xf32>
    %cst_12 = arith.constant 0.000000e+00 : f32
    %15 = vector.broadcast %cst_12 : f32 to vector<32x128xf32>
    %16 = arith.maximumf %14, %15 : vector<32x128xf32>
    %17 = arith.truncf %16 : vector<32x128xf32> to vector<32x128xbf16>
    %c0_13 = arith.constant 0 : index
    %c0_14 = arith.constant 0 : index
    %18 = vector.load %arg7[%c0_13, %c0_14] : memref<128x1024xbf16, #tpu.memory_space<vmem>>, vector<128x1024xbf16>
    %cst_15 = arith.constant dense<0.000000e+00> : vector<32x1024xf32>
    %19 = tpu.matmul %17, %18, %cst_15 {dimension_numbers = #tpu.dot_dimension_numbers<[1], [0], [0], [1], [0, 0, 1, 1], [], []>} : vector<32x128xbf16>, vector<128x1024xbf16>, vector<32x1024xf32> -> vector<32x1024xf32>
    %20 = vector.shape_cast %19 : vector<32x1024xf32> to vector<1x32x1024xf32>
    %c0_i32 = arith.constant 0 : i32
    %21 = arith.cmpi eq, %arg1, %c0_i32 : i32
    %22 = arith.extui %21 : i1 to i32
    %c0_i32_16 = arith.constant 0 : i32
    %23 = arith.cmpi ne, %22, %c0_i32_16 : i32
    scf.if %23 {
      %cst_26 = arith.constant 0xFF800000 : f32
      %32 = vector.broadcast %cst_26 : f32 to vector<1x1x1024xf32>
      %c0_27 = arith.constant 0 : index
      %c0_28 = arith.constant 0 : index
      %c0_29 = arith.constant 0 : index
      %33 = vector.load %arg9[%c0_27, %c0_28, %c0_29] : memref<1x1x1024xf32, #tpu.memory_space<vmem>>, vector<1x1x1024xf32>
      tpu.vector_store %arg9[%c0_27, %c0_28, %c0_29], %32 {strides = array<i32>} : memref<1x1x1024xf32, #tpu.memory_space<vmem>>, vector<1x1x1024xf32>,
    } else {
    }
    %cst_17 = arith.constant dense<0xFF800000> : vector<1x1024xf32>
    %24 = vector.multi_reduction <maximumf>, %20, %cst_17 [1] : vector<1x32x1024xf32> to vector<1x1024xf32>
    %25 = vector.shape_cast %24 : vector<1x1024xf32> to vector<1x1x1024xf32>
    %c0_18 = arith.constant 0 : index
    %c0_19 = arith.constant 0 : index
    %c0_20 = arith.constant 0 : index
    %26 = vector.load %arg9[%c0_18, %c0_19, %c0_20] : memref<1x1x1024xf32, #tpu.memory_space<vmem>>, vector<1x1x1024xf32>
    %27 = arith.maximumf %26, %25 : vector<1x1x1024xf32>
    %c0_21 = arith.constant 0 : index
    %c0_22 = arith.constant 0 : index
    %c0_23 = arith.constant 0 : index
    %28 = vector.load %arg9[%c0_21, %c0_22, %c0_23] : memref<1x1x1024xf32, #tpu.memory_space<vmem>>, vector<1x1x1024xf32>
    tpu.vector_store %arg9[%c0_21, %c0_22, %c0_23], %27 {strides = array<i32>} : memref<1x1x1024xf32, #tpu.memory_space<vmem>>, vector<1x1x1024xf32>,
    %c0_i32_24 = arith.constant 0 : i32
    %29 = arith.cmpi eq, %arg1, %c0_i32_24 : i32
    %30 = arith.extui %29 : i1 to i32
    %c0_i32_25 = arith.constant 0 : i32
    %31 = arith.cmpi ne, %30, %c0_i32_25 : i32
    scf.if %31 {
      %c0_26 = arith.constant 0 : index
      %c0_27 = arith.constant 0 : index
      %c0_28 = arith.constant 0 : index
      %32 = vector.load %arg9[%c0_26, %c0_27, %c0_28] : memref<1x1x1024xf32, #tpu.memory_space<vmem>>, vector<1x1x1024xf32>
      %c0_29 = arith.constant 0 : index
      %c0_30 = arith.constant 0 : index
      %33 = vector.load %arg8[%c0_29, %c0_30] : memref<1x1024xf32, #tpu.memory_space<vmem>>, vector<1x1024xf32>
      %34 = vector.shape_cast %33 : vector<1x1024xf32> to vector<1x1x1024xf32>
      %35 = arith.addf %32, %34 : vector<1x1x1024xf32>
      %cst_31 = arith.constant 0.000000e+00 : f32
      %36 = vector.broadcast %cst_31 : f32 to vector<1x1x1024xf32>
      %37 = arith.maximumf %35, %36 : vector<1x1x1024xf32>
      %c0_32 = arith.constant 0 : index
      %c0_33 = arith.constant 0 : index
      %c0_34 = arith.constant 0 : index
      %38 = vector.load %arg9[%c0_32, %c0_33, %c0_34] : memref<1x1x1024xf32, #tpu.memory_space<vmem>>, vector<1x1x1024xf32>
      tpu.vector_store %arg9[%c0_32, %c0_33, %c0_34], %37 {strides = array<i32>} : memref<1x1x1024xf32, #tpu.memory_space<vmem>>, vector<1x1x1024xf32>,
    } else {
    }
    return
  }
  func.func @transform_0(%arg0: i32, %arg1: i32) -> (i32, i32, i32) {
    %c0_i32 = arith.constant 0 : i32
    %c0_i32_0 = arith.constant 0 : i32
    return %arg0, %arg1, %c0_i32 : i32, i32, i32
  }
  func.func @transform_1(%arg0: i32, %arg1: i32) -> (i32, i32) {
    %c0_i32 = arith.constant 0 : i32
    %c0_i32_0 = arith.constant 0 : i32
    %c0_i32_1 = arith.constant 0 : i32
    return %c0_i32, %c0_i32_0 : i32, i32
  }
  func.func @transform_2(%arg0: i32, %arg1: i32) -> (i32, i32) {
    %c0_i32 = arith.constant 0 : i32
    %c0_i32_0 = arith.constant 0 : i32
    %c0_i32_1 = arith.constant 0 : i32
    return %c0_i32, %c0_i32_0 : i32, i32
  }
  func.func @transform_3(%arg0: i32, %arg1: i32) -> (i32, i32) {
    %c0_i32 = arith.constant 0 : i32
    %c0_i32_0 = arith.constant 0 : i32
    %c0_i32_1 = arith.constant 0 : i32
    return %c0_i32, %c0_i32_0 : i32, i32
  }
  func.func @transform_4(%arg0: i32, %arg1: i32) -> (i32, i32) {
    %c0_i32 = arith.constant 0 : i32
    %c0_i32_0 = arith.constant 0 : i32
    %c0_i32_1 = arith.constant 0 : i32
    return %c0_i32, %c0_i32_0 : i32, i32
  }
  func.func @transform_5(%arg0: i32, %arg1: i32) -> (i32, i32) {
    %c0_i32 = arith.constant 0 : i32
    %c0_i32_0 = arith.constant 0 : i32
    %c0_i32_1 = arith.constant 0 : i32
    return %c0_i32, %c0_i32_0 : i32, i32
  }
  func.func @transform_6(%arg0: i32, %arg1: i32) -> (i32, i32) {
    %c0_i32 = arith.constant 0 : i32
    %c0_i32_0 = arith.constant 0 : i32
    %c0_i32_1 = arith.constant 0 : i32
    return %c0_i32, %c0_i32_0 : i32, i32
  }
  func.func @transform_7(%arg0: i32, %arg1: i32) -> (i32, i32, i32) {
    %c0_i32 = arith.constant 0 : i32
    %c0_i32_0 = arith.constant 0 : i32
    %c0_i32_1 = arith.constant 0 : i32
    return %arg0, %c0_i32, %c0_i32_0 : i32, i32, i32
  }
}

module attributes {stable_mosaic.version = 11 : i64} {
  func.func @_fc_head_kernel(%arg0: memref<2x1024xf32, #tpu.memory_space<vmem>>, %arg1: memref<1024x512xbf16, #tpu.memory_space<vmem>>, %arg2: memref<1x512xf32, #tpu.memory_space<vmem>>, %arg3: memref<512x256xbf16, #tpu.memory_space<vmem>>, %arg4: memref<1x256xf32, #tpu.memory_space<vmem>>, %arg5: memref<256x4096xbf16, #tpu.memory_space<vmem>>, %arg6: memref<1x4096xf32, #tpu.memory_space<vmem>>, %arg7: memref<2x4096xf32, #tpu.memory_space<vmem>>) attributes {dimension_semantics = [], scalar_prefetch = 0 : i64, scratch_operands = 0 : i64, tpu.core_type = #tpu.core_type<tc>} {
    %c0 = arith.constant 0 : index
    %c0_0 = arith.constant 0 : index
    %0 = vector.load %arg0[%c0, %c0_0] : memref<2x1024xf32, #tpu.memory_space<vmem>>, vector<2x1024xf32>
    %1 = arith.truncf %0 : vector<2x1024xf32> to vector<2x1024xbf16>
    %c0_1 = arith.constant 0 : index
    %c0_2 = arith.constant 0 : index
    %2 = vector.load %arg1[%c0_1, %c0_2] : memref<1024x512xbf16, #tpu.memory_space<vmem>>, vector<1024x512xbf16>
    %cst = arith.constant dense<0.000000e+00> : vector<2x512xf32>
    %3 = tpu.matmul %1, %2, %cst {dimension_numbers = #tpu.dot_dimension_numbers<[1], [0], [0], [1], [0, 0, 1, 1], [], []>} : vector<2x1024xbf16>, vector<1024x512xbf16>, vector<2x512xf32> -> vector<2x512xf32>
    %c0_3 = arith.constant 0 : index
    %c0_4 = arith.constant 0 : index
    %4 = vector.load %arg2[%c0_3, %c0_4] : memref<1x512xf32, #tpu.memory_space<vmem>>, vector<1x512xf32>
    %5 = vector.broadcast %4 : vector<1x512xf32> to vector<2x512xf32>
    %6 = arith.addf %3, %5 : vector<2x512xf32>
    %cst_5 = arith.constant 0.000000e+00 : f32
    %7 = vector.broadcast %cst_5 : f32 to vector<2x512xf32>
    %8 = arith.maximumf %6, %7 : vector<2x512xf32>
    %9 = arith.truncf %8 : vector<2x512xf32> to vector<2x512xbf16>
    %c0_6 = arith.constant 0 : index
    %c0_7 = arith.constant 0 : index
    %10 = vector.load %arg3[%c0_6, %c0_7] : memref<512x256xbf16, #tpu.memory_space<vmem>>, vector<512x256xbf16>
    %cst_8 = arith.constant dense<0.000000e+00> : vector<2x256xf32>
    %11 = tpu.matmul %9, %10, %cst_8 {dimension_numbers = #tpu.dot_dimension_numbers<[1], [0], [0], [1], [0, 0, 1, 1], [], []>} : vector<2x512xbf16>, vector<512x256xbf16>, vector<2x256xf32> -> vector<2x256xf32>
    %c0_9 = arith.constant 0 : index
    %c0_10 = arith.constant 0 : index
    %12 = vector.load %arg4[%c0_9, %c0_10] : memref<1x256xf32, #tpu.memory_space<vmem>>, vector<1x256xf32>
    %13 = vector.broadcast %12 : vector<1x256xf32> to vector<2x256xf32>
    %14 = arith.addf %11, %13 : vector<2x256xf32>
    %cst_11 = arith.constant 0.000000e+00 : f32
    %15 = vector.broadcast %cst_11 : f32 to vector<2x256xf32>
    %16 = arith.maximumf %14, %15 : vector<2x256xf32>
    %17 = arith.truncf %16 : vector<2x256xf32> to vector<2x256xbf16>
    %c0_12 = arith.constant 0 : index
    %c0_13 = arith.constant 0 : index
    %18 = vector.load %arg5[%c0_12, %c0_13] : memref<256x4096xbf16, #tpu.memory_space<vmem>>, vector<256x4096xbf16>
    %cst_14 = arith.constant dense<0.000000e+00> : vector<2x4096xf32>
    %19 = tpu.matmul %17, %18, %cst_14 {dimension_numbers = #tpu.dot_dimension_numbers<[1], [0], [0], [1], [0, 0, 1, 1], [], []>} : vector<2x256xbf16>, vector<256x4096xbf16>, vector<2x4096xf32> -> vector<2x4096xf32>
    %c0_15 = arith.constant 0 : index
    %c0_16 = arith.constant 0 : index
    %20 = vector.load %arg6[%c0_15, %c0_16] : memref<1x4096xf32, #tpu.memory_space<vmem>>, vector<1x4096xf32>
    %21 = vector.broadcast %20 : vector<1x4096xf32> to vector<2x4096xf32>
    %22 = arith.addf %19, %21 : vector<2x4096xf32>
    %c0_17 = arith.constant 0 : index
    %c0_18 = arith.constant 0 : index
    %23 = vector.load %arg7[%c0_17, %c0_18] : memref<2x4096xf32, #tpu.memory_space<vmem>>, vector<2x4096xf32>
    tpu.vector_store %arg7[%c0_17, %c0_18], %22 {strides = array<i32>} : memref<2x4096xf32, #tpu.memory_space<vmem>>, vector<2x4096xf32>,
    return
  }
}

</mosaic_0001>

<llo_original>
// kernel: stnkd_forward.2
$region0: #{stnkd_forward.2}
  #allocation0 [shape = 'u32[]', space=smem, size = 0x4, offset = 0x4, fixed_abs, tag = 'smem constant byte address 0x4 - core index']
  #allocation1 [shape = 'u32[144,128]{1,0:T(1,128)}', space=vmem, size = 0x12000, scoped, tag = 'internal scratch']
  %s0 = inlined_call_operand.vmem [shape: bf16[2,32,64], index: 0, kind: input, shape index: {}]
  %s1 = inlined_call_operand.hbm [shape: bf16[64,64], index: 1, kind: input, shape index: {}]
  %s2 = inlined_call_operand.hbm [shape: f32[1,64], index: 2, kind: input, shape index: {}]
  %s3 = inlined_call_operand.hbm [shape: bf16[64,128], index: 3, kind: input, shape index: {}]
  %s4 = inlined_call_operand.hbm [shape: f32[1,128], index: 4, kind: input, shape index: {}]
  %s5 = inlined_call_operand.hbm [shape: bf16[128,1024], index: 5, kind: input, shape index: {}]
  %s6 = inlined_call_operand.hbm [shape: f32[1,1024], index: 6, kind: input, shape index: {}]
  %s7 = inlined_call_operand.vmem [shape: f32[2,1,1024], index: 7, kind: output, shape index: {}]
  %s8 = sld [smem:[#allocation0]]
  $region93: #{stnkd_forward.2} parent=0
    _
  %s10 = ssub.s32 1, %s8
  %s11 = scalar_select 0, %s10, %s8
  $region1: #{stnkd_forward.2} parent=0
    #allocation2 [shape = 'u8[16384]{0}', space=vmem, size = 0x4000, scoped, tag = 'input window, operand 1, single buffered']
    #allocation3 [shape = 's32[2]{0}', space=sflag, size = 0x8, scoped, tag = 'scoped memory for stnkd_forward.2']
    #allocation4 [shape = 'u8[512]{0}', space=vmem, size = 0x400, scoped, tag = 'input window, operand 2, single buffered']
    #allocation5 [shape = 's32[1]{0}', space=sflag, size = 0x4, scoped, tag = 'scoped memory for stnkd_forward.2']
    #allocation6 [shape = 'u8[16384]{0}', space=vmem, size = 0x4000, scoped, tag = 'input window, operand 3, single buffered']
    #allocation7 [shape = 'u8[512]{0}', space=vmem, size = 0x400, scoped, tag = 'input window, operand 4, single buffered']
    #allocation8 [shape = 's32[1]{0}', space=sflag, size = 0x4, scoped, tag = 'scoped memory for stnkd_forward.2']
    #allocation9 [shape = 'u8[262144]{0}', space=vmem, size = 0x40000, scoped, tag = 'input window, operand 5, single buffered']
    #allocation10 [shape = 'u8[4096]{0}', space=vmem, size = 0x1000, scoped, tag = 'input window, operand 6, single buffered']
    #allocation11 [shape = 's32[1]{0}', space=sflag, size = 0x4, scoped, tag = 'scoped memory for stnkd_forward.2']
    %12 = vsyncpa [#allocation3], 0
    %13 = vsyncpa [#allocation5], 0
    %14 = vsyncpa [#allocation8], 0
    %15 = vsyncpa [#allocation11], 0
    loop: start=0, step=1, limit=4
    $region2: #{stnkd_forward.2} parent=1 // loop_pre_header
      _
    $region3: #{stnkd_forward.2} parent=1 // loop_header
      %s17 = sphi 0, %s21
      %p18 = scmp.ge.s32.totalorder %s17, 4
      %s24 = sphi 0, %s36
      %s25 = sphi 0, %s32
      %s26 = sphi 0, %s24
      %s27 = sphi 0, %s25
      %s28 = sphi 0, %s26
      %s29 = sphi 0, %s27
      %s41 = sphi 0, %s43
      %s44 = sphi 0, %s41
      %s45 = sphi 0, %s44
      %s61 = sphi 0, %s45
      %s65 = sphi 0, %s65
      %s67 = sphi 0, %s65
      %s68 = sphi 0, %s67
      %s82 = sphi 0, %s68
      %s86 = sphi 0, %s86
      %s88 = sphi 0, %s86
      %s89 = sphi 0, %s88
      %s103 = sphi 0, %s89
      %s107 = sphi 0, %s107
      %s109 = sphi 0, %s107
      %s110 = sphi 0, %s109
      %s124 = sphi 0, %s110
      %s128 = sphi 0, %s128
      %s130 = sphi 0, %s128
      %s131 = sphi 0, %s130
      %s145 = sphi 0, %s131
      %s149 = sphi 0, %s149
      %s151 = sphi 0, %s149
      %s152 = sphi 0, %s151
      %s166 = sphi 0, %s152
      %s170 = sphi 0, %s170
      %s172 = sphi 0, %s170
      %s173 = sphi 0, %s172
      %s187 = sphi 0, %s173
      %s193 = sphi 0, %s195
      %s196 = sphi 0, %s193
      %s197 = sphi 0, %s196
      %s213 = sphi 0, %s197
    $region4: #{stnkd_forward.2} parent=1 // loop_header_branch
      %20 = sbr.rel (%p18) target = $region8
    $region5: #{stnkd_forward.2} parent=1 // loop_body
      %s22 = ssub.s32 %s17, 1
      %s23 = ssub.s32 %s17, 2
      %s30 = sadd.s32 1, %s25
      %p31 = scmp.ge.s32.totalorder %s30, 1
      %s32 = scalar_select %p31, 0, %s30
      %s33 = sadd.s32 1, %s24
      %s34 = scalar_select %p31, %s33, %s24
      %p35 = scmp.ge.s32.totalorder %s34, 2
      %s36 = scalar_select %p35, 0, %s34
      %s37 = ssub.s32 %s24, %s36
      %s38 = ssub.s32 %s25, %s32
      %s39 = sor.u32 %s37, %s38
      %p40 = scmp.eq.s32.totalorder %s39, 0
      %s42 = sadd.s32 %s41, 1
      %s43 = scalar_select %p40, %s41, %s42
      %p46 = pneg %p40
      %p47 = scmp.eq.s32.totalorder %s17, 1
      %p48 = por %p46, %p47
      %p49 = scmp.ne.s32.totalorder %s41, %s44
      %p50 = scmp.eq.s32.totalorder %s17, 0
      %p51 = por %p49, %p50
      %p52 = scmp.ne.s32.totalorder %s41, %s44
      %p53 = scmp.eq.s32.totalorder %s22, 1
      %p54 = por %p52, %p53
      %p55 = scmp.ne.s32.totalorder %s44, %s45
      %p56 = scmp.eq.s32.totalorder %s22, 0
      %p57 = por %p55, %p56
      %p58 = scmp.ne.s32.totalorder %s44, %s45
      %p59 = scmp.eq.s32.totalorder %s23, 1
      %p60 = por %p58, %p59
      %p62 = scmp.ne.s32.totalorder %s45, %s61
      %p63 = scmp.eq.s32.totalorder %s23, 0
      %p64 = por %p62, %p63
      %s66 = sadd.s32 %s65, 1
      %p69 = scmp.eq.s32.totalorder %s17, 1
      %p70 = scmp.ne.s32.totalorder %s65, %s67
      %p71 = scmp.eq.s32.totalorder %s17, 0
      %p72 = por %p70, %p71
      %p73 = scmp.ne.s32.totalorder %s65, %s67
      %p74 = scmp.eq.s32.totalorder %s22, 1
      %p75 = por %p73, %p74
      %p76 = scmp.ne.s32.totalorder %s67, %s68
      %p77 = scmp.eq.s32.totalorder %s22, 0
      %p78 = por %p76, %p77
      %p79 = scmp.ne.s32.totalorder %s67, %s68
      %p80 = scmp.eq.s32.totalorder %s23, 1
      %p81 = por %p79, %p80
      %p83 = scmp.ne.s32.totalorder %s68, %s82
      %p84 = scmp.eq.s32.totalorder %s23, 0
      %p85 = por %p83, %p84
      %s87 = sadd.s32 %s86, 1
      %p90 = scmp.eq.s32.totalorder %s17, 1
      %p91 = scmp.ne.s32.totalorder %s86, %s88
      %p92 = scmp.eq.s32.totalorder %s17, 0
      %p93 = por %p91, %p92
      %p94 = scmp.ne.s32.totalorder %s86, %s88
      %p95 = scmp.eq.s32.totalorder %s22, 1
      %p96 = por %p94, %p95
      %p97 = scmp.ne.s32.totalorder %s88, %s89
      %p98 = scmp.eq.s32.totalorder %s22, 0
      %p99 = por %p97, %p98
      %p100 = scmp.ne.s32.totalorder %s88, %s89
      %p101 = scmp.eq.s32.totalorder %s23, 1
      %p102 = por %p100, %p101
      %p104 = scmp.ne.s32.totalorder %s89, %s103
      %p105 = scmp.eq.s32.totalorder %s23, 0
      %p106 = por %p104, %p105
      %s108 = sadd.s32 %s107, 1
      %p111 = scmp.eq.s32.totalorder %s17, 1
      %p112 = scmp.ne.s32.totalorder %s107, %s109
      %p113 = scmp.eq.s32.totalorder %s17, 0
      %p114 = por %p112, %p113
      %p115 = scmp.ne.s32.totalorder %s107, %s109
      %p116 = scmp.eq.s32.totalorder %s22, 1
      %p117 = por %p115, %p116
      %p118 = scmp.ne.s32.totalorder %s109, %s110
      %p119 = scmp.eq.s32.totalorder %s22, 0
      %p120 = por %p118, %p119
      %p121 = scmp.ne.s32.totalorder %s109, %s110
      %p122 = scmp.eq.s32.totalorder %s23, 1
      %p123 = por %p121, %p122
      %p125 = scmp.ne.s32.totalorder %s110, %s124
      %p126 = scmp.eq.s32.totalorder %s23, 0
      %p127 = por %p125, %p126
      %s129 = sadd.s32 %s128, 1
      %p132 = scmp.eq.s32.totalorder %s17, 1
      %p133 = scmp.ne.s32.totalorder %s128, %s130
      %p134 = scmp.eq.s32.totalorder %s17, 0
      %p135 = por %p133, %p134
      %p136 = scmp.ne.s32.totalorder %s128, %s130
      %p137 = scmp.eq.s32.totalorder %s22, 1
      %p138 = por %p136, %p137
      %p139 = scmp.ne.s32.totalorder %s130, %s131
      %p140 = scmp.eq.s32.totalorder %s22, 0
      %p141 = por %p139, %p140
      %p142 = scmp.ne.s32.totalorder %s130, %s131
      %p143 = scmp.eq.s32.totalorder %s23, 1
      %p144 = por %p142, %p143
      %p146 = scmp.ne.s32.totalorder %s131, %s145
      %p147 = scmp.eq.s32.totalorder %s23, 0
      %p148 = por %p146, %p147
      %s150 = sadd.s32 %s149, 1
      %p153 = scmp.eq.s32.totalorder %s17, 1
      %p154 = scmp.ne.s32.totalorder %s149, %s151
      %p155 = scmp.eq.s32.totalorder %s17, 0
      %p156 = por %p154, %p155
      %p157 = scmp.ne.s32.totalorder %s149, %s151
      %p158 = scmp.eq.s32.totalorder %s22, 1
      %p159 = por %p157, %p158
      %p160 = scmp.ne.s32.totalorder %s151, %s152
      %p161 = scmp.eq.s32.totalorder %s22, 0
      %p162 = por %p160, %p161
      %p163 = scmp.ne.s32.totalorder %s151, %s152
      %p164 = scmp.eq.s32.totalorder %s23, 1
      %p165 = por %p163, %p164
      %p167 = scmp.ne.s32.totalorder %s152, %s166
      %p168 = scmp.eq.s32.totalorder %s23, 0
      %p169 = por %p167, %p168
      %s171 = sadd.s32 %s170, 1
      %p174 = scmp.eq.s32.totalorder %s17, 1
      %p175 = scmp.ne.s32.totalorder %s170, %s172
      %p176 = scmp.eq.s32.totalorder %s17, 0
      %p177 = por %p175, %p176
      %p178 = scmp.ne.s32.totalorder %s170, %s172
      %p179 = scmp.eq.s32.totalorder %s22, 1
      %p180 = por %p178, %p179
      %p181 = scmp.ne.s32.totalorder %s172, %s173
      %p182 = scmp.eq.s32.totalorder %s22, 0
      %p183 = por %p181, %p182
      %p184 = scmp.ne.s32.totalorder %s172, %s173
      %p185 = scmp.eq.s32.totalorder %s23, 1
      %p186 = por %p184, %p185
      %p188 = scmp.ne.s32.totalorder %s173, %s187
      %p189 = scmp.eq.s32.totalorder %s23, 0
      %p190 = por %p188, %p189
      %s191 = ssub.s32 %s24, %s36
      %p192 = scmp.eq.s32.totalorder %s191, 0
      %s194 = sadd.s32 %s193, 1
      %s195 = scalar_select %p192, %s193, %s194
      %p198 = pneg %p192
      %p199 = scmp.eq.s32.totalorder %s17, 1
      %p200 = por %p198, %p199
      %p201 = scmp.ne.s32.totalorder %s193, %s196
      %p202 = scmp.eq.s32.totalorder %s17, 0
      %p203 = por %p201, %p202
      %p204 = scmp.ne.s32.totalorder %s193, %s196
      %p205 = scmp.eq.s32.totalorder %s22, 1
      %p206 = por %p204, %p205
      %p207 = scmp.ne.s32.totalorder %s196, %s197
      %p208 = scmp.eq.s32.totalorder %s22, 0
      %p209 = por %p207, %p208
      %p210 = scmp.ne.s32.totalorder %s196, %s197
      %p211 = scmp.eq.s32.totalorder %s23, 1
      %p212 = por %p210, %p211
      %p214 = scmp.ne.s32.totalorder %s197, %s213
      %p215 = scmp.eq.s32.totalorder %s23, 0
      %p216 = por %p214, %p215
      %p217 = scmp.le.s32.totalorder 1, %s17
      %p218 = scmp.lt.s32.totalorder %s17, 3
      %p219 = pnand %p217, %p218
      %p220 = pneg %p219
      // Predicated region
      $region9: #{stnkd_forward.2} parent=5 // pred_check
        _
      $region10: #{stnkd_forward.2} parent=5 // pred_check_branch
        %222 = sbr.rel (%p219) target = $region12
      $region11: #{stnkd_forward.2} parent=5 // pred_region
        %s223 = ssub.s32 %s17, 1
        // Predicated region
        $region13: #{stnkd_forward.2} parent=11 // pred_check
          %p224 = pneg %p78
        $region14: #{stnkd_forward.2} parent=11 // pred_check_branch
          %226 = sbr.rel (%p224) target = $region16
        $region15: #{stnkd_forward.2} parent=11 // pred_region
          %s228 = ssub.s32 512, 512
          %229 = vsyncadd [#allocation3], %s228
          %s230 = sshll.u32 [#allocation2], 4
          %s231 = int_to_ptr.vmem [resolvable:$true] %s230
          %236 = dma.hbm_to_vmem [thread:$0]  %s1, 512, %s231, [#allocation3], 64, 64, 4
        $region16: #{stnkd_forward.2} parent=11 // pred_fallthru
          _
        // Predicated region
        $region17: #{stnkd_forward.2} parent=11 // pred_check
          %p237 = pneg %p99
        $region18: #{stnkd_forward.2} parent=11 // pred_check_branch
          %239 = sbr.rel (%p237) target = $region20
        $region19: #{stnkd_forward.2} parent=11 // pred_region
          %s241 = ssub.s32 16, 16
          %242 = vsyncadd [#allocation5], %s241
          %s244 = sshll.u32 [#allocation4], 4
          %s245 = int_to_ptr.vmem [resolvable:$true] %s244
          %247 = dma.hbm_to_vmem [thread:$0]  %s2, 16, %s245, [#allocation5]
        $region20: #{stnkd_forward.2} parent=11 // pred_fallthru
          _
        // Predicated region
        $region21: #{stnkd_forward.2} parent=11 // pred_check
          %p248 = pneg %p120
        $region22: #{stnkd_forward.2} parent=11 // pred_check_branch
          %250 = sbr.rel (%p248) target = $region24
        $region23: #{stnkd_forward.2} parent=11 // pred_region
          %s252 = ssub.s32 512, 512
          %253 = vsyncadd [#allocation5], %s252
          %s254 = sshll.u32 [#allocation6], 4
          %s255 = int_to_ptr.vmem [resolvable:$true] %s254
          %260 = dma.hbm_to_vmem [thread:$0]  %s3, 512, %s255, [#allocation5], 64, 64, 4
        $region24: #{stnkd_forward.2} parent=11 // pred_fallthru
          _
        // Predicated region
        $region25: #{stnkd_forward.2} parent=11 // pred_check
          %p261 = pneg %p141
        $region26: #{stnkd_forward.2} parent=11 // pred_check_branch
          %263 = sbr.rel (%p261) target = $region28
        $region27: #{stnkd_forward.2} parent=11 // pred_region
          %s265 = ssub.s32 16, 16
          %266 = vsyncadd [#allocation8], %s265
          %s268 = sshll.u32 [#allocation7], 4
          %s269 = int_to_ptr.vmem [resolvable:$true] %s268
          %271 = dma.hbm_to_vmem [thread:$0]  %s4, 16, %s269, [#allocation8]
        $region28: #{stnkd_forward.2} parent=11 // pred_fallthru
          _
        // Predicated region
        $region29: #{stnkd_forward.2} parent=11 // pred_check
          %p272 = pneg %p162
        $region30: #{stnkd_forward.2} parent=11 // pred_check_branch
          %274 = sbr.rel (%p272) target = $region32
        $region31: #{stnkd_forward.2} parent=11 // pred_region
          %s276 = ssub.s32 8192, 8192
          %277 = vsyncadd [#allocation8], %s276
          %s278 = sshll.u32 [#allocation9], 4
          %s279 = int_to_ptr.vmem [resolvable:$true] %s278
          %284 = dma.hbm_to_vmem [thread:$0]  %s5, 8192, %s279, [#allocation8], 512, 512, 32
        $region32: #{stnkd_forward.2} parent=11 // pred_fallthru
          _
        // Predicated region
        $region33: #{stnkd_forward.2} parent=11 // pred_check
          %p285 = pneg %p183
        $region34: #{stnkd_forward.2} parent=11 // pred_check_branch
          %287 = sbr.rel (%p285) target = $region36
        $region35: #{stnkd_forward.2} parent=11 // pred_region
          %s289 = ssub.s32 128, 128
          %290 = vsyncadd [#allocation11], %s289
          %s292 = sshll.u32 [#allocation10], 4
          %s293 = int_to_ptr.vmem [resolvable:$true] %s292
          %295 = dma.hbm_to_vmem [thread:$0]  %s6, 128, %s293, [#allocation11]
        $region36: #{stnkd_forward.2} parent=11 // pred_fallthru
          _
      $region12: #{stnkd_forward.2} parent=5 // pred_fallthru
        _
      %p296 = scmp.lt.s32.totalorder %s17, 2
      // Predicated region
      $region37: #{stnkd_forward.2} parent=5 // pred_check
        %p297 = pneg %p296
      $region38: #{stnkd_forward.2} parent=5 // pred_check_branch
        %299 = sbr.rel (%p297) target = $region40
      $region39: #{stnkd_forward.2} parent=5 // pred_region
        // Predicated region
        $region41: #{stnkd_forward.2} parent=39 // pred_check
          %p300 = pneg %p51
        $region42: #{stnkd_forward.2} parent=39 // pred_check_branch
          %302 = sbr.rel (%p300) target = $region44
        $region43: #{stnkd_forward.2} parent=39 // pred_region
          %s303 = smul.u32 4, %s25
          %p304 = scmp.lt.s32.totalorder %s24, 1
          %s305 = scalar_select %p304, %s24, 1
          %p306 = scmp.lt.s32.totalorder %s303, 3
          %s307 = scalar_select %p306, %s303, 3
          %s308 = smul.addr %s305, 4
          %s309 = sadd.s32 %s307, %s308
          %s310 = smul.addr %s309, 4
          %s311 = scalar_lea.vmem %s0, %s310
          %s312 = smul.u32 4, %s25
        $region44: #{stnkd_forward.2} parent=39 // pred_fallthru
          _
      $region40: #{stnkd_forward.2} parent=5 // pred_fallthru
        _
      %p313 = scmp.le.s32.totalorder 1, %s17
      %p314 = scmp.lt.s32.totalorder %s17, 3
      %p315 = pnand %p313, %p314
      %p316 = pneg %p315
      // Predicated region
      $region45: #{stnkd_forward.2} parent=5 // pred_check
        _
      $region46: #{stnkd_forward.2} parent=5 // pred_check_branch
        %318 = sbr.rel (%p315) target = $region48
      $region47: #{stnkd_forward.2} parent=5 // pred_region
        %s319 = ssub.s32 %s17, 1
        // Predicated region
        $region49: #{stnkd_forward.2} parent=47 // pred_check
          %p320 = pneg %p78
        $region50: #{stnkd_forward.2} parent=47 // pred_check_branch
          %322 = sbr.rel (%p320) target = $region52
        $region51: #{stnkd_forward.2} parent=47 // pred_region
          %323 = dma.done [#allocation3], 512
        $region52: #{stnkd_forward.2} parent=47 // pred_fallthru
          _
        // Predicated region
        $region53: #{stnkd_forward.2} parent=47 // pred_check
          %p324 = pneg %p99
        $region54: #{stnkd_forward.2} parent=47 // pred_check_branch
          %326 = sbr.rel (%p324) target = $region56
        $region55: #{stnkd_forward.2} parent=47 // pred_region
          %327 = dma.done [#allocation5], 16
        $region56: #{stnkd_forward.2} parent=47 // pred_fallthru
          _
        // Predicated region
        $region57: #{stnkd_forward.2} parent=47 // pred_check
          %p328 = pneg %p120
        $region58: #{stnkd_forward.2} parent=47 // pred_check_branch
          %330 = sbr.rel (%p328) target = $region60
        $region59: #{stnkd_forward.2} parent=47 // pred_region
          %331 = dma.done [#allocation5], 512
        $region60: #{stnkd_forward.2} parent=47 // pred_fallthru
          _
        // Predicated region
        $region61: #{stnkd_forward.2} parent=47 // pred_check
          %p332 = pneg %p141
        $region62: #{stnkd_forward.2} parent=47 // pred_check_branch
          %334 = sbr.rel (%p332) target = $region64
        $region63: #{stnkd_forward.2} parent=47 // pred_region
          %335 = dma.done [#allocation8], 16
        $region64: #{stnkd_forward.2} parent=47 // pred_fallthru
          _
        // Predicated region
        $region65: #{stnkd_forward.2} parent=47 // pred_check
          %p336 = pneg %p162
        $region66: #{stnkd_forward.2} parent=47 // pred_check_branch
          %338 = sbr.rel (%p336) target = $region68
        $region67: #{stnkd_forward.2} parent=47 // pred_region
          %339 = dma.done [#allocation8], 8192
        $region68: #{stnkd_forward.2} parent=47 // pred_fallthru
          _
        // Predicated region
        $region69: #{stnkd_forward.2} parent=47 // pred_check
          %p340 = pneg %p183
        $region70: #{stnkd_forward.2} parent=47 // pred_check_branch
          %342 = sbr.rel (%p340) target = $region72
        $region71: #{stnkd_forward.2} parent=47 // pred_region
          %343 = dma.done [#allocation11], 128
        $region72: #{stnkd_forward.2} parent=47 // pred_fallthru
          _
        %s344 = smul.u32 4, %s27
        %p345 = scmp.lt.s32.totalorder %s26, 1
        %s346 = scalar_select %p345, %s26, 1
        %p347 = scmp.lt.s32.totalorder %s344, 3
        %s348 = scalar_select %p347, %s344, 3
        %s349 = smul.addr %s346, 4
        %s350 = sadd.s32 %s348, %s349
        %s351 = smul.addr %s350, 4
        %s352 = scalar_lea.vmem %s0, %s351
        %p353 = pneg %p57
        %p354 = pneg %p54
        %p355 = pneg %p78
        %p356 = pneg %p75
        %p357 = pneg %p99
        %p358 = pneg %p96
        %p359 = pneg %p120
        %p360 = pneg %p117
        %p361 = pneg %p141
        %p362 = pneg %p138
        %p363 = pneg %p162
        %p364 = pneg %p159
        %p365 = pneg %p183
        %p366 = pneg %p180
        %p367 = pneg %p209
        %p368 = pneg %p206
        %p369 = scmp.lt.s32.totalorder %s26, 1
        %s370 = scalar_select %p369, %s26, 1
        %s371 = smul.addr %s370, 8
        %s372 = scalar_lea.vmem %s7, %s371
        %s373 = smul.u32 4, %s27
        %p374 = scmp.lt.s32.totalorder %s26, 1
        %s375 = scalar_select %p374, %s26, 1
        %p376 = scmp.lt.s32.totalorder %s373, 3
        %s377 = scalar_select %p376, %s373, 3
        %s378 = smul.addr %s375, 4
        %s379 = sadd.s32 %s377, %s378
        %s380 = smul.addr %s379, 4
        %s381 = scalar_lea.vmem %s0, %s380
        %s382 = smul.u32 4, %s27
        %p383 = scmp.lt.s32.totalorder %s26, 1
        %s384 = scalar_select %p383, %s26, 1
        %s385 = smul.addr %s384, 8
        %s386 = scalar_lea.vmem %s7, %s385
        %v388 = vld [vmem:[%s381] sm:$0xf]
        %v389 = vld [vmem:[%s381 + $0x4] sm:$0xf]
        %v390 = vld [vmem:[%s381 + $0x8] sm:$0xf]
        %v391 = vld [vmem:[%s381 + $0xc] sm:$0xf]
        %v392 = vld [vmem:[#allocation2] sm:$0xf]
        %v393 = vld [vmem:[#allocation2 + $0x4] sm:$0xf]
        %v394 = vld [vmem:[#allocation2 + $0x8] sm:$0xf]
        %v395 = vld [vmem:[#allocation2 + $0xc] sm:$0xf]
        %v396 = vld [vmem:[#allocation2 + $0x10] sm:$0xf]
        %v397 = vld [vmem:[#allocation2 + $0x14] sm:$0xf]
        %v398 = vld [vmem:[#allocation2 + $0x18] sm:$0xf]
        %v399 = vld [vmem:[#allocation2 + $0x1c] sm:$0xf]
        %v400 = vld [vmem:[#allocation4] sm:$0x1]
        %v402 = vlaneseq
        %v403 = vshrl.u32 %v402, 7
        %v404 = vsub.s32 0, %v403
        %v405 = vrot.slane %v400, %v404
        %v411 = vunpack.c.l.b16 %v388
        %v412 = vunpack.c.l.b16 %v389
        %v413 = vunpack.c.l.b16 %v390
        %v414 = vunpack.c.l.b16 %v391
        %v415 = vpack.c.b16 %v412, %v411
        %v416 = vpack.c.b16 %v414, %v413
        %v425 = vunpack.c.l.b16 %v392
        %v426 = vunpack.c.l.b16 %v393
        %v427 = vunpack.c.l.b16 %v394
        %v428 = vunpack.c.l.b16 %v395
        %v429 = vunpack.c.l.b16 %v396
        %v430 = vunpack.c.l.b16 %v397
        %v431 = vunpack.c.l.b16 %v398
        %v432 = vunpack.c.l.b16 %v399
        %v433 = vpack.c.b16 %v426, %v425
        %v434 = vpack.c.b16 %v428, %v427
        %v435 = vpack.c.b16 %v430, %v429
        %v436 = vpack.c.b16 %v432, %v431
        %vm441 = vcmask 523264
        %v443 = vsel %vm441, %v415, 0
        %v446 = vsel %vm441, %v416, 0
        %448 = vmatprep.subr.bf16.mxu0 0
        %449 = vmatpush1.bf16.msra.mxu0 0
        %450 = vmatprep.subr.bf16.mxu0 0
        %451 = vmatpush1.bf16.msra.mxu0 0
        %452 = vmatprep.subr.bf16.mxu0 0
        %453 = vmatpush1.bf16.msra.mxu0 0
        %454 = vmatprep.subr.bf16.mxu0 0
        %455 = vmatpush1.bf16.msra.mxu0 0
        %456 = vmatprep.subr.bf16.mxu0 0
        %457 = vmatpush1.bf16.msra.mxu0 %v436
        %458 = vmatprep.subr.bf16.mxu0 0
        %459 = vmatpush1.bf16.msra.mxu0 %v435
        %460 = vmatprep.subr.bf16.mxu0 0
        %461 = vmatpush1.bf16.msra.mxu0 %v434
        %462 = vmatprep.subr.bf16.mxu0 0
        %463 = vmatpush1.bf16.msra.mxu0 %v433
        %464 = vmatprep.subr.bf16.mxu0 0
        %465 = vmatpush2.bf16.msra.mxu0 0
        %466 = vmatprep.subr.bf16.mxu0 0
        %467 = vmatpush2.bf16.msra.mxu0 0
        %468 = vmatprep.subr.bf16.mxu0 0
        %469 = vmatpush2.bf16.msra.mxu0 0
        %470 = vmatprep.subr.bf16.mxu0 0
        %471 = vmatpush2.bf16.msra.mxu0 0
        %472 = vmatprep.subr.bf16.mxu0 0
        %473 = vmatpush2.bf16.msra.mxu0 0
        %474 = vmatprep.subr.bf16.mxu0 0
        %475 = vmatpush2.bf16.msra.mxu0 0
        %476 = vmatprep.subr.bf16.mxu0 0
        %477 = vmatpush2.bf16.msra.mxu0 0
        %478 = vmatprep.subr.bf16.mxu0 0
        %479 = vmatpush2.bf16.msra.mxu0 0
        %480 = vmatprep.mubr.bf16.mxu0 0
        %481 = vmatmul.mubr.bf16.gmra.mxu0 %v443
        %v482 = vpop.f32.mrf.mxu0
        %v483 = vadd.f32 %v405, %v482
        %v484 = vpop.f32.mrf.mxu0
        %v485 = vpop.f32.mrf.mxu0
        %v486 = vadd.f32 %v405, %v485
        %v487 = vpop.f32.mrf.mxu0
        %488 = vmatprep.mubr.bf16.mxu0 0
        %489 = vmatmul.mubr.bf16.gmra.mxu0 %v446
        %v490 = vpop.f32.mrf.mxu0
        %v491 = vadd.f32 %v405, %v490
        %v492 = vpop.f32.mrf.mxu0
        %v493 = vpop.f32.mrf.mxu0
        %v494 = vadd.f32 %v405, %v493
        %v495 = vpop.f32.mrf.mxu0
        %496 = vdwg.mxu0
        %v497 = vmax.f32 %v483, 0.0
        %v498 = vmax.f32 %v486, 0.0
        %v499 = vmax.f32 %v491, 0.0
        %v500 = vmax.f32 %v494, 0.0
        %v501 = vpack.c.bf16 %v498, %v497
        %v502 = vpack.c.bf16 %v500, %v499
        %v503 = vld [vmem:[#allocation6] sm:$0xf]
        %v504 = vld [vmem:[#allocation6 + $0x4] sm:$0xf]
        %v505 = vld [vmem:[#allocation6 + $0x8] sm:$0xf]
        %v506 = vld [vmem:[#allocation6 + $0xc] sm:$0xf]
        %v507 = vld [vmem:[#allocation6 + $0x10] sm:$0xf]
        %v508 = vld [vmem:[#allocation6 + $0x14] sm:$0xf]
        %v509 = vld [vmem:[#allocation6 + $0x18] sm:$0xf]
        %v510 = vld [vmem:[#allocation6 + $0x1c] sm:$0xf]
        %v511 = vld [vmem:[#allocation7] sm:$0x1]
        %v513 = vlaneseq
        %v514 = vshrl.u32 %v513, 7
        %v515 = vsub.s32 0, %v514
        %v516 = vrot.slane %v511, %v515
        %v526 = vunpack.c.l.b16 %v503
        %v527 = vunpack.c.l.b16 %v504
        %v528 = vunpack.c.l.b16 %v505
        %v529 = vunpack.c.l.b16 %v506
        %v530 = vunpack.c.l.b16 %v507
        %v531 = vunpack.c.l.b16 %v508
        %v532 = vunpack.c.l.b16 %v509
        %v533 = vunpack.c.l.b16 %v510
        %v534 = vpack.c.b16 %v527, %v526
        %v535 = vpack.c.b16 %v529, %v528
        %v536 = vpack.c.b16 %v531, %v530
        %v537 = vpack.c.b16 %v533, %v532
        %v543 = vsel %vm441, %v501, 0
        %v546 = vsel %vm441, %v502, 0
        %548 = vmatprep.subr.bf16.mxu0 0
        %549 = vmatpush1.bf16.msra.mxu0 0
        %550 = vmatprep.subr.bf16.mxu0 0
        %551 = vmatpush1.bf16.msra.mxu0 0
        %552 = vmatprep.subr.bf16.mxu0 0
        %553 = vmatpush1.bf16.msra.mxu0 0
        %554 = vmatprep.subr.bf16.mxu0 0
        %555 = vmatpush1.bf16.msra.mxu0 0
        %556 = vmatprep.subr.bf16.mxu0 0
        %557 = vmatpush1.bf16.msra.mxu0 %v537
        %558 = vmatprep.subr.bf16.mxu0 0
        %559 = vmatpush1.bf16.msra.mxu0 %v536
        %560 = vmatprep.subr.bf16.mxu0 0
        %561 = vmatpush1.bf16.msra.mxu0 %v535
        %562 = vmatprep.subr.bf16.mxu0 0
        %563 = vmatpush1.bf16.msra.mxu0 %v534
        %564 = vmatprep.subr.bf16.mxu0 0
        %565 = vmatpush2.bf16.msra.mxu0 0
        %566 = vmatprep.subr.bf16.mxu0 0
        %567 = vmatpush2.bf16.msra.mxu0 0
        %568 = vmatprep.subr.bf16.mxu0 0
        %569 = vmatpush2.bf16.msra.mxu0 0
        %570 = vmatprep.subr.bf16.mxu0 0
        %571 = vmatpush2.bf16.msra.mxu0 0
        %572 = vmatprep.subr.bf16.mxu0 0
        %573 = vmatpush2.bf16.msra.mxu0 0
        %574 = vmatprep.subr.bf16.mxu0 0
        %575 = vmatpush2.bf16.msra.mxu0 0
        %576 = vmatprep.subr.bf16.mxu0 0
        %577 = vmatpush2.bf16.msra.mxu0 0
        %578 = vmatprep.subr.bf16.mxu0 0
        %579 = vmatpush2.bf16.msra.mxu0 0
        %580 = vmatprep.mubr.bf16.mxu0 0
        %581 = vmatmul.mubr.bf16.gmra.mxu0 %v543
        %v582 = vpop.f32.mrf.mxu0
        %v583 = vadd.f32 %v516, %v582
        %v584 = vpop.f32.mrf.mxu0
        %v585 = vpop.f32.mrf.mxu0
        %v586 = vadd.f32 %v516, %v585
        %v587 = vpop.f32.mrf.mxu0
        %588 = vmatprep.mubr.bf16.mxu0 0
        %589 = vmatmul.mubr.bf16.gmra.mxu0 %v546
        %v590 = vpop.f32.mrf.mxu0
        %v591 = vadd.f32 %v516, %v590
        %v592 = vpop.f32.mrf.mxu0
        %v593 = vpop.f32.mrf.mxu0
        %v594 = vadd.f32 %v516, %v593
        %v595 = vpop.f32.mrf.mxu0
        %596 = vdwg.mxu0
        %v597 = vmax.f32 %v583, 0.0
        %v598 = vmax.f32 %v586, 0.0
        %v599 = vmax.f32 %v591, 0.0
        %v600 = vmax.f32 %v594, 0.0
        %v601 = vpack.c.bf16 %v598, %v597
        %v602 = vpack.c.bf16 %v600, %v599
        %v603 = vld [vmem:[#allocation9] sm:$0xff]
        %v604 = vld [vmem:[#allocation9 + $0x8] sm:$0xff]
        %v605 = vld [vmem:[#allocation9 + $0x10] sm:$0xff]
        %v606 = vld [vmem:[#allocation9 + $0x18] sm:$0xff]
        %v607 = vld [vmem:[#allocation9 + $0x20] sm:$0xff]
        %v608 = vld [vmem:[#allocation9 + $0x28] sm:$0xff]
        %v609 = vld [vmem:[#allocation9 + $0x30] sm:$0xff]
        %v610 = vld [vmem:[#allocation9 + $0x38] sm:$0xff]
        %v611 = vld [vmem:[#allocation9 + $0x40] sm:$0xff]
        %v612 = vld [vmem:[#allocation9 + $0x48] sm:$0xff]
        %v613 = vld [vmem:[#allocation9 + $0x50] sm:$0xff]
        %v614 = vld [vmem:[#allocation9 + $0x58] sm:$0xff]
        %v615 = vld [vmem:[#allocation9 + $0x60] sm:$0xff]
        %v616 = vld [vmem:[#allocation9 + $0x68] sm:$0xff]
        %v617 = vld [vmem:[#allocation9 + $0x70] sm:$0xff]
        %v618 = vld [vmem:[#allocation9 + $0x78] sm:$0xff]
        %v619 = vld [vmem:[#allocation9 + $0x80] sm:$0xff]
        %v620 = vld [vmem:[#allocation9 + $0x88] sm:$0xff]
        %v621 = vld [vmem:[#allocation9 + $0x90] sm:$0xff]
        %v622 = vld [vmem:[#allocation9 + $0x98] sm:$0xff]
        %v623 = vld [vmem:[#allocation9 + $0xa0] sm:$0xff]
        %v624 = vld [vmem:[#allocation9 + $0xa8] sm:$0xff]
        %v625 = vld [vmem:[#allocation9 + $0xb0] sm:$0xff]
        %v626 = vld [vmem:[#allocation9 + $0xb8] sm:$0xff]
        %v627 = vld [vmem:[#allocation9 + $0xc0] sm:$0xff]
        %v628 = vld [vmem:[#allocation9 + $0xc8] sm:$0xff]
        %v629 = vld [vmem:[#allocation9 + $0xd0] sm:$0xff]
        %v630 = vld [vmem:[#allocation9 + $0xd8] sm:$0xff]
        %v631 = vld [vmem:[#allocation9 + $0xe0] sm:$0xff]
        %v632 = vld [vmem:[#allocation9 + $0xe8] sm:$0xff]
        %v633 = vld [vmem:[#allocation9 + $0xf0] sm:$0xff]
        %v634 = vld [vmem:[#allocation9 + $0xf8] sm:$0xff]
        %v635 = vld [vmem:[#allocation9 + $0x100] sm:$0xff]
        %v636 = vld [vmem:[#allocation9 + $0x108] sm:$0xff]
        %v637 = vld [vmem:[#allocation9 + $0x110] sm:$0xff]
        %v638 = vld [vmem:[#allocation9 + $0x118] sm:$0xff]
        %v639 = vld [vmem:[#allocation9 + $0x120] sm:$0xff]
        %v640 = vld [vmem:[#allocation9 + $0x128] sm:$0xff]
        %v641 = vld [vmem:[#allocation9 + $0x130] sm:$0xff]
        %v642 = vld [vmem:[#allocation9 + $0x138] sm:$0xff]
        %v643 = vld [vmem:[#allocation9 + $0x140] sm:$0xff]
        %v644 = vld [vmem:[#allocation9 + $0x148] sm:$0xff]
        %v645 = vld [vmem:[#allocation9 + $0x150] sm:$0xff]
        %v646 = vld [vmem:[#allocation9 + $0x158] sm:$0xff]
        %v647 = vld [vmem:[#allocation9 + $0x160] sm:$0xff]
        %v648 = vld [vmem:[#allocation9 + $0x168] sm:$0xff]
        %v649 = vld [vmem:[#allocation9 + $0x170] sm:$0xff]
        %v650 = vld [vmem:[#allocation9 + $0x178] sm:$0xff]
        %v651 = vld [vmem:[#allocation9 + $0x180] sm:$0xff]
        %v652 = vld [vmem:[#allocation9 + $0x188] sm:$0xff]
        %v653 = vld [vmem:[#allocation9 + $0x190] sm:$0xff]
        %v654 = vld [vmem:[#allocation9 + $0x198] sm:$0xff]
        %v655 = vld [vmem:[#allocation9 + $0x1a0] sm:$0xff]
        %v656 = vld [vmem:[#allocation9 + $0x1a8] sm:$0xff]
        %v657 = vld [vmem:[#allocation9 + $0x1b0] sm:$0xff]
        %v658 = vld [vmem:[#allocation9 + $0x1b8] sm:$0xff]
        %v659 = vld [vmem:[#allocation9 + $0x1c0] sm:$0xff]
        %v660 = vld [vmem:[#allocation9 + $0x1c8] sm:$0xff]
        %v661 = vld [vmem:[#allocation9 + $0x1d0] sm:$0xff]
        %v662 = vld [vmem:[#allocation9 + $0x1d8] sm:$0xff]
        %v663 = vld [vmem:[#allocation9 + $0x1e0] sm:$0xff]
        %v664 = vld [vmem:[#allocation9 + $0x1e8] sm:$0xff]
        %v665 = vld [vmem:[#allocation9 + $0x1f0] sm:$0xff]
        %v666 = vld [vmem:[#allocation9 + $0x1f8] sm:$0xff]
        %v731 = vunpack.c.l.b16 %v603
        %v732 = vunpack.c.h.b16 %v603
        %v733 = vunpack.c.l.b16 %v604
        %v734 = vunpack.c.h.b16 %v604
        %v735 = vunpack.c.l.b16 %v605
        %v736 = vunpack.c.h.b16 %v605
        %v737 = vunpack.c.l.b16 %v606
        %v738 = vunpack.c.h.b16 %v606
        %v739 = vunpack.c.l.b16 %v607
        %v740 = vunpack.c.h.b16 %v607
        %v741 = vunpack.c.l.b16 %v608
        %v742 = vunpack.c.h.b16 %v608
        %v743 = vunpack.c.l.b16 %v609
        %v744 = vunpack.c.h.b16 %v609
        %v745 = vunpack.c.l.b16 %v610
        %v746 = vunpack.c.h.b16 %v610
        %v747 = vunpack.c.l.b16 %v611
        %v748 = vunpack.c.h.b16 %v611
        %v749 = vunpack.c.l.b16 %v612
        %v750 = vunpack.c.h.b16 %v612
        %v751 = vunpack.c.l.b16 %v613
        %v752 = vunpack.c.h.b16 %v613
        %v753 = vunpack.c.l.b16 %v614
        %v754 = vunpack.c.h.b16 %v614
        %v755 = vunpack.c.l.b16 %v615
        %v756 = vunpack.c.h.b16 %v615
        %v757 = vunpack.c.l.b16 %v616
        %v758 = vunpack.c.h.b16 %v616
        %v759 = vunpack.c.l.b16 %v617
        %v760 = vunpack.c.h.b16 %v617
        %v761 = vunpack.c.l.b16 %v618
        %v762 = vunpack.c.h.b16 %v618
        %v763 = vunpack.c.l.b16 %v619
        %v764 = vunpack.c.h.b16 %v619
        %v765 = vunpack.c.l.b16 %v620
        %v766 = vunpack.c.h.b16 %v620
        %v767 = vunpack.c.l.b16 %v621
        %v768 = vunpack.c.h.b16 %v621
        %v769 = vunpack.c.l.b16 %v622
        %v770 = vunpack.c.h.b16 %v622
        %v771 = vunpack.c.l.b16 %v623
        %v772 = vunpack.c.h.b16 %v623
        %v773 = vunpack.c.l.b16 %v624
        %v774 = vunpack.c.h.b16 %v624
        %v775 = vunpack.c.l.b16 %v625
        %v776 = vunpack.c.h.b16 %v625
        %v777 = vunpack.c.l.b16 %v626
        %v778 = vunpack.c.h.b16 %v626
        %v779 = vunpack.c.l.b16 %v627
        %v780 = vunpack.c.h.b16 %v627
        %v781 = vunpack.c.l.b16 %v628
        %v782 = vunpack.c.h.b16 %v628
        %v783 = vunpack.c.l.b16 %v629
        %v784 = vunpack.c.h.b16 %v629
        %v785 = vunpack.c.l.b16 %v630
        %v786 = vunpack.c.h.b16 %v630
        %v787 = vunpack.c.l.b16 %v631
        %v788 = vunpack.c.h.b16 %v631
        %v789 = vunpack.c.l.b16 %v632
        %v790 = vunpack.c.h.b16 %v632
        %v791 = vunpack.c.l.b16 %v633
        %v792 = vunpack.c.h.b16 %v633
        %v793 = vunpack.c.l.b16 %v634
        %v794 = vunpack.c.h.b16 %v634
        %v795 = vunpack.c.l.b16 %v635
        %v796 = vunpack.c.h.b16 %v635
        %v797 = vunpack.c.l.b16 %v636
        %v798 = vunpack.c.h.b16 %v636
        %v799 = vunpack.c.l.b16 %v637
        %v800 = vunpack.c.h.b16 %v637
        %v801 = vunpack.c.l.b16 %v638
        %v802 = vunpack.c.h.b16 %v638
        %v803 = vunpack.c.l.b16 %v639
        %v804 = vunpack.c.h.b16 %v639
        %v805 = vunpack.c.l.b16 %v640
        %v806 = vunpack.c.h.b16 %v640
        %v807 = vunpack.c.l.b16 %v641
        %v808 = vunpack.c.h.b16 %v641
        %v809 = vunpack.c.l.b16 %v642
        %v810 = vunpack.c.h.b16 %v642
        %v811 = vunpack.c.l.b16 %v643
        %v812 = vunpack.c.h.b16 %v643
        %v813 = vunpack.c.l.b16 %v644
        %v814 = vunpack.c.h.b16 %v644
        %v815 = vunpack.c.l.b16 %v645
        %v816 = vunpack.c.h.b16 %v645
        %v817 = vunpack.c.l.b16 %v646
        %v818 = vunpack.c.h.b16 %v646
        %v819 = vunpack.c.l.b16 %v647
        %v820 = vunpack.c.h.b16 %v647
        %v821 = vunpack.c.l.b16 %v648
        %v822 = vunpack.c.h.b16 %v648
        %v823 = vunpack.c.l.b16 %v649
        %v824 = vunpack.c.h.b16 %v649
        %v825 = vunpack.c.l.b16 %v650
        %v826 = vunpack.c.h.b16 %v650
        %v827 = vunpack.c.l.b16 %v651
        %v828 = vunpack.c.h.b16 %v651
        %v829 = vunpack.c.l.b16 %v652
        %v830 = vunpack.c.h.b16 %v652
        %v831 = vunpack.c.l.b16 %v653
        %v832 = vunpack.c.h.b16 %v653
        %v833 = vunpack.c.l.b16 %v654
        %v834 = vunpack.c.h.b16 %v654
        %v835 = vunpack.c.l.b16 %v655
        %v836 = vunpack.c.h.b16 %v655
        %v837 = vunpack.c.l.b16 %v656
        %v838 = vunpack.c.h.b16 %v656
        %v839 = vunpack.c.l.b16 %v657
        %v840 = vunpack.c.h.b16 %v657
        %v841 = vunpack.c.l.b16 %v658
        %v842 = vunpack.c.h.b16 %v658
        %v843 = vunpack.c.l.b16 %v659
        %v844 = vunpack.c.h.b16 %v659
        %v845 = vunpack.c.l.b16 %v660
        %v846 = vunpack.c.h.b16 %v660
        %v847 = vunpack.c.l.b16 %v661
        %v848 = vunpack.c.h.b16 %v661
        %v849 = vunpack.c.l.b16 %v662
        %v850 = vunpack.c.h.b16 %v662
        %v851 = vunpack.c.l.b16 %v663
        %v852 = vunpack.c.h.b16 %v663
        %v853 = vunpack.c.l.b16 %v664
        %v854 = vunpack.c.h.b16 %v664
        %v855 = vunpack.c.l.b16 %v665
        %v856 = vunpack.c.h.b16 %v665
        %v857 = vunpack.c.l.b16 %v666
        %v858 = vunpack.c.h.b16 %v666
        %v859 = vpack.c.b16 %v739, %v731
        %v860 = vpack.c.b16 %v740, %v732
        %v861 = vpack.c.b16 %v741, %v733
        %v862 = vpack.c.b16 %v742, %v734
        %v863 = vpack.c.b16 %v743, %v735
        %v864 = vpack.c.b16 %v744, %v736
        %v865 = vpack.c.b16 %v745, %v737
        %v866 = vpack.c.b16 %v746, %v738
        %v867 = vpack.c.b16 %v755, %v747
        %v868 = vpack.c.b16 %v756, %v748
        %v869 = vpack.c.b16 %v757, %v749
        %v870 = vpack.c.b16 %v758, %v750
        %v871 = vpack.c.b16 %v759, %v751
        %v872 = vpack.c.b16 %v760, %v752
        %v873 = vpack.c.b16 %v761, %v753
        %v874 = vpack.c.b16 %v762, %v754
        %v875 = vpack.c.b16 %v771, %v763
        %v876 = vpack.c.b16 %v772, %v764
        %v877 = vpack.c.b16 %v773, %v765
        %v878 = vpack.c.b16 %v774, %v766
        %v879 = vpack.c.b16 %v775, %v767
        %v880 = vpack.c.b16 %v776, %v768
        %v881 = vpack.c.b16 %v777, %v769
        %v882 = vpack.c.b16 %v778, %v770
        %v883 = vpack.c.b16 %v787, %v779
        %v884 = vpack.c.b16 %v788, %v780
        %v885 = vpack.c.b16 %v789, %v781
        %v886 = vpack.c.b16 %v790, %v782
        %v887 = vpack.c.b16 %v791, %v783
        %v888 = vpack.c.b16 %v792, %v784
        %v889 = vpack.c.b16 %v793, %v785
        %v890 = vpack.c.b16 %v794, %v786
        %v891 = vpack.c.b16 %v803, %v795
        %v892 = vpack.c.b16 %v804, %v796
        %v893 = vpack.c.b16 %v805, %v797
        %v894 = vpack.c.b16 %v806, %v798
        %v895 = vpack.c.b16 %v807, %v799
        %v896 = vpack.c.b16 %v808, %v800
        %v897 = vpack.c.b16 %v809, %v801
        %v898 = vpack.c.b16 %v810, %v802
        %v899 = vpack.c.b16 %v819, %v811
        %v900 = vpack.c.b16 %v820, %v812
        %v901 = vpack.c.b16 %v821, %v813
        %v902 = vpack.c.b16 %v822, %v814
        %v903 = vpack.c.b16 %v823, %v815
        %v904 = vpack.c.b16 %v824, %v816
        %v905 = vpack.c.b16 %v825, %v817
        %v906 = vpack.c.b16 %v826, %v818
        %v907 = vpack.c.b16 %v835, %v827
        %v908 = vpack.c.b16 %v836, %v828
        %v909 = vpack.c.b16 %v837, %v829
        %v910 = vpack.c.b16 %v838, %v830
        %v911 = vpack.c.b16 %v839, %v831
        %v912 = vpack.c.b16 %v840, %v832
        %v913 = vpack.c.b16 %v841, %v833
        %v914 = vpack.c.b16 %v842, %v834
        %v915 = vpack.c.b16 %v851, %v843
        %v916 = vpack.c.b16 %v852, %v844
        %v917 = vpack.c.b16 %v853, %v845
        %v918 = vpack.c.b16 %v854, %v846
        %v919 = vpack.c.b16 %v855, %v847
        %v920 = vpack.c.b16 %v856, %v848
        %v921 = vpack.c.b16 %v857, %v849
        %v922 = vpack.c.b16 %v858, %v850
        %987 = vmatprep.subr.bf16.mxu0 %v916
        %988 = vmatpush1.bf16.msra.mxu0 %v915
        %989 = vmatprep.subr.bf16.mxu0 %v908
        %990 = vmatpush1.bf16.msra.mxu0 %v907
        %991 = vmatprep.subr.bf16.mxu0 %v900
        %992 = vmatpush1.bf16.msra.mxu0 %v899
        %993 = vmatprep.subr.bf16.mxu0 %v892
        %994 = vmatpush1.bf16.msra.mxu0 %v891
        %995 = vmatprep.subr.bf16.mxu0 %v884
        %996 = vmatpush1.bf16.msra.mxu0 %v883
        %997 = vmatprep.subr.bf16.mxu0 %v876
        %998 = vmatpush1.bf16.msra.mxu0 %v875
        %999 = vmatprep.subr.bf16.mxu0 %v868
        %1000 = vmatpush1.bf16.msra.mxu0 %v867
        %1001 = vmatprep.subr.bf16.mxu0 %v860
        %1002 = vmatpush1.bf16.msra.mxu0 %v859
        %1003 = vmatprep.subr.bf16.mxu0 0
        %1004 = vmatpush2.bf16.msra.mxu0 0
        %1005 = vmatprep.subr.bf16.mxu0 0
        %1006 = vmatpush2.bf16.msra.mxu0 0
        %1007 = vmatprep.subr.bf16.mxu0 0
        %1008 = vmatpush2.bf16.msra.mxu0 0
        %1009 = vmatprep.subr.bf16.mxu0 0
        %1010 = vmatpush2.bf16.msra.mxu0 0
        %1011 = vmatprep.subr.bf16.mxu0 0
        %1012 = vmatpush2.bf16.msra.mxu0 0
        %1013 = vmatprep.subr.bf16.mxu0 0
        %1014 = vmatpush2.bf16.msra.mxu0 0
        %1015 = vmatprep.subr.bf16.mxu0 0
        %1016 = vmatpush2.bf16.msra.mxu0 0
        %1017 = vmatprep.subr.bf16.mxu0 0
        %1018 = vmatpush2.bf16.msra.mxu0 0
        %1019 = vmatprep.mubr.bf16.mxu0 0
        %1020 = vmatmul.mubr.bf16.gmra.mxu0 %v601
        %v1021 = vpop.f32.mrf.mxu0
        %v1022 = vadd.f32 0.0, %v1021
        %v1023 = vpop.f32.mrf.mxu0
        %v1024 = vadd.f32 0.0, %v1023
        %v1025 = vpop.f32.mrf.mxu0
        %v1026 = vadd.f32 0.0, %v1025
        %v1027 = vpop.f32.mrf.mxu0
        %v1028 = vadd.f32 0.0, %v1027
        %1029 = vmatprep.mubr.bf16.mxu0 0
        %1030 = vmatmul.mubr.bf16.gmra.mxu0 %v602
        %v1031 = vpop.f32.mrf.mxu0
        %v1032 = vadd.f32 0.0, %v1031
        %v1033 = vpop.f32.mrf.mxu0
        %v1034 = vadd.f32 0.0, %v1033
        %v1035 = vpop.f32.mrf.mxu0
        %v1036 = vadd.f32 0.0, %v1035
        %v1037 = vpop.f32.mrf.mxu0
        %v1038 = vadd.f32 0.0, %v1037
        %1039 = vdwg.mxu0
        %1040 = vmatprep.subr.bf16.mxu0 %v918
        %1041 = vmatpush1.bf16.msra.mxu0 %v917
        %1042 = vmatprep.subr.bf16.mxu0 %v910
        %1043 = vmatpush1.bf16.msra.mxu0 %v909
        %1044 = vmatprep.subr.bf16.mxu0 %v902
        %1045 = vmatpush1.bf16.msra.mxu0 %v901
        %1046 = vmatprep.subr.bf16.mxu0 %v894
        %1047 = vmatpush1.bf16.msra.mxu0 %v893
        %1048 = vmatprep.subr.bf16.mxu0 %v886
        %1049 = vmatpush1.bf16.msra.mxu0 %v885
        %1050 = vmatprep.subr.bf16.mxu0 %v878
        %1051 = vmatpush1.bf16.msra.mxu0 %v877
        %1052 = vmatprep.subr.bf16.mxu0 %v870
        %1053 = vmatpush1.bf16.msra.mxu0 %v869
        %1054 = vmatprep.subr.bf16.mxu0 %v862
        %1055 = vmatpush1.bf16.msra.mxu0 %v861
        %1056 = vmatprep.subr.bf16.mxu0 0
        %1057 = vmatpush2.bf16.msra.mxu0 0
        %1058 = vmatprep.subr.bf16.mxu0 0
        %1059 = vmatpush2.bf16.msra.mxu0 0
        %1060 = vmatprep.subr.bf16.mxu0 0
        %1061 = vmatpush2.bf16.msra.mxu0 0
        %1062 = vmatprep.subr.bf16.mxu0 0
        %1063 = vmatpush2.bf16.msra.mxu0 0
        %1064 = vmatprep.subr.bf16.mxu0 0
        %1065 = vmatpush2.bf16.msra.mxu0 0
        %1066 = vmatprep.subr.bf16.mxu0 0
        %1067 = vmatpush2.bf16.msra.mxu0 0
        %1068 = vmatprep.subr.bf16.mxu0 0
        %1069 = vmatpush2.bf16.msra.mxu0 0
        %1070 = vmatprep.subr.bf16.mxu0 0
        %1071 = vmatpush2.bf16.msra.mxu0 0
        %1072 = vmatprep.mubr.bf16.mxu0 0
        %1073 = vmatmul.mubr.bf16.gmra.mxu0 %v601
        %v1074 = vpop.f32.mrf.mxu0
        %v1075 = vadd.f32 0.0, %v1074
        %v1076 = vpop.f32.mrf.mxu0
        %v1077 = vadd.f32 0.0, %v1076
        %v1078 = vpop.f32.mrf.mxu0
        %v1079 = vadd.f32 0.0, %v1078
        %v1080 = vpop.f32.mrf.mxu0
        %v1081 = vadd.f32 0.0, %v1080
        %1082 = vmatprep.mubr.bf16.mxu0 0
        %1083 = vmatmul.mubr.bf16.gmra.mxu0 %v602
        %v1084 = vpop.f32.mrf.mxu0
        %v1085 = vadd.f32 0.0, %v1084
        %v1086 = vpop.f32.mrf.mxu0
        %v1087 = vadd.f32 0.0, %v1086
        %v1088 = vpop.f32.mrf.mxu0
        %v1089 = vadd.f32 0.0, %v1088
        %v1090 = vpop.f32.mrf.mxu0
        %v1091 = vadd.f32 0.0, %v1090
        %1092 = vdwg.mxu0
        %1093 = vmatprep.subr.bf16.mxu0 %v920
        %1094 = vmatpush1.bf16.msra.mxu0 %v919
        %1095 = vmatprep.subr.bf16.mxu0 %v912
        %1096 = vmatpush1.bf16.msra.mxu0 %v911
        %1097 = vmatprep.subr.bf16.mxu0 %v904
        %1098 = vmatpush1.bf16.msra.mxu0 %v903
        %1099 = vmatprep.subr.bf16.mxu0 %v896
        %1100 = vmatpush1.bf16.msra.mxu0 %v895
        %1101 = vmatprep.subr.bf16.mxu0 %v888
        %1102 = vmatpush1.bf16.msra.mxu0 %v887
        %1103 = vmatprep.subr.bf16.mxu0 %v880
        %1104 = vmatpush1.bf16.msra.mxu0 %v879
        %1105 = vmatprep.subr.bf16.mxu0 %v872
        %1106 = vmatpush1.bf16.msra.mxu0 %v871
        %1107 = vmatprep.subr.bf16.mxu0 %v864
        %1108 = vmatpush1.bf16.msra.mxu0 %v863
        %1109 = vmatprep.subr.bf16.mxu0 0
        %1110 = vmatpush2.bf16.msra.mxu0 0
        %1111 = vmatprep.subr.bf16.mxu0 0
        %1112 = vmatpush2.bf16.msra.mxu0 0
        %1113 = vmatprep.subr.bf16.mxu0 0
        %1114 = vmatpush2.bf16.msra.mxu0 0
        %1115 = vmatprep.subr.bf16.mxu0 0
        %1116 = vmatpush2.bf16.msra.mxu0 0
        %1117 = vmatprep.subr.bf16.mxu0 0
        %1118 = vmatpush2.bf16.msra.mxu0 0
        %1119 = vmatprep.subr.bf16.mxu0 0
        %1120 = vmatpush2.bf16.msra.mxu0 0
        %1121 = vmatprep.subr.bf16.mxu0 0
        %1122 = vmatpush2.bf16.msra.mxu0 0
        %1123 = vmatprep.subr.bf16.mxu0 0
        %1124 = vmatpush2.bf16.msra.mxu0 0
        %1125 = vmatprep.mubr.bf16.mxu0 0
        %1126 = vmatmul.mubr.bf16.gmra.mxu0 %v601
        %v1127 = vpop.f32.mrf.mxu0
        %v1128 = vadd.f32 0.0, %v1127
        %v1129 = vpop.f32.mrf.mxu0
        %v1130 = vadd.f32 0.0, %v1129
        %v1131 = vpop.f32.mrf.mxu0
        %v1132 = vadd.f32 0.0, %v1131
        %v1133 = vpop.f32.mrf.mxu0
        %v1134 = vadd.f32 0.0, %v1133
        %1135 = vmatprep.mubr.bf16.mxu0 0
        %1136 = vmatmul.mubr.bf16.gmra.mxu0 %v602
        %v1137 = vpop.f32.mrf.mxu0
        %v1138 = vadd.f32 0.0, %v1137
        %v1139 = vpop.f32.mrf.mxu0
        %v1140 = vadd.f32 0.0, %v1139
        %v1141 = vpop.f32.mrf.mxu0
        %v1142 = vadd.f32 0.0, %v1141
        %v1143 = vpop.f32.mrf.mxu0
        %v1144 = vadd.f32 0.0, %v1143
        %1145 = vdwg.mxu0
        %1146 = vmatprep.subr.bf16.mxu0 %v922
        %1147 = vmatpush1.bf16.msra.mxu0 %v921
        %1148 = vmatprep.subr.bf16.mxu0 %v914
        %1149 = vmatpush1.bf16.msra.mxu0 %v913
        %1150 = vmatprep.subr.bf16.mxu0 %v906
        %1151 = vmatpush1.bf16.msra.mxu0 %v905
        %1152 = vmatprep.subr.bf16.mxu0 %v898
        %1153 = vmatpush1.bf16.msra.mxu0 %v897
        %1154 = vmatprep.subr.bf16.mxu0 %v890
        %1155 = vmatpush1.bf16.msra.mxu0 %v889
        %1156 = vmatprep.subr.bf16.mxu0 %v882
        %1157 = vmatpush1.bf16.msra.mxu0 %v881
        %1158 = vmatprep.subr.bf16.mxu0 %v874
        %1159 = vmatpush1.bf16.msra.mxu0 %v873
        %1160 = vmatprep.subr.bf16.mxu0 %v866
        %1161 = vmatpush1.bf16.msra.mxu0 %v865
        %1162 = vmatprep.subr.bf16.mxu0 0
        %1163 = vmatpush2.bf16.msra.mxu0 0
        %1164 = vmatprep.subr.bf16.mxu0 0
        %1165 = vmatpush2.bf16.msra.mxu0 0
        %1166 = vmatprep.subr.bf16.mxu0 0
        %1167 = vmatpush2.bf16.msra.mxu0 0
        %1168 = vmatprep.subr.bf16.mxu0 0
        %1169 = vmatpush2.bf16.msra.mxu0 0
        %1170 = vmatprep.subr.bf16.mxu0 0
        %1171 = vmatpush2.bf16.msra.mxu0 0
        %1172 = vmatprep.subr.bf16.mxu0 0
        %1173 = vmatpush2.bf16.msra.mxu0 0
        %1174 = vmatprep.subr.bf16.mxu0 0
        %1175 = vmatpush2.bf16.msra.mxu0 0
        %1176 = vmatprep.subr.bf16.mxu0 0
        %1177 = vmatpush2.bf16.msra.mxu0 0
        %1178 = vmatprep.mubr.bf16.mxu0 0
        %1179 = vmatmul.mubr.bf16.gmra.mxu0 %v601
        %v1180 = vpop.f32.mrf.mxu0
        %v1181 = vadd.f32 0.0, %v1180
        %v1182 = vpop.f32.mrf.mxu0
        %v1183 = vadd.f32 0.0, %v1182
        %v1184 = vpop.f32.mrf.mxu0
        %v1185 = vadd.f32 0.0, %v1184
        %v1186 = vpop.f32.mrf.mxu0
        %v1187 = vadd.f32 0.0, %v1186
        %1188 = vmatprep.mubr.bf16.mxu0 0
        %1189 = vmatmul.mubr.bf16.gmra.mxu0 %v602
        %v1190 = vpop.f32.mrf.mxu0
        %v1191 = vadd.f32 0.0, %v1190
        %v1192 = vpop.f32.mrf.mxu0
        %v1193 = vadd.f32 0.0, %v1192
        %v1194 = vpop.f32.mrf.mxu0
        %v1195 = vadd.f32 0.0, %v1194
        %v1196 = vpop.f32.mrf.mxu0
        %v1197 = vadd.f32 0.0, %v1196
        %1198 = vdwg.mxu0
        %p1199 = scmp.eq.s32.totalorder %s27, 0
        // Predicated region
        $region73: #{stnkd_forward.2} parent=47 // pred_check
          %p1200 = pneg %p1199
        $region74: #{stnkd_forward.2} parent=47 // pred_check_branch
          %1202 = sbr.rel (%p1200) target = $region76
        $region75: #{stnkd_forward.2} parent=47 // pred_region
          %1203 = vst [vmem:[%s386] sm:$0xff] -inf
        $region76: #{stnkd_forward.2} parent=47 // pred_fallthru
          _
        %v1204 = vmax.f32 %v1022, %v1026
        %v1205 = vmax.f32 %v1204, %v1032
        %v1206 = vmax.f32 %v1205, %v1036
        %v1207 = vrot.slane %v1206, 4
        %v1208 = vmax.f32 %v1206, %v1207
        %v1209 = vrot.slane %v1208, 2
        %v1210 = vmax.f32 %v1208, %v1209
        %v1211 = vrot.slane %v1210, 1
        %v1212 = vmax.f32 %v1210, %v1211
        %v1213 = vmax.f32 %v1024, %v1028
        %v1214 = vmax.f32 %v1213, %v1034
        %v1215 = vmax.f32 %v1214, %v1038
        %v1216 = vrot.slane %v1215, 4
        %v1217 = vmax.f32 %v1215, %v1216
        %v1218 = vrot.slane %v1217, 2
        %v1219 = vmax.f32 %v1217, %v1218
        %v1220 = vrot.slane %v1219, 1
        %v1221 = vmax.f32 %v1219, %v1220
        %v1222 = vmax.f32 %v1075, %v1079
        %v1223 = vmax.f32 %v1222, %v1085
        %v1224 = vmax.f32 %v1223, %v1089
        %v1225 = vrot.slane %v1224, 4
        %v1226 = vmax.f32 %v1224, %v1225
        %v1227 = vrot.slane %v1226, 2
        %v1228 = vmax.f32 %v1226, %v1227
        %v1229 = vrot.slane %v1228, 1
        %v1230 = vmax.f32 %v1228, %v1229
        %v1231 = vmax.f32 %v1077, %v1081
        %v1232 = vmax.f32 %v1231, %v1087
        %v1233 = vmax.f32 %v1232, %v1091
        %v1234 = vrot.slane %v1233, 4
        %v1235 = vmax.f32 %v1233, %v1234
        %v1236 = vrot.slane %v1235, 2
        %v1237 = vmax.f32 %v1235, %v1236
        %v1238 = vrot.slane %v1237, 1
        %v1239 = vmax.f32 %v1237, %v1238
        %v1240 = vmax.f32 %v1128, %v1132
        %v1241 = vmax.f32 %v1240, %v1138
        %v1242 = vmax.f32 %v1241, %v1142
        %v1243 = vrot.slane %v1242, 4
        %v1244 = vmax.f32 %v1242, %v1243
        %v1245 = vrot.slane %v1244, 2
        %v1246 = vmax.f32 %v1244, %v1245
        %v1247 = vrot.slane %v1246, 1
        %v1248 = vmax.f32 %v1246, %v1247
        %v1249 = vmax.f32 %v1130, %v1134
        %v1250 = vmax.f32 %v1249, %v1140
        %v1251 = vmax.f32 %v1250, %v1144
        %v1252 = vrot.slane %v1251, 4
        %v1253 = vmax.f32 %v1251, %v1252
        %v1254 = vrot.slane %v1253, 2
        %v1255 = vmax.f32 %v1253, %v1254
        %v1256 = vrot.slane %v1255, 1
        %v1257 = vmax.f32 %v1255, %v1256
        %v1258 = vmax.f32 %v1181, %v1185
        %v1259 = vmax.f32 %v1258, %v1191
        %v1260 = vmax.f32 %v1259, %v1195
        %v1261 = vrot.slane %v1260, 4
        %v1262 = vmax.f32 %v1260, %v1261
        %v1263 = vrot.slane %v1262, 2
        %v1264 = vmax.f32 %v1262, %v1263
        %v1265 = vrot.slane %v1264, 1
        %v1266 = vmax.f32 %v1264, %v1265
        %v1267 = vmax.f32 %v1183, %v1187
        %v1268 = vmax.f32 %v1267, %v1193
        %v1269 = vmax.f32 %v1268, %v1197
        %v1270 = vrot.slane %v1269, 4
        %v1271 = vmax.f32 %v1269, %v1270
        %v1272 = vrot.slane %v1271, 2
        %v1273 = vmax.f32 %v1271, %v1272
        %v1274 = vrot.slane %v1273, 1
        %v1275 = vmax.f32 %v1273, %v1274
        %v1276 = vld [vmem:[%s386] sm:$0xff]
        %v1285 = vcombine.low %v1212, %v1221
        %v1286 = vcombine.low %v1230, %v1239
        %v1287 = vcombine.low %v1248, %v1257
        %v1288 = vcombine.low %v1266, %v1275
        %v1290 = vunpack.c.l.s4 1966171168
        %v1291 = vunpack.c.0.s8 %v1290
        %v1292 = vlaneseq
        %v1293 = vshrl.u32 %v1292, 7
        %v1294 = vsub.s32 %v1291, %v1293
        %v1295 = vrot.slane %v1285, %v1294
        %v1297 = vunpack.c.l.s4 1966171168
        %v1298 = vunpack.c.0.s8 %v1297
        %v1299 = vlaneseq
        %v1300 = vshrl.u32 %v1299, 7
        %v1301 = vsub.s32 %v1298, %v1300
        %v1302 = vrot.slane %v1286, %v1301
        %v1304 = vunpack.c.l.s4 1966171168
        %v1305 = vunpack.c.0.s8 %v1304
        %v1306 = vlaneseq
        %v1307 = vshrl.u32 %v1306, 7
        %v1308 = vsub.s32 %v1305, %v1307
        %v1309 = vrot.slane %v1287, %v1308
        %v1311 = vunpack.c.l.s4 1966171168
        %v1312 = vunpack.c.0.s8 %v1311
        %v1313 = vlaneseq
        %v1314 = vshrl.u32 %v1313, 7
        %v1315 = vsub.s32 %v1312, %v1314
        %v1316 = vrot.slane %v1288, %v1315
        %v1317 = vcombine.low %v1295, %v1302
        %v1318 = vcombine.low %v1309, %v1316
        %v1320 = vunpack.c.l.s4 1966171168
        %v1321 = vunpack.c.0.s8 %v1320
        %v1322 = vlaneseq
        %v1323 = vshrl.u32 %v1322, 7
        %v1324 = vsub.s32 %v1321, %v1323
        %v1325 = vrot.slane %v1317, %v1324
        %v1327 = vunpack.c.l.s4 1966171168
        %v1328 = vunpack.c.0.s8 %v1327
        %v1329 = vlaneseq
        %v1330 = vshrl.u32 %v1329, 7
        %v1331 = vsub.s32 %v1328, %v1330
        %v1332 = vrot.slane %v1318, %v1331
        %v1333 = vcombine.low %v1325, %v1332
        %v1335 = vmax.f32 %v1276, %v1333
        %1336 = vst [vmem:[%s386] sm:$0xff] %v1335
        // Predicated region
        $region77: #{stnkd_forward.2} parent=47 // pred_check
          %p1337 = pneg %p1199
        $region78: #{stnkd_forward.2} parent=47 // pred_check_branch
          %1339 = sbr.rel (%p1337) target = $region80
        $region79: #{stnkd_forward.2} parent=47 // pred_region
          %v1340 = vld [vmem:[%s386] sm:$0xff]
          %v1341 = vld [vmem:[#allocation10] sm:$0xff]
          %v1342 = vadd.f32 %v1340, %v1341
          %v1343 = vmax.f32 %v1342, 0.0
          %1344 = vst [vmem:[%s386] sm:$0xff] %v1343
        $region80: #{stnkd_forward.2} parent=47 // pred_fallthru
          _
        %p1345 = scmp.lt.s32.totalorder %s26, 1
        %s1346 = scalar_select %p1345, %s26, 1
        %s1347 = smul.addr %s1346, 8
        %s1348 = scalar_lea.vmem %s7, %s1347
        // Predicated region
        $region81: #{stnkd_forward.2} parent=47 // pred_check
          %p1349 = pneg %p206
        $region82: #{stnkd_forward.2} parent=47 // pred_check_branch
          %1351 = sbr.rel (%p1349) target = $region84
        $region83: #{stnkd_forward.2} parent=47 // pred_region
          _
        $region84: #{stnkd_forward.2} parent=47 // pred_fallthru
          _
      $region48: #{stnkd_forward.2} parent=5 // pred_fallthru
        _
      %p1352 = scmp.le.s32.totalorder 2, %s17
      // Predicated region
      $region85: #{stnkd_forward.2} parent=5 // pred_check
        %p1353 = pneg %p1352
      $region86: #{stnkd_forward.2} parent=5 // pred_check_branch
        %1355 = sbr.rel (%p1353) target = $region88
      $region87: #{stnkd_forward.2} parent=5 // pred_region
        %s1356 = ssub.s32 %s17, 2
        // Predicated region
        $region89: #{stnkd_forward.2} parent=87 // pred_check
          %p1357 = pneg %p212
        $region90: #{stnkd_forward.2} parent=87 // pred_check_branch
          %1359 = sbr.rel (%p1357) target = $region92
        $region91: #{stnkd_forward.2} parent=87 // pred_region
          %p1360 = scmp.lt.s32.totalorder %s28, 1
          %s1361 = scalar_select %p1360, %s28, 1
          %s1362 = smul.addr %s1361, 8
          %s1363 = scalar_lea.vmem %s7, %s1362
        $region92: #{stnkd_forward.2} parent=87 // pred_fallthru
          _
      $region88: #{stnkd_forward.2} parent=5 // pred_fallthru
        _
    $region6: #{stnkd_forward.2} parent=1 // loop_footer
      %s21 = sadd.s32 1, %s17
    $region7: #{stnkd_forward.2} parent=1 // loop_footer_branch
      %16 = sbr.rel target = $region3
    $region8: #{stnkd_forward.2} parent=1 // loop_exit
      _
    %1364 = vsyncpa [#allocation3], 1
    %s1365 = scalar_lea.sflag [#allocation3], 1
    %1366 = vsyncpa %s1365, 1
    %1367 = vsyncpa [#allocation5], 1
    %1368 = vsyncpa [#allocation8], 1
    %1369 = vsyncpa [#allocation11], 1

// kernel: stnkd_forward.3
$region0: #{stnkd_forward.3}
  #allocation0 [shape = 'u32[]', space=smem, size = 0x4, offset = 0x4, fixed_abs, tag = 'smem constant byte address 0x4 - core index']
  #allocation1 [shape = 'u32[144,128]{1,0:T(1,128)}', space=vmem, size = 0x12000, scoped, tag = 'internal scratch']
  %s0 = inlined_call_operand.vmem [shape: f32[2,1024], index: 0, kind: input, shape index: {}]
  %s1 = inlined_call_operand.hbm [shape: bf16[1024,512], index: 1, kind: input, shape index: {}]
  %s2 = inlined_call_operand.hbm [shape: f32[1,512], index: 2, kind: input, shape index: {}]
  %s3 = inlined_call_operand.hbm [shape: bf16[512,256], index: 3, kind: input, shape index: {}]
  %s4 = inlined_call_operand.hbm [shape: f32[1,256], index: 4, kind: input, shape index: {}]
  %s5 = inlined_call_operand.hbm [shape: bf16[256,4096], index: 5, kind: input, shape index: {}]
  %s6 = inlined_call_operand.vmem [shape: f32[1,4096], index: 6, kind: input, shape index: {}]
  %s7 = inlined_call_operand.vmem [shape: f32[2,4096], index: 7, kind: output, shape index: {}]
  %s8 = sld [smem:[#allocation0]]
  $region58: #{stnkd_forward.3} parent=0
    _
  %s10 = ssub.s32 1, %s8
  %s11 = scalar_select 0, %s10, %s8
  $region1: #{stnkd_forward.3} parent=0
    #allocation2 [shape = 'u8[1048576]{0}', space=vmem, size = 0x100000, scoped, tag = 'input window, operand 1, single buffered']
    #allocation3 [shape = 's32[1]{0}', space=sflag, size = 0x4, scoped, tag = 'scoped memory for stnkd_forward.3']
    #allocation4 [shape = 'u8[2048]{0}', space=vmem, size = 0x800, scoped, tag = 'input window, operand 2, single buffered']
    #allocation5 [shape = 's32[1]{0}', space=sflag, size = 0x4, scoped, tag = 'scoped memory for stnkd_forward.3']
    #allocation6 [shape = 'u8[262144]{0}', space=vmem, size = 0x40000, scoped, tag = 'input window, operand 3, single buffered']
    #allocation7 [shape = 'u8[1024]{0}', space=vmem, size = 0x400, scoped, tag = 'input window, operand 4, single buffered']
    #allocation8 [shape = 's32[1]{0}', space=sflag, size = 0x4, scoped, tag = 'scoped memory for stnkd_forward.3']
    #allocation9 [shape = 'u8[2097152]{0}', space=vmem, size = 0x200000, scoped, tag = 'input window, operand 5, single buffered']
    %12 = vsyncpa [#allocation3], 0
    %13 = vsyncpa [#allocation5], 0
    %14 = vsyncpa [#allocation8], 0
    // Predicated region
    $region2: #{stnkd_forward.3} parent=1 // pred_check
      _
    $region3: #{stnkd_forward.3} parent=1 // pred_check_branch
      %16 = sbr.rel (0) target = $region5
    $region4: #{stnkd_forward.3} parent=1 // pred_region
      _
    $region5: #{stnkd_forward.3} parent=1 // pred_fallthru
      _
    // Predicated region
    $region6: #{stnkd_forward.3} parent=1 // pred_check
      _
    $region7: #{stnkd_forward.3} parent=1 // pred_check_branch
      %18 = sbr.rel (0) target = $region9
    $region8: #{stnkd_forward.3} parent=1 // pred_region
      %s20 = ssub.s32 32768, 32768
      %21 = vsyncadd [#allocation3], %s20
      %s22 = sshll.u32 [#allocation2], 4
      %s23 = int_to_ptr.vmem [resolvable:$true] %s22
      %28 = dma.hbm_to_vmem [thread:$0]  %s1, 32768, %s23, [#allocation3], 256, 256, 16
    $region9: #{stnkd_forward.3} parent=1 // pred_fallthru
      _
    // Predicated region
    $region10: #{stnkd_forward.3} parent=1 // pred_check
      _
    $region11: #{stnkd_forward.3} parent=1 // pred_check_branch
      %30 = sbr.rel (0) target = $region13
    $region12: #{stnkd_forward.3} parent=1 // pred_region
      %s32 = ssub.s32 64, 64
      %33 = vsyncadd [#allocation5], %s32
      %s35 = sshll.u32 [#allocation4], 4
      %s36 = int_to_ptr.vmem [resolvable:$true] %s35
      %38 = dma.hbm_to_vmem [thread:$0]  %s2, 64, %s36, [#allocation5]
    $region13: #{stnkd_forward.3} parent=1 // pred_fallthru
      _
    // Predicated region
    $region14: #{stnkd_forward.3} parent=1 // pred_check
      _
    $region15: #{stnkd_forward.3} parent=1 // pred_check_branch
      %40 = sbr.rel (0) target = $region17
    $region16: #{stnkd_forward.3} parent=1 // pred_region
      %s42 = ssub.s32 8192, 8192
      %43 = vsyncadd [#allocation5], %s42
      %s44 = sshll.u32 [#allocation6], 4
      %s45 = int_to_ptr.vmem [resolvable:$true] %s44
      %50 = dma.hbm_to_vmem [thread:$0]  %s3, 8192, %s45, [#allocation5], 128, 128, 8
    $region17: #{stnkd_forward.3} parent=1 // pred_fallthru
      _
    // Predicated region
    $region18: #{stnkd_forward.3} parent=1 // pred_check
      _
    $region19: #{stnkd_forward.3} parent=1 // pred_check_branch
      %52 = sbr.rel (0) target = $region21
    $region20: #{stnkd_forward.3} parent=1 // pred_region
      %s54 = ssub.s32 32, 32
      %55 = vsyncadd [#allocation8], %s54
      %s57 = sshll.u32 [#allocation7], 4
      %s58 = int_to_ptr.vmem [resolvable:$true] %s57
      %60 = dma.hbm_to_vmem [thread:$0]  %s4, 32, %s58, [#allocation8]
    $region21: #{stnkd_forward.3} parent=1 // pred_fallthru
      _
    // Predicated region
    $region22: #{stnkd_forward.3} parent=1 // pred_check
      _
    $region23: #{stnkd_forward.3} parent=1 // pred_check_branch
      %62 = sbr.rel (0) target = $region25
    $region24: #{stnkd_forward.3} parent=1 // pred_region
      %s64 = ssub.s32 65536, 65536
      %65 = vsyncadd [#allocation8], %s64
      %s66 = sshll.u32 [#allocation9], 4
      %s67 = int_to_ptr.vmem [resolvable:$true] %s66
      %72 = dma.hbm_to_vmem [thread:$0]  %s5, 65536, %s67, [#allocation8], 2048, 2048, 128
    $region25: #{stnkd_forward.3} parent=1 // pred_fallthru
      _
    // Predicated region
    $region26: #{stnkd_forward.3} parent=1 // pred_check
      _
    $region27: #{stnkd_forward.3} parent=1 // pred_check_branch
      %74 = sbr.rel (0) target = $region29
    $region28: #{stnkd_forward.3} parent=1 // pred_region
      _
    $region29: #{stnkd_forward.3} parent=1 // pred_fallthru
      _
    // Predicated region
    $region30: #{stnkd_forward.3} parent=1 // pred_check
      _
    $region31: #{stnkd_forward.3} parent=1 // pred_check_branch
      %76 = sbr.rel (0) target = $region33
    $region32: #{stnkd_forward.3} parent=1 // pred_region
      %77 = dma.done [#allocation3], 32768
    $region33: #{stnkd_forward.3} parent=1 // pred_fallthru
      _
    // Predicated region
    $region34: #{stnkd_forward.3} parent=1 // pred_check
      _
    $region35: #{stnkd_forward.3} parent=1 // pred_check_branch
      %79 = sbr.rel (0) target = $region37
    $region36: #{stnkd_forward.3} parent=1 // pred_region
      %80 = dma.done [#allocation5], 64
    $region37: #{stnkd_forward.3} parent=1 // pred_fallthru
      _
    // Predicated region
    $region38: #{stnkd_forward.3} parent=1 // pred_check
      _
    $region39: #{stnkd_forward.3} parent=1 // pred_check_branch
      %82 = sbr.rel (0) target = $region41
    $region40: #{stnkd_forward.3} parent=1 // pred_region
      %83 = dma.done [#allocation5], 8192
    $region41: #{stnkd_forward.3} parent=1 // pred_fallthru
      _
    // Predicated region
    $region42: #{stnkd_forward.3} parent=1 // pred_check
      _
    $region43: #{stnkd_forward.3} parent=1 // pred_check_branch
      %85 = sbr.rel (0) target = $region45
    $region44: #{stnkd_forward.3} parent=1 // pred_region
      %86 = dma.done [#allocation8], 32
    $region45: #{stnkd_forward.3} parent=1 // pred_fallthru
      _
    // Predicated region
    $region46: #{stnkd_forward.3} parent=1 // pred_check
      _
    $region47: #{stnkd_forward.3} parent=1 // pred_check_branch
      %88 = sbr.rel (0) target = $region49
    $region48: #{stnkd_forward.3} parent=1 // pred_region
      %89 = dma.done [#allocation8], 65536
    $region49: #{stnkd_forward.3} parent=1 // pred_fallthru
      _
    %v90 = vld [vmem:[%s0] sm:$0xff]
    %v91 = vld [vmem:[%s0 + $0x8] sm:$0xff]
    %v94 = vcombine.high %v90, %v90
    %v96 = vunpack.c.l.s4 1983009808
    %v97 = vunpack.c.0.s8 %v96
    %v98 = vlaneseq
    %v99 = vshrl.u32 %v98, 7
    %v100 = vsub.s32 %v97, %v99
    %v101 = vrot.slane %v90, %v100
    %v103 = vunpack.c.l.s4 1983009808
    %v104 = vunpack.c.0.s8 %v103
    %v105 = vlaneseq
    %v106 = vshrl.u32 %v105, 7
    %v107 = vsub.s32 %v104, %v106
    %v108 = vrot.slane %v94, %v107
    %v109 = vcombine.high %v101, %v101
    %v110 = vcombine.high %v108, %v108
    %v111 = vcombine.high %v91, %v91
    %v113 = vunpack.c.l.s4 1983009808
    %v114 = vunpack.c.0.s8 %v113
    %v115 = vlaneseq
    %v116 = vshrl.u32 %v115, 7
    %v117 = vsub.s32 %v114, %v116
    %v118 = vrot.slane %v91, %v117
    %v120 = vunpack.c.l.s4 1983009808
    %v121 = vunpack.c.0.s8 %v120
    %v122 = vlaneseq
    %v123 = vshrl.u32 %v122, 7
    %v124 = vsub.s32 %v121, %v123
    %v125 = vrot.slane %v111, %v124
    %v126 = vcombine.high %v118, %v118
    %v127 = vcombine.high %v125, %v125
    %v136 = vpack.c.bf16 %v101, %v101
    %v137 = vpack.c.bf16 %v109, %v109
    %v138 = vpack.c.bf16 %v108, %v108
    %v139 = vpack.c.bf16 %v110, %v110
    %v140 = vpack.c.bf16 %v118, %v118
    %v141 = vpack.c.bf16 %v126, %v126
    %v142 = vpack.c.bf16 %v125, %v125
    %v143 = vpack.c.bf16 %v127, %v127
    %v144 = vld [vmem:[#allocation2] sm:$0xff]
    %v145 = vld [vmem:[#allocation2 + $0x8] sm:$0xff]
    %v146 = vld [vmem:[#allocation2 + $0x10] sm:$0xff]
    %v147 = vld [vmem:[#allocation2 + $0x18] sm:$0xff]
    %v148 = vld [vmem:[#allocation2 + $0x20] sm:$0xff]
    %v149 = vld [vmem:[#allocation2 + $0x28] sm:$0xff]
    %v150 = vld [vmem:[#allocation2 + $0x30] sm:$0xff]
    %v151 = vld [vmem:[#allocation2 + $0x38] sm:$0xff]
    %v152 = vld [vmem:[#allocation2 + $0x40] sm:$0xff]
    %v153 = vld [vmem:[#allocation2 + $0x48] sm:$0xff]
    %v154 = vld [vmem:[#allocation2 + $0x50] sm:$0xff]
    %v155 = vld [vmem:[#allocation2 + $0x58] sm:$0xff]
    %v156 = vld [vmem:[#allocation2 + $0x60] sm:$0xff]
    %v157 = vld [vmem:[#allocation2 + $0x68] sm:$0xff]
    %v158 = vld [vmem:[#allocation2 + $0x70] sm:$0xff]
    %v159 = vld [vmem:[#allocation2 + $0x78] sm:$0xff]
    %v160 = vld [vmem:[#allocation2 + $0x80] sm:$0xff]
    %v161 = vld [vmem:[#allocation2 + $0x88] sm:$0xff]
    %v162 = vld [vmem:[#allocation2 + $0x90] sm:$0xff]
    %v163 = vld [vmem:[#allocation2 + $0x98] sm:$0xff]
    %v164 = vld [vmem:[#allocation2 + $0xa0] sm:$0xff]
    %v165 = vld [vmem:[#allocation2 + $0xa8] sm:$0xff]
    %v166 = vld [vmem:[#allocation2 + $0xb0] sm:$0xff]
    %v167 = vld [vmem:[#allocation2 + $0xb8] sm:$0xff]
    %v168 = vld [vmem:[#allocation2 + $0xc0] sm:$0xff]
    %v169 = vld [vmem:[#allocation2 + $0xc8] sm:$0xff]
    %v170 = vld [vmem:[#allocation2 + $0xd0] sm:$0xff]
    %v171 = vld [vmem:[#allocation2 + $0xd8] sm:$0xff]
    %v172 = vld [vmem:[#allocation2 + $0xe0] sm:$0xff]
    %v173 = vld [vmem:[#allocation2 + $0xe8] sm:$0xff]
    %v174 = vld [vmem:[#allocation2 + $0xf0] sm:$0xff]
    %v175 = vld [vmem:[#allocation2 + $0xf8] sm:$0xff]
    %v176 = vld [vmem:[#allocation2 + $0x100] sm:$0xff]
    %v177 = vld [vmem:[#allocation2 + $0x108] sm:$0xff]
    %v178 = vld [vmem:[#allocation2 + $0x110] sm:$0xff]
    %v179 = vld [vmem:[#allocation2 + $0x118] sm:$0xff]
    %v180 = vld [vmem:[#allocation2 + $0x120] sm:$0xff]
    %v181 = vld [vmem:[#allocation2 + $0x128] sm:$0xff]
    %v182 = vld [vmem:[#allocation2 + $0x130] sm:$0xff]
    %v183 = vld [vmem:[#allocation2 + $0x138] sm:$0xff]
    %v184 = vld [vmem:[#allocation2 + $0x140] sm:$0xff]
    %v185 = vld [vmem:[#allocation2 + $0x148] sm:$0xff]
    %v186 = vld [vmem:[#allocation2 + $0x150] sm:$0xff]
    %v187 = vld [vmem:[#allocation2 + $0x158] sm:$0xff]
    %v188 = vld [vmem:[#allocation2 + $0x160] sm:$0xff]
    %v189 = vld [vmem:[#allocation2 + $0x168] sm:$0xff]
    %v190 = vld [vmem:[#allocation2 + $0x170] sm:$0xff]
    %v191 = vld [vmem:[#allocation2 + $0x178] sm:$0xff]
    %v192 = vld [vmem:[#allocation2 + $0x180] sm:$0xff]
    %v193 = vld [vmem:[#allocation2 + $0x188] sm:$0xff]
    %v194 = vld [vmem:[#allocation2 + $0x190] sm:$0xff]
    %v195 = vld [vmem:[#allocation2 + $0x198] sm:$0xff]
    %v196 = vld [vmem:[#allocation2 + $0x1a0] sm:$0xff]
    %v197 = vld [vmem:[#allocation2 + $0x1a8] sm:$0xff]
    %v198 = vld [vmem:[#allocation2 + $0x1b0] sm:$0xff]
    %v199 = vld [vmem:[#allocation2 + $0x1b8] sm:$0xff]
    %v200 = vld [vmem:[#allocation2 + $0x1c0] sm:$0xff]
    %v201 = vld [vmem:[#allocation2 + $0x1c8] sm:$0xff]
    %v202 = vld [vmem:[#allocation2 + $0x1d0] sm:$0xff]
    %v203 = vld [vmem:[#allocation2 + $0x1d8] sm:$0xff]
    %v204 = vld [vmem:[#allocation2 + $0x1e0] sm:$0xff]
    %v205 = vld [vmem:[#allocation2 + $0x1e8] sm:$0xff]
    %v206 = vld [vmem:[#allocation2 + $0x1f0] sm:$0xff]
    %v207 = vld [vmem:[#allocation2 + $0x1f8] sm:$0xff]
    %v208 = vld [vmem:[#allocation2 + $0x200] sm:$0xff]
    %v209 = vld [vmem:[#allocation2 + $0x208] sm:$0xff]
    %v210 = vld [vmem:[#allocation2 + $0x210] sm:$0xff]
    %v211 = vld [vmem:[#allocation2 + $0x218] sm:$0xff]
    %v212 = vld [vmem:[#allocation2 + $0x220] sm:$0xff]
    %v213 = vld [vmem:[#allocation2 + $0x228] sm:$0xff]
    %v214 = vld [vmem:[#allocation2 + $0x230] sm:$0xff]
    %v215 = vld [vmem:[#allocation2 + $0x238] sm:$0xff]
    %v216 = vld [vmem:[#allocation2 + $0x240] sm:$0xff]
    %v217 = vld [vmem:[#allocation2 + $0x248] sm:$0xff]
    %v218 = vld [vmem:[#allocation2 + $0x250] sm:$0xff]
    %v219 = vld [vmem:[#allocation2 + $0x258] sm:$0xff]
    %v220 = vld [vmem:[#allocation2 + $0x260] sm:$0xff]
    %v221 = vld [vmem:[#allocation2 + $0x268] sm:$0xff]
    %v222 = vld [vmem:[#allocation2 + $0x270] sm:$0xff]
    %v223 = vld [vmem:[#allocation2 + $0x278] sm:$0xff]
    %v224 = vld [vmem:[#allocation2 + $0x280] sm:$0xff]
    %v225 = vld [vmem:[#allocation2 + $0x288] sm:$0xff]
    %v226 = vld [vmem:[#allocation2 + $0x290] sm:$0xff]
    %v227 = vld [vmem:[#allocation2 + $0x298] sm:$0xff]
    %v228 = vld [vmem:[#allocation2 + $0x2a0] sm:$0xff]
    %v229 = vld [vmem:[#allocation2 + $0x2a8] sm:$0xff]
    %v230 = vld [vmem:[#allocation2 + $0x2b0] sm:$0xff]
    %v231 = vld [vmem:[#allocation2 + $0x2b8] sm:$0xff]
    %v232 = vld [vmem:[#allocation2 + $0x2c0] sm:$0xff]
    %v233 = vld [vmem:[#allocation2 + $0x2c8] sm:$0xff]
    %v234 = vld [vmem:[#allocation2 + $0x2d0] sm:$0xff]
    %v235 = vld [vmem:[#allocation2 + $0x2d8] sm:$0xff]
    %v236 = vld [vmem:[#allocation2 + $0x2e0] sm:$0xff]
    %v237 = vld [vmem:[#allocation2 + $0x2e8] sm:$0xff]
    %v238 = vld [vmem:[#allocation2 + $0x2f0] sm:$0xff]
    %v239 = vld [vmem:[#allocation2 + $0x2f8] sm:$0xff]
    %v240 = vld [vmem:[#allocation2 + $0x300] sm:$0xff]
    %v241 = vld [vmem:[#allocation2 + $0x308] sm:$0xff]
    %v242 = vld [vmem:[#allocation2 + $0x310] sm:$0xff]
    %v243 = vld [vmem:[#allocation2 + $0x318] sm:$0xff]
    %v244 = vld [vmem:[#allocation2 + $0x320] sm:$0xff]
    %v245 = vld [vmem:[#allocation2 + $0x328] sm:$0xff]
    %v246 = vld [vmem:[#allocation2 + $0x330] sm:$0xff]
    %v247 = vld [vmem:[#allocation2 + $0x338] sm:$0xff]
    %v248 = vld [vmem:[#allocation2 + $0x340] sm:$0xff]
    %v249 = vld [vmem:[#allocation2 + $0x348] sm:$0xff]
    %v250 = vld [vmem:[#allocation2 + $0x350] sm:$0xff]
    %v251 = vld [vmem:[#allocation2 + $0x358] sm:$0xff]
    %v252 = vld [vmem:[#allocation2 + $0x360] sm:$0xff]
    %v253 = vld [vmem:[#allocation2 + $0x368] sm:$0xff]
    %v254 = vld [vmem:[#allocation2 + $0x370] sm:$0xff]
    %v255 = vld [vmem:[#allocation2 + $0x378] sm:$0xff]
    %v256 = vld [vmem:[#allocation2 + $0x380] sm:$0xff]
    %v257 = vld [vmem:[#allocation2 + $0x388] sm:$0xff]
    %v258 = vld [vmem:[#allocation2 + $0x390] sm:$0xff]
    %v259 = vld [vmem:[#allocation2 + $0x398] sm:$0xff]
    %v260 = vld [vmem:[#allocation2 + $0x3a0] sm:$0xff]
    %v261 = vld [vmem:[#allocation2 + $0x3a8] sm:$0xff]
    %v262 = vld [vmem:[#allocation2 + $0x3b0] sm:$0xff]
    %v263 = vld [vmem:[#allocation2 + $0x3b8] sm:$0xff]
    %v264 = vld [vmem:[#allocation2 + $0x3c0] sm:$0xff]
    %v265 = vld [vmem:[#allocation2 + $0x3c8] sm:$0xff]
    %v266 = vld [vmem:[#allocation2 + $0x3d0] sm:$0xff]
    %v267 = vld [vmem:[#allocation2 + $0x3d8] sm:$0xff]
    %v268 = vld [vmem:[#allocation2 + $0x3e0] sm:$0xff]
    %v269 = vld [vmem:[#allocation2 + $0x3e8] sm:$0xff]
    %v270 = vld [vmem:[#allocation2 + $0x3f0] sm:$0xff]
    %v271 = vld [vmem:[#allocation2 + $0x3f8] sm:$0xff]
    %v272 = vld [vmem:[#allocation2 + $0x400] sm:$0xff]
    %v273 = vld [vmem:[#allocation2 + $0x408] sm:$0xff]
    %v274 = vld [vmem:[#allocation2 + $0x410] sm:$0xff]
    %v275 = vld [vmem:[#allocation2 + $0x418] sm:$0xff]
    %v276 = vld [vmem:[#allocation2 + $0x420] sm:$0xff]
    %v277 = vld [vmem:[#allocation2 + $0x428] sm:$0xff]
    %v278 = vld [vmem:[#allocation2 + $0x430] sm:$0xff]
    %v279 = vld [vmem:[#allocation2 + $0x438] sm:$0xff]
    %v280 = vld [vmem:[#allocation2 + $0x440] sm:$0xff]
    %v281 = vld [vmem:[#allocation2 + $0x448] sm:$0xff]
    %v282 = vld [vmem:[#allocation2 + $0x450] sm:$0xff]
    %v283 = vld [vmem:[#allocation2 + $0x458] sm:$0xff]
    %v284 = vld [vmem:[#allocation2 + $0x460] sm:$0xff]
    %v285 = vld [vmem:[#allocation2 + $0x468] sm:$0xff]
    %v286 = vld [vmem:[#allocation2 + $0x470] sm:$0xff]
    %v287 = vld [vmem:[#allocation2 + $0x478] sm:$0xff]
    %v288 = vld [vmem:[#allocation2 + $0x480] sm:$0xff]
    %v289 = vld [vmem:[#allocation2 + $0x488] sm:$0xff]
    %v290 = vld [vmem:[#allocation2 + $0x490] sm:$0xff]
    %v291 = vld [vmem:[#allocation2 + $0x498] sm:$0xff]
    %v292 = vld [vmem:[#allocation2 + $0x4a0] sm:$0xff]
    %v293 = vld [vmem:[#allocation2 + $0x4a8] sm:$0xff]
    %v294 = vld [vmem:[#allocation2 + $0x4b0] sm:$0xff]
    %v295 = vld [vmem:[#allocation2 + $0x4b8] sm:$0xff]
    %v296 = vld [vmem:[#allocation2 + $0x4c0] sm:$0xff]
    %v297 = vld [vmem:[#allocation2 + $0x4c8] sm:$0xff]
    %v298 = vld [vmem:[#allocation2 + $0x4d0] sm:$0xff]
    %v299 = vld [vmem:[#allocation2 + $0x4d8] sm:$0xff]
    %v300 = vld [vmem:[#allocation2 + $0x4e0] sm:$0xff]
    %v301 = vld [vmem:[#allocation2 + $0x4e8] sm:$0xff]
    %v302 = vld [vmem:[#allocation2 + $0x4f0] sm:$0xff]
    %v303 = vld [vmem:[#allocation2 + $0x4f8] sm:$0xff]
    %v304 = vld [vmem:[#allocation2 + $0x500] sm:$0xff]
    %v305 = vld [vmem:[#allocation2 + $0x508] sm:$0xff]
    %v306 = vld [vmem:[#allocation2 + $0x510] sm:$0xff]
    %v307 = vld [vmem:[#allocation2 + $0x518] sm:$0xff]
    %v308 = vld [vmem:[#allocation2 + $0x520] sm:$0xff]
    %v309 = vld [vmem:[#allocation2 + $0x528] sm:$0xff]
    %v310 = vld [vmem:[#allocation2 + $0x530] sm:$0xff]
    %v311 = vld [vmem:[#allocation2 + $0x538] sm:$0xff]
    %v312 = vld [vmem:[#allocation2 + $0x540] sm:$0xff]
    %v313 = vld [vmem:[#allocation2 + $0x548] sm:$0xff]
    %v314 = vld [vmem:[#allocation2 + $0x550] sm:$0xff]
    %v315 = vld [vmem:[#allocation2 + $0x558] sm:$0xff]
    %v316 = vld [vmem:[#allocation2 + $0x560] sm:$0xff]
    %v317 = vld [vmem:[#allocation2 + $0x568] sm:$0xff]
    %v318 = vld [vmem:[#allocation2 + $0x570] sm:$0xff]
    %v319 = vld [vmem:[#allocation2 + $0x578] sm:$0xff]
    %v320 = vld [vmem:[#allocation2 + $0x580] sm:$0xff]
    %v321 = vld [vmem:[#allocation2 + $0x588] sm:$0xff]
    %v322 = vld [vmem:[#allocation2 + $0x590] sm:$0xff]
    %v323 = vld [vmem:[#allocation2 + $0x598] sm:$0xff]
    %v324 = vld [vmem:[#allocation2 + $0x5a0] sm:$0xff]
    %v325 = vld [vmem:[#allocation2 + $0x5a8] sm:$0xff]
    %v326 = vld [vmem:[#allocation2 + $0x5b0] sm:$0xff]
    %v327 = vld [vmem:[#allocation2 + $0x5b8] sm:$0xff]
    %v328 = vld [vmem:[#allocation2 + $0x5c0] sm:$0xff]
    %v329 = vld [vmem:[#allocation2 + $0x5c8] sm:$0xff]
    %v330 = vld [vmem:[#allocation2 + $0x5d0] sm:$0xff]
    %v331 = vld [vmem:[#allocation2 + $0x5d8] sm:$0xff]
    %v332 = vld [vmem:[#allocation2 + $0x5e0] sm:$0xff]
    %v333 = vld [vmem:[#allocation2 + $0x5e8] sm:$0xff]
    %v334 = vld [vmem:[#allocation2 + $0x5f0] sm:$0xff]
    %v335 = vld [vmem:[#allocation2 + $0x5f8] sm:$0xff]
    %v336 = vld [vmem:[#allocation2 + $0x600] sm:$0xff]
    %v337 = vld [vmem:[#allocation2 + $0x608] sm:$0xff]
    %v338 = vld [vmem:[#allocation2 + $0x610] sm:$0xff]
    %v339 = vld [vmem:[#allocation2 + $0x618] sm:$0xff]
    %v340 = vld [vmem:[#allocation2 + $0x620] sm:$0xff]
    %v341 = vld [vmem:[#allocation2 + $0x628] sm:$0xff]
    %v342 = vld [vmem:[#allocation2 + $0x630] sm:$0xff]
    %v343 = vld [vmem:[#allocation2 + $0x638] sm:$0xff]
    %v344 = vld [vmem:[#allocation2 + $0x640] sm:$0xff]
    %v345 = vld [vmem:[#allocation2 + $0x648] sm:$0xff]
    %v346 = vld [vmem:[#allocation2 + $0x650] sm:$0xff]
    %v347 = vld [vmem:[#allocation2 + $0x658] sm:$0xff]
    %v348 = vld [vmem:[#allocation2 + $0x660] sm:$0xff]
    %v349 = vld [vmem:[#allocation2 + $0x668] sm:$0xff]
    %v350 = vld [vmem:[#allocation2 + $0x670] sm:$0xff]
    %v351 = vld [vmem:[#allocation2 + $0x678] sm:$0xff]
    %v352 = vld [vmem:[#allocation2 + $0x680] sm:$0xff]
    %v353 = vld [vmem:[#allocation2 + $0x688] sm:$0xff]
    %v354 = vld [vmem:[#allocation2 + $0x690] sm:$0xff]
    %v355 = vld [vmem:[#allocation2 + $0x698] sm:$0xff]
    %v356 = vld [vmem:[#allocation2 + $0x6a0] sm:$0xff]
    %v357 = vld [vmem:[#allocation2 + $0x6a8] sm:$0xff]
    %v358 = vld [vmem:[#allocation2 + $0x6b0] sm:$0xff]
    %v359 = vld [vmem:[#allocation2 + $0x6b8] sm:$0xff]
    %v360 = vld [vmem:[#allocation2 + $0x6c0] sm:$0xff]
    %v361 = vld [vmem:[#allocation2 + $0x6c8] sm:$0xff]
    %v362 = vld [vmem:[#allocation2 + $0x6d0] sm:$0xff]
    %v363 = vld [vmem:[#allocation2 + $0x6d8] sm:$0xff]
    %v364 = vld [vmem:[#allocation2 + $0x6e0] sm:$0xff]
    %v365 = vld [vmem:[#allocation2 + $0x6e8] sm:$0xff]
    %v366 = vld [vmem:[#allocation2 + $0x6f0] sm:$0xff]
    %v367 = vld [vmem:[#allocation2 + $0x6f8] sm:$0xff]
    %v368 = vld [vmem:[#allocation2 + $0x700] sm:$0xff]
    %v369 = vld [vmem:[#allocation2 + $0x708] sm:$0xff]
    %v370 = vld [vmem:[#allocation2 + $0x710] sm:$0xff]
    %v371 = vld [vmem:[#allocation2 + $0x718] sm:$0xff]
    %v372 = vld [vmem:[#allocation2 + $0x720] sm:$0xff]
    %v373 = vld [vmem:[#allocation2 + $0x728] sm:$0xff]
    %v374 = vld [vmem:[#allocation2 + $0x730] sm:$0xff]
    %v375 = vld [vmem:[#allocation2 + $0x738] sm:$0xff]
    %v376 = vld [vmem:[#allocation2 + $0x740] sm:$0xff]
    %v377 = vld [vmem:[#allocation2 + $0x748] sm:$0xff]
    %v378 = vld [vmem:[#allocation2 + $0x750] sm:$0xff]
    %v379 = vld [vmem:[#allocation2 + $0x758] sm:$0xff]
    %v380 = vld [vmem:[#allocation2 + $0x760] sm:$0xff]
    %v381 = vld [vmem:[#allocation2 + $0x768] sm:$0xff]
    %v382 = vld [vmem:[#allocation2 + $0x770] sm:$0xff]
    %v383 = vld [vmem:[#allocation2 + $0x778] sm:$0xff]
    %v384 = vld [vmem:[#allocation2 + $0x780] sm:$0xff]
    %v385 = vld [vmem:[#allocation2 + $0x788] sm:$0xff]
    %v386 = vld [vmem:[#allocation2 + $0x790] sm:$0xff]
    %v387 = vld [vmem:[#allocation2 + $0x798] sm:$0xff]
    %v388 = vld [vmem:[#allocation2 + $0x7a0] sm:$0xff]
    %v389 = vld [vmem:[#allocation2 + $0x7a8] sm:$0xff]
    %v390 = vld [vmem:[#allocation2 + $0x7b0] sm:$0xff]
    %v391 = vld [vmem:[#allocation2 + $0x7b8] sm:$0xff]
    %v392 = vld [vmem:[#allocation2 + $0x7c0] sm:$0xff]
    %v393 = vld [vmem:[#allocation2 + $0x7c8] sm:$0xff]
    %v394 = vld [vmem:[#allocation2 + $0x7d0] sm:$0xff]
    %v395 = vld [vmem:[#allocation2 + $0x7d8] sm:$0xff]
    %v396 = vld [vmem:[#allocation2 + $0x7e0] sm:$0xff]
    %v397 = vld [vmem:[#allocation2 + $0x7e8] sm:$0xff]
    %v398 = vld [vmem:[#allocation2 + $0x7f0] sm:$0xff]
    %v399 = vld [vmem:[#allocation2 + $0x7f8] sm:$0xff]
    %v400 = vld [vmem:[#allocation4] sm:$0xf]
    %v402 = vlaneseq
    %v403 = vshrl.u32 %v402, 7
    %v404 = vsub.s32 0, %v403
    %v405 = vrot.slane %v400, %v404
    %v406 = vlaneseq
    %v407 = vshrl.u32 %v406, 7
    %v408 = vsub.s32 1, %v407
    %v409 = vrot.slane %v400, %v408
    %v410 = vlaneseq
    %v411 = vshrl.u32 %v410, 7
    %v412 = vsub.s32 2, %v411
    %v413 = vrot.slane %v400, %v412
    %v414 = vlaneseq
    %v415 = vshrl.u32 %v414, 7
    %v416 = vsub.s32 3, %v415
    %v417 = vrot.slane %v400, %v416
    %v678 = vunpack.c.l.b16 %v144
    %v679 = vunpack.c.h.b16 %v144
    %v680 = vunpack.c.l.b16 %v145
    %v681 = vunpack.c.h.b16 %v145
    %v682 = vunpack.c.l.b16 %v146
    %v683 = vunpack.c.h.b16 %v146
    %v684 = vunpack.c.l.b16 %v147
    %v685 = vunpack.c.h.b16 %v147
    %v686 = vunpack.c.l.b16 %v148
    %v687 = vunpack.c.h.b16 %v148
    %v688 = vunpack.c.l.b16 %v149
    %v689 = vunpack.c.h.b16 %v149
    %v690 = vunpack.c.l.b16 %v150
    %v691 = vunpack.c.h.b16 %v150
    %v692 = vunpack.c.l.b16 %v151
    %v693 = vunpack.c.h.b16 %v151
    %v694 = vunpack.c.l.b16 %v152
    %v695 = vunpack.c.h.b16 %v152
    %v696 = vunpack.c.l.b16 %v153
    %v697 = vunpack.c.h.b16 %v153
    %v698 = vunpack.c.l.b16 %v154
    %v699 = vunpack.c.h.b16 %v154
    %v700 = vunpack.c.l.b16 %v155
    %v701 = vunpack.c.h.b16 %v155
    %v702 = vunpack.c.l.b16 %v156
    %v703 = vunpack.c.h.b16 %v156
    %v704 = vunpack.c.l.b16 %v157
    %v705 = vunpack.c.h.b16 %v157
    %v706 = vunpack.c.l.b16 %v158
    %v707 = vunpack.c.h.b16 %v158
    %v708 = vunpack.c.l.b16 %v159
    %v709 = vunpack.c.h.b16 %v159
    %v710 = vunpack.c.l.b16 %v160
    %v711 = vunpack.c.h.b16 %v160
    %v712 = vunpack.c.l.b16 %v161
    %v713 = vunpack.c.h.b16 %v161
    %v714 = vunpack.c.l.b16 %v162
    %v715 = vunpack.c.h.b16 %v162
    %v716 = vunpack.c.l.b16 %v163
    %v717 = vunpack.c.h.b16 %v163
    %v718 = vunpack.c.l.b16 %v164
    %v719 = vunpack.c.h.b16 %v164
    %v720 = vunpack.c.l.b16 %v165
    %v721 = vunpack.c.h.b16 %v165
    %v722 = vunpack.c.l.b16 %v166
    %v723 = vunpack.c.h.b16 %v166
    %v724 = vunpack.c.l.b16 %v167
    %v725 = vunpack.c.h.b16 %v167
    %v726 = vunpack.c.l.b16 %v168
    %v727 = vunpack.c.h.b16 %v168
    %v728 = vunpack.c.l.b16 %v169
    %v729 = vunpack.c.h.b16 %v169
    %v730 = vunpack.c.l.b16 %v170
    %v731 = vunpack.c.h.b16 %v170
    %v732 = vunpack.c.l.b16 %v171
    %v733 = vunpack.c.h.b16 %v171
    %v734 = vunpack.c.l.b16 %v172
    %v735 = vunpack.c.h.b16 %v172
    %v736 = vunpack.c.l.b16 %v173
    %v737 = vunpack.c.h.b16 %v173
    %v738 = vunpack.c.l.b16 %v174
    %v739 = vunpack.c.h.b16 %v174
    %v740 = vunpack.c.l.b16 %v175
    %v741 = vunpack.c.h.b16 %v175
    %v742 = vunpack.c.l.b16 %v176
    %v743 = vunpack.c.h.b16 %v176
    %v744 = vunpack.c.l.b16 %v177
    %v745 = vunpack.c.h.b16 %v177
    %v746 = vunpack.c.l.b16 %v178
    %v747 = vunpack.c.h.b16 %v178
    %v748 = vunpack.c.l.b16 %v179
    %v749 = vunpack.c.h.b16 %v179
    %v750 = vunpack.c.l.b16 %v180
    %v751 = vunpack.c.h.b16 %v180
    %v752 = vunpack.c.l.b16 %v181
    %v753 = vunpack.c.h.b16 %v181
    %v754 = vunpack.c.l.b16 %v182
    %v755 = vunpack.c.h.b16 %v182
    %v756 = vunpack.c.l.b16 %v183
    %v757 = vunpack.c.h.b16 %v183
    %v758 = vunpack.c.l.b16 %v184
    %v759 = vunpack.c.h.b16 %v184
    %v760 = vunpack.c.l.b16 %v185
    %v761 = vunpack.c.h.b16 %v185
    %v762 = vunpack.c.l.b16 %v186
    %v763 = vunpack.c.h.b16 %v186
    %v764 = vunpack.c.l.b16 %v187
    %v765 = vunpack.c.h.b16 %v187
    %v766 = vunpack.c.l.b16 %v188
    %v767 = vunpack.c.h.b16 %v188
    %v768 = vunpack.c.l.b16 %v189
    %v769 = vunpack.c.h.b16 %v189
    %v770 = vunpack.c.l.b16 %v190
    %v771 = vunpack.c.h.b16 %v190
    %v772 = vunpack.c.l.b16 %v191
    %v773 = vunpack.c.h.b16 %v191
    %v774 = vunpack.c.l.b16 %v192
    %v775 = vunpack.c.h.b16 %v192
    %v776 = vunpack.c.l.b16 %v193
    %v777 = vunpack.c.h.b16 %v193
    %v778 = vunpack.c.l.b16 %v194
    %v779 = vunpack.c.h.b16 %v194
    %v780 = vunpack.c.l.b16 %v195
    %v781 = vunpack.c.h.b16 %v195
    %v782 = vunpack.c.l.b16 %v196
    %v783 = vunpack.c.h.b16 %v196
    %v784 = vunpack.c.l.b16 %v197
    %v785 = vunpack.c.h.b16 %v197
    %v786 = vunpack.c.l.b16 %v198
    %v787 = vunpack.c.h.b16 %v198
    %v788 = vunpack.c.l.b16 %v199
    %v789 = vunpack.c.h.b16 %v199
    %v790 = vunpack.c.l.b16 %v200
    %v791 = vunpack.c.h.b16 %v200
    %v792 = vunpack.c.l.b16 %v201
    %v793 = vunpack.c.h.b16 %v201
    %v794 = vunpack.c.l.b16 %v202
    %v795 = vunpack.c.h.b16 %v202
    %v796 = vunpack.c.l.b16 %v203
    %v797 = vunpack.c.h.b16 %v203
    %v798 = vunpack.c.l.b16 %v204
    %v799 = vunpack.c.h.b16 %v204
    %v800 = vunpack.c.l.b16 %v205
    %v801 = vunpack.c.h.b16 %v205
    %v802 = vunpack.c.l.b16 %v206
    %v803 = vunpack.c.h.b16 %v206
    %v804 = vunpack.c.l.b16 %v207
    %v805 = vunpack.c.h.b16 %v207
    %v806 = vunpack.c.l.b16 %v208
    %v807 = vunpack.c.h.b16 %v208
    %v808 = vunpack.c.l.b16 %v209
    %v809 = vunpack.c.h.b16 %v209
    %v810 = vunpack.c.l.b16 %v210
    %v811 = vunpack.c.h.b16 %v210
    %v812 = vunpack.c.l.b16 %v211
    %v813 = vunpack.c.h.b16 %v211
    %v814 = vunpack.c.l.b16 %v212
    %v815 = vunpack.c.h.b16 %v212
    %v816 = vunpack.c.l.b16 %v213
    %v817 = vunpack.c.h.b16 %v213
    %v818 = vunpack.c.l.b16 %v214
    %v819 = vunpack.c.h.b16 %v214
    %v820 = vunpack.c.l.b16 %v215
    %v821 = vunpack.c.h.b16 %v215
    %v822 = vunpack.c.l.b16 %v216
    %v823 = vunpack.c.h.b16 %v216
    %v824 = vunpack.c.l.b16 %v217
    %v825 = vunpack.c.h.b16 %v217
    %v826 = vunpack.c.l.b16 %v218
    %v827 = vunpack.c.h.b16 %v218
    %v828 = vunpack.c.l.b16 %v219
    %v829 = vunpack.c.h.b16 %v219
    %v830 = vunpack.c.l.b16 %v220
    %v831 = vunpack.c.h.b16 %v220
    %v832 = vunpack.c.l.b16 %v221
    %v833 = vunpack.c.h.b16 %v221
    %v834 = vunpack.c.l.b16 %v222
    %v835 = vunpack.c.h.b16 %v222
    %v836 = vunpack.c.l.b16 %v223
    %v837 = vunpack.c.h.b16 %v223
    %v838 = vunpack.c.l.b16 %v224
    %v839 = vunpack.c.h.b16 %v224
    %v840 = vunpack.c.l.b16 %v225
    %v841 = vunpack.c.h.b16 %v225
    %v842 = vunpack.c.l.b16 %v226
    %v843 = vunpack.c.h.b16 %v226
    %v844 = vunpack.c.l.b16 %v227
    %v845 = vunpack.c.h.b16 %v227
    %v846 = vunpack.c.l.b16 %v228
    %v847 = vunpack.c.h.b16 %v228
    %v848 = vunpack.c.l.b16 %v229
    %v849 = vunpack.c.h.b16 %v229
    %v850 = vunpack.c.l.b16 %v230
    %v851 = vunpack.c.h.b16 %v230
    %v852 = vunpack.c.l.b16 %v231
    %v853 = vunpack.c.h.b16 %v231
    %v854 = vunpack.c.l.b16 %v232
    %v855 = vunpack.c.h.b16 %v232
    %v856 = vunpack.c.l.b16 %v233
    %v857 = vunpack.c.h.b16 %v233
    %v858 = vunpack.c.l.b16 %v234
    %v859 = vunpack.c.h.b16 %v234
    %v860 = vunpack.c.l.b16 %v235
    %v861 = vunpack.c.h.b16 %v235
    %v862 = vunpack.c.l.b16 %v236
    %v863 = vunpack.c.h.b16 %v236
    %v864 = vunpack.c.l.b16 %v237
    %v865 = vunpack.c.h.b16 %v237
    %v866 = vunpack.c.l.b16 %v238
    %v867 = vunpack.c.h.b16 %v238
    %v868 = vunpack.c.l.b16 %v239
    %v869 = vunpack.c.h.b16 %v239
    %v870 = vunpack.c.l.b16 %v240
    %v871 = vunpack.c.h.b16 %v240
    %v872 = vunpack.c.l.b16 %v241
    %v873 = vunpack.c.h.b16 %v241
    %v874 = vunpack.c.l.b16 %v242
    %v875 = vunpack.c.h.b16 %v242
    %v876 = vunpack.c.l.b16 %v243
    %v877 = vunpack.c.h.b16 %v243
    %v878 = vunpack.c.l.b16 %v244
    %v879 = vunpack.c.h.b16 %v244
    %v880 = vunpack.c.l.b16 %v245
    %v881 = vunpack.c.h.b16 %v245
    %v882 = vunpack.c.l.b16 %v246
    %v883 = vunpack.c.h.b16 %v246
    %v884 = vunpack.c.l.b16 %v247
    %v885 = vunpack.c.h.b16 %v247
    %v886 = vunpack.c.l.b16 %v248
    %v887 = vunpack.c.h.b16 %v248
    %v888 = vunpack.c.l.b16 %v249
    %v889 = vunpack.c.h.b16 %v249
    %v890 = vunpack.c.l.b16 %v250
    %v891 = vunpack.c.h.b16 %v250
    %v892 = vunpack.c.l.b16 %v251
    %v893 = vunpack.c.h.b16 %v251
    %v894 = vunpack.c.l.b16 %v252
    %v895 = vunpack.c.h.b16 %v252
    %v896 = vunpack.c.l.b16 %v253
    %v897 = vunpack.c.h.b16 %v253
    %v898 = vunpack.c.l.b16 %v254
    %v899 = vunpack.c.h.b16 %v254
    %v900 = vunpack.c.l.b16 %v255
    %v901 = vunpack.c.h.b16 %v255
    %v902 = vunpack.c.l.b16 %v256
    %v903 = vunpack.c.h.b16 %v256
    %v904 = vunpack.c.l.b16 %v257
    %v905 = vunpack.c.h.b16 %v257
    %v906 = vunpack.c.l.b16 %v258
    %v907 = vunpack.c.h.b16 %v258
    %v908 = vunpack.c.l.b16 %v259
    %v909 = vunpack.c.h.b16 %v259
    %v910 = vunpack.c.l.b16 %v260
    %v911 = vunpack.c.h.b16 %v260
    %v912 = vunpack.c.l.b16 %v261
    %v913 = vunpack.c.h.b16 %v261
    %v914 = vunpack.c.l.b16 %v262
    %v915 = vunpack.c.h.b16 %v262
    %v916 = vunpack.c.l.b16 %v263
    %v917 = vunpack.c.h.b16 %v263
    %v918 = vunpack.c.l.b16 %v264
    %v919 = vunpack.c.h.b16 %v264
    %v920 = vunpack.c.l.b16 %v265
    %v921 = vunpack.c.h.b16 %v265
    %v922 = vunpack.c.l.b16 %v266
    %v923 = vunpack.c.h.b16 %v266
    %v924 = vunpack.c.l.b16 %v267
    %v925 = vunpack.c.h.b16 %v267
    %v926 = vunpack.c.l.b16 %v268
    %v927 = vunpack.c.h.b16 %v268
    %v928 = vunpack.c.l.b16 %v269
    %v929 = vunpack.c.h.b16 %v269
    %v930 = vunpack.c.l.b16 %v270
    %v931 = vunpack.c.h.b16 %v270
    %v932 = vunpack.c.l.b16 %v271
    %v933 = vunpack.c.h.b16 %v271
    %v934 = vunpack.c.l.b16 %v272
    %v935 = vunpack.c.h.b16 %v272
    %v936 = vunpack.c.l.b16 %v273
    %v937 = vunpack.c.h.b16 %v273
    %v938 = vunpack.c.l.b16 %v274
    %v939 = vunpack.c.h.b16 %v274
    %v940 = vunpack.c.l.b16 %v275
    %v941 = vunpack.c.h.b16 %v275
    %v942 = vunpack.c.l.b16 %v276
    %v943 = vunpack.c.h.b16 %v276
    %v944 = vunpack.c.l.b16 %v277
    %v945 = vunpack.c.h.b16 %v277
    %v946 = vunpack.c.l.b16 %v278
    %v947 = vunpack.c.h.b16 %v278
    %v948 = vunpack.c.l.b16 %v279
    %v949 = vunpack.c.h.b16 %v279
    %v950 = vunpack.c.l.b16 %v280
    %v951 = vunpack.c.h.b16 %v280
    %v952 = vunpack.c.l.b16 %v281
    %v953 = vunpack.c.h.b16 %v281
    %v954 = vunpack.c.l.b16 %v282
    %v955 = vunpack.c.h.b16 %v282
    %v956 = vunpack.c.l.b16 %v283
    %v957 = vunpack.c.h.b16 %v283
    %v958 = vunpack.c.l.b16 %v284
    %v959 = vunpack.c.h.b16 %v284
    %v960 = vunpack.c.l.b16 %v285
    %v961 = vunpack.c.h.b16 %v285
    %v962 = vunpack.c.l.b16 %v286
    %v963 = vunpack.c.h.b16 %v286
    %v964 = vunpack.c.l.b16 %v287
    %v965 = vunpack.c.h.b16 %v287
    %v966 = vunpack.c.l.b16 %v288
    %v967 = vunpack.c.h.b16 %v288
    %v968 = vunpack.c.l.b16 %v289
    %v969 = vunpack.c.h.b16 %v289
    %v970 = vunpack.c.l.b16 %v290
    %v971 = vunpack.c.h.b16 %v290
    %v972 = vunpack.c.l.b16 %v291
    %v973 = vunpack.c.h.b16 %v291
    %v974 = vunpack.c.l.b16 %v292
    %v975 = vunpack.c.h.b16 %v292
    %v976 = vunpack.c.l.b16 %v293
    %v977 = vunpack.c.h.b16 %v293
    %v978 = vunpack.c.l.b16 %v294
    %v979 = vunpack.c.h.b16 %v294
    %v980 = vunpack.c.l.b16 %v295
    %v981 = vunpack.c.h.b16 %v295
    %v982 = vunpack.c.l.b16 %v296
    %v983 = vunpack.c.h.b16 %v296
    %v984 = vunpack.c.l.b16 %v297
    %v985 = vunpack.c.h.b16 %v297
    %v986 = vunpack.c.l.b16 %v298
    %v987 = vunpack.c.h.b16 %v298
    %v988 = vunpack.c.l.b16 %v299
    %v989 = vunpack.c.h.b16 %v299
    %v990 = vunpack.c.l.b16 %v300
    %v991 = vunpack.c.h.b16 %v300
    %v992 = vunpack.c.l.b16 %v301
    %v993 = vunpack.c.h.b16 %v301
    %v994 = vunpack.c.l.b16 %v302
    %v995 = vunpack.c.h.b16 %v302
    %v996 = vunpack.c.l.b16 %v303
    %v997 = vunpack.c.h.b16 %v303
    %v998 = vunpack.c.l.b16 %v304
    %v999 = vunpack.c.h.b16 %v304
    %v1000 = vunpack.c.l.b16 %v305
    %v1001 = vunpack.c.h.b16 %v305
    %v1002 = vunpack.c.l.b16 %v306
    %v1003 = vunpack.c.h.b16 %v306
    %v1004 = vunpack.c.l.b16 %v307
    %v1005 = vunpack.c.h.b16 %v307
    %v1006 = vunpack.c.l.b16 %v308
    %v1007 = vunpack.c.h.b16 %v308
    %v1008 = vunpack.c.l.b16 %v309
    %v1009 = vunpack.c.h.b16 %v309
    %v1010 = vunpack.c.l.b16 %v310
    %v1011 = vunpack.c.h.b16 %v310
    %v1012 = vunpack.c.l.b16 %v311
    %v1013 = vunpack.c.h.b16 %v311
    %v1014 = vunpack.c.l.b16 %v312
    %v1015 = vunpack.c.h.b16 %v312
    %v1016 = vunpack.c.l.b16 %v313
    %v1017 = vunpack.c.h.b16 %v313
    %v1018 = vunpack.c.l.b16 %v314
    %v1019 = vunpack.c.h.b16 %v314
    %v1020 = vunpack.c.l.b16 %v315
    %v1021 = vunpack.c.h.b16 %v315
    %v1022 = vunpack.c.l.b16 %v316
    %v1023 = vunpack.c.h.b16 %v316
    %v1024 = vunpack.c.l.b16 %v317
    %v1025 = vunpack.c.h.b16 %v317
    %v1026 = vunpack.c.l.b16 %v318
    %v1027 = vunpack.c.h.b16 %v318
    %v1028 = vunpack.c.l.b16 %v319
    %v1029 = vunpack.c.h.b16 %v319
    %v1030 = vunpack.c.l.b16 %v320
    %v1031 = vunpack.c.h.b16 %v320
    %v1032 = vunpack.c.l.b16 %v321
    %v1033 = vunpack.c.h.b16 %v321
    %v1034 = vunpack.c.l.b16 %v322
    %v1035 = vunpack.c.h.b16 %v322
    %v1036 = vunpack.c.l.b16 %v323
    %v1037 = vunpack.c.h.b16 %v323
    %v1038 = vunpack.c.l.b16 %v324
    %v1039 = vunpack.c.h.b16 %v324
    %v1040 = vunpack.c.l.b16 %v325
    %v1041 = vunpack.c.h.b16 %v325
    %v1042 = vunpack.c.l.b16 %v326
    %v1043 = vunpack.c.h.b16 %v326
    %v1044 = vunpack.c.l.b16 %v327
    %v1045 = vunpack.c.h.b16 %v327
    %v1046 = vunpack.c.l.b16 %v328
    %v1047 = vunpack.c.h.b16 %v328
    %v1048 = vunpack.c.l.b16 %v329
    %v1049 = vunpack.c.h.b16 %v329
    %v1050 = vunpack.c.l.b16 %v330
    %v1051 = vunpack.c.h.b16 %v330
    %v1052 = vunpack.c.l.b16 %v331
    %v1053 = vunpack.c.h.b16 %v331
    %v1054 = vunpack.c.l.b16 %v332
    %v1055 = vunpack.c.h.b16 %v332
    %v1056 = vunpack.c.l.b16 %v333
    %v1057 = vunpack.c.h.b16 %v333
    %v1058 = vunpack.c.l.b16 %v334
    %v1059 = vunpack.c.h.b16 %v334
    %v1060 = vunpack.c.l.b16 %v335
    %v1061 = vunpack.c.h.b16 %v335
    %v1062 = vunpack.c.l.b16 %v336
    %v1063 = vunpack.c.h.b16 %v336
    %v1064 = vunpack.c.l.b16 %v337
    %v1065 = vunpack.c.h.b16 %v337
    %v1066 = vunpack.c.l.b16 %v338
    %v1067 = vunpack.c.h.b16 %v338
    %v1068 = vunpack.c.l.b16 %v339
    %v1069 = vunpack.c.h.b16 %v339
    %v1070 = vunpack.c.l.b16 %v340
    %v1071 = vunpack.c.h.b16 %v340
    %v1072 = vunpack.c.l.b16 %v341
    %v1073 = vunpack.c.h.b16 %v341
    %v1074 = vunpack.c.l.b16 %v342
    %v1075 = vunpack.c.h.b16 %v342
    %v1076 = vunpack.c.l.b16 %v343
    %v1077 = vunpack.c.h.b16 %v343
    %v1078 = vunpack.c.l.b16 %v344
    %v1079 = vunpack.c.h.b16 %v344
    %v1080 = vunpack.c.l.b16 %v345
    %v1081 = vunpack.c.h.b16 %v345
    %v1082 = vunpack.c.l.b16 %v346
    %v1083 = vunpack.c.h.b16 %v346
    %v1084 = vunpack.c.l.b16 %v347
    %v1085 = vunpack.c.h.b16 %v347
    %v1086 = vunpack.c.l.b16 %v348
    %v1087 = vunpack.c.h.b16 %v348
    %v1088 = vunpack.c.l.b16 %v349
    %v1089 = vunpack.c.h.b16 %v349
    %v1090 = vunpack.c.l.b16 %v350
    %v1091 = vunpack.c.h.b16 %v350
    %v1092 = vunpack.c.l.b16 %v351
    %v1093 = vunpack.c.h.b16 %v351
    %v1094 = vunpack.c.l.b16 %v352
    %v1095 = vunpack.c.h.b16 %v352
    %v1096 = vunpack.c.l.b16 %v353
    %v1097 = vunpack.c.h.b16 %v353
    %v1098 = vunpack.c.l.b16 %v354
    %v1099 = vunpack.c.h.b16 %v354
    %v1100 = vunpack.c.l.b16 %v355
    %v1101 = vunpack.c.h.b16 %v355
    %v1102 = vunpack.c.l.b16 %v356
    %v1103 = vunpack.c.h.b16 %v356
    %v1104 = vunpack.c.l.b16 %v357
    %v1105 = vunpack.c.h.b16 %v357
    %v1106 = vunpack.c.l.b16 %v358
    %v1107 = vunpack.c.h.b16 %v358
    %v1108 = vunpack.c.l.b16 %v359
    %v1109 = vunpack.c.h.b16 %v359
    %v1110 = vunpack.c.l.b16 %v360
    %v1111 = vunpack.c.h.b16 %v360
    %v1112 = vunpack.c.l.b16 %v361
    %v1113 = vunpack.c.h.b16 %v361
    %v1114 = vunpack.c.l.b16 %v362
    %v1115 = vunpack.c.h.b16 %v362
    %v1116 = vunpack.c.l.b16 %v363
    %v1117 = vunpack.c.h.b16 %v363
    %v1118 = vunpack.c.l.b16 %v364
    %v1119 = vunpack.c.h.b16 %v364
    %v1120 = vunpack.c.l.b16 %v365
    %v1121 = vunpack.c.h.b16 %v365
    %v1122 = vunpack.c.l.b16 %v366
    %v1123 = vunpack.c.h.b16 %v366
    %v1124 = vunpack.c.l.b16 %v367
    %v1125 = vunpack.c.h.b16 %v367
    %v1126 = vunpack.c.l.b16 %v368
    %v1127 = vunpack.c.h.b16 %v368
    %v1128 = vunpack.c.l.b16 %v369
    %v1129 = vunpack.c.h.b16 %v369
    %v1130 = vunpack.c.l.b16 %v370
    %v1131 = vunpack.c.h.b16 %v370
    %v1132 = vunpack.c.l.b16 %v371
    %v1133 = vunpack.c.h.b16 %v371
    %v1134 = vunpack.c.l.b16 %v372
    %v1135 = vunpack.c.h.b16 %v372
    %v1136 = vunpack.c.l.b16 %v373
    %v1137 = vunpack.c.h.b16 %v373
    %v1138 = vunpack.c.l.b16 %v374
    %v1139 = vunpack.c.h.b16 %v374
    %v1140 = vunpack.c.l.b16 %v375
    %v1141 = vunpack.c.h.b16 %v375
    %v1142 = vunpack.c.l.b16 %v376
    %v1143 = vunpack.c.h.b16 %v376
    %v1144 = vunpack.c.l.b16 %v377
    %v1145 = vunpack.c.h.b16 %v377
    %v1146 = vunpack.c.l.b16 %v378
    %v1147 = vunpack.c.h.b16 %v378
    %v1148 = vunpack.c.l.b16 %v379
    %v1149 = vunpack.c.h.b16 %v379
    %v1150 = vunpack.c.l.b16 %v380
    %v1151 = vunpack.c.h.b16 %v380
    %v1152 = vunpack.c.l.b16 %v381
    %v1153 = vunpack.c.h.b16 %v381
    %v1154 = vunpack.c.l.b16 %v382
    %v1155 = vunpack.c.h.b16 %v382
    %v1156 = vunpack.c.l.b16 %v383
    %v1157 = vunpack.c.h.b16 %v383
    %v1158 = vunpack.c.l.b16 %v384
    %v1159 = vunpack.c.h.b16 %v384
    %v1160 = vunpack.c.l.b16 %v385
    %v1161 = vunpack.c.h.b16 %v385
    %v1162 = vunpack.c.l.b16 %v386
    %v1163 = vunpack.c.h.b16 %v386
    %v1164 = vunpack.c.l.b16 %v387
    %v1165 = vunpack.c.h.b16 %v387
    %v1166 = vunpack.c.l.b16 %v388
    %v1167 = vunpack.c.h.b16 %v388
    %v1168 = vunpack.c.l.b16 %v389
    %v1169 = vunpack.c.h.b16 %v389
    %v1170 = vunpack.c.l.b16 %v390
    %v1171 = vunpack.c.h.b16 %v390
    %v1172 = vunpack.c.l.b16 %v391
    %v1173 = vunpack.c.h.b16 %v391
    %v1174 = vunpack.c.l.b16 %v392
    %v1175 = vunpack.c.h.b16 %v392
    %v1176 = vunpack.c.l.b16 %v393
    %v1177 = vunpack.c.h.b16 %v393
    %v1178 = vunpack.c.l.b16 %v394
    %v1179 = vunpack.c.h.b16 %v394
    %v1180 = vunpack.c.l.b16 %v395
    %v1181 = vunpack.c.h.b16 %v395
    %v1182 = vunpack.c.l.b16 %v396
    %v1183 = vunpack.c.h.b16 %v396
    %v1184 = vunpack.c.l.b16 %v397
    %v1185 = vunpack.c.h.b16 %v397
    %v1186 = vunpack.c.l.b16 %v398
    %v1187 = vunpack.c.h.b16 %v398
    %v1188 = vunpack.c.l.b16 %v399
    %v1189 = vunpack.c.h.b16 %v399
    %v1190 = vpack.c.b16 %v682, %v678
    %v1191 = vpack.c.b16 %v683, %v679
    %v1192 = vpack.c.b16 %v684, %v680
    %v1193 = vpack.c.b16 %v685, %v681
    %v1194 = vpack.c.b16 %v690, %v686
    %v1195 = vpack.c.b16 %v691, %v687
    %v1196 = vpack.c.b16 %v692, %v688
    %v1197 = vpack.c.b16 %v693, %v689
    %v1198 = vpack.c.b16 %v698, %v694
    %v1199 = vpack.c.b16 %v699, %v695
    %v1200 = vpack.c.b16 %v700, %v696
    %v1201 = vpack.c.b16 %v701, %v697
    %v1202 = vpack.c.b16 %v706, %v702
    %v1203 = vpack.c.b16 %v707, %v703
    %v1204 = vpack.c.b16 %v708, %v704
    %v1205 = vpack.c.b16 %v709, %v705
    %v1206 = vpack.c.b16 %v714, %v710
    %v1207 = vpack.c.b16 %v715, %v711
    %v1208 = vpack.c.b16 %v716, %v712
    %v1209 = vpack.c.b16 %v717, %v713
    %v1210 = vpack.c.b16 %v722, %v718
    %v1211 = vpack.c.b16 %v723, %v719
    %v1212 = vpack.c.b16 %v724, %v720
    %v1213 = vpack.c.b16 %v725, %v721
    %v1214 = vpack.c.b16 %v730, %v726
    %v1215 = vpack.c.b16 %v731, %v727
    %v1216 = vpack.c.b16 %v732, %v728
    %v1217 = vpack.c.b16 %v733, %v729
    %v1218 = vpack.c.b16 %v738, %v734
    %v1219 = vpack.c.b16 %v739, %v735
    %v1220 = vpack.c.b16 %v740, %v736
    %v1221 = vpack.c.b16 %v741, %v737
    %v1222 = vpack.c.b16 %v746, %v742
    %v1223 = vpack.c.b16 %v747, %v743
    %v1224 = vpack.c.b16 %v748, %v744
    %v1225 = vpack.c.b16 %v749, %v745
    %v1226 = vpack.c.b16 %v754, %v750
    %v1227 = vpack.c.b16 %v755, %v751
    %v1228 = vpack.c.b16 %v756, %v752
    %v1229 = vpack.c.b16 %v757, %v753
    %v1230 = vpack.c.b16 %v762, %v758
    %v1231 = vpack.c.b16 %v763, %v759
    %v1232 = vpack.c.b16 %v764, %v760
    %v1233 = vpack.c.b16 %v765, %v761
    %v1234 = vpack.c.b16 %v770, %v766
    %v1235 = vpack.c.b16 %v771, %v767
    %v1236 = vpack.c.b16 %v772, %v768
    %v1237 = vpack.c.b16 %v773, %v769
    %v1238 = vpack.c.b16 %v778, %v774
    %v1239 = vpack.c.b16 %v779, %v775
    %v1240 = vpack.c.b16 %v780, %v776
    %v1241 = vpack.c.b16 %v781, %v777
    %v1242 = vpack.c.b16 %v786, %v782
    %v1243 = vpack.c.b16 %v787, %v783
    %v1244 = vpack.c.b16 %v788, %v784
    %v1245 = vpack.c.b16 %v789, %v785
    %v1246 = vpack.c.b16 %v794, %v790
    %v1247 = vpack.c.b16 %v795, %v791
    %v1248 = vpack.c.b16 %v796, %v792
    %v1249 = vpack.c.b16 %v797, %v793
    %v1250 = vpack.c.b16 %v802, %v798
    %v1251 = vpack.c.b16 %v803, %v799
    %v1252 = vpack.c.b16 %v804, %v800
    %v1253 = vpack.c.b16 %v805, %v801
    %v1254 = vpack.c.b16 %v810, %v806
    %v1255 = vpack.c.b16 %v811, %v807
    %v1256 = vpack.c.b16 %v812, %v808
    %v1257 = vpack.c.b16 %v813, %v809
    %v1258 = vpack.c.b16 %v818, %v814
    %v1259 = vpack.c.b16 %v819, %v815
    %v1260 = vpack.c.b16 %v820, %v816
    %v1261 = vpack.c.b16 %v821, %v817
    %v1262 = vpack.c.b16 %v826, %v822
    %v1263 = vpack.c.b16 %v827, %v823
    %v1264 = vpack.c.b16 %v828, %v824
    %v1265 = vpack.c.b16 %v829, %v825
    %v1266 = vpack.c.b16 %v834, %v830
    %v1267 = vpack.c.b16 %v835, %v831
    %v1268 = vpack.c.b16 %v836, %v832
    %v1269 = vpack.c.b16 %v837, %v833
    %v1270 = vpack.c.b16 %v842, %v838
    %v1271 = vpack.c.b16 %v843, %v839
    %v1272 = vpack.c.b16 %v844, %v840
    %v1273 = vpack.c.b16 %v845, %v841
    %v1274 = vpack.c.b16 %v850, %v846
    %v1275 = vpack.c.b16 %v851, %v847
    %v1276 = vpack.c.b16 %v852, %v848
    %v1277 = vpack.c.b16 %v853, %v849
    %v1278 = vpack.c.b16 %v858, %v854
    %v1279 = vpack.c.b16 %v859, %v855
    %v1280 = vpack.c.b16 %v860, %v856
    %v1281 = vpack.c.b16 %v861, %v857
    %v1282 = vpack.c.b16 %v866, %v862
    %v1283 = vpack.c.b16 %v867, %v863
    %v1284 = vpack.c.b16 %v868, %v864
    %v1285 = vpack.c.b16 %v869, %v865
    %v1286 = vpack.c.b16 %v874, %v870
    %v1287 = vpack.c.b16 %v875, %v871
    %v1288 = vpack.c.b16 %v876, %v872
    %v1289 = vpack.c.b16 %v877, %v873
    %v1290 = vpack.c.b16 %v882, %v878
    %v1291 = vpack.c.b16 %v883, %v879
    %v1292 = vpack.c.b16 %v884, %v880
    %v1293 = vpack.c.b16 %v885, %v881
    %v1294 = vpack.c.b16 %v890, %v886
    %v1295 = vpack.c.b16 %v891, %v887
    %v1296 = vpack.c.b16 %v892, %v888
    %v1297 = vpack.c.b16 %v893, %v889
    %v1298 = vpack.c.b16 %v898, %v894
    %v1299 = vpack.c.b16 %v899, %v895
    %v1300 = vpack.c.b16 %v900, %v896
    %v1301 = vpack.c.b16 %v901, %v897
    %v1302 = vpack.c.b16 %v906, %v902
    %v1303 = vpack.c.b16 %v907, %v903
    %v1304 = vpack.c.b16 %v908, %v904
    %v1305 = vpack.c.b16 %v909, %v905
    %v1306 = vpack.c.b16 %v914, %v910
    %v1307 = vpack.c.b16 %v915, %v911
    %v1308 = vpack.c.b16 %v916, %v912
    %v1309 = vpack.c.b16 %v917, %v913
    %v1310 = vpack.c.b16 %v922, %v918
    %v1311 = vpack.c.b16 %v923, %v919
    %v1312 = vpack.c.b16 %v924, %v920
    %v1313 = vpack.c.b16 %v925, %v921
    %v1314 = vpack.c.b16 %v930, %v926
    %v1315 = vpack.c.b16 %v931, %v927
    %v1316 = vpack.c.b16 %v932, %v928
    %v1317 = vpack.c.b16 %v933, %v929
    %v1318 = vpack.c.b16 %v938, %v934
    %v1319 = vpack.c.b16 %v939, %v935
    %v1320 = vpack.c.b16 %v940, %v936
    %v1321 = vpack.c.b16 %v941, %v937
    %v1322 = vpack.c.b16 %v946, %v942
    %v1323 = vpack.c.b16 %v947, %v943
    %v1324 = vpack.c.b16 %v948, %v944
    %v1325 = vpack.c.b16 %v949, %v945
    %v1326 = vpack.c.b16 %v954, %v950
    %v1327 = vpack.c.b16 %v955, %v951
    %v1328 = vpack.c.b16 %v956, %v952
    %v1329 = vpack.c.b16 %v957, %v953
    %v1330 = vpack.c.b16 %v962, %v958
    %v1331 = vpack.c.b16 %v963, %v959
    %v1332 = vpack.c.b16 %v964, %v960
    %v1333 = vpack.c.b16 %v965, %v961
    %v1334 = vpack.c.b16 %v970, %v966
    %v1335 = vpack.c.b16 %v971, %v967
    %v1336 = vpack.c.b16 %v972, %v968
    %v1337 = vpack.c.b16 %v973, %v969
    %v1338 = vpack.c.b16 %v978, %v974
    %v1339 = vpack.c.b16 %v979, %v975
    %v1340 = vpack.c.b16 %v980, %v976
    %v1341 = vpack.c.b16 %v981, %v977
    %v1342 = vpack.c.b16 %v986, %v982
    %v1343 = vpack.c.b16 %v987, %v983
    %v1344 = vpack.c.b16 %v988, %v984
    %v1345 = vpack.c.b16 %v989, %v985
    %v1346 = vpack.c.b16 %v994, %v990
    %v1347 = vpack.c.b16 %v995, %v991
    %v1348 = vpack.c.b16 %v996, %v992
    %v1349 = vpack.c.b16 %v997, %v993
    %v1350 = vpack.c.b16 %v1002, %v998
    %v1351 = vpack.c.b16 %v1003, %v999
    %v1352 = vpack.c.b16 %v1004, %v1000
    %v1353 = vpack.c.b16 %v1005, %v1001
    %v1354 = vpack.c.b16 %v1010, %v1006
    %v1355 = vpack.c.b16 %v1011, %v1007
    %v1356 = vpack.c.b16 %v1012, %v1008
    %v1357 = vpack.c.b16 %v1013, %v1009
    %v1358 = vpack.c.b16 %v1018, %v1014
    %v1359 = vpack.c.b16 %v1019, %v1015
    %v1360 = vpack.c.b16 %v1020, %v1016
    %v1361 = vpack.c.b16 %v1021, %v1017
    %v1362 = vpack.c.b16 %v1026, %v1022
    %v1363 = vpack.c.b16 %v1027, %v1023
    %v1364 = vpack.c.b16 %v1028, %v1024
    %v1365 = vpack.c.b16 %v1029, %v1025
    %v1366 = vpack.c.b16 %v1034, %v1030
    %v1367 = vpack.c.b16 %v1035, %v1031
    %v1368 = vpack.c.b16 %v1036, %v1032
    %v1369 = vpack.c.b16 %v1037, %v1033
    %v1370 = vpack.c.b16 %v1042, %v1038
    %v1371 = vpack.c.b16 %v1043, %v1039
    %v1372 = vpack.c.b16 %v1044, %v1040
    %v1373 = vpack.c.b16 %v1045, %v1041
    %v1374 = vpack.c.b16 %v1050, %v1046
    %v1375 = vpack.c.b16 %v1051, %v1047
    %v1376 = vpack.c.b16 %v1052, %v1048
    %v1377 = vpack.c.b16 %v1053, %v1049
    %v1378 = vpack.c.b16 %v1058, %v1054
    %v1379 = vpack.c.b16 %v1059, %v1055
    %v1380 = vpack.c.b16 %v1060, %v1056
    %v1381 = vpack.c.b16 %v1061, %v1057
    %v1382 = vpack.c.b16 %v1066, %v1062
    %v1383 = vpack.c.b16 %v1067, %v1063
    %v1384 = vpack.c.b16 %v1068, %v1064
    %v1385 = vpack.c.b16 %v1069, %v1065
    %v1386 = vpack.c.b16 %v1074, %v1070
    %v1387 = vpack.c.b16 %v1075, %v1071
    %v1388 = vpack.c.b16 %v1076, %v1072
    %v1389 = vpack.c.b16 %v1077, %v1073
    %v1390 = vpack.c.b16 %v1082, %v1078
    %v1391 = vpack.c.b16 %v1083, %v1079
    %v1392 = vpack.c.b16 %v1084, %v1080
    %v1393 = vpack.c.b16 %v1085, %v1081
    %v1394 = vpack.c.b16 %v1090, %v1086
    %v1395 = vpack.c.b16 %v1091, %v1087
    %v1396 = vpack.c.b16 %v1092, %v1088
    %v1397 = vpack.c.b16 %v1093, %v1089
    %v1398 = vpack.c.b16 %v1098, %v1094
    %v1399 = vpack.c.b16 %v1099, %v1095
    %v1400 = vpack.c.b16 %v1100, %v1096
    %v1401 = vpack.c.b16 %v1101, %v1097
    %v1402 = vpack.c.b16 %v1106, %v1102
    %v1403 = vpack.c.b16 %v1107, %v1103
    %v1404 = vpack.c.b16 %v1108, %v1104
    %v1405 = vpack.c.b16 %v1109, %v1105
    %v1406 = vpack.c.b16 %v1114, %v1110
    %v1407 = vpack.c.b16 %v1115, %v1111
    %v1408 = vpack.c.b16 %v1116, %v1112
    %v1409 = vpack.c.b16 %v1117, %v1113
    %v1410 = vpack.c.b16 %v1122, %v1118
    %v1411 = vpack.c.b16 %v1123, %v1119
    %v1412 = vpack.c.b16 %v1124, %v1120
    %v1413 = vpack.c.b16 %v1125, %v1121
    %v1414 = vpack.c.b16 %v1130, %v1126
    %v1415 = vpack.c.b16 %v1131, %v1127
    %v1416 = vpack.c.b16 %v1132, %v1128
    %v1417 = vpack.c.b16 %v1133, %v1129
    %v1418 = vpack.c.b16 %v1138, %v1134
    %v1419 = vpack.c.b16 %v1139, %v1135
    %v1420 = vpack.c.b16 %v1140, %v1136
    %v1421 = vpack.c.b16 %v1141, %v1137
    %v1422 = vpack.c.b16 %v1146, %v1142
    %v1423 = vpack.c.b16 %v1147, %v1143
    %v1424 = vpack.c.b16 %v1148, %v1144
    %v1425 = vpack.c.b16 %v1149, %v1145
    %v1426 = vpack.c.b16 %v1154, %v1150
    %v1427 = vpack.c.b16 %v1155, %v1151
    %v1428 = vpack.c.b16 %v1156, %v1152
    %v1429 = vpack.c.b16 %v1157, %v1153
    %v1430 = vpack.c.b16 %v1162, %v1158
    %v1431 = vpack.c.b16 %v1163, %v1159
    %v1432 = vpack.c.b16 %v1164, %v1160
    %v1433 = vpack.c.b16 %v1165, %v1161
    %v1434 = vpack.c.b16 %v1170, %v1166
    %v1435 = vpack.c.b16 %v1171, %v1167
    %v1436 = vpack.c.b16 %v1172, %v1168
    %v1437 = vpack.c.b16 %v1173, %v1169
    %v1438 = vpack.c.b16 %v1178, %v1174
    %v1439 = vpack.c.b16 %v1179, %v1175
    %v1440 = vpack.c.b16 %v1180, %v1176
    %v1441 = vpack.c.b16 %v1181, %v1177
    %v1442 = vpack.c.b16 %v1186, %v1182
    %v1443 = vpack.c.b16 %v1187, %v1183
    %v1444 = vpack.c.b16 %v1188, %v1184
    %v1445 = vpack.c.b16 %v1189, %v1185
    %1702 = vmatprep.subr.bf16.mxu0 %v1219
    %1703 = vmatpush1.bf16.msra.mxu0 %v1218
    %1704 = vmatprep.subr.bf16.mxu0 %v1215
    %1705 = vmatpush1.bf16.msra.mxu0 %v1214
    %1706 = vmatprep.subr.bf16.mxu0 %v1211
    %1707 = vmatpush1.bf16.msra.mxu0 %v1210
    %1708 = vmatprep.subr.bf16.mxu0 %v1207
    %1709 = vmatpush1.bf16.msra.mxu0 %v1206
    %1710 = vmatprep.subr.bf16.mxu0 %v1203
    %1711 = vmatpush1.bf16.msra.mxu0 %v1202
    %1712 = vmatprep.subr.bf16.mxu0 %v1199
    %1713 = vmatpush1.bf16.msra.mxu0 %v1198
    %1714 = vmatprep.subr.bf16.mxu0 %v1195
    %1715 = vmatpush1.bf16.msra.mxu0 %v1194
    %1716 = vmatprep.subr.bf16.mxu0 %v1191
    %1717 = vmatpush1.bf16.msra.mxu0 %v1190
    %1718 = vmatprep.subr.bf16.mxu0 %v1251
    %1719 = vmatpush2.bf16.msra.mxu0 %v1250
    %1720 = vmatprep.subr.bf16.mxu0 %v1247
    %1721 = vmatpush2.bf16.msra.mxu0 %v1246
    %1722 = vmatprep.subr.bf16.mxu0 %v1243
    %1723 = vmatpush2.bf16.msra.mxu0 %v1242
    %1724 = vmatprep.subr.bf16.mxu0 %v1239
    %1725 = vmatpush2.bf16.msra.mxu0 %v1238
    %1726 = vmatprep.subr.bf16.mxu0 %v1235
    %1727 = vmatpush2.bf16.msra.mxu0 %v1234
    %1728 = vmatprep.subr.bf16.mxu0 %v1231
    %1729 = vmatpush2.bf16.msra.mxu0 %v1230
    %1730 = vmatprep.subr.bf16.mxu0 %v1227
    %1731 = vmatpush2.bf16.msra.mxu0 %v1226
    %1732 = vmatprep.subr.bf16.mxu0 %v1223
    %1733 = vmatpush2.bf16.msra.mxu0 %v1222
    %1734 = vmatprep.mubr.bf16.mxu0 %v137
    %1735 = vmatmul.mubr.bf16.gmra.mxu0 %v136
    %v1736 = vpop.f32.mrf.mxu0
    %v1737 = vadd.f32 %v405, %v1736
    %v1738 = vpop.f32.mrf.mxu0
    %v1739 = vadd.f32 %v409, %v1738
    %v1740 = vpop.f32.mrf.mxu0
    %v1741 = vpop.f32.mrf.mxu0
    %1742 = vdwg.mxu0
    %1743 = vmatprep.subr.bf16.mxu0 %v1283
    %1744 = vmatpush1.bf16.msra.mxu0 %v1282
    %1745 = vmatprep.subr.bf16.mxu0 %v1279
    %1746 = vmatpush1.bf16.msra.mxu0 %v1278
    %1747 = vmatprep.subr.bf16.mxu0 %v1275
    %1748 = vmatpush1.bf16.msra.mxu0 %v1274
    %1749 = vmatprep.subr.bf16.mxu0 %v1271
    %1750 = vmatpush1.bf16.msra.mxu0 %v1270
    %1751 = vmatprep.subr.bf16.mxu0 %v1267
    %1752 = vmatpush1.bf16.msra.mxu0 %v1266
    %1753 = vmatprep.subr.bf16.mxu0 %v1263
    %1754 = vmatpush1.bf16.msra.mxu0 %v1262
    %1755 = vmatprep.subr.bf16.mxu0 %v1259
    %1756 = vmatpush1.bf16.msra.mxu0 %v1258
    %1757 = vmatprep.subr.bf16.mxu0 %v1255
    %1758 = vmatpush1.bf16.msra.mxu0 %v1254
    %1759 = vmatprep.subr.bf16.mxu0 %v1315
    %1760 = vmatpush2.bf16.msra.mxu0 %v1314
    %1761 = vmatprep.subr.bf16.mxu0 %v1311
    %1762 = vmatpush2.bf16.msra.mxu0 %v1310
    %1763 = vmatprep.subr.bf16.mxu0 %v1307
    %1764 = vmatpush2.bf16.msra.mxu0 %v1306
    %1765 = vmatprep.subr.bf16.mxu0 %v1303
    %1766 = vmatpush2.bf16.msra.mxu0 %v1302
    %1767 = vmatprep.subr.bf16.mxu0 %v1299
    %1768 = vmatpush2.bf16.msra.mxu0 %v1298
    %1769 = vmatprep.subr.bf16.mxu0 %v1295
    %1770 = vmatpush2.bf16.msra.mxu0 %v1294
    %1771 = vmatprep.subr.bf16.mxu0 %v1291
    %1772 = vmatpush2.bf16.msra.mxu0 %v1290
    %1773 = vmatprep.subr.bf16.mxu0 %v1287
    %1774 = vmatpush2.bf16.msra.mxu0 %v1286
    %1775 = vmatprep.mubr.bf16.mxu0 %v139
    %1776 = vmatmul.mubr.bf16.gmra.mxu0 %v138
    %v1777 = vpop.f32.mrf.mxu0
    %v1778 = vadd.f32 %v1737, %v1777
    %v1779 = vpop.f32.mrf.mxu0
    %v1780 = vadd.f32 %v1739, %v1779
    %v1781 = vpop.f32.mrf.mxu0
    %v1782 = vpop.f32.mrf.mxu0
    %1783 = vdwg.mxu0
    %1784 = vmatprep.subr.bf16.mxu0 %v1347
    %1785 = vmatpush1.bf16.msra.mxu0 %v1346
    %1786 = vmatprep.subr.bf16.mxu0 %v1343
    %1787 = vmatpush1.bf16.msra.mxu0 %v1342
    %1788 = vmatprep.subr.bf16.mxu0 %v1339
    %1789 = vmatpush1.bf16.msra.mxu0 %v1338
    %1790 = vmatprep.subr.bf16.mxu0 %v1335
    %1791 = vmatpush1.bf16.msra.mxu0 %v1334
    %1792 = vmatprep.subr.bf16.mxu0 %v1331
    %1793 = vmatpush1.bf16.msra.mxu0 %v1330
    %1794 = vmatprep.subr.bf16.mxu0 %v1327
    %1795 = vmatpush1.bf16.msra.mxu0 %v1326
    %1796 = vmatprep.subr.bf16.mxu0 %v1323
    %1797 = vmatpush1.bf16.msra.mxu0 %v1322
    %1798 = vmatprep.subr.bf16.mxu0 %v1319
    %1799 = vmatpush1.bf16.msra.mxu0 %v1318
    %1800 = vmatprep.subr.bf16.mxu0 %v1379
    %1801 = vmatpush2.bf16.msra.mxu0 %v1378
    %1802 = vmatprep.subr.bf16.mxu0 %v1375
    %1803 = vmatpush2.bf16.msra.mxu0 %v1374
    %1804 = vmatprep.subr.bf16.mxu0 %v1371
    %1805 = vmatpush2.bf16.msra.mxu0 %v1370
    %1806 = vmatprep.subr.bf16.mxu0 %v1367
    %1807 = vmatpush2.bf16.msra.mxu0 %v1366
    %1808 = vmatprep.subr.bf16.mxu0 %v1363
    %1809 = vmatpush2.bf16.msra.mxu0 %v1362
    %1810 = vmatprep.subr.bf16.mxu0 %v1359
    %1811 = vmatpush2.bf16.msra.mxu0 %v1358
    %1812 = vmatprep.subr.bf16.mxu0 %v1355
    %1813 = vmatpush2.bf16.msra.mxu0 %v1354
    %1814 = vmatprep.subr.bf16.mxu0 %v1351
    %1815 = vmatpush2.bf16.msra.mxu0 %v1350
    %1816 = vmatprep.mubr.bf16.mxu0 %v141
    %1817 = vmatmul.mubr.bf16.gmra.mxu0 %v140
    %v1818 = vpop.f32.mrf.mxu0
    %v1819 = vadd.f32 %v1778, %v1818
    %v1820 = vpop.f32.mrf.mxu0
    %v1821 = vadd.f32 %v1780, %v1820
    %v1822 = vpop.f32.mrf.mxu0
    %v1823 = vpop.f32.mrf.mxu0
    %1824 = vdwg.mxu0
    %1825 = vmatprep.subr.bf16.mxu0 %v1411
    %1826 = vmatpush1.bf16.msra.mxu0 %v1410
    %1827 = vmatprep.subr.bf16.mxu0 %v1407
    %1828 = vmatpush1.bf16.msra.mxu0 %v1406
    %1829 = vmatprep.subr.bf16.mxu0 %v1403
    %1830 = vmatpush1.bf16.msra.mxu0 %v1402
    %1831 = vmatprep.subr.bf16.mxu0 %v1399
    %1832 = vmatpush1.bf16.msra.mxu0 %v1398
    %1833 = vmatprep.subr.bf16.mxu0 %v1395
    %1834 = vmatpush1.bf16.msra.mxu0 %v1394
    %1835 = vmatprep.subr.bf16.mxu0 %v1391
    %1836 = vmatpush1.bf16.msra.mxu0 %v1390
    %1837 = vmatprep.subr.bf16.mxu0 %v1387
    %1838 = vmatpush1.bf16.msra.mxu0 %v1386
    %1839 = vmatprep.subr.bf16.mxu0 %v1383
    %1840 = vmatpush1.bf16.msra.mxu0 %v1382
    %1841 = vmatprep.subr.bf16.mxu0 %v1443
    %1842 = vmatpush2.bf16.msra.mxu0 %v1442
    %1843 = vmatprep.subr.bf16.mxu0 %v1439
    %1844 = vmatpush2.bf16.msra.mxu0 %v1438
    %1845 = vmatprep.subr.bf16.mxu0 %v1435
    %1846 = vmatpush2.bf16.msra.mxu0 %v1434
    %1847 = vmatprep.subr.bf16.mxu0 %v1431
    %1848 = vmatpush2.bf16.msra.mxu0 %v1430
    %1849 = vmatprep.subr.bf16.mxu0 %v1427
    %1850 = vmatpush2.bf16.msra.mxu0 %v1426
    %1851 = vmatprep.subr.bf16.mxu0 %v1423
    %1852 = vmatpush2.bf16.msra.mxu0 %v1422
    %1853 = vmatprep.subr.bf16.mxu0 %v1419
    %1854 = vmatpush2.bf16.msra.mxu0 %v1418
    %1855 = vmatprep.subr.bf16.mxu0 %v1415
    %1856 = vmatpush2.bf16.msra.mxu0 %v1414
    %1857 = vmatprep.mubr.bf16.mxu0 %v143
    %1858 = vmatmul.mubr.bf16.gmra.mxu0 %v142
    %v1859 = vpop.f32.mrf.mxu0
    %v1860 = vadd.f32 %v1819, %v1859
    %v1861 = vpop.f32.mrf.mxu0
    %v1862 = vadd.f32 %v1821, %v1861
    %v1863 = vpop.f32.mrf.mxu0
    %v1864 = vpop.f32.mrf.mxu0
    %1865 = vdwg.mxu0
    %1866 = vmatprep.subr.bf16.mxu0 %v1221
    %1867 = vmatpush1.bf16.msra.mxu0 %v1220
    %1868 = vmatprep.subr.bf16.mxu0 %v1217
    %1869 = vmatpush1.bf16.msra.mxu0 %v1216
    %1870 = vmatprep.subr.bf16.mxu0 %v1213
    %1871 = vmatpush1.bf16.msra.mxu0 %v1212
    %1872 = vmatprep.subr.bf16.mxu0 %v1209
    %1873 = vmatpush1.bf16.msra.mxu0 %v1208
    %1874 = vmatprep.subr.bf16.mxu0 %v1205
    %1875 = vmatpush1.bf16.msra.mxu0 %v1204
    %1876 = vmatprep.subr.bf16.mxu0 %v1201
    %1877 = vmatpush1.bf16.msra.mxu0 %v1200
    %1878 = vmatprep.subr.bf16.mxu0 %v1197
    %1879 = vmatpush1.bf16.msra.mxu0 %v1196
    %1880 = vmatprep.subr.bf16.mxu0 %v1193
    %1881 = vmatpush1.bf16.msra.mxu0 %v1192
    %1882 = vmatprep.subr.bf16.mxu0 %v1253
    %1883 = vmatpush2.bf16.msra.mxu0 %v1252
    %1884 = vmatprep.subr.bf16.mxu0 %v1249
    %1885 = vmatpush2.bf16.msra.mxu0 %v1248
    %1886 = vmatprep.subr.bf16.mxu0 %v1245
    %1887 = vmatpush2.bf16.msra.mxu0 %v1244
    %1888 = vmatprep.subr.bf16.mxu0 %v1241
    %1889 = vmatpush2.bf16.msra.mxu0 %v1240
    %1890 = vmatprep.subr.bf16.mxu0 %v1237
    %1891 = vmatpush2.bf16.msra.mxu0 %v1236
    %1892 = vmatprep.subr.bf16.mxu0 %v1233
    %1893 = vmatpush2.bf16.msra.mxu0 %v1232
    %1894 = vmatprep.subr.bf16.mxu0 %v1229
    %1895 = vmatpush2.bf16.msra.mxu0 %v1228
    %1896 = vmatprep.subr.bf16.mxu0 %v1225
    %1897 = vmatpush2.bf16.msra.mxu0 %v1224
    %1898 = vmatprep.mubr.bf16.mxu0 %v137
    %1899 = vmatmul.mubr.bf16.gmra.mxu0 %v136
    %v1900 = vpop.f32.mrf.mxu0
    %v1901 = vadd.f32 %v413, %v1900
    %v1902 = vpop.f32.mrf.mxu0
    %v1903 = vadd.f32 %v417, %v1902
    %v1904 = vpop.f32.mrf.mxu0
    %v1905 = vpop.f32.mrf.mxu0
    %1906 = vdwg.mxu0
    %1907 = vmatprep.subr.bf16.mxu0 %v1285
    %1908 = vmatpush1.bf16.msra.mxu0 %v1284
    %1909 = vmatprep.subr.bf16.mxu0 %v1281
    %1910 = vmatpush1.bf16.msra.mxu0 %v1280
    %1911 = vmatprep.subr.bf16.mxu0 %v1277
    %1912 = vmatpush1.bf16.msra.mxu0 %v1276
    %1913 = vmatprep.subr.bf16.mxu0 %v1273
    %1914 = vmatpush1.bf16.msra.mxu0 %v1272
    %1915 = vmatprep.subr.bf16.mxu0 %v1269
    %1916 = vmatpush1.bf16.msra.mxu0 %v1268
    %1917 = vmatprep.subr.bf16.mxu0 %v1265
    %1918 = vmatpush1.bf16.msra.mxu0 %v1264
    %1919 = vmatprep.subr.bf16.mxu0 %v1261
    %1920 = vmatpush1.bf16.msra.mxu0 %v1260
    %1921 = vmatprep.subr.bf16.mxu0 %v1257
    %1922 = vmatpush1.bf16.msra.mxu0 %v1256
    %1923 = vmatprep.subr.bf16.mxu0 %v1317
    %1924 = vmatpush2.bf16.msra.mxu0 %v1316
    %1925 = vmatprep.subr.bf16.mxu0 %v1313
    %1926 = vmatpush2.bf16.msra.mxu0 %v1312
    %1927 = vmatprep.subr.bf16.mxu0 %v1309
    %1928 = vmatpush2.bf16.msra.mxu0 %v1308
    %1929 = vmatprep.subr.bf16.mxu0 %v1305
    %1930 = vmatpush2.bf16.msra.mxu0 %v1304
    %1931 = vmatprep.subr.bf16.mxu0 %v1301
    %1932 = vmatpush2.bf16.msra.mxu0 %v1300
    %1933 = vmatprep.subr.bf16.mxu0 %v1297
    %1934 = vmatpush2.bf16.msra.mxu0 %v1296
    %1935 = vmatprep.subr.bf16.mxu0 %v1293
    %1936 = vmatpush2.bf16.msra.mxu0 %v1292
    %1937 = vmatprep.subr.bf16.mxu0 %v1289
    %1938 = vmatpush2.bf16.msra.mxu0 %v1288
    %1939 = vmatprep.mubr.bf16.mxu0 %v139
    %1940 = vmatmul.mubr.bf16.gmra.mxu0 %v138
    %v1941 = vpop.f32.mrf.mxu0
    %v1942 = vadd.f32 %v1901, %v1941
    %v1943 = vpop.f32.mrf.mxu0
    %v1944 = vadd.f32 %v1903, %v1943
    %v1945 = vpop.f32.mrf.mxu0
    %v1946 = vpop.f32.mrf.mxu0
    %1947 = vdwg.mxu0
    %1948 = vmatprep.subr.bf16.mxu0 %v1349
    %1949 = vmatpush1.bf16.msra.mxu0 %v1348
    %1950 = vmatprep.subr.bf16.mxu0 %v1345
    %1951 = vmatpush1.bf16.msra.mxu0 %v1344
    %1952 = vmatprep.subr.bf16.mxu0 %v1341
    %1953 = vmatpush1.bf16.msra.mxu0 %v1340
    %1954 = vmatprep.subr.bf16.mxu0 %v1337
    %1955 = vmatpush1.bf16.msra.mxu0 %v1336
    %1956 = vmatprep.subr.bf16.mxu0 %v1333
    %1957 = vmatpush1.bf16.msra.mxu0 %v1332
    %1958 = vmatprep.subr.bf16.mxu0 %v1329
    %1959 = vmatpush1.bf16.msra.mxu0 %v1328
    %1960 = vmatprep.subr.bf16.mxu0 %v1325
    %1961 = vmatpush1.bf16.msra.mxu0 %v1324
    %1962 = vmatprep.subr.bf16.mxu0 %v1321
    %1963 = vmatpush1.bf16.msra.mxu0 %v1320
    %1964 = vmatprep.subr.bf16.mxu0 %v1381
    %1965 = vmatpush2.bf16.msra.mxu0 %v1380
    %1966 = vmatprep.subr.bf16.mxu0 %v1377
    %1967 = vmatpush2.bf16.msra.mxu0 %v1376
    %1968 = vmatprep.subr.bf16.mxu0 %v1373
    %1969 = vmatpush2.bf16.msra.mxu0 %v1372
    %1970 = vmatprep.subr.bf16.mxu0 %v1369
    %1971 = vmatpush2.bf16.msra.mxu0 %v1368
    %1972 = vmatprep.subr.bf16.mxu0 %v1365
    %1973 = vmatpush2.bf16.msra.mxu0 %v1364
    %1974 = vmatprep.subr.bf16.mxu0 %v1361
    %1975 = vmatpush2.bf16.msra.mxu0 %v1360
    %1976 = vmatprep.subr.bf16.mxu0 %v1357
    %1977 = vmatpush2.bf16.msra.mxu0 %v1356
    %1978 = vmatprep.subr.bf16.mxu0 %v1353
    %1979 = vmatpush2.bf16.msra.mxu0 %v1352
    %1980 = vmatprep.mubr.bf16.mxu0 %v141
    %1981 = vmatmul.mubr.bf16.gmra.mxu0 %v140
    %v1982 = vpop.f32.mrf.mxu0
    %v1983 = vadd.f32 %v1942, %v1982
    %v1984 = vpop.f32.mrf.mxu0
    %v1985 = vadd.f32 %v1944, %v1984
    %v1986 = vpop.f32.mrf.mxu0
    %v1987 = vpop.f32.mrf.mxu0
    %1988 = vdwg.mxu0
    %1989 = vmatprep.subr.bf16.mxu0 %v1413
    %1990 = vmatpush1.bf16.msra.mxu0 %v1412
    %1991 = vmatprep.subr.bf16.mxu0 %v1409
    %1992 = vmatpush1.bf16.msra.mxu0 %v1408
    %1993 = vmatprep.subr.bf16.mxu0 %v1405
    %1994 = vmatpush1.bf16.msra.mxu0 %v1404
    %1995 = vmatprep.subr.bf16.mxu0 %v1401
    %1996 = vmatpush1.bf16.msra.mxu0 %v1400
    %1997 = vmatprep.subr.bf16.mxu0 %v1397
    %1998 = vmatpush1.bf16.msra.mxu0 %v1396
    %1999 = vmatprep.subr.bf16.mxu0 %v1393
    %2000 = vmatpush1.bf16.msra.mxu0 %v1392
    %2001 = vmatprep.subr.bf16.mxu0 %v1389
    %2002 = vmatpush1.bf16.msra.mxu0 %v1388
    %2003 = vmatprep.subr.bf16.mxu0 %v1385
    %2004 = vmatpush1.bf16.msra.mxu0 %v1384
    %2005 = vmatprep.subr.bf16.mxu0 %v1445
    %2006 = vmatpush2.bf16.msra.mxu0 %v1444
    %2007 = vmatprep.subr.bf16.mxu0 %v1441
    %2008 = vmatpush2.bf16.msra.mxu0 %v1440
    %2009 = vmatprep.subr.bf16.mxu0 %v1437
    %2010 = vmatpush2.bf16.msra.mxu0 %v1436
    %2011 = vmatprep.subr.bf16.mxu0 %v1433
    %2012 = vmatpush2.bf16.msra.mxu0 %v1432
    %2013 = vmatprep.subr.bf16.mxu0 %v1429
    %2014 = vmatpush2.bf16.msra.mxu0 %v1428
    %2015 = vmatprep.subr.bf16.mxu0 %v1425
    %2016 = vmatpush2.bf16.msra.mxu0 %v1424
    %2017 = vmatprep.subr.bf16.mxu0 %v1421
    %2018 = vmatpush2.bf16.msra.mxu0 %v1420
    %2019 = vmatprep.subr.bf16.mxu0 %v1417
    %2020 = vmatpush2.bf16.msra.mxu0 %v1416
    %2021 = vmatprep.mubr.bf16.mxu0 %v143
    %2022 = vmatmul.mubr.bf16.gmra.mxu0 %v142
    %v2023 = vpop.f32.mrf.mxu0
    %v2024 = vadd.f32 %v1983, %v2023
    %v2025 = vpop.f32.mrf.mxu0
    %v2026 = vadd.f32 %v1985, %v2025
    %v2027 = vpop.f32.mrf.mxu0
    %v2028 = vpop.f32.mrf.mxu0
    %2029 = vdwg.mxu0
    %v2030 = vmax.f32 %v1860, 0.0
    %v2031 = vmax.f32 %v1862, 0.0
    %v2032 = vmax.f32 %v2024, 0.0
    %v2033 = vmax.f32 %v2026, 0.0
    %v2034 = vpack.c.bf16 %v2030, %v2030
    %v2035 = vpack.c.bf16 %v2031, %v2031
    %v2036 = vpack.c.bf16 %v2032, %v2032
    %v2037 = vpack.c.bf16 %v2033, %v2033
    %v2038 = vld [vmem:[#allocation6] sm:$0xff]
    %v2039 = vld [vmem:[#allocation6 + $0x8] sm:$0xff]
    %v2040 = vld [vmem:[#allocation6 + $0x10] sm:$0xff]
    %v2041 = vld [vmem:[#allocation6 + $0x18] sm:$0xff]
    %v2042 = vld [vmem:[#allocation6 + $0x20] sm:$0xff]
    %v2043 = vld [vmem:[#allocation6 + $0x28] sm:$0xff]
    %v2044 = vld [vmem:[#allocation6 + $0x30] sm:$0xff]
    %v2045 = vld [vmem:[#allocation6 + $0x38] sm:$0xff]
    %v2046 = vld [vmem:[#allocation6 + $0x40] sm:$0xff]
    %v2047 = vld [vmem:[#allocation6 + $0x48] sm:$0xff]
    %v2048 = vld [vmem:[#allocation6 + $0x50] sm:$0xff]
    %v2049 = vld [vmem:[#allocation6 + $0x58] sm:$0xff]
    %v2050 = vld [vmem:[#allocation6 + $0x60] sm:$0xff]
    %v2051 = vld [vmem:[#allocation6 + $0x68] sm:$0xff]
    %v2052 = vld [vmem:[#allocation6 + $0x70] sm:$0xff]
    %v2053 = vld [vmem:[#allocation6 + $0x78] sm:$0xff]
    %v2054 = vld [vmem:[#allocation6 + $0x80] sm:$0xff]
    %v2055 = vld [vmem:[#allocation6 + $0x88] sm:$0xff]
    %v2056 = vld [vmem:[#allocation6 + $0x90] sm:$0xff]
    %v2057 = vld [vmem:[#allocation6 + $0x98] sm:$0xff]
    %v2058 = vld [vmem:[#allocation6 + $0xa0] sm:$0xff]
    %v2059 = vld [vmem:[#allocation6 + $0xa8] sm:$0xff]
    %v2060 = vld [vmem:[#allocation6 + $0xb0] sm:$0xff]
    %v2061 = vld [vmem:[#allocation6 + $0xb8] sm:$0xff]
    %v2062 = vld [vmem:[#allocation6 + $0xc0] sm:$0xff]
    %v2063 = vld [vmem:[#allocation6 + $0xc8] sm:$0xff]
    %v2064 = vld [vmem:[#allocation6 + $0xd0] sm:$0xff]
    %v2065 = vld [vmem:[#allocation6 + $0xd8] sm:$0xff]
    %v2066 = vld [vmem:[#allocation6 + $0xe0] sm:$0xff]
    %v2067 = vld [vmem:[#allocation6 + $0xe8] sm:$0xff]
    %v2068 = vld [vmem:[#allocation6 + $0xf0] sm:$0xff]
    %v2069 = vld [vmem:[#allocation6 + $0xf8] sm:$0xff]
    %v2070 = vld [vmem:[#allocation6 + $0x100] sm:$0xff]
    %v2071 = vld [vmem:[#allocation6 + $0x108] sm:$0xff]
    %v2072 = vld [vmem:[#allocation6 + $0x110] sm:$0xff]
    %v2073 = vld [vmem:[#allocation6 + $0x118] sm:$0xff]
    %v2074 = vld [vmem:[#allocation6 + $0x120] sm:$0xff]
    %v2075 = vld [vmem:[#allocation6 + $0x128] sm:$0xff]
    %v2076 = vld [vmem:[#allocation6 + $0x130] sm:$0xff]
    %v2077 = vld [vmem:[#allocation6 + $0x138] sm:$0xff]
    %v2078 = vld [vmem:[#allocation6 + $0x140] sm:$0xff]
    %v2079 = vld [vmem:[#allocation6 + $0x148] sm:$0xff]
    %v2080 = vld [vmem:[#allocation6 + $0x150] sm:$0xff]
    %v2081 = vld [vmem:[#allocation6 + $0x158] sm:$0xff]
    %v2082 = vld [vmem:[#allocation6 + $0x160] sm:$0xff]
    %v2083 = vld [vmem:[#allocation6 + $0x168] sm:$0xff]
    %v2084 = vld [vmem:[#allocation6 + $0x170] sm:$0xff]
    %v2085 = vld [vmem:[#allocation6 + $0x178] sm:$0xff]
    %v2086 = vld [vmem:[#allocation6 + $0x180] sm:$0xff]
    %v2087 = vld [vmem:[#allocation6 + $0x188] sm:$0xff]
    %v2088 = vld [vmem:[#allocation6 + $0x190] sm:$0xff]
    %v2089 = vld [vmem:[#allocation6 + $0x198] sm:$0xff]
    %v2090 = vld [vmem:[#allocation6 + $0x1a0] sm:$0xff]
    %v2091 = vld [vmem:[#allocation6 + $0x1a8] sm:$0xff]
    %v2092 = vld [vmem:[#allocation6 + $0x1b0] sm:$0xff]
    %v2093 = vld [vmem:[#allocation6 + $0x1b8] sm:$0xff]
    %v2094 = vld [vmem:[#allocation6 + $0x1c0] sm:$0xff]
    %v2095 = vld [vmem:[#allocation6 + $0x1c8] sm:$0xff]
    %v2096 = vld [vmem:[#allocation6 + $0x1d0] sm:$0xff]
    %v2097 = vld [vmem:[#allocation6 + $0x1d8] sm:$0xff]
    %v2098 = vld [vmem:[#allocation6 + $0x1e0] sm:$0xff]
    %v2099 = vld [vmem:[#allocation6 + $0x1e8] sm:$0xff]
    %v2100 = vld [vmem:[#allocation6 + $0x1f0] sm:$0xff]
    %v2101 = vld [vmem:[#allocation6 + $0x1f8] sm:$0xff]
    %v2102 = vld [vmem:[#allocation7] sm:$0x3]
    %v2104 = vlaneseq
    %v2105 = vshrl.u32 %v2104, 7
    %v2106 = vsub.s32 0, %v2105
    %v2107 = vrot.slane %v2102, %v2106
    %v2108 = vlaneseq
    %v2109 = vshrl.u32 %v2108, 7
    %v2110 = vsub.s32 1, %v2109
    %v2111 = vrot.slane %v2102, %v2110
    %v2178 = vunpack.c.l.b16 %v2038
    %v2179 = vunpack.c.h.b16 %v2038
    %v2180 = vunpack.c.l.b16 %v2039
    %v2181 = vunpack.c.h.b16 %v2039
    %v2182 = vunpack.c.l.b16 %v2040
    %v2183 = vunpack.c.h.b16 %v2040
    %v2184 = vunpack.c.l.b16 %v2041
    %v2185 = vunpack.c.h.b16 %v2041
    %v2186 = vunpack.c.l.b16 %v2042
    %v2187 = vunpack.c.h.b16 %v2042
    %v2188 = vunpack.c.l.b16 %v2043
    %v2189 = vunpack.c.h.b16 %v2043
    %v2190 = vunpack.c.l.b16 %v2044
    %v2191 = vunpack.c.h.b16 %v2044
    %v2192 = vunpack.c.l.b16 %v2045
    %v2193 = vunpack.c.h.b16 %v2045
    %v2194 = vunpack.c.l.b16 %v2046
    %v2195 = vunpack.c.h.b16 %v2046
    %v2196 = vunpack.c.l.b16 %v2047
    %v2197 = vunpack.c.h.b16 %v2047
    %v2198 = vunpack.c.l.b16 %v2048
    %v2199 = vunpack.c.h.b16 %v2048
    %v2200 = vunpack.c.l.b16 %v2049
    %v2201 = vunpack.c.h.b16 %v2049
    %v2202 = vunpack.c.l.b16 %v2050
    %v2203 = vunpack.c.h.b16 %v2050
    %v2204 = vunpack.c.l.b16 %v2051
    %v2205 = vunpack.c.h.b16 %v2051
    %v2206 = vunpack.c.l.b16 %v2052
    %v2207 = vunpack.c.h.b16 %v2052
    %v2208 = vunpack.c.l.b16 %v2053
    %v2209 = vunpack.c.h.b16 %v2053
    %v2210 = vunpack.c.l.b16 %v2054
    %v2211 = vunpack.c.h.b16 %v2054
    %v2212 = vunpack.c.l.b16 %v2055
    %v2213 = vunpack.c.h.b16 %v2055
    %v2214 = vunpack.c.l.b16 %v2056
    %v2215 = vunpack.c.h.b16 %v2056
    %v2216 = vunpack.c.l.b16 %v2057
    %v2217 = vunpack.c.h.b16 %v2057
    %v2218 = vunpack.c.l.b16 %v2058
    %v2219 = vunpack.c.h.b16 %v2058
    %v2220 = vunpack.c.l.b16 %v2059
    %v2221 = vunpack.c.h.b16 %v2059
    %v2222 = vunpack.c.l.b16 %v2060
    %v2223 = vunpack.c.h.b16 %v2060
    %v2224 = vunpack.c.l.b16 %v2061
    %v2225 = vunpack.c.h.b16 %v2061
    %v2226 = vunpack.c.l.b16 %v2062
    %v2227 = vunpack.c.h.b16 %v2062
    %v2228 = vunpack.c.l.b16 %v2063
    %v2229 = vunpack.c.h.b16 %v2063
    %v2230 = vunpack.c.l.b16 %v2064
    %v2231 = vunpack.c.h.b16 %v2064
    %v2232 = vunpack.c.l.b16 %v2065
    %v2233 = vunpack.c.h.b16 %v2065
    %v2234 = vunpack.c.l.b16 %v2066
    %v2235 = vunpack.c.h.b16 %v2066
    %v2236 = vunpack.c.l.b16 %v2067
    %v2237 = vunpack.c.h.b16 %v2067
    %v2238 = vunpack.c.l.b16 %v2068
    %v2239 = vunpack.c.h.b16 %v2068
    %v2240 = vunpack.c.l.b16 %v2069
    %v2241 = vunpack.c.h.b16 %v2069
    %v2242 = vunpack.c.l.b16 %v2070
    %v2243 = vunpack.c.h.b16 %v2070
    %v2244 = vunpack.c.l.b16 %v2071
    %v2245 = vunpack.c.h.b16 %v2071
    %v2246 = vunpack.c.l.b16 %v2072
    %v2247 = vunpack.c.h.b16 %v2072
    %v2248 = vunpack.c.l.b16 %v2073
    %v2249 = vunpack.c.h.b16 %v2073
    %v2250 = vunpack.c.l.b16 %v2074
    %v2251 = vunpack.c.h.b16 %v2074
    %v2252 = vunpack.c.l.b16 %v2075
    %v2253 = vunpack.c.h.b16 %v2075
    %v2254 = vunpack.c.l.b16 %v2076
    %v2255 = vunpack.c.h.b16 %v2076
    %v2256 = vunpack.c.l.b16 %v2077
    %v2257 = vunpack.c.h.b16 %v2077
    %v2258 = vunpack.c.l.b16 %v2078
    %v2259 = vunpack.c.h.b16 %v2078
    %v2260 = vunpack.c.l.b16 %v2079
    %v2261 = vunpack.c.h.b16 %v2079
    %v2262 = vunpack.c.l.b16 %v2080
    %v2263 = vunpack.c.h.b16 %v2080
    %v2264 = vunpack.c.l.b16 %v2081
    %v2265 = vunpack.c.h.b16 %v2081
    %v2266 = vunpack.c.l.b16 %v2082
    %v2267 = vunpack.c.h.b16 %v2082
    %v2268 = vunpack.c.l.b16 %v2083
    %v2269 = vunpack.c.h.b16 %v2083
    %v2270 = vunpack.c.l.b16 %v2084
    %v2271 = vunpack.c.h.b16 %v2084
    %v2272 = vunpack.c.l.b16 %v2085
    %v2273 = vunpack.c.h.b16 %v2085
    %v2274 = vunpack.c.l.b16 %v2086
    %v2275 = vunpack.c.h.b16 %v2086
    %v2276 = vunpack.c.l.b16 %v2087
    %v2277 = vunpack.c.h.b16 %v2087
    %v2278 = vunpack.c.l.b16 %v2088
    %v2279 = vunpack.c.h.b16 %v2088
    %v2280 = vunpack.c.l.b16 %v2089
    %v2281 = vunpack.c.h.b16 %v2089
    %v2282 = vunpack.c.l.b16 %v2090
    %v2283 = vunpack.c.h.b16 %v2090
    %v2284 = vunpack.c.l.b16 %v2091
    %v2285 = vunpack.c.h.b16 %v2091
    %v2286 = vunpack.c.l.b16 %v2092
    %v2287 = vunpack.c.h.b16 %v2092
    %v2288 = vunpack.c.l.b16 %v2093
    %v2289 = vunpack.c.h.b16 %v2093
    %v2290 = vunpack.c.l.b16 %v2094
    %v2291 = vunpack.c.h.b16 %v2094
    %v2292 = vunpack.c.l.b16 %v2095
    %v2293 = vunpack.c.h.b16 %v2095
    %v2294 = vunpack.c.l.b16 %v2096
    %v2295 = vunpack.c.h.b16 %v2096
    %v2296 = vunpack.c.l.b16 %v2097
    %v2297 = vunpack.c.h.b16 %v2097
    %v2298 = vunpack.c.l.b16 %v2098
    %v2299 = vunpack.c.h.b16 %v2098
    %v2300 = vunpack.c.l.b16 %v2099
    %v2301 = vunpack.c.h.b16 %v2099
    %v2302 = vunpack.c.l.b16 %v2100
    %v2303 = vunpack.c.h.b16 %v2100
    %v2304 = vunpack.c.l.b16 %v2101
    %v2305 = vunpack.c.h.b16 %v2101
    %v2306 = vpack.c.b16 %v2180, %v2178
    %v2307 = vpack.c.b16 %v2181, %v2179
    %v2308 = vpack.c.b16 %v2184, %v2182
    %v2309 = vpack.c.b16 %v2185, %v2183
    %v2310 = vpack.c.b16 %v2188, %v2186
    %v2311 = vpack.c.b16 %v2189, %v2187
    %v2312 = vpack.c.b16 %v2192, %v2190
    %v2313 = vpack.c.b16 %v2193, %v2191
    %v2314 = vpack.c.b16 %v2196, %v2194
    %v2315 = vpack.c.b16 %v2197, %v2195
    %v2316 = vpack.c.b16 %v2200, %v2198
    %v2317 = vpack.c.b16 %v2201, %v2199
    %v2318 = vpack.c.b16 %v2204, %v2202
    %v2319 = vpack.c.b16 %v2205, %v2203
    %v2320 = vpack.c.b16 %v2208, %v2206
    %v2321 = vpack.c.b16 %v2209, %v2207
    %v2322 = vpack.c.b16 %v2212, %v2210
    %v2323 = vpack.c.b16 %v2213, %v2211
    %v2324 = vpack.c.b16 %v2216, %v2214
    %v2325 = vpack.c.b16 %v2217, %v2215
    %v2326 = vpack.c.b16 %v2220, %v2218
    %v2327 = vpack.c.b16 %v2221, %v2219
    %v2328 = vpack.c.b16 %v2224, %v2222
    %v2329 = vpack.c.b16 %v2225, %v2223
    %v2330 = vpack.c.b16 %v2228, %v2226
    %v2331 = vpack.c.b16 %v2229, %v2227
    %v2332 = vpack.c.b16 %v2232, %v2230
    %v2333 = vpack.c.b16 %v2233, %v2231
    %v2334 = vpack.c.b16 %v2236, %v2234
    %v2335 = vpack.c.b16 %v2237, %v2235
    %v2336 = vpack.c.b16 %v2240, %v2238
    %v2337 = vpack.c.b16 %v2241, %v2239
    %v2338 = vpack.c.b16 %v2244, %v2242
    %v2339 = vpack.c.b16 %v2245, %v2243
    %v2340 = vpack.c.b16 %v2248, %v2246
    %v2341 = vpack.c.b16 %v2249, %v2247
    %v2342 = vpack.c.b16 %v2252, %v2250
    %v2343 = vpack.c.b16 %v2253, %v2251
    %v2344 = vpack.c.b16 %v2256, %v2254
    %v2345 = vpack.c.b16 %v2257, %v2255
    %v2346 = vpack.c.b16 %v2260, %v2258
    %v2347 = vpack.c.b16 %v2261, %v2259
    %v2348 = vpack.c.b16 %v2264, %v2262
    %v2349 = vpack.c.b16 %v2265, %v2263
    %v2350 = vpack.c.b16 %v2268, %v2266
    %v2351 = vpack.c.b16 %v2269, %v2267
    %v2352 = vpack.c.b16 %v2272, %v2270
    %v2353 = vpack.c.b16 %v2273, %v2271
    %v2354 = vpack.c.b16 %v2276, %v2274
    %v2355 = vpack.c.b16 %v2277, %v2275
    %v2356 = vpack.c.b16 %v2280, %v2278
    %v2357 = vpack.c.b16 %v2281, %v2279
    %v2358 = vpack.c.b16 %v2284, %v2282
    %v2359 = vpack.c.b16 %v2285, %v2283
    %v2360 = vpack.c.b16 %v2288, %v2286
    %v2361 = vpack.c.b16 %v2289, %v2287
    %v2362 = vpack.c.b16 %v2292, %v2290
    %v2363 = vpack.c.b16 %v2293, %v2291
    %v2364 = vpack.c.b16 %v2296, %v2294
    %v2365 = vpack.c.b16 %v2297, %v2295
    %v2366 = vpack.c.b16 %v2300, %v2298
    %v2367 = vpack.c.b16 %v2301, %v2299
    %v2368 = vpack.c.b16 %v2304, %v2302
    %v2369 = vpack.c.b16 %v2305, %v2303
    %2434 = vmatprep.subr.bf16.mxu0 %v2321
    %2435 = vmatpush1.bf16.msra.mxu0 %v2320
    %2436 = vmatprep.subr.bf16.mxu0 %v2319
    %2437 = vmatpush1.bf16.msra.mxu0 %v2318
    %2438 = vmatprep.subr.bf16.mxu0 %v2317
    %2439 = vmatpush1.bf16.msra.mxu0 %v2316
    %2440 = vmatprep.subr.bf16.mxu0 %v2315
    %2441 = vmatpush1.bf16.msra.mxu0 %v2314
    %2442 = vmatprep.subr.bf16.mxu0 %v2313
    %2443 = vmatpush1.bf16.msra.mxu0 %v2312
    %2444 = vmatprep.subr.bf16.mxu0 %v2311
    %2445 = vmatpush1.bf16.msra.mxu0 %v2310
    %2446 = vmatprep.subr.bf16.mxu0 %v2309
    %2447 = vmatpush1.bf16.msra.mxu0 %v2308
    %2448 = vmatprep.subr.bf16.mxu0 %v2307
    %2449 = vmatpush1.bf16.msra.mxu0 %v2306
    %2450 = vmatprep.subr.bf16.mxu0 %v2337
    %2451 = vmatpush2.bf16.msra.mxu0 %v2336
    %2452 = vmatprep.subr.bf16.mxu0 %v2335
    %2453 = vmatpush2.bf16.msra.mxu0 %v2334
    %2454 = vmatprep.subr.bf16.mxu0 %v2333
    %2455 = vmatpush2.bf16.msra.mxu0 %v2332
    %2456 = vmatprep.subr.bf16.mxu0 %v2331
    %2457 = vmatpush2.bf16.msra.mxu0 %v2330
    %2458 = vmatprep.subr.bf16.mxu0 %v2329
    %2459 = vmatpush2.bf16.msra.mxu0 %v2328
    %2460 = vmatprep.subr.bf16.mxu0 %v2327
    %2461 = vmatpush2.bf16.msra.mxu0 %v2326
    %2462 = vmatprep.subr.bf16.mxu0 %v2325
    %2463 = vmatpush2.bf16.msra.mxu0 %v2324
    %2464 = vmatprep.subr.bf16.mxu0 %v2323
    %2465 = vmatpush2.bf16.msra.mxu0 %v2322
    %2466 = vmatprep.mubr.bf16.mxu0 %v2035
    %2467 = vmatmul.mubr.bf16.gmra.mxu0 %v2034
    %v2468 = vpop.f32.mrf.mxu0
    %v2469 = vadd.f32 %v2107, %v2468
    %v2470 = vpop.f32.mrf.mxu0
    %v2471 = vadd.f32 %v2111, %v2470
    %v2472 = vpop.f32.mrf.mxu0
    %v2473 = vpop.f32.mrf.mxu0
    %2474 = vdwg.mxu0
    %2475 = vmatprep.subr.bf16.mxu0 %v2353
    %2476 = vmatpush1.bf16.msra.mxu0 %v2352
    %2477 = vmatprep.subr.bf16.mxu0 %v2351
    %2478 = vmatpush1.bf16.msra.mxu0 %v2350
    %2479 = vmatprep.subr.bf16.mxu0 %v2349
    %2480 = vmatpush1.bf16.msra.mxu0 %v2348
    %2481 = vmatprep.subr.bf16.mxu0 %v2347
    %2482 = vmatpush1.bf16.msra.mxu0 %v2346
    %2483 = vmatprep.subr.bf16.mxu0 %v2345
    %2484 = vmatpush1.bf16.msra.mxu0 %v2344
    %2485 = vmatprep.subr.bf16.mxu0 %v2343
    %2486 = vmatpush1.bf16.msra.mxu0 %v2342
    %2487 = vmatprep.subr.bf16.mxu0 %v2341
    %2488 = vmatpush1.bf16.msra.mxu0 %v2340
    %2489 = vmatprep.subr.bf16.mxu0 %v2339
    %2490 = vmatpush1.bf16.msra.mxu0 %v2338
    %2491 = vmatprep.subr.bf16.mxu0 %v2369
    %2492 = vmatpush2.bf16.msra.mxu0 %v2368
    %2493 = vmatprep.subr.bf16.mxu0 %v2367
    %2494 = vmatpush2.bf16.msra.mxu0 %v2366
    %2495 = vmatprep.subr.bf16.mxu0 %v2365
    %2496 = vmatpush2.bf16.msra.mxu0 %v2364
    %2497 = vmatprep.subr.bf16.mxu0 %v2363
    %2498 = vmatpush2.bf16.msra.mxu0 %v2362
    %2499 = vmatprep.subr.bf16.mxu0 %v2361
    %2500 = vmatpush2.bf16.msra.mxu0 %v2360
    %2501 = vmatprep.subr.bf16.mxu0 %v2359
    %2502 = vmatpush2.bf16.msra.mxu0 %v2358
    %2503 = vmatprep.subr.bf16.mxu0 %v2357
    %2504 = vmatpush2.bf16.msra.mxu0 %v2356
    %2505 = vmatprep.subr.bf16.mxu0 %v2355
    %2506 = vmatpush2.bf16.msra.mxu0 %v2354
    %2507 = vmatprep.mubr.bf16.mxu0 %v2037
    %2508 = vmatmul.mubr.bf16.gmra.mxu0 %v2036
    %v2509 = vpop.f32.mrf.mxu0
    %v2510 = vadd.f32 %v2469, %v2509
    %v2511 = vpop.f32.mrf.mxu0
    %v2512 = vadd.f32 %v2471, %v2511
    %v2513 = vpop.f32.mrf.mxu0
    %v2514 = vpop.f32.mrf.mxu0
    %2515 = vdwg.mxu0
    %v2516 = vmax.f32 %v2510, 0.0
    %v2517 = vmax.f32 %v2512, 0.0
    %v2518 = vpack.c.bf16 %v2516, %v2516
    %v2519 = vpack.c.bf16 %v2517, %v2517
    %v2520 = vld [vmem:[#allocation9] sm:$0xff]
    %v2521 = vld [vmem:[#allocation9 + $0x8] sm:$0xff]
    %v2522 = vld [vmem:[#allocation9 + $0x10] sm:$0xff]
    %v2523 = vld [vmem:[#allocation9 + $0x18] sm:$0xff]
    %v2524 = vld [vmem:[#allocation9 + $0x20] sm:$0xff]
    %v2525 = vld [vmem:[#allocation9 + $0x28] sm:$0xff]
    %v2526 = vld [vmem:[#allocation9 + $0x30] sm:$0xff]
    %v2527 = vld [vmem:[#allocation9 + $0x38] sm:$0xff]
    %v2528 = vld [vmem:[#allocation9 + $0x40] sm:$0xff]
    %v2529 = vld [vmem:[#allocation9 + $0x48] sm:$0xff]
    %v2530 = vld [vmem:[#allocation9 + $0x50] sm:$0xff]
    %v2531 = vld [vmem:[#allocation9 + $0x58] sm:$0xff]
    %v2532 = vld [vmem:[#allocation9 + $0x60] sm:$0xff]
    %v2533 = vld [vmem:[#allocation9 + $0x68] sm:$0xff]
    %v2534 = vld [vmem:[#allocation9 + $0x70] sm:$0xff]
    %v2535 = vld [vmem:[#allocation9 + $0x78] sm:$0xff]
    %v2536 = vld [vmem:[#allocation9 + $0x80] sm:$0xff]
    %v2537 = vld [vmem:[#allocation9 + $0x88] sm:$0xff]
    %v2538 = vld [vmem:[#allocation9 + $0x90] sm:$0xff]
    %v2539 = vld [vmem:[#allocation9 + $0x98] sm:$0xff]
    %v2540 = vld [vmem:[#allocation9 + $0xa0] sm:$0xff]
    %v2541 = vld [vmem:[#allocation9 + $0xa8] sm:$0xff]
    %v2542 = vld [vmem:[#allocation9 + $0xb0] sm:$0xff]
    %v2543 = vld [vmem:[#allocation9 + $0xb8] sm:$0xff]
    %v2544 = vld [vmem:[#allocation9 + $0xc0] sm:$0xff]
    %v2545 = vld [vmem:[#allocation9 + $0xc8] sm:$0xff]
    %v2546 = vld [vmem:[#allocation9 + $0xd0] sm:$0xff]
    %v2547 = vld [vmem:[#allocation9 + $0xd8] sm:$0xff]
    %v2548 = vld [vmem:[#allocation9 + $0xe0] sm:$0xff]
    %v2549 = vld [vmem:[#allocation9 + $0xe8] sm:$0xff]
    %v2550 = vld [vmem:[#allocation9 + $0xf0] sm:$0xff]
    %v2551 = vld [vmem:[#allocation9 + $0xf8] sm:$0xff]
    %v2552 = vld [vmem:[#allocation9 + $0x100] sm:$0xff]
    %v2553 = vld [vmem:[#allocation9 + $0x108] sm:$0xff]
    %v2554 = vld [vmem:[#allocation9 + $0x110] sm:$0xff]
    %v2555 = vld [vmem:[#allocation9 + $0x118] sm:$0xff]
    %v2556 = vld [vmem:[#allocation9 + $0x120] sm:$0xff]
    %v2557 = vld [vmem:[#allocation9 + $0x128] sm:$0xff]
    %v2558 = vld [vmem:[#allocation9 + $0x130] sm:$0xff]
    %v2559 = vld [vmem:[#allocation9 + $0x138] sm:$0xff]
    %v2560 = vld [vmem:[#allocation9 + $0x140] sm:$0xff]
    %v2561 = vld [vmem:[#allocation9 + $0x148] sm:$0xff]
    %v2562 = vld [vmem:[#allocation9 + $0x150] sm:$0xff]
    %v2563 = vld [vmem:[#allocation9 + $0x158] sm:$0xff]
    %v2564 = vld [vmem:[#allocation9 + $0x160] sm:$0xff]
    %v2565 = vld [vmem:[#allocation9 + $0x168] sm:$0xff]
    %v2566 = vld [vmem:[#allocation9 + $0x170] sm:$0xff]
    %v2567 = vld [vmem:[#allocation9 + $0x178] sm:$0xff]
    %v2568 = vld [vmem:[#allocation9 + $0x180] sm:$0xff]
    %v2569 = vld [vmem:[#allocation9 + $0x188] sm:$0xff]
    %v2570 = vld [vmem:[#allocation9 + $0x190] sm:$0xff]
    %v2571 = vld [vmem:[#allocation9 + $0x198] sm:$0xff]
    %v2572 = vld [vmem:[#allocation9 + $0x1a0] sm:$0xff]
    %v2573 = vld [vmem:[#allocation9 + $0x1a8] sm:$0xff]
    %v2574 = vld [vmem:[#allocation9 + $0x1b0] sm:$0xff]
    %v2575 = vld [vmem:[#allocation9 + $0x1b8] sm:$0xff]
    %v2576 = vld [vmem:[#allocation9 + $0x1c0] sm:$0xff]
    %v2577 = vld [vmem:[#allocation9 + $0x1c8] sm:$0xff]
    %v2578 = vld [vmem:[#allocation9 + $0x1d0] sm:$0xff]
    %v2579 = vld [vmem:[#allocation9 + $0x1d8] sm:$0xff]
    %v2580 = vld [vmem:[#allocation9 + $0x1e0] sm:$0xff]
    %v2581 = vld [vmem:[#allocation9 + $0x1e8] sm:$0xff]
    %v2582 = vld [vmem:[#allocation9 + $0x1f0] sm:$0xff]
    %v2583 = vld [vmem:[#allocation9 + $0x1f8] sm:$0xff]
    %v2584 = vld [vmem:[#allocation9 + $0x200] sm:$0xff]
    %v2585 = vld [vmem:[#allocation9 + $0x208] sm:$0xff]
    %v2586 = vld [vmem:[#allocation9 + $0x210] sm:$0xff]
    %v2587 = vld [vmem:[#allocation9 + $0x218] sm:$0xff]
    %v2588 = vld [vmem:[#allocation9 + $0x220] sm:$0xff]
    %v2589 = vld [vmem:[#allocation9 + $0x228] sm:$0xff]
    %v2590 = vld [vmem:[#allocation9 + $0x230] sm:$0xff]
    %v2591 = vld [vmem:[#allocation9 + $0x238] sm:$0xff]
    %v2592 = vld [vmem:[#allocation9 + $0x240] sm:$0xff]
    %v2593 = vld [vmem:[#allocation9 + $0x248] sm:$0xff]
    %v2594 = vld [vmem:[#allocation9 + $0x250] sm:$0xff]
    %v2595 = vld [vmem:[#allocation9 + $0x258] sm:$0xff]
    %v2596 = vld [vmem:[#allocation9 + $0x260] sm:$0xff]
    %v2597 = vld [vmem:[#allocation9 + $0x268] sm:$0xff]
    %v2598 = vld [vmem:[#allocation9 + $0x270] sm:$0xff]
    %v2599 = vld [vmem:[#allocation9 + $0x278] sm:$0xff]
    %v2600 = vld [vmem:[#allocation9 + $0x280] sm:$0xff]
    %v2601 = vld [vmem:[#allocation9 + $0x288] sm:$0xff]
    %v2602 = vld [vmem:[#allocation9 + $0x290] sm:$0xff]
    %v2603 = vld [vmem:[#allocation9 + $0x298] sm:$0xff]
    %v2604 = vld [vmem:[#allocation9 + $0x2a0] sm:$0xff]
    %v2605 = vld [vmem:[#allocation9 + $0x2a8] sm:$0xff]
    %v2606 = vld [vmem:[#allocation9 + $0x2b0] sm:$0xff]
    %v2607 = vld [vmem:[#allocation9 + $0x2b8] sm:$0xff]
    %v2608 = vld [vmem:[#allocation9 + $0x2c0] sm:$0xff]
    %v2609 = vld [vmem:[#allocation9 + $0x2c8] sm:$0xff]
    %v2610 = vld [vmem:[#allocation9 + $0x2d0] sm:$0xff]
    %v2611 = vld [vmem:[#allocation9 + $0x2d8] sm:$0xff]
    %v2612 = vld [vmem:[#allocation9 + $0x2e0] sm:$0xff]
    %v2613 = vld [vmem:[#allocation9 + $0x2e8] sm:$0xff]
    %v2614 = vld [vmem:[#allocation9 + $0x2f0] sm:$0xff]
    %v2615 = vld [vmem:[#allocation9 + $0x2f8] sm:$0xff]
    %v2616 = vld [vmem:[#allocation9 + $0x300] sm:$0xff]
    %v2617 = vld [vmem:[#allocation9 + $0x308] sm:$0xff]
    %v2618 = vld [vmem:[#allocation9 + $0x310] sm:$0xff]
    %v2619 = vld [vmem:[#allocation9 + $0x318] sm:$0xff]
    %v2620 = vld [vmem:[#allocation9 + $0x320] sm:$0xff]
    %v2621 = vld [vmem:[#allocation9 + $0x328] sm:$0xff]
    %v2622 = vld [vmem:[#allocation9 + $0x330] sm:$0xff]
    %v2623 = vld [vmem:[#allocation9 + $0x338] sm:$0xff]
    %v2624 = vld [vmem:[#allocation9 + $0x340] sm:$0xff]
    %v2625 = vld [vmem:[#allocation9 + $0x348] sm:$0xff]
    %v2626 = vld [vmem:[#allocation9 + $0x350] sm:$0xff]
    %v2627 = vld [vmem:[#allocation9 + $0x358] sm:$0xff]
    %v2628 = vld [vmem:[#allocation9 + $0x360] sm:$0xff]
    %v2629 = vld [vmem:[#allocation9 + $0x368] sm:$0xff]
    %v2630 = vld [vmem:[#allocation9 + $0x370] sm:$0xff]
    %v2631 = vld [vmem:[#allocation9 + $0x378] sm:$0xff]
    %v2632 = vld [vmem:[#allocation9 + $0x380] sm:$0xff]
    %v2633 = vld [vmem:[#allocation9 + $0x388] sm:$0xff]
    %v2634 = vld [vmem:[#allocation9 + $0x390] sm:$0xff]
    %v2635 = vld [vmem:[#allocation9 + $0x398] sm:$0xff]
    %v2636 = vld [vmem:[#allocation9 + $0x3a0] sm:$0xff]
    %v2637 = vld [vmem:[#allocation9 + $0x3a8] sm:$0xff]
    %v2638 = vld [vmem:[#allocation9 + $0x3b0] sm:$0xff]
    %v2639 = vld [vmem:[#allocation9 + $0x3b8] sm:$0xff]
    %v2640 = vld [vmem:[#allocation9 + $0x3c0] sm:$0xff]
    %v2641 = vld [vmem:[#allocation9 + $0x3c8] sm:$0xff]
    %v2642 = vld [vmem:[#allocation9 + $0x3d0] sm:$0xff]
    %v2643 = vld [vmem:[#allocation9 + $0x3d8] sm:$0xff]
    %v2644 = vld [vmem:[#allocation9 + $0x3e0] sm:$0xff]
    %v2645 = vld [vmem:[#allocation9 + $0x3e8] sm:$0xff]
    %v2646 = vld [vmem:[#allocation9 + $0x3f0] sm:$0xff]
    %v2647 = vld [vmem:[#allocation9 + $0x3f8] sm:$0xff]
    %v2648 = vld [vmem:[#allocation9 + $0x400] sm:$0xff]
    %v2649 = vld [vmem:[#allocation9 + $0x408] sm:$0xff]
    %v2650 = vld [vmem:[#allocation9 + $0x410] sm:$0xff]
    %v2651 = vld [vmem:[#allocation9 + $0x418] sm:$0xff]
    %v2652 = vld [vmem:[#allocation9 + $0x420] sm:$0xff]
    %v2653 = vld [vmem:[#allocation9 + $0x428] sm:$0xff]
    %v2654 = vld [vmem:[#allocation9 + $0x430] sm:$0xff]
    %v2655 = vld [vmem:[#allocation9 + $0x438] sm:$0xff]
    %v2656 = vld [vmem:[#allocation9 + $0x440] sm:$0xff]
    %v2657 = vld [vmem:[#allocation9 + $0x448] sm:$0xff]
    %v2658 = vld [vmem:[#allocation9 + $0x450] sm:$0xff]
    %v2659 = vld [vmem:[#allocation9 + $0x458] sm:$0xff]
    %v2660 = vld [vmem:[#allocation9 + $0x460] sm:$0xff]
    %v2661 = vld [vmem:[#allocation9 + $0x468] sm:$0xff]
    %v2662 = vld [vmem:[#allocation9 + $0x470] sm:$0xff]
    %v2663 = vld [vmem:[#allocation9 + $0x478] sm:$0xff]
    %v2664 = vld [vmem:[#allocation9 + $0x480] sm:$0xff]
    %v2665 = vld [vmem:[#allocation9 + $0x488] sm:$0xff]
    %v2666 = vld [vmem:[#allocation9 + $0x490] sm:$0xff]
    %v2667 = vld [vmem:[#allocation9 + $0x498] sm:$0xff]
    %v2668 = vld [vmem:[#allocation9 + $0x4a0] sm:$0xff]
    %v2669 = vld [vmem:[#allocation9 + $0x4a8] sm:$0xff]
    %v2670 = vld [vmem:[#allocation9 + $0x4b0] sm:$0xff]
    %v2671 = vld [vmem:[#allocation9 + $0x4b8] sm:$0xff]
    %v2672 = vld [vmem:[#allocation9 + $0x4c0] sm:$0xff]
    %v2673 = vld [vmem:[#allocation9 + $0x4c8] sm:$0xff]
    %v2674 = vld [vmem:[#allocation9 + $0x4d0] sm:$0xff]
    %v2675 = vld [vmem:[#allocation9 + $0x4d8] sm:$0xff]
    %v2676 = vld [vmem:[#allocation9 + $0x4e0] sm:$0xff]
    %v2677 = vld [vmem:[#allocation9 + $0x4e8] sm:$0xff]
    %v2678 = vld [vmem:[#allocation9 + $0x4f0] sm:$0xff]
    %v2679 = vld [vmem:[#allocation9 + $0x4f8] sm:$0xff]
    %v2680 = vld [vmem:[#allocation9 + $0x500] sm:$0xff]
    %v2681 = vld [vmem:[#allocation9 + $0x508] sm:$0xff]
    %v2682 = vld [vmem:[#allocation9 + $0x510] sm:$0xff]
    %v2683 = vld [vmem:[#allocation9 + $0x518] sm:$0xff]
    %v2684 = vld [vmem:[#allocation9 + $0x520] sm:$0xff]
    %v2685 = vld [vmem:[#allocation9 + $0x528] sm:$0xff]
    %v2686 = vld [vmem:[#allocation9 + $0x530] sm:$0xff]
    %v2687 = vld [vmem:[#allocation9 + $0x538] sm:$0xff]
    %v2688 = vld [vmem:[#allocation9 + $0x540] sm:$0xff]
    %v2689 = vld [vmem:[#allocation9 + $0x548] sm:$0xff]
    %v2690 = vld [vmem:[#allocation9 + $0x550] sm:$0xff]
    %v2691 = vld [vmem:[#allocation9 + $0x558] sm:$0xff]
    %v2692 = vld [vmem:[#allocation9 + $0x560] sm:$0xff]
    %v2693 = vld [vmem:[#allocation9 + $0x568] sm:$0xff]
    %v2694 = vld [vmem:[#allocation9 + $0x570] sm:$0xff]
    %v2695 = vld [vmem:[#allocation9 + $0x578] sm:$0xff]
    %v2696 = vld [vmem:[#allocation9 + $0x580] sm:$0xff]
    %v2697 = vld [vmem:[#allocation9 + $0x588] sm:$0xff]
    %v2698 = vld [vmem:[#allocation9 + $0x590] sm:$0xff]
    %v2699 = vld [vmem:[#allocation9 + $0x598] sm:$0xff]
    %v2700 = vld [vmem:[#allocation9 + $0x5a0] sm:$0xff]
    %v2701 = vld [vmem:[#allocation9 + $0x5a8] sm:$0xff]
    %v2702 = vld [vmem:[#allocation9 + $0x5b0] sm:$0xff]
    %v2703 = vld [vmem:[#allocation9 + $0x5b8] sm:$0xff]
    %v2704 = vld [vmem:[#allocation9 + $0x5c0] sm:$0xff]
    %v2705 = vld [vmem:[#allocation9 + $0x5c8] sm:$0xff]
    %v2706 = vld [vmem:[#allocation9 + $0x5d0] sm:$0xff]
    %v2707 = vld [vmem:[#allocation9 + $0x5d8] sm:$0xff]
    %v2708 = vld [vmem:[#allocation9 + $0x5e0] sm:$0xff]
    %v2709 = vld [vmem:[#allocation9 + $0x5e8] sm:$0xff]
    %v2710 = vld [vmem:[#allocation9 + $0x5f0] sm:$0xff]
    %v2711 = vld [vmem:[#allocation9 + $0x5f8] sm:$0xff]
    %v2712 = vld [vmem:[#allocation9 + $0x600] sm:$0xff]
    %v2713 = vld [vmem:[#allocation9 + $0x608] sm:$0xff]
    %v2714 = vld [vmem:[#allocation9 + $0x610] sm:$0xff]
    %v2715 = vld [vmem:[#allocation9 + $0x618] sm:$0xff]
    %v2716 = vld [vmem:[#allocation9 + $0x620] sm:$0xff]
    %v2717 = vld [vmem:[#allocation9 + $0x628] sm:$0xff]
    %v2718 = vld [vmem:[#allocation9 + $0x630] sm:$0xff]
    %v2719 = vld [vmem:[#allocation9 + $0x638] sm:$0xff]
    %v2720 = vld [vmem:[#allocation9 + $0x640] sm:$0xff]
    %v2721 = vld [vmem:[#allocation9 + $0x648] sm:$0xff]
    %v2722 = vld [vmem:[#allocation9 + $0x650] sm:$0xff]
    %v2723 = vld [vmem:[#allocation9 + $0x658] sm:$0xff]
    %v2724 = vld [vmem:[#allocation9 + $0x660] sm:$0xff]
    %v2725 = vld [vmem:[#allocation9 + $0x668] sm:$0xff]
    %v2726 = vld [vmem:[#allocation9 + $0x670] sm:$0xff]
    %v2727 = vld [vmem:[#allocation9 + $0x678] sm:$0xff]
    %v2728 = vld [vmem:[#allocation9 + $0x680] sm:$0xff]
    %v2729 = vld [vmem:[#allocation9 + $0x688] sm:$0xff]
    %v2730 = vld [vmem:[#allocation9 + $0x690] sm:$0xff]
    %v2731 = vld [vmem:[#allocation9 + $0x698] sm:$0xff]
    %v2732 = vld [vmem:[#allocation9 + $0x6a0] sm:$0xff]
    %v2733 = vld [vmem:[#allocation9 + $0x6a8] sm:$0xff]
    %v2734 = vld [vmem:[#allocation9 + $0x6b0] sm:$0xff]
    %v2735 = vld [vmem:[#allocation9 + $0x6b8] sm:$0xff]
    %v2736 = vld [vmem:[#allocation9 + $0x6c0] sm:$0xff]
    %v2737 = vld [vmem:[#allocation9 + $0x6c8] sm:$0xff]
    %v2738 = vld [vmem:[#allocation9 + $0x6d0] sm:$0xff]
    %v2739 = vld [vmem:[#allocation9 + $0x6d8] sm:$0xff]
    %v2740 = vld [vmem:[#allocation9 + $0x6e0] sm:$0xff]
    %v2741 = vld [vmem:[#allocation9 + $0x6e8] sm:$0xff]
    %v2742 = vld [vmem:[#allocation9 + $0x6f0] sm:$0xff]
    %v2743 = vld [vmem:[#allocation9 + $0x6f8] sm:$0xff]
    %v2744 = vld [vmem:[#allocation9 + $0x700] sm:$0xff]
    %v2745 = vld [vmem:[#allocation9 + $0x708] sm:$0xff]
    %v2746 = vld [vmem:[#allocation9 + $0x710] sm:$0xff]
    %v2747 = vld [vmem:[#allocation9 + $0x718] sm:$0xff]
    %v2748 = vld [vmem:[#allocation9 + $0x720] sm:$0xff]
    %v2749 = vld [vmem:[#allocation9 + $0x728] sm:$0xff]
    %v2750 = vld [vmem:[#allocation9 + $0x730] sm:$0xff]
    %v2751 = vld [vmem:[#allocation9 + $0x738] sm:$0xff]
    %v2752 = vld [vmem:[#allocation9 + $0x740] sm:$0xff]
    %v2753 = vld [vmem:[#allocation9 + $0x748] sm:$0xff]
    %v2754 = vld [vmem:[#allocation9 + $0x750] sm:$0xff]
    %v2755 = vld [vmem:[#allocation9 + $0x758] sm:$0xff]
    %v2756 = vld [vmem:[#allocation9 + $0x760] sm:$0xff]
    %v2757 = vld [vmem:[#allocation9 + $0x768] sm:$0xff]
    %v2758 = vld [vmem:[#allocation9 + $0x770] sm:$0xff]
    %v2759 = vld [vmem:[#allocation9 + $0x778] sm:$0xff]
    %v2760 = vld [vmem:[#allocation9 + $0x780] sm:$0xff]
    %v2761 = vld [vmem:[#allocation9 + $0x788] sm:$0xff]
    %v2762 = vld [vmem:[#allocation9 + $0x790] sm:$0xff]
    %v2763 = vld [vmem:[#allocation9 + $0x798] sm:$0xff]
    %v2764 = vld [vmem:[#allocation9 + $0x7a0] sm:$0xff]
    %v2765 = vld [vmem:[#allocation9 + $0x7a8] sm:$0xff]
    %v2766 = vld [vmem:[#allocation9 + $0x7b0] sm:$0xff]
    %v2767 = vld [vmem:[#allocation9 + $0x7b8] sm:$0xff]
    %v2768 = vld [vmem:[#allocation9 + $0x7c0] sm:$0xff]
    %v2769 = vld [vmem:[#allocation9 + $0x7c8] sm:$0xff]
    %v2770 = vld [vmem:[#allocation9 + $0x7d0] sm:$0xff]
    %v2771 = vld [vmem:[#allocation9 + $0x7d8] sm:$0xff]
    %v2772 = vld [vmem:[#allocation9 + $0x7e0] sm:$0xff]
    %v2773 = vld [vmem:[#allocation9 + $0x7e8] sm:$0xff]
    %v2774 = vld [vmem:[#allocation9 + $0x7f0] sm:$0xff]
    %v2775 = vld [vmem:[#allocation9 + $0x7f8] sm:$0xff]
    %v2776 = vld [vmem:[#allocation9 + $0x800] sm:$0xff]
    %v2777 = vld [vmem:[#allocation9 + $0x808] sm:$0xff]
    %v2778 = vld [vmem:[#allocation9 + $0x810] sm:$0xff]
    %v2779 = vld [vmem:[#allocation9 + $0x818] sm:$0xff]
    %v2780 = vld [vmem:[#allocation9 + $0x820] sm:$0xff]
    %v2781 = vld [vmem:[#allocation9 + $0x828] sm:$0xff]
    %v2782 = vld [vmem:[#allocation9 + $0x830] sm:$0xff]
    %v2783 = vld [vmem:[#allocation9 + $0x838] sm:$0xff]
    %v2784 = vld [vmem:[#allocation9 + $0x840] sm:$0xff]
    %v2785 = vld [vmem:[#allocation9 + $0x848] sm:$0xff]
    %v2786 = vld [vmem:[#allocation9 + $0x850] sm:$0xff]
    %v2787 = vld [vmem:[#allocation9 + $0x858] sm:$0xff]
    %v2788 = vld [vmem:[#allocation9 + $0x860] sm:$0xff]
    %v2789 = vld [vmem:[#allocation9 + $0x868] sm:$0xff]
    %v2790 = vld [vmem:[#allocation9 + $0x870] sm:$0xff]
    %v2791 = vld [vmem:[#allocation9 + $0x878] sm:$0xff]
    %v2792 = vld [vmem:[#allocation9 + $0x880] sm:$0xff]
    %v2793 = vld [vmem:[#allocation9 + $0x888] sm:$0xff]
    %v2794 = vld [vmem:[#allocation9 + $0x890] sm:$0xff]
    %v2795 = vld [vmem:[#allocation9 + $0x898] sm:$0xff]
    %v2796 = vld [vmem:[#allocation9 + $0x8a0] sm:$0xff]
    %v2797 = vld [vmem:[#allocation9 + $0x8a8] sm:$0xff]
    %v2798 = vld [vmem:[#allocation9 + $0x8b0] sm:$0xff]
    %v2799 = vld [vmem:[#allocation9 + $0x8b8] sm:$0xff]
    %v2800 = vld [vmem:[#allocation9 + $0x8c0] sm:$0xff]
    %v2801 = vld [vmem:[#allocation9 + $0x8c8] sm:$0xff]
    %v2802 = vld [vmem:[#allocation9 + $0x8d0] sm:$0xff]
    %v2803 = vld [vmem:[#allocation9 + $0x8d8] sm:$0xff]
    %v2804 = vld [vmem:[#allocation9 + $0x8e0] sm:$0xff]
    %v2805 = vld [vmem:[#allocation9 + $0x8e8] sm:$0xff]
    %v2806 = vld [vmem:[#allocation9 + $0x8f0] sm:$0xff]
    %v2807 = vld [vmem:[#allocation9 + $0x8f8] sm:$0xff]
    %v2808 = vld [vmem:[#allocation9 + $0x900] sm:$0xff]
    %v2809 = vld [vmem:[#allocation9 + $0x908] sm:$0xff]
    %v2810 = vld [vmem:[#allocation9 + $0x910] sm:$0xff]
    %v2811 = vld [vmem:[#allocation9 + $0x918] sm:$0xff]
    %v2812 = vld [vmem:[#allocation9 + $0x920] sm:$0xff]
    %v2813 = vld [vmem:[#allocation9 + $0x928] sm:$0xff]
    %v2814 = vld [vmem:[#allocation9 + $0x930] sm:$0xff]
    %v2815 = vld [vmem:[#allocation9 + $0x938] sm:$0xff]
    %v2816 = vld [vmem:[#allocation9 + $0x940] sm:$0xff]
    %v2817 = vld [vmem:[#allocation9 + $0x948] sm:$0xff]
    %v2818 = vld [vmem:[#allocation9 + $0x950] sm:$0xff]
    %v2819 = vld [vmem:[#allocation9 + $0x958] sm:$0xff]
    %v2820 = vld [vmem:[#allocation9 + $0x960] sm:$0xff]
    %v2821 = vld [vmem:[#allocation9 + $0x968] sm:$0xff]
    %v2822 = vld [vmem:[#allocation9 + $0x970] sm:$0xff]
    %v2823 = vld [vmem:[#allocation9 + $0x978] sm:$0xff]
    %v2824 = vld [vmem:[#allocation9 + $0x980] sm:$0xff]
    %v2825 = vld [vmem:[#allocation9 + $0x988] sm:$0xff]
    %v2826 = vld [vmem:[#allocation9 + $0x990] sm:$0xff]
    %v2827 = vld [vmem:[#allocation9 + $0x998] sm:$0xff]
    %v2828 = vld [vmem:[#allocation9 + $0x9a0] sm:$0xff]
    %v2829 = vld [vmem:[#allocation9 + $0x9a8] sm:$0xff]
    %v2830 = vld [vmem:[#allocation9 + $0x9b0] sm:$0xff]
    %v2831 = vld [vmem:[#allocation9 + $0x9b8] sm:$0xff]
    %v2832 = vld [vmem:[#allocation9 + $0x9c0] sm:$0xff]
    %v2833 = vld [vmem:[#allocation9 + $0x9c8] sm:$0xff]
    %v2834 = vld [vmem:[#allocation9 + $0x9d0] sm:$0xff]
    %v2835 = vld [vmem:[#allocation9 + $0x9d8] sm:$0xff]
    %v2836 = vld [vmem:[#allocation9 + $0x9e0] sm:$0xff]
    %v2837 = vld [vmem:[#allocation9 + $0x9e8] sm:$0xff]
    %v2838 = vld [vmem:[#allocation9 + $0x9f0] sm:$0xff]
    %v2839 = vld [vmem:[#allocation9 + $0x9f8] sm:$0xff]
    %v2840 = vld [vmem:[#allocation9 + $0xa00] sm:$0xff]
    %v2841 = vld [vmem:[#allocation9 + $0xa08] sm:$0xff]
    %v2842 = vld [vmem:[#allocation9 + $0xa10] sm:$0xff]
    %v2843 = vld [vmem:[#allocation9 + $0xa18] sm:$0xff]
    %v2844 = vld [vmem:[#allocation9 + $0xa20] sm:$0xff]
    %v2845 = vld [vmem:[#allocation9 + $0xa28] sm:$0xff]
    %v2846 = vld [vmem:[#allocation9 + $0xa30] sm:$0xff]
    %v2847 = vld [vmem:[#allocation9 + $0xa38] sm:$0xff]
    %v2848 = vld [vmem:[#allocation9 + $0xa40] sm:$0xff]
    %v2849 = vld [vmem:[#allocation9 + $0xa48] sm:$0xff]
    %v2850 = vld [vmem:[#allocation9 + $0xa50] sm:$0xff]
    %v2851 = vld [vmem:[#allocation9 + $0xa58] sm:$0xff]
    %v2852 = vld [vmem:[#allocation9 + $0xa60] sm:$0xff]
    %v2853 = vld [vmem:[#allocation9 + $0xa68] sm:$0xff]
    %v2854 = vld [vmem:[#allocation9 + $0xa70] sm:$0xff]
    %v2855 = vld [vmem:[#allocation9 + $0xa78] sm:$0xff]
    %v2856 = vld [vmem:[#allocation9 + $0xa80] sm:$0xff]
    %v2857 = vld [vmem:[#allocation9 + $0xa88] sm:$0xff]
    %v2858 = vld [vmem:[#allocation9 + $0xa90] sm:$0xff]
    %v2859 = vld [vmem:[#allocation9 + $0xa98] sm:$0xff]
    %v2860 = vld [vmem:[#allocation9 + $0xaa0] sm:$0xff]
    %v2861 = vld [vmem:[#allocation9 + $0xaa8] sm:$0xff]
    %v2862 = vld [vmem:[#allocation9 + $0xab0] sm:$0xff]
    %v2863 = vld [vmem:[#allocation9 + $0xab8] sm:$0xff]
    %v2864 = vld [vmem:[#allocation9 + $0xac0] sm:$0xff]
    %v2865 = vld [vmem:[#allocation9 + $0xac8] sm:$0xff]
    %v2866 = vld [vmem:[#allocation9 + $0xad0] sm:$0xff]
    %v2867 = vld [vmem:[#allocation9 + $0xad8] sm:$0xff]
    %v2868 = vld [vmem:[#allocation9 + $0xae0] sm:$0xff]
    %v2869 = vld [vmem:[#allocation9 + $0xae8] sm:$0xff]
    %v2870 = vld [vmem:[#allocation9 + $0xaf0] sm:$0xff]
    %v2871 = vld [vmem:[#allocation9 + $0xaf8] sm:$0xff]
    %v2872 = vld [vmem:[#allocation9 + $0xb00] sm:$0xff]
    %v2873 = vld [vmem:[#allocation9 + $0xb08] sm:$0xff]
    %v2874 = vld [vmem:[#allocation9 + $0xb10] sm:$0xff]
    %v2875 = vld [vmem:[#allocation9 + $0xb18] sm:$0xff]
    %v2876 = vld [vmem:[#allocation9 + $0xb20] sm:$0xff]
    %v2877 = vld [vmem:[#allocation9 + $0xb28] sm:$0xff]
    %v2878 = vld [vmem:[#allocation9 + $0xb30] sm:$0xff]
    %v2879 = vld [vmem:[#allocation9 + $0xb38] sm:$0xff]
    %v2880 = vld [vmem:[#allocation9 + $0xb40] sm:$0xff]
    %v2881 = vld [vmem:[#allocation9 + $0xb48] sm:$0xff]
    %v2882 = vld [vmem:[#allocation9 + $0xb50] sm:$0xff]
    %v2883 = vld [vmem:[#allocation9 + $0xb58] sm:$0xff]
    %v2884 = vld [vmem:[#allocation9 + $0xb60] sm:$0xff]
    %v2885 = vld [vmem:[#allocation9 + $0xb68] sm:$0xff]
    %v2886 = vld [vmem:[#allocation9 + $0xb70] sm:$0xff]
    %v2887 = vld [vmem:[#allocation9 + $0xb78] sm:$0xff]
    %v2888 = vld [vmem:[#allocation9 + $0xb80] sm:$0xff]
    %v2889 = vld [vmem:[#allocation9 + $0xb88] sm:$0xff]
    %v2890 = vld [vmem:[#allocation9 + $0xb90] sm:$0xff]
    %v2891 = vld [vmem:[#allocation9 + $0xb98] sm:$0xff]
    %v2892 = vld [vmem:[#allocation9 + $0xba0] sm:$0xff]
    %v2893 = vld [vmem:[#allocation9 + $0xba8] sm:$0xff]
    %v2894 = vld [vmem:[#allocation9 + $0xbb0] sm:$0xff]
    %v2895 = vld [vmem:[#allocation9 + $0xbb8] sm:$0xff]
    %v2896 = vld [vmem:[#allocation9 + $0xbc0] sm:$0xff]
    %v2897 = vld [vmem:[#allocation9 + $0xbc8] sm:$0xff]
    %v2898 = vld [vmem:[#allocation9 + $0xbd0] sm:$0xff]
    %v2899 = vld [vmem:[#allocation9 + $0xbd8] sm:$0xff]
    %v2900 = vld [vmem:[#allocation9 + $0xbe0] sm:$0xff]
    %v2901 = vld [vmem:[#allocation9 + $0xbe8] sm:$0xff]
    %v2902 = vld [vmem:[#allocation9 + $0xbf0] sm:$0xff]
    %v2903 = vld [vmem:[#allocation9 + $0xbf8] sm:$0xff]
    %v2904 = vld [vmem:[#allocation9 + $0xc00] sm:$0xff]
    %v2905 = vld [vmem:[#allocation9 + $0xc08] sm:$0xff]
    %v2906 = vld [vmem:[#allocation9 + $0xc10] sm:$0xff]
    %v2907 = vld [vmem:[#allocation9 + $0xc18] sm:$0xff]
    %v2908 = vld [vmem:[#allocation9 + $0xc20] sm:$0xff]
    %v2909 = vld [vmem:[#allocation9 + $0xc28] sm:$0xff]
    %v2910 = vld [vmem:[#allocation9 + $0xc30] sm:$0xff]
    %v2911 = vld [vmem:[#allocation9 + $0xc38] sm:$0xff]
    %v2912 = vld [vmem:[#allocation9 + $0xc40] sm:$0xff]
    %v2913 = vld [vmem:[#allocation9 + $0xc48] sm:$0xff]
    %v2914 = vld [vmem:[#allocation9 + $0xc50] sm:$0xff]
    %v2915 = vld [vmem:[#allocation9 + $0xc58] sm:$0xff]
    %v2916 = vld [vmem:[#allocation9 + $0xc60] sm:$0xff]
    %v2917 = vld [vmem:[#allocation9 + $0xc68] sm:$0xff]
    %v2918 = vld [vmem:[#allocation9 + $0xc70] sm:$0xff]
    %v2919 = vld [vmem:[#allocation9 + $0xc78] sm:$0xff]
    %v2920 = vld [vmem:[#allocation9 + $0xc80] sm:$0xff]
    %v2921 = vld [vmem:[#allocation9 + $0xc88] sm:$0xff]
    %v2922 = vld [vmem:[#allocation9 + $0xc90] sm:$0xff]
    %v2923 = vld [vmem:[#allocation9 + $0xc98] sm:$0xff]
    %v2924 = vld [vmem:[#allocation9 + $0xca0] sm:$0xff]
    %v2925 = vld [vmem:[#allocation9 + $0xca8] sm:$0xff]
    %v2926 = vld [vmem:[#allocation9 + $0xcb0] sm:$0xff]
    %v2927 = vld [vmem:[#allocation9 + $0xcb8] sm:$0xff]
    %v2928 = vld [vmem:[#allocation9 + $0xcc0] sm:$0xff]
    %v2929 = vld [vmem:[#allocation9 + $0xcc8] sm:$0xff]
    %v2930 = vld [vmem:[#allocation9 + $0xcd0] sm:$0xff]
    %v2931 = vld [vmem:[#allocation9 + $0xcd8] sm:$0xff]
    %v2932 = vld [vmem:[#allocation9 + $0xce0] sm:$0xff]
    %v2933 = vld [vmem:[#allocation9 + $0xce8] sm:$0xff]
    %v2934 = vld [vmem:[#allocation9 + $0xcf0] sm:$0xff]
    %v2935 = vld [vmem:[#allocation9 + $0xcf8] sm:$0xff]
    %v2936 = vld [vmem:[#allocation9 + $0xd00] sm:$0xff]
    %v2937 = vld [vmem:[#allocation9 + $0xd08] sm:$0xff]
    %v2938 = vld [vmem:[#allocation9 + $0xd10] sm:$0xff]
    %v2939 = vld [vmem:[#allocation9 + $0xd18] sm:$0xff]
    %v2940 = vld [vmem:[#allocation9 + $0xd20] sm:$0xff]
    %v2941 = vld [vmem:[#allocation9 + $0xd28] sm:$0xff]
    %v2942 = vld [vmem:[#allocation9 + $0xd30] sm:$0xff]
    %v2943 = vld [vmem:[#allocation9 + $0xd38] sm:$0xff]
    %v2944 = vld [vmem:[#allocation9 + $0xd40] sm:$0xff]
    %v2945 = vld [vmem:[#allocation9 + $0xd48] sm:$0xff]
    %v2946 = vld [vmem:[#allocation9 + $0xd50] sm:$0xff]
    %v2947 = vld [vmem:[#allocation9 + $0xd58] sm:$0xff]
    %v2948 = vld [vmem:[#allocation9 + $0xd60] sm:$0xff]
    %v2949 = vld [vmem:[#allocation9 + $0xd68] sm:$0xff]
    %v2950 = vld [vmem:[#allocation9 + $0xd70] sm:$0xff]
    %v2951 = vld [vmem:[#allocation9 + $0xd78] sm:$0xff]
    %v2952 = vld [vmem:[#allocation9 + $0xd80] sm:$0xff]
    %v2953 = vld [vmem:[#allocation9 + $0xd88] sm:$0xff]
    %v2954 = vld [vmem:[#allocation9 + $0xd90] sm:$0xff]
    %v2955 = vld [vmem:[#allocation9 + $0xd98] sm:$0xff]
    %v2956 = vld [vmem:[#allocation9 + $0xda0] sm:$0xff]
    %v2957 = vld [vmem:[#allocation9 + $0xda8] sm:$0xff]
    %v2958 = vld [vmem:[#allocation9 + $0xdb0] sm:$0xff]
    %v2959 = vld [vmem:[#allocation9 + $0xdb8] sm:$0xff]
    %v2960 = vld [vmem:[#allocation9 + $0xdc0] sm:$0xff]
    %v2961 = vld [vmem:[#allocation9 + $0xdc8] sm:$0xff]
    %v2962 = vld [vmem:[#allocation9 + $0xdd0] sm:$0xff]
    %v2963 = vld [vmem:[#allocation9 + $0xdd8] sm:$0xff]
    %v2964 = vld [vmem:[#allocation9 + $0xde0] sm:$0xff]
    %v2965 = vld [vmem:[#allocation9 + $0xde8] sm:$0xff]
    %v2966 = vld [vmem:[#allocation9 + $0xdf0] sm:$0xff]
    %v2967 = vld [vmem:[#allocation9 + $0xdf8] sm:$0xff]
    %v2968 = vld [vmem:[#allocation9 + $0xe00] sm:$0xff]
    %v2969 = vld [vmem:[#allocation9 + $0xe08] sm:$0xff]
    %v2970 = vld [vmem:[#allocation9 + $0xe10] sm:$0xff]
    %v2971 = vld [vmem:[#allocation9 + $0xe18] sm:$0xff]
    %v2972 = vld [vmem:[#allocation9 + $0xe20] sm:$0xff]
    %v2973 = vld [vmem:[#allocation9 + $0xe28] sm:$0xff]
    %v2974 = vld [vmem:[#allocation9 + $0xe30] sm:$0xff]
    %v2975 = vld [vmem:[#allocation9 + $0xe38] sm:$0xff]
    %v2976 = vld [vmem:[#allocation9 + $0xe40] sm:$0xff]
    %v2977 = vld [vmem:[#allocation9 + $0xe48] sm:$0xff]
    %v2978 = vld [vmem:[#allocation9 + $0xe50] sm:$0xff]
    %v2979 = vld [vmem:[#allocation9 + $0xe58] sm:$0xff]
    %v2980 = vld [vmem:[#allocation9 + $0xe60] sm:$0xff]
    %v2981 = vld [vmem:[#allocation9 + $0xe68] sm:$0xff]
    %v2982 = vld [vmem:[#allocation9 + $0xe70] sm:$0xff]
    %v2983 = vld [vmem:[#allocation9 + $0xe78] sm:$0xff]
    %v2984 = vld [vmem:[#allocation9 + $0xe80] sm:$0xff]
    %v2985 = vld [vmem:[#allocation9 + $0xe88] sm:$0xff]
    %v2986 = vld [vmem:[#allocation9 + $0xe90] sm:$0xff]
    %v2987 = vld [vmem:[#allocation9 + $0xe98] sm:$0xff]
    %v2988 = vld [vmem:[#allocation9 + $0xea0] sm:$0xff]
    %v2989 = vld [vmem:[#allocation9 + $0xea8] sm:$0xff]
    %v2990 = vld [vmem:[#allocation9 + $0xeb0] sm:$0xff]
    %v2991 = vld [vmem:[#allocation9 + $0xeb8] sm:$0xff]
    %v2992 = vld [vmem:[#allocation9 + $0xec0] sm:$0xff]
    %v2993 = vld [vmem:[#allocation9 + $0xec8] sm:$0xff]
    %v2994 = vld [vmem:[#allocation9 + $0xed0] sm:$0xff]
    %v2995 = vld [vmem:[#allocation9 + $0xed8] sm:$0xff]
    %v2996 = vld [vmem:[#allocation9 + $0xee0] sm:$0xff]
    %v2997 = vld [vmem:[#allocation9 + $0xee8] sm:$0xff]
    %v2998 = vld [vmem:[#allocation9 + $0xef0] sm:$0xff]
    %v2999 = vld [vmem:[#allocation9 + $0xef8] sm:$0xff]
    %v3000 = vld [vmem:[#allocation9 + $0xf00] sm:$0xff]
    %v3001 = vld [vmem:[#allocation9 + $0xf08] sm:$0xff]
    %v3002 = vld [vmem:[#allocation9 + $0xf10] sm:$0xff]
    %v3003 = vld [vmem:[#allocation9 + $0xf18] sm:$0xff]
    %v3004 = vld [vmem:[#allocation9 + $0xf20] sm:$0xff]
    %v3005 = vld [vmem:[#allocation9 + $0xf28] sm:$0xff]
    %v3006 = vld [vmem:[#allocation9 + $0xf30] sm:$0xff]
    %v3007 = vld [vmem:[#allocation9 + $0xf38] sm:$0xff]
    %v3008 = vld [vmem:[#allocation9 + $0xf40] sm:$0xff]
    %v3009 = vld [vmem:[#allocation9 + $0xf48] sm:$0xff]
    %v3010 = vld [vmem:[#allocation9 + $0xf50] sm:$0xff]
    %v3011 = vld [vmem:[#allocation9 + $0xf58] sm:$0xff]
    %v3012 = vld [vmem:[#allocation9 + $0xf60] sm:$0xff]
    %v3013 = vld [vmem:[#allocation9 + $0xf68] sm:$0xff]
    %v3014 = vld [vmem:[#allocation9 + $0xf70] sm:$0xff]
    %v3015 = vld [vmem:[#allocation9 + $0xf78] sm:$0xff]
    %v3016 = vld [vmem:[#allocation9 + $0xf80] sm:$0xff]
    %v3017 = vld [vmem:[#allocation9 + $0xf88] sm:$0xff]
    %v3018 = vld [vmem:[#allocation9 + $0xf90] sm:$0xff]
    %v3019 = vld [vmem:[#allocation9 + $0xf98] sm:$0xff]
    %v3020 = vld [vmem:[#allocation9 + $0xfa0] sm:$0xff]
    %v3021 = vld [vmem:[#allocation9 + $0xfa8] sm:$0xff]
    %v3022 = vld [vmem:[#allocation9 + $0xfb0] sm:$0xff]
    %v3023 = vld [vmem:[#allocation9 + $0xfb8] sm:$0xff]
    %v3024 = vld [vmem:[#allocation9 + $0xfc0] sm:$0xff]
    %v3025 = vld [vmem:[#allocation9 + $0xfc8] sm:$0xff]
    %v3026 = vld [vmem:[#allocation9 + $0xfd0] sm:$0xff]
    %v3027 = vld [vmem:[#allocation9 + $0xfd8] sm:$0xff]
    %v3028 = vld [vmem:[#allocation9 + $0xfe0] sm:$0xff]
    %v3029 = vld [vmem:[#allocation9 + $0xfe8] sm:$0xff]
    %v3030 = vld [vmem:[#allocation9 + $0xff0] sm:$0xff]
    %v3031 = vld [vmem:[#allocation9 + $0xff8] sm:$0xff]
    %v3032 = vld [vmem:[%s6] sm:$0xff]
    %v3033 = vld [vmem:[%s6 + $0x8] sm:$0xff]
    %v3034 = vld [vmem:[%s6 + $0x10] sm:$0xff]
    %v3035 = vld [vmem:[%s6 + $0x18] sm:$0xff]
    %v3040 = vlaneseq
    %v3041 = vshrl.u32 %v3040, 7
    %v3042 = vsub.s32 0, %v3041
    %v3043 = vrot.slane %v3032, %v3042
    %v3044 = vlaneseq
    %v3045 = vshrl.u32 %v3044, 7
    %v3046 = vsub.s32 1, %v3045
    %v3047 = vrot.slane %v3032, %v3046
    %v3048 = vlaneseq
    %v3049 = vshrl.u32 %v3048, 7
    %v3050 = vsub.s32 2, %v3049
    %v3051 = vrot.slane %v3032, %v3050
    %v3052 = vlaneseq
    %v3053 = vshrl.u32 %v3052, 7
    %v3054 = vsub.s32 3, %v3053
    %v3055 = vrot.slane %v3032, %v3054
    %v3056 = vlaneseq
    %v3057 = vshrl.u32 %v3056, 7
    %v3058 = vsub.s32 4, %v3057
    %v3059 = vrot.slane %v3032, %v3058
    %v3060 = vlaneseq
    %v3061 = vshrl.u32 %v3060, 7
    %v3062 = vsub.s32 5, %v3061
    %v3063 = vrot.slane %v3032, %v3062
    %v3064 = vlaneseq
    %v3065 = vshrl.u32 %v3064, 7
    %v3066 = vsub.s32 6, %v3065
    %v3067 = vrot.slane %v3032, %v3066
    %v3068 = vlaneseq
    %v3069 = vshrl.u32 %v3068, 7
    %v3070 = vsub.s32 7, %v3069
    %v3071 = vrot.slane %v3032, %v3070
    %v3072 = vlaneseq
    %v3073 = vshrl.u32 %v3072, 7
    %v3074 = vsub.s32 0, %v3073
    %v3075 = vrot.slane %v3033, %v3074
    %v3076 = vlaneseq
    %v3077 = vshrl.u32 %v3076, 7
    %v3078 = vsub.s32 1, %v3077
    %v3079 = vrot.slane %v3033, %v3078
    %v3080 = vlaneseq
    %v3081 = vshrl.u32 %v3080, 7
    %v3082 = vsub.s32 2, %v3081
    %v3083 = vrot.slane %v3033, %v3082
    %v3084 = vlaneseq
    %v3085 = vshrl.u32 %v3084, 7
    %v3086 = vsub.s32 3, %v3085
    %v3087 = vrot.slane %v3033, %v3086
    %v3088 = vlaneseq
    %v3089 = vshrl.u32 %v3088, 7
    %v3090 = vsub.s32 4, %v3089
    %v3091 = vrot.slane %v3033, %v3090
    %v3092 = vlaneseq
    %v3093 = vshrl.u32 %v3092, 7
    %v3094 = vsub.s32 5, %v3093
    %v3095 = vrot.slane %v3033, %v3094
    %v3096 = vlaneseq
    %v3097 = vshrl.u32 %v3096, 7
    %v3098 = vsub.s32 6, %v3097
    %v3099 = vrot.slane %v3033, %v3098
    %v3100 = vlaneseq
    %v3101 = vshrl.u32 %v3100, 7
    %v3102 = vsub.s32 7, %v3101
    %v3103 = vrot.slane %v3033, %v3102
    %v3104 = vlaneseq
    %v3105 = vshrl.u32 %v3104, 7
    %v3106 = vsub.s32 0, %v3105
    %v3107 = vrot.slane %v3034, %v3106
    %v3108 = vlaneseq
    %v3109 = vshrl.u32 %v3108, 7
    %v3110 = vsub.s32 1, %v3109
    %v3111 = vrot.slane %v3034, %v3110
    %v3112 = vlaneseq
    %v3113 = vshrl.u32 %v3112, 7
    %v3114 = vsub.s32 2, %v3113
    %v3115 = vrot.slane %v3034, %v3114
    %v3116 = vlaneseq
    %v3117 = vshrl.u32 %v3116, 7
    %v3118 = vsub.s32 3, %v3117
    %v3119 = vrot.slane %v3034, %v3118
    %v3120 = vlaneseq
    %v3121 = vshrl.u32 %v3120, 7
    %v3122 = vsub.s32 4, %v3121
    %v3123 = vrot.slane %v3034, %v3122
    %v3124 = vlaneseq
    %v3125 = vshrl.u32 %v3124, 7
    %v3126 = vsub.s32 5, %v3125
    %v3127 = vrot.slane %v3034, %v3126
    %v3128 = vlaneseq
    %v3129 = vshrl.u32 %v3128, 7
    %v3130 = vsub.s32 6, %v3129
    %v3131 = vrot.slane %v3034, %v3130
    %v3132 = vlaneseq
    %v3133 = vshrl.u32 %v3132, 7
    %v3134 = vsub.s32 7, %v3133
    %v3135 = vrot.slane %v3034, %v3134
    %v3136 = vlaneseq
    %v3137 = vshrl.u32 %v3136, 7
    %v3138 = vsub.s32 0, %v3137
    %v3139 = vrot.slane %v3035, %v3138
    %v3140 = vlaneseq
    %v3141 = vshrl.u32 %v3140, 7
    %v3142 = vsub.s32 1, %v3141
    %v3143 = vrot.slane %v3035, %v3142
    %v3144 = vlaneseq
    %v3145 = vshrl.u32 %v3144, 7
    %v3146 = vsub.s32 2, %v3145
    %v3147 = vrot.slane %v3035, %v3146
    %v3148 = vlaneseq
    %v3149 = vshrl.u32 %v3148, 7
    %v3150 = vsub.s32 3, %v3149
    %v3151 = vrot.slane %v3035, %v3150
    %v3152 = vlaneseq
    %v3153 = vshrl.u32 %v3152, 7
    %v3154 = vsub.s32 4, %v3153
    %v3155 = vrot.slane %v3035, %v3154
    %v3156 = vlaneseq
    %v3157 = vshrl.u32 %v3156, 7
    %v3158 = vsub.s32 5, %v3157
    %v3159 = vrot.slane %v3035, %v3158
    %v3160 = vlaneseq
    %v3161 = vshrl.u32 %v3160, 7
    %v3162 = vsub.s32 6, %v3161
    %v3163 = vrot.slane %v3035, %v3162
    %v3164 = vlaneseq
    %v3165 = vshrl.u32 %v3164, 7
    %v3166 = vsub.s32 7, %v3165
    %v3167 = vrot.slane %v3035, %v3166
    %v3712 = vunpack.c.l.b16 %v2520
    %v3713 = vunpack.c.h.b16 %v2520
    %v3714 = vunpack.c.l.b16 %v2521
    %v3715 = vunpack.c.h.b16 %v2521
    %v3716 = vunpack.c.l.b16 %v2522
    %v3717 = vunpack.c.h.b16 %v2522
    %v3718 = vunpack.c.l.b16 %v2523
    %v3719 = vunpack.c.h.b16 %v2523
    %v3720 = vunpack.c.l.b16 %v2524
    %v3721 = vunpack.c.h.b16 %v2524
    %v3722 = vunpack.c.l.b16 %v2525
    %v3723 = vunpack.c.h.b16 %v2525
    %v3724 = vunpack.c.l.b16 %v2526
    %v3725 = vunpack.c.h.b16 %v2526
    %v3726 = vunpack.c.l.b16 %v2527
    %v3727 = vunpack.c.h.b16 %v2527
    %v3728 = vunpack.c.l.b16 %v2528
    %v3729 = vunpack.c.h.b16 %v2528
    %v3730 = vunpack.c.l.b16 %v2529
    %v3731 = vunpack.c.h.b16 %v2529
    %v3732 = vunpack.c.l.b16 %v2530
    %v3733 = vunpack.c.h.b16 %v2530
    %v3734 = vunpack.c.l.b16 %v2531
    %v3735 = vunpack.c.h.b16 %v2531
    %v3736 = vunpack.c.l.b16 %v2532
    %v3737 = vunpack.c.h.b16 %v2532
    %v3738 = vunpack.c.l.b16 %v2533
    %v3739 = vunpack.c.h.b16 %v2533
    %v3740 = vunpack.c.l.b16 %v2534
    %v3741 = vunpack.c.h.b16 %v2534
    %v3742 = vunpack.c.l.b16 %v2535
    %v3743 = vunpack.c.h.b16 %v2535
    %v3744 = vunpack.c.l.b16 %v2536
    %v3745 = vunpack.c.h.b16 %v2536
    %v3746 = vunpack.c.l.b16 %v2537
    %v3747 = vunpack.c.h.b16 %v2537
    %v3748 = vunpack.c.l.b16 %v2538
    %v3749 = vunpack.c.h.b16 %v2538
    %v3750 = vunpack.c.l.b16 %v2539
    %v3751 = vunpack.c.h.b16 %v2539
    %v3752 = vunpack.c.l.b16 %v2540
    %v3753 = vunpack.c.h.b16 %v2540
    %v3754 = vunpack.c.l.b16 %v2541
    %v3755 = vunpack.c.h.b16 %v2541
    %v3756 = vunpack.c.l.b16 %v2542
    %v3757 = vunpack.c.h.b16 %v2542
    %v3758 = vunpack.c.l.b16 %v2543
    %v3759 = vunpack.c.h.b16 %v2543
    %v3760 = vunpack.c.l.b16 %v2544
    %v3761 = vunpack.c.h.b16 %v2544
    %v3762 = vunpack.c.l.b16 %v2545
    %v3763 = vunpack.c.h.b16 %v2545
    %v3764 = vunpack.c.l.b16 %v2546
    %v3765 = vunpack.c.h.b16 %v2546
    %v3766 = vunpack.c.l.b16 %v2547
    %v3767 = vunpack.c.h.b16 %v2547
    %v3768 = vunpack.c.l.b16 %v2548
    %v3769 = vunpack.c.h.b16 %v2548
    %v3770 = vunpack.c.l.b16 %v2549
    %v3771 = vunpack.c.h.b16 %v2549
    %v3772 = vunpack.c.l.b16 %v2550
    %v3773 = vunpack.c.h.b16 %v2550
    %v3774 = vunpack.c.l.b16 %v2551
    %v3775 = vunpack.c.h.b16 %v2551
    %v3776 = vunpack.c.l.b16 %v2552
    %v3777 = vunpack.c.h.b16 %v2552
    %v3778 = vunpack.c.l.b16 %v2553
    %v3779 = vunpack.c.h.b16 %v2553
    %v3780 = vunpack.c.l.b16 %v2554
    %v3781 = vunpack.c.h.b16 %v2554
    %v3782 = vunpack.c.l.b16 %v2555
    %v3783 = vunpack.c.h.b16 %v2555
    %v3784 = vunpack.c.l.b16 %v2556
    %v3785 = vunpack.c.h.b16 %v2556
    %v3786 = vunpack.c.l.b16 %v2557
    %v3787 = vunpack.c.h.b16 %v2557
    %v3788 = vunpack.c.l.b16 %v2558
    %v3789 = vunpack.c.h.b16 %v2558
    %v3790 = vunpack.c.l.b16 %v2559
    %v3791 = vunpack.c.h.b16 %v2559
    %v3792 = vunpack.c.l.b16 %v2560
    %v3793 = vunpack.c.h.b16 %v2560
    %v3794 = vunpack.c.l.b16 %v2561
    %v3795 = vunpack.c.h.b16 %v2561
    %v3796 = vunpack.c.l.b16 %v2562
    %v3797 = vunpack.c.h.b16 %v2562
    %v3798 = vunpack.c.l.b16 %v2563
    %v3799 = vunpack.c.h.b16 %v2563
    %v3800 = vunpack.c.l.b16 %v2564
    %v3801 = vunpack.c.h.b16 %v2564
    %v3802 = vunpack.c.l.b16 %v2565
    %v3803 = vunpack.c.h.b16 %v2565
    %v3804 = vunpack.c.l.b16 %v2566
    %v3805 = vunpack.c.h.b16 %v2566
    %v3806 = vunpack.c.l.b16 %v2567
    %v3807 = vunpack.c.h.b16 %v2567
    %v3808 = vunpack.c.l.b16 %v2568
    %v3809 = vunpack.c.h.b16 %v2568
    %v3810 = vunpack.c.l.b16 %v2569
    %v3811 = vunpack.c.h.b16 %v2569
    %v3812 = vunpack.c.l.b16 %v2570
    %v3813 = vunpack.c.h.b16 %v2570
    %v3814 = vunpack.c.l.b16 %v2571
    %v3815 = vunpack.c.h.b16 %v2571
    %v3816 = vunpack.c.l.b16 %v2572
    %v3817 = vunpack.c.h.b16 %v2572
    %v3818 = vunpack.c.l.b16 %v2573
    %v3819 = vunpack.c.h.b16 %v2573
    %v3820 = vunpack.c.l.b16 %v2574
    %v3821 = vunpack.c.h.b16 %v2574
    %v3822 = vunpack.c.l.b16 %v2575
    %v3823 = vunpack.c.h.b16 %v2575
    %v3824 = vunpack.c.l.b16 %v2576
    %v3825 = vunpack.c.h.b16 %v2576
    %v3826 = vunpack.c.l.b16 %v2577
    %v3827 = vunpack.c.h.b16 %v2577
    %v3828 = vunpack.c.l.b16 %v2578
    %v3829 = vunpack.c.h.b16 %v2578
    %v3830 = vunpack.c.l.b16 %v2579
    %v3831 = vunpack.c.h.b16 %v2579
    %v3832 = vunpack.c.l.b16 %v2580
    %v3833 = vunpack.c.h.b16 %v2580
    %v3834 = vunpack.c.l.b16 %v2581
    %v3835 = vunpack.c.h.b16 %v2581
    %v3836 = vunpack.c.l.b16 %v2582
    %v3837 = vunpack.c.h.b16 %v2582
    %v3838 = vunpack.c.l.b16 %v2583
    %v3839 = vunpack.c.h.b16 %v2583
    %v3840 = vunpack.c.l.b16 %v2584
    %v3841 = vunpack.c.h.b16 %v2584
    %v3842 = vunpack.c.l.b16 %v2585
    %v3843 = vunpack.c.h.b16 %v2585
    %v3844 = vunpack.c.l.b16 %v2586
    %v3845 = vunpack.c.h.b16 %v2586
    %v3846 = vunpack.c.l.b16 %v2587
    %v3847 = vunpack.c.h.b16 %v2587
    %v3848 = vunpack.c.l.b16 %v2588
    %v3849 = vunpack.c.h.b16 %v2588
    %v3850 = vunpack.c.l.b16 %v2589
    %v3851 = vunpack.c.h.b16 %v2589
    %v3852 = vunpack.c.l.b16 %v2590
    %v3853 = vunpack.c.h.b16 %v2590
    %v3854 = vunpack.c.l.b16 %v2591
    %v3855 = vunpack.c.h.b16 %v2591
    %v3856 = vunpack.c.l.b16 %v2592
    %v3857 = vunpack.c.h.b16 %v2592
    %v3858 = vunpack.c.l.b16 %v2593
    %v3859 = vunpack.c.h.b16 %v2593
    %v3860 = vunpack.c.l.b16 %v2594
    %v3861 = vunpack.c.h.b16 %v2594
    %v3862 = vunpack.c.l.b16 %v2595
    %v3863 = vunpack.c.h.b16 %v2595
    %v3864 = vunpack.c.l.b16 %v2596
    %v3865 = vunpack.c.h.b16 %v2596
    %v3866 = vunpack.c.l.b16 %v2597
    %v3867 = vunpack.c.h.b16 %v2597
    %v3868 = vunpack.c.l.b16 %v2598
    %v3869 = vunpack.c.h.b16 %v2598
    %v3870 = vunpack.c.l.b16 %v2599
    %v3871 = vunpack.c.h.b16 %v2599
    %v3872 = vunpack.c.l.b16 %v2600
    %v3873 = vunpack.c.h.b16 %v2600
    %v3874 = vunpack.c.l.b16 %v2601
    %v3875 = vunpack.c.h.b16 %v2601
    %v3876 = vunpack.c.l.b16 %v2602
    %v3877 = vunpack.c.h.b16 %v2602
    %v3878 = vunpack.c.l.b16 %v2603
    %v3879 = vunpack.c.h.b16 %v2603
    %v3880 = vunpack.c.l.b16 %v2604
    %v3881 = vunpack.c.h.b16 %v2604
    %v3882 = vunpack.c.l.b16 %v2605
    %v3883 = vunpack.c.h.b16 %v2605
    %v3884 = vunpack.c.l.b16 %v2606
    %v3885 = vunpack.c.h.b16 %v2606
    %v3886 = vunpack.c.l.b16 %v2607
    %v3887 = vunpack.c.h.b16 %v2607
    %v3888 = vunpack.c.l.b16 %v2608
    %v3889 = vunpack.c.h.b16 %v2608
    %v3890 = vunpack.c.l.b16 %v2609
    %v3891 = vunpack.c.h.b16 %v2609
    %v3892 = vunpack.c.l.b16 %v2610
    %v3893 = vunpack.c.h.b16 %v2610
    %v3894 = vunpack.c.l.b16 %v2611
    %v3895 = vunpack.c.h.b16 %v2611
    %v3896 = vunpack.c.l.b16 %v2612
    %v3897 = vunpack.c.h.b16 %v2612
    %v3898 = vunpack.c.l.b16 %v2613
    %v3899 = vunpack.c.h.b16 %v2613
    %v3900 = vunpack.c.l.b16 %v2614
    %v3901 = vunpack.c.h.b16 %v2614
    %v3902 = vunpack.c.l.b16 %v2615
    %v3903 = vunpack.c.h.b16 %v2615
    %v3904 = vunpack.c.l.b16 %v2616
    %v3905 = vunpack.c.h.b16 %v2616
    %v3906 = vunpack.c.l.b16 %v2617
    %v3907 = vunpack.c.h.b16 %v2617
    %v3908 = vunpack.c.l.b16 %v2618
    %v3909 = vunpack.c.h.b16 %v2618
    %v3910 = vunpack.c.l.b16 %v2619
    %v3911 = vunpack.c.h.b16 %v2619
    %v3912 = vunpack.c.l.b16 %v2620
    %v3913 = vunpack.c.h.b16 %v2620
    %v3914 = vunpack.c.l.b16 %v2621
    %v3915 = vunpack.c.h.b16 %v2621
    %v3916 = vunpack.c.l.b16 %v2622
    %v3917 = vunpack.c.h.b16 %v2622
    %v3918 = vunpack.c.l.b16 %v2623
    %v3919 = vunpack.c.h.b16 %v2623
    %v3920 = vunpack.c.l.b16 %v2624
    %v3921 = vunpack.c.h.b16 %v2624
    %v3922 = vunpack.c.l.b16 %v2625
    %v3923 = vunpack.c.h.b16 %v2625
    %v3924 = vunpack.c.l.b16 %v2626
    %v3925 = vunpack.c.h.b16 %v2626
    %v3926 = vunpack.c.l.b16 %v2627
    %v3927 = vunpack.c.h.b16 %v2627
    %v3928 = vunpack.c.l.b16 %v2628
    %v3929 = vunpack.c.h.b16 %v2628
    %v3930 = vunpack.c.l.b16 %v2629
    %v3931 = vunpack.c.h.b16 %v2629
    %v3932 = vunpack.c.l.b16 %v2630
    %v3933 = vunpack.c.h.b16 %v2630
    %v3934 = vunpack.c.l.b16 %v2631
    %v3935 = vunpack.c.h.b16 %v2631
    %v3936 = vunpack.c.l.b16 %v2632
    %v3937 = vunpack.c.h.b16 %v2632
    %v3938 = vunpack.c.l.b16 %v2633
    %v3939 = vunpack.c.h.b16 %v2633
    %v3940 = vunpack.c.l.b16 %v2634
    %v3941 = vunpack.c.h.b16 %v2634
    %v3942 = vunpack.c.l.b16 %v2635
    %v3943 = vunpack.c.h.b16 %v2635
    %v3944 = vunpack.c.l.b16 %v2636
    %v3945 = vunpack.c.h.b16 %v2636
    %v3946 = vunpack.c.l.b16 %v2637
    %v3947 = vunpack.c.h.b16 %v2637
    %v3948 = vunpack.c.l.b16 %v2638
    %v3949 = vunpack.c.h.b16 %v2638
    %v3950 = vunpack.c.l.b16 %v2639
    %v3951 = vunpack.c.h.b16 %v2639
    %v3952 = vunpack.c.l.b16 %v2640
    %v3953 = vunpack.c.h.b16 %v2640
    %v3954 = vunpack.c.l.b16 %v2641
    %v3955 = vunpack.c.h.b16 %v2641
    %v3956 = vunpack.c.l.b16 %v2642
    %v3957 = vunpack.c.h.b16 %v2642
    %v3958 = vunpack.c.l.b16 %v2643
    %v3959 = vunpack.c.h.b16 %v2643
    %v3960 = vunpack.c.l.b16 %v2644
    %v3961 = vunpack.c.h.b16 %v2644
    %v3962 = vunpack.c.l.b16 %v2645
    %v3963 = vunpack.c.h.b16 %v2645
    %v3964 = vunpack.c.l.b16 %v2646
    %v3965 = vunpack.c.h.b16 %v2646
    %v3966 = vunpack.c.l.b16 %v2647
    %v3967 = vunpack.c.h.b16 %v2647
    %v3968 = vunpack.c.l.b16 %v2648
    %v3969 = vunpack.c.h.b16 %v2648
    %v3970 = vunpack.c.l.b16 %v2649
    %v3971 = vunpack.c.h.b16 %v2649
    %v3972 = vunpack.c.l.b16 %v2650
    %v3973 = vunpack.c.h.b16 %v2650
    %v3974 = vunpack.c.l.b16 %v2651
    %v3975 = vunpack.c.h.b16 %v2651
    %v3976 = vunpack.c.l.b16 %v2652
    %v3977 = vunpack.c.h.b16 %v2652
    %v3978 = vunpack.c.l.b16 %v2653
    %v3979 = vunpack.c.h.b16 %v2653
    %v3980 = vunpack.c.l.b16 %v2654
    %v3981 = vunpack.c.h.b16 %v2654
    %v3982 = vunpack.c.l.b16 %v2655
    %v3983 = vunpack.c.h.b16 %v2655
    %v3984 = vunpack.c.l.b16 %v2656
    %v3985 = vunpack.c.h.b16 %v2656
    %v3986 = vunpack.c.l.b16 %v2657
    %v3987 = vunpack.c.h.b16 %v2657
    %v3988 = vunpack.c.l.b16 %v2658
    %v3989 = vunpack.c.h.b16 %v2658
    %v3990 = vunpack.c.l.b16 %v2659
    %v3991 = vunpack.c.h.b16 %v2659
    %v3992 = vunpack.c.l.b16 %v2660
    %v3993 = vunpack.c.h.b16 %v2660
    %v3994 = vunpack.c.l.b16 %v2661
    %v3995 = vunpack.c.h.b16 %v2661
    %v3996 = vunpack.c.l.b16 %v2662
    %v3997 = vunpack.c.h.b16 %v2662
    %v3998 = vunpack.c.l.b16 %v2663
    %v3999 = vunpack.c.h.b16 %v2663
    %v4000 = vunpack.c.l.b16 %v2664
    %v4001 = vunpack.c.h.b16 %v2664
    %v4002 = vunpack.c.l.b16 %v2665
    %v4003 = vunpack.c.h.b16 %v2665
    %v4004 = vunpack.c.l.b16 %v2666
    %v4005 = vunpack.c.h.b16 %v2666
    %v4006 = vunpack.c.l.b16 %v2667
    %v4007 = vunpack.c.h.b16 %v2667
    %v4008 = vunpack.c.l.b16 %v2668
    %v4009 = vunpack.c.h.b16 %v2668
    %v4010 = vunpack.c.l.b16 %v2669
    %v4011 = vunpack.c.h.b16 %v2669
    %v4012 = vunpack.c.l.b16 %v2670
    %v4013 = vunpack.c.h.b16 %v2670
    %v4014 = vunpack.c.l.b16 %v2671
    %v4015 = vunpack.c.h.b16 %v2671
    %v4016 = vunpack.c.l.b16 %v2672
    %v4017 = vunpack.c.h.b16 %v2672
    %v4018 = vunpack.c.l.b16 %v2673
    %v4019 = vunpack.c.h.b16 %v2673
    %v4020 = vunpack.c.l.b16 %v2674
    %v4021 = vunpack.c.h.b16 %v2674
    %v4022 = vunpack.c.l.b16 %v2675
    %v4023 = vunpack.c.h.b16 %v2675
    %v4024 = vunpack.c.l.b16 %v2676
    %v4025 = vunpack.c.h.b16 %v2676
    %v4026 = vunpack.c.l.b16 %v2677
    %v4027 = vunpack.c.h.b16 %v2677
    %v4028 = vunpack.c.l.b16 %v2678
    %v4029 = vunpack.c.h.b16 %v2678
    %v4030 = vunpack.c.l.b16 %v2679
    %v4031 = vunpack.c.h.b16 %v2679
    %v4032 = vunpack.c.l.b16 %v2680
    %v4033 = vunpack.c.h.b16 %v2680
    %v4034 = vunpack.c.l.b16 %v2681
    %v4035 = vunpack.c.h.b16 %v2681
    %v4036 = vunpack.c.l.b16 %v2682
    %v4037 = vunpack.c.h.b16 %v2682
    %v4038 = vunpack.c.l.b16 %v2683
    %v4039 = vunpack.c.h.b16 %v2683
    %v4040 = vunpack.c.l.b16 %v2684
    %v4041 = vunpack.c.h.b16 %v2684
    %v4042 = vunpack.c.l.b16 %v2685
    %v4043 = vunpack.c.h.b16 %v2685
    %v4044 = vunpack.c.l.b16 %v2686
    %v4045 = vunpack.c.h.b16 %v2686
    %v4046 = vunpack.c.l.b16 %v2687
    %v4047 = vunpack.c.h.b16 %v2687
    %v4048 = vunpack.c.l.b16 %v2688
    %v4049 = vunpack.c.h.b16 %v2688
    %v4050 = vunpack.c.l.b16 %v2689
    %v4051 = vunpack.c.h.b16 %v2689
    %v4052 = vunpack.c.l.b16 %v2690
    %v4053 = vunpack.c.h.b16 %v2690
    %v4054 = vunpack.c.l.b16 %v2691
    %v4055 = vunpack.c.h.b16 %v2691
    %v4056 = vunpack.c.l.b16 %v2692
    %v4057 = vunpack.c.h.b16 %v2692
    %v4058 = vunpack.c.l.b16 %v2693
    %v4059 = vunpack.c.h.b16 %v2693
    %v4060 = vunpack.c.l.b16 %v2694
    %v4061 = vunpack.c.h.b16 %v2694
    %v4062 = vunpack.c.l.b16 %v2695
    %v4063 = vunpack.c.h.b16 %v2695
    %v4064 = vunpack.c.l.b16 %v2696
    %v4065 = vunpack.c.h.b16 %v2696
    %v4066 = vunpack.c.l.b16 %v2697
    %v4067 = vunpack.c.h.b16 %v2697
    %v4068 = vunpack.c.l.b16 %v2698
    %v4069 = vunpack.c.h.b16 %v2698
    %v4070 = vunpack.c.l.b16 %v2699
    %v4071 = vunpack.c.h.b16 %v2699
    %v4072 = vunpack.c.l.b16 %v2700
    %v4073 = vunpack.c.h.b16 %v2700
    %v4074 = vunpack.c.l.b16 %v2701
    %v4075 = vunpack.c.h.b16 %v2701
    %v4076 = vunpack.c.l.b16 %v2702
    %v4077 = vunpack.c.h.b16 %v2702
    %v4078 = vunpack.c.l.b16 %v2703
    %v4079 = vunpack.c.h.b16 %v2703
    %v4080 = vunpack.c.l.b16 %v2704
    %v4081 = vunpack.c.h.b16 %v2704
    %v4082 = vunpack.c.l.b16 %v2705
    %v4083 = vunpack.c.h.b16 %v2705
    %v4084 = vunpack.c.l.b16 %v2706
    %v4085 = vunpack.c.h.b16 %v2706
    %v4086 = vunpack.c.l.b16 %v2707
    %v4087 = vunpack.c.h.b16 %v2707
    %v4088 = vunpack.c.l.b16 %v2708
    %v4089 = vunpack.c.h.b16 %v2708
    %v4090 = vunpack.c.l.b16 %v2709
    %v4091 = vunpack.c.h.b16 %v2709
    %v4092 = vunpack.c.l.b16 %v2710
    %v4093 = vunpack.c.h.b16 %v2710
    %v4094 = vunpack.c.l.b16 %v2711
    %v4095 = vunpack.c.h.b16 %v2711
    %v4096 = vunpack.c.l.b16 %v2712
    %v4097 = vunpack.c.h.b16 %v2712
    %v4098 = vunpack.c.l.b16 %v2713
    %v4099 = vunpack.c.h.b16 %v2713
    %v4100 = vunpack.c.l.b16 %v2714
    %v4101 = vunpack.c.h.b16 %v2714
    %v4102 = vunpack.c.l.b16 %v2715
    %v4103 = vunpack.c.h.b16 %v2715
    %v4104 = vunpack.c.l.b16 %v2716
    %v4105 = vunpack.c.h.b16 %v2716
    %v4106 = vunpack.c.l.b16 %v2717
    %v4107 = vunpack.c.h.b16 %v2717
    %v4108 = vunpack.c.l.b16 %v2718
    %v4109 = vunpack.c.h.b16 %v2718
    %v4110 = vunpack.c.l.b16 %v2719
    %v4111 = vunpack.c.h.b16 %v2719
    %v4112 = vunpack.c.l.b16 %v2720
    %v4113 = vunpack.c.h.b16 %v2720
    %v4114 = vunpack.c.l.b16 %v2721
    %v4115 = vunpack.c.h.b16 %v2721
    %v4116 = vunpack.c.l.b16 %v2722
    %v4117 = vunpack.c.h.b16 %v2722
    %v4118 = vunpack.c.l.b16 %v2723
    %v4119 = vunpack.c.h.b16 %v2723
    %v4120 = vunpack.c.l.b16 %v2724
    %v4121 = vunpack.c.h.b16 %v2724
    %v4122 = vunpack.c.l.b16 %v2725
    %v4123 = vunpack.c.h.b16 %v2725
    %v4124 = vunpack.c.l.b16 %v2726
    %v4125 = vunpack.c.h.b16 %v2726
    %v4126 = vunpack.c.l.b16 %v2727
    %v4127 = vunpack.c.h.b16 %v2727
    %v4128 = vunpack.c.l.b16 %v2728
    %v4129 = vunpack.c.h.b16 %v2728
    %v4130 = vunpack.c.l.b16 %v2729
    %v4131 = vunpack.c.h.b16 %v2729
    %v4132 = vunpack.c.l.b16 %v2730
    %v4133 = vunpack.c.h.b16 %v2730
    %v4134 = vunpack.c.l.b16 %v2731
    %v4135 = vunpack.c.h.b16 %v2731
    %v4136 = vunpack.c.l.b16 %v2732
    %v4137 = vunpack.c.h.b16 %v2732
    %v4138 = vunpack.c.l.b16 %v2733
    %v4139 = vunpack.c.h.b16 %v2733
    %v4140 = vunpack.c.l.b16 %v2734
    %v4141 = vunpack.c.h.b16 %v2734
    %v4142 = vunpack.c.l.b16 %v2735
    %v4143 = vunpack.c.h.b16 %v2735
    %v4144 = vunpack.c.l.b16 %v2736
    %v4145 = vunpack.c.h.b16 %v2736
    %v4146 = vunpack.c.l.b16 %v2737
    %v4147 = vunpack.c.h.b16 %v2737
    %v4148 = vunpack.c.l.b16 %v2738
    %v4149 = vunpack.c.h.b16 %v2738
    %v4150 = vunpack.c.l.b16 %v2739
    %v4151 = vunpack.c.h.b16 %v2739
    %v4152 = vunpack.c.l.b16 %v2740
    %v4153 = vunpack.c.h.b16 %v2740
    %v4154 = vunpack.c.l.b16 %v2741
    %v4155 = vunpack.c.h.b16 %v2741
    %v4156 = vunpack.c.l.b16 %v2742
    %v4157 = vunpack.c.h.b16 %v2742
    %v4158 = vunpack.c.l.b16 %v2743
    %v4159 = vunpack.c.h.b16 %v2743
    %v4160 = vunpack.c.l.b16 %v2744
    %v4161 = vunpack.c.h.b16 %v2744
    %v4162 = vunpack.c.l.b16 %v2745
    %v4163 = vunpack.c.h.b16 %v2745
    %v4164 = vunpack.c.l.b16 %v2746
    %v4165 = vunpack.c.h.b16 %v2746
    %v4166 = vunpack.c.l.b16 %v2747
    %v4167 = vunpack.c.h.b16 %v2747
    %v4168 = vunpack.c.l.b16 %v2748
    %v4169 = vunpack.c.h.b16 %v2748
    %v4170 = vunpack.c.l.b16 %v2749
    %v4171 = vunpack.c.h.b16 %v2749
    %v4172 = vunpack.c.l.b16 %v2750
    %v4173 = vunpack.c.h.b16 %v2750
    %v4174 = vunpack.c.l.b16 %v2751
    %v4175 = vunpack.c.h.b16 %v2751
    %v4176 = vunpack.c.l.b16 %v2752
    %v4177 = vunpack.c.h.b16 %v2752
    %v4178 = vunpack.c.l.b16 %v2753
    %v4179 = vunpack.c.h.b16 %v2753
    %v4180 = vunpack.c.l.b16 %v2754
    %v4181 = vunpack.c.h.b16 %v2754
    %v4182 = vunpack.c.l.b16 %v2755
    %v4183 = vunpack.c.h.b16 %v2755
    %v4184 = vunpack.c.l.b16 %v2756
    %v4185 = vunpack.c.h.b16 %v2756
    %v4186 = vunpack.c.l.b16 %v2757
    %v4187 = vunpack.c.h.b16 %v2757
    %v4188 = vunpack.c.l.b16 %v2758
    %v4189 = vunpack.c.h.b16 %v2758
    %v4190 = vunpack.c.l.b16 %v2759
    %v4191 = vunpack.c.h.b16 %v2759
    %v4192 = vunpack.c.l.b16 %v2760
    %v4193 = vunpack.c.h.b16 %v2760
    %v4194 = vunpack.c.l.b16 %v2761
    %v4195 = vunpack.c.h.b16 %v2761
    %v4196 = vunpack.c.l.b16 %v2762
    %v4197 = vunpack.c.h.b16 %v2762
    %v4198 = vunpack.c.l.b16 %v2763
    %v4199 = vunpack.c.h.b16 %v2763
    %v4200 = vunpack.c.l.b16 %v2764
    %v4201 = vunpack.c.h.b16 %v2764
    %v4202 = vunpack.c.l.b16 %v2765
    %v4203 = vunpack.c.h.b16 %v2765
    %v4204 = vunpack.c.l.b16 %v2766
    %v4205 = vunpack.c.h.b16 %v2766
    %v4206 = vunpack.c.l.b16 %v2767
    %v4207 = vunpack.c.h.b16 %v2767
    %v4208 = vunpack.c.l.b16 %v2768
    %v4209 = vunpack.c.h.b16 %v2768
    %v4210 = vunpack.c.l.b16 %v2769
    %v4211 = vunpack.c.h.b16 %v2769
    %v4212 = vunpack.c.l.b16 %v2770
    %v4213 = vunpack.c.h.b16 %v2770
    %v4214 = vunpack.c.l.b16 %v2771
    %v4215 = vunpack.c.h.b16 %v2771
    %v4216 = vunpack.c.l.b16 %v2772
    %v4217 = vunpack.c.h.b16 %v2772
    %v4218 = vunpack.c.l.b16 %v2773
    %v4219 = vunpack.c.h.b16 %v2773
    %v4220 = vunpack.c.l.b16 %v2774
    %v4221 = vunpack.c.h.b16 %v2774
    %v4222 = vunpack.c.l.b16 %v2775
    %v4223 = vunpack.c.h.b16 %v2775
    %v4224 = vunpack.c.l.b16 %v2776
    %v4225 = vunpack.c.h.b16 %v2776
    %v4226 = vunpack.c.l.b16 %v2777
    %v4227 = vunpack.c.h.b16 %v2777
    %v4228 = vunpack.c.l.b16 %v2778
    %v4229 = vunpack.c.h.b16 %v2778
    %v4230 = vunpack.c.l.b16 %v2779
    %v4231 = vunpack.c.h.b16 %v2779
    %v4232 = vunpack.c.l.b16 %v2780
    %v4233 = vunpack.c.h.b16 %v2780
    %v4234 = vunpack.c.l.b16 %v2781
    %v4235 = vunpack.c.h.b16 %v2781
    %v4236 = vunpack.c.l.b16 %v2782
    %v4237 = vunpack.c.h.b16 %v2782
    %v4238 = vunpack.c.l.b16 %v2783
    %v4239 = vunpack.c.h.b16 %v2783
    %v4240 = vunpack.c.l.b16 %v2784
    %v4241 = vunpack.c.h.b16 %v2784
    %v4242 = vunpack.c.l.b16 %v2785
    %v4243 = vunpack.c.h.b16 %v2785
    %v4244 = vunpack.c.l.b16 %v2786
    %v4245 = vunpack.c.h.b16 %v2786
    %v4246 = vunpack.c.l.b16 %v2787
    %v4247 = vunpack.c.h.b16 %v2787
    %v4248 = vunpack.c.l.b16 %v2788
    %v4249 = vunpack.c.h.b16 %v2788
    %v4250 = vunpack.c.l.b16 %v2789
    %v4251 = vunpack.c.h.b16 %v2789
    %v4252 = vunpack.c.l.b16 %v2790
    %v4253 = vunpack.c.h.b16 %v2790
    %v4254 = vunpack.c.l.b16 %v2791
    %v4255 = vunpack.c.h.b16 %v2791
    %v4256 = vunpack.c.l.b16 %v2792
    %v4257 = vunpack.c.h.b16 %v2792
    %v4258 = vunpack.c.l.b16 %v2793
    %v4259 = vunpack.c.h.b16 %v2793
    %v4260 = vunpack.c.l.b16 %v2794
    %v4261 = vunpack.c.h.b16 %v2794
    %v4262 = vunpack.c.l.b16 %v2795
    %v4263 = vunpack.c.h.b16 %v2795
    %v4264 = vunpack.c.l.b16 %v2796
    %v4265 = vunpack.c.h.b16 %v2796
    %v4266 = vunpack.c.l.b16 %v2797
    %v4267 = vunpack.c.h.b16 %v2797
    %v4268 = vunpack.c.l.b16 %v2798
    %v4269 = vunpack.c.h.b16 %v2798
    %v4270 = vunpack.c.l.b16 %v2799
    %v4271 = vunpack.c.h.b16 %v2799
    %v4272 = vunpack.c.l.b16 %v2800
    %v4273 = vunpack.c.h.b16 %v2800
    %v4274 = vunpack.c.l.b16 %v2801
    %v4275 = vunpack.c.h.b16 %v2801
    %v4276 = vunpack.c.l.b16 %v2802
    %v4277 = vunpack.c.h.b16 %v2802
    %v4278 = vunpack.c.l.b16 %v2803
    %v4279 = vunpack.c.h.b16 %v2803
    %v4280 = vunpack.c.l.b16 %v2804
    %v4281 = vunpack.c.h.b16 %v2804
    %v4282 = vunpack.c.l.b16 %v2805
    %v4283 = vunpack.c.h.b16 %v2805
    %v4284 = vunpack.c.l.b16 %v2806
    %v4285 = vunpack.c.h.b16 %v2806
    %v4286 = vunpack.c.l.b16 %v2807
    %v4287 = vunpack.c.h.b16 %v2807
    %v4288 = vunpack.c.l.b16 %v2808
    %v4289 = vunpack.c.h.b16 %v2808
    %v4290 = vunpack.c.l.b16 %v2809
    %v4291 = vunpack.c.h.b16 %v2809
    %v4292 = vunpack.c.l.b16 %v2810
    %v4293 = vunpack.c.h.b16 %v2810
    %v4294 = vunpack.c.l.b16 %v2811
    %v4295 = vunpack.c.h.b16 %v2811
    %v4296 = vunpack.c.l.b16 %v2812
    %v4297 = vunpack.c.h.b16 %v2812
    %v4298 = vunpack.c.l.b16 %v2813
    %v4299 = vunpack.c.h.b16 %v2813
    %v4300 = vunpack.c.l.b16 %v2814
    %v4301 = vunpack.c.h.b16 %v2814
    %v4302 = vunpack.c.l.b16 %v2815
    %v4303 = vunpack.c.h.b16 %v2815
    %v4304 = vunpack.c.l.b16 %v2816
    %v4305 = vunpack.c.h.b16 %v2816
    %v4306 = vunpack.c.l.b16 %v2817
    %v4307 = vunpack.c.h.b16 %v2817
    %v4308 = vunpack.c.l.b16 %v2818
    %v4309 = vunpack.c.h.b16 %v2818
    %v4310 = vunpack.c.l.b16 %v2819
    %v4311 = vunpack.c.h.b16 %v2819
    %v4312 = vunpack.c.l.b16 %v2820
    %v4313 = vunpack.c.h.b16 %v2820
    %v4314 = vunpack.c.l.b16 %v2821
    %v4315 = vunpack.c.h.b16 %v2821
    %v4316 = vunpack.c.l.b16 %v2822
    %v4317 = vunpack.c.h.b16 %v2822
    %v4318 = vunpack.c.l.b16 %v2823
    %v4319 = vunpack.c.h.b16 %v2823
    %v4320 = vunpack.c.l.b16 %v2824
    %v4321 = vunpack.c.h.b16 %v2824
    %v4322 = vunpack.c.l.b16 %v2825
    %v4323 = vunpack.c.h.b16 %v2825
    %v4324 = vunpack.c.l.b16 %v2826
    %v4325 = vunpack.c.h.b16 %v2826
    %v4326 = vunpack.c.l.b16 %v2827
    %v4327 = vunpack.c.h.b16 %v2827
    %v4328 = vunpack.c.l.b16 %v2828
    %v4329 = vunpack.c.h.b16 %v2828
    %v4330 = vunpack.c.l.b16 %v2829
    %v4331 = vunpack.c.h.b16 %v2829
    %v4332 = vunpack.c.l.b16 %v2830
    %v4333 = vunpack.c.h.b16 %v2830
    %v4334 = vunpack.c.l.b16 %v2831
    %v4335 = vunpack.c.h.b16 %v2831
    %v4336 = vunpack.c.l.b16 %v2832
    %v4337 = vunpack.c.h.b16 %v2832
    %v4338 = vunpack.c.l.b16 %v2833
    %v4339 = vunpack.c.h.b16 %v2833
    %v4340 = vunpack.c.l.b16 %v2834
    %v4341 = vunpack.c.h.b16 %v2834
    %v4342 = vunpack.c.l.b16 %v2835
    %v4343 = vunpack.c.h.b16 %v2835
    %v4344 = vunpack.c.l.b16 %v2836
    %v4345 = vunpack.c.h.b16 %v2836
    %v4346 = vunpack.c.l.b16 %v2837
    %v4347 = vunpack.c.h.b16 %v2837
    %v4348 = vunpack.c.l.b16 %v2838
    %v4349 = vunpack.c.h.b16 %v2838
    %v4350 = vunpack.c.l.b16 %v2839
    %v4351 = vunpack.c.h.b16 %v2839
    %v4352 = vunpack.c.l.b16 %v2840
    %v4353 = vunpack.c.h.b16 %v2840
    %v4354 = vunpack.c.l.b16 %v2841
    %v4355 = vunpack.c.h.b16 %v2841
    %v4356 = vunpack.c.l.b16 %v2842
    %v4357 = vunpack.c.h.b16 %v2842
    %v4358 = vunpack.c.l.b16 %v2843
    %v4359 = vunpack.c.h.b16 %v2843
    %v4360 = vunpack.c.l.b16 %v2844
    %v4361 = vunpack.c.h.b16 %v2844
    %v4362 = vunpack.c.l.b16 %v2845
    %v4363 = vunpack.c.h.b16 %v2845
    %v4364 = vunpack.c.l.b16 %v2846
    %v4365 = vunpack.c.h.b16 %v2846
    %v4366 = vunpack.c.l.b16 %v2847
    %v4367 = vunpack.c.h.b16 %v2847
    %v4368 = vunpack.c.l.b16 %v2848
    %v4369 = vunpack.c.h.b16 %v2848
    %v4370 = vunpack.c.l.b16 %v2849
    %v4371 = vunpack.c.h.b16 %v2849
    %v4372 = vunpack.c.l.b16 %v2850
    %v4373 = vunpack.c.h.b16 %v2850
    %v4374 = vunpack.c.l.b16 %v2851
    %v4375 = vunpack.c.h.b16 %v2851
    %v4376 = vunpack.c.l.b16 %v2852
    %v4377 = vunpack.c.h.b16 %v2852
    %v4378 = vunpack.c.l.b16 %v2853
    %v4379 = vunpack.c.h.b16 %v2853
    %v4380 = vunpack.c.l.b16 %v2854
    %v4381 = vunpack.c.h.b16 %v2854
    %v4382 = vunpack.c.l.b16 %v2855
    %v4383 = vunpack.c.h.b16 %v2855
    %v4384 = vunpack.c.l.b16 %v2856
    %v4385 = vunpack.c.h.b16 %v2856
    %v4386 = vunpack.c.l.b16 %v2857
    %v4387 = vunpack.c.h.b16 %v2857
    %v4388 = vunpack.c.l.b16 %v2858
    %v4389 = vunpack.c.h.b16 %v2858
    %v4390 = vunpack.c.l.b16 %v2859
    %v4391 = vunpack.c.h.b16 %v2859
    %v4392 = vunpack.c.l.b16 %v2860
    %v4393 = vunpack.c.h.b16 %v2860
    %v4394 = vunpack.c.l.b16 %v2861
    %v4395 = vunpack.c.h.b16 %v2861
    %v4396 = vunpack.c.l.b16 %v2862
    %v4397 = vunpack.c.h.b16 %v2862
    %v4398 = vunpack.c.l.b16 %v2863
    %v4399 = vunpack.c.h.b16 %v2863
    %v4400 = vunpack.c.l.b16 %v2864
    %v4401 = vunpack.c.h.b16 %v2864
    %v4402 = vunpack.c.l.b16 %v2865
    %v4403 = vunpack.c.h.b16 %v2865
    %v4404 = vunpack.c.l.b16 %v2866
    %v4405 = vunpack.c.h.b16 %v2866
    %v4406 = vunpack.c.l.b16 %v2867
    %v4407 = vunpack.c.h.b16 %v2867
    %v4408 = vunpack.c.l.b16 %v2868
    %v4409 = vunpack.c.h.b16 %v2868
    %v4410 = vunpack.c.l.b16 %v2869
    %v4411 = vunpack.c.h.b16 %v2869
    %v4412 = vunpack.c.l.b16 %v2870
    %v4413 = vunpack.c.h.b16 %v2870
    %v4414 = vunpack.c.l.b16 %v2871
    %v4415 = vunpack.c.h.b16 %v2871
    %v4416 = vunpack.c.l.b16 %v2872
    %v4417 = vunpack.c.h.b16 %v2872
    %v4418 = vunpack.c.l.b16 %v2873
    %v4419 = vunpack.c.h.b16 %v2873
    %v4420 = vunpack.c.l.b16 %v2874
    %v4421 = vunpack.c.h.b16 %v2874
    %v4422 = vunpack.c.l.b16 %v2875
    %v4423 = vunpack.c.h.b16 %v2875
    %v4424 = vunpack.c.l.b16 %v2876
    %v4425 = vunpack.c.h.b16 %v2876
    %v4426 = vunpack.c.l.b16 %v2877
    %v4427 = vunpack.c.h.b16 %v2877
    %v4428 = vunpack.c.l.b16 %v2878
    %v4429 = vunpack.c.h.b16 %v2878
    %v4430 = vunpack.c.l.b16 %v2879
    %v4431 = vunpack.c.h.b16 %v2879
    %v4432 = vunpack.c.l.b16 %v2880
    %v4433 = vunpack.c.h.b16 %v2880
    %v4434 = vunpack.c.l.b16 %v2881
    %v4435 = vunpack.c.h.b16 %v2881
    %v4436 = vunpack.c.l.b16 %v2882
    %v4437 = vunpack.c.h.b16 %v2882
    %v4438 = vunpack.c.l.b16 %v2883
    %v4439 = vunpack.c.h.b16 %v2883
    %v4440 = vunpack.c.l.b16 %v2884
    %v4441 = vunpack.c.h.b16 %v2884
    %v4442 = vunpack.c.l.b16 %v2885
    %v4443 = vunpack.c.h.b16 %v2885
    %v4444 = vunpack.c.l.b16 %v2886
    %v4445 = vunpack.c.h.b16 %v2886
    %v4446 = vunpack.c.l.b16 %v2887
    %v4447 = vunpack.c.h.b16 %v2887
    %v4448 = vunpack.c.l.b16 %v2888
    %v4449 = vunpack.c.h.b16 %v2888
    %v4450 = vunpack.c.l.b16 %v2889
    %v4451 = vunpack.c.h.b16 %v2889
    %v4452 = vunpack.c.l.b16 %v2890
    %v4453 = vunpack.c.h.b16 %v2890
    %v4454 = vunpack.c.l.b16 %v2891
    %v4455 = vunpack.c.h.b16 %v2891
    %v4456 = vunpack.c.l.b16 %v2892
    %v4457 = vunpack.c.h.b16 %v2892
    %v4458 = vunpack.c.l.b16 %v2893
    %v4459 = vunpack.c.h.b16 %v2893
    %v4460 = vunpack.c.l.b16 %v2894
    %v4461 = vunpack.c.h.b16 %v2894
    %v4462 = vunpack.c.l.b16 %v2895
    %v4463 = vunpack.c.h.b16 %v2895
    %v4464 = vunpack.c.l.b16 %v2896
    %v4465 = vunpack.c.h.b16 %v2896
    %v4466 = vunpack.c.l.b16 %v2897
    %v4467 = vunpack.c.h.b16 %v2897
    %v4468 = vunpack.c.l.b16 %v2898
    %v4469 = vunpack.c.h.b16 %v2898
    %v4470 = vunpack.c.l.b16 %v2899
    %v4471 = vunpack.c.h.b16 %v2899
    %v4472 = vunpack.c.l.b16 %v2900
    %v4473 = vunpack.c.h.b16 %v2900
    %v4474 = vunpack.c.l.b16 %v2901
    %v4475 = vunpack.c.h.b16 %v2901
    %v4476 = vunpack.c.l.b16 %v2902
    %v4477 = vunpack.c.h.b16 %v2902
    %v4478 = vunpack.c.l.b16 %v2903
    %v4479 = vunpack.c.h.b16 %v2903
    %v4480 = vunpack.c.l.b16 %v2904
    %v4481 = vunpack.c.h.b16 %v2904
    %v4482 = vunpack.c.l.b16 %v2905
    %v4483 = vunpack.c.h.b16 %v2905
    %v4484 = vunpack.c.l.b16 %v2906
    %v4485 = vunpack.c.h.b16 %v2906
    %v4486 = vunpack.c.l.b16 %v2907
    %v4487 = vunpack.c.h.b16 %v2907
    %v4488 = vunpack.c.l.b16 %v2908
    %v4489 = vunpack.c.h.b16 %v2908
    %v4490 = vunpack.c.l.b16 %v2909
    %v4491 = vunpack.c.h.b16 %v2909
    %v4492 = vunpack.c.l.b16 %v2910
    %v4493 = vunpack.c.h.b16 %v2910
    %v4494 = vunpack.c.l.b16 %v2911
    %v4495 = vunpack.c.h.b16 %v2911
    %v4496 = vunpack.c.l.b16 %v2912
    %v4497 = vunpack.c.h.b16 %v2912
    %v4498 = vunpack.c.l.b16 %v2913
    %v4499 = vunpack.c.h.b16 %v2913
    %v4500 = vunpack.c.l.b16 %v2914
    %v4501 = vunpack.c.h.b16 %v2914
    %v4502 = vunpack.c.l.b16 %v2915
    %v4503 = vunpack.c.h.b16 %v2915
    %v4504 = vunpack.c.l.b16 %v2916
    %v4505 = vunpack.c.h.b16 %v2916
    %v4506 = vunpack.c.l.b16 %v2917
    %v4507 = vunpack.c.h.b16 %v2917
    %v4508 = vunpack.c.l.b16 %v2918
    %v4509 = vunpack.c.h.b16 %v2918
    %v4510 = vunpack.c.l.b16 %v2919
    %v4511 = vunpack.c.h.b16 %v2919
    %v4512 = vunpack.c.l.b16 %v2920
    %v4513 = vunpack.c.h.b16 %v2920
    %v4514 = vunpack.c.l.b16 %v2921
    %v4515 = vunpack.c.h.b16 %v2921
    %v4516 = vunpack.c.l.b16 %v2922
    %v4517 = vunpack.c.h.b16 %v2922
    %v4518 = vunpack.c.l.b16 %v2923
    %v4519 = vunpack.c.h.b16 %v2923
    %v4520 = vunpack.c.l.b16 %v2924
    %v4521 = vunpack.c.h.b16 %v2924
    %v4522 = vunpack.c.l.b16 %v2925
    %v4523 = vunpack.c.h.b16 %v2925
    %v4524 = vunpack.c.l.b16 %v2926
    %v4525 = vunpack.c.h.b16 %v2926
    %v4526 = vunpack.c.l.b16 %v2927
    %v4527 = vunpack.c.h.b16 %v2927
    %v4528 = vunpack.c.l.b16 %v2928
    %v4529 = vunpack.c.h.b16 %v2928
    %v4530 = vunpack.c.l.b16 %v2929
    %v4531 = vunpack.c.h.b16 %v2929
    %v4532 = vunpack.c.l.b16 %v2930
    %v4533 = vunpack.c.h.b16 %v2930
    %v4534 = vunpack.c.l.b16 %v2931
    %v4535 = vunpack.c.h.b16 %v2931
    %v4536 = vunpack.c.l.b16 %v2932
    %v4537 = vunpack.c.h.b16 %v2932
    %v4538 = vunpack.c.l.b16 %v2933
    %v4539 = vunpack.c.h.b16 %v2933
    %v4540 = vunpack.c.l.b16 %v2934
    %v4541 = vunpack.c.h.b16 %v2934
    %v4542 = vunpack.c.l.b16 %v2935
    %v4543 = vunpack.c.h.b16 %v2935
    %v4544 = vunpack.c.l.b16 %v2936
    %v4545 = vunpack.c.h.b16 %v2936
    %v4546 = vunpack.c.l.b16 %v2937
    %v4547 = vunpack.c.h.b16 %v2937
    %v4548 = vunpack.c.l.b16 %v2938
    %v4549 = vunpack.c.h.b16 %v2938
    %v4550 = vunpack.c.l.b16 %v2939
    %v4551 = vunpack.c.h.b16 %v2939
    %v4552 = vunpack.c.l.b16 %v2940
    %v4553 = vunpack.c.h.b16 %v2940
    %v4554 = vunpack.c.l.b16 %v2941
    %v4555 = vunpack.c.h.b16 %v2941
    %v4556 = vunpack.c.l.b16 %v2942
    %v4557 = vunpack.c.h.b16 %v2942
    %v4558 = vunpack.c.l.b16 %v2943
    %v4559 = vunpack.c.h.b16 %v2943
    %v4560 = vunpack.c.l.b16 %v2944
    %v4561 = vunpack.c.h.b16 %v2944
    %v4562 = vunpack.c.l.b16 %v2945
    %v4563 = vunpack.c.h.b16 %v2945
    %v4564 = vunpack.c.l.b16 %v2946
    %v4565 = vunpack.c.h.b16 %v2946
    %v4566 = vunpack.c.l.b16 %v2947
    %v4567 = vunpack.c.h.b16 %v2947
    %v4568 = vunpack.c.l.b16 %v2948
    %v4569 = vunpack.c.h.b16 %v2948
    %v4570 = vunpack.c.l.b16 %v2949
    %v4571 = vunpack.c.h.b16 %v2949
    %v4572 = vunpack.c.l.b16 %v2950
    %v4573 = vunpack.c.h.b16 %v2950
    %v4574 = vunpack.c.l.b16 %v2951
    %v4575 = vunpack.c.h.b16 %v2951
    %v4576 = vunpack.c.l.b16 %v2952
    %v4577 = vunpack.c.h.b16 %v2952
    %v4578 = vunpack.c.l.b16 %v2953
    %v4579 = vunpack.c.h.b16 %v2953
    %v4580 = vunpack.c.l.b16 %v2954
    %v4581 = vunpack.c.h.b16 %v2954
    %v4582 = vunpack.c.l.b16 %v2955
    %v4583 = vunpack.c.h.b16 %v2955
    %v4584 = vunpack.c.l.b16 %v2956
    %v4585 = vunpack.c.h.b16 %v2956
    %v4586 = vunpack.c.l.b16 %v2957
    %v4587 = vunpack.c.h.b16 %v2957
    %v4588 = vunpack.c.l.b16 %v2958
    %v4589 = vunpack.c.h.b16 %v2958
    %v4590 = vunpack.c.l.b16 %v2959
    %v4591 = vunpack.c.h.b16 %v2959
    %v4592 = vunpack.c.l.b16 %v2960
    %v4593 = vunpack.c.h.b16 %v2960
    %v4594 = vunpack.c.l.b16 %v2961
    %v4595 = vunpack.c.h.b16 %v2961
    %v4596 = vunpack.c.l.b16 %v2962
    %v4597 = vunpack.c.h.b16 %v2962
    %v4598 = vunpack.c.l.b16 %v2963
    %v4599 = vunpack.c.h.b16 %v2963
    %v4600 = vunpack.c.l.b16 %v2964
    %v4601 = vunpack.c.h.b16 %v2964
    %v4602 = vunpack.c.l.b16 %v2965
    %v4603 = vunpack.c.h.b16 %v2965
    %v4604 = vunpack.c.l.b16 %v2966
    %v4605 = vunpack.c.h.b16 %v2966
    %v4606 = vunpack.c.l.b16 %v2967
    %v4607 = vunpack.c.h.b16 %v2967
    %v4608 = vunpack.c.l.b16 %v2968
    %v4609 = vunpack.c.h.b16 %v2968
    %v4610 = vunpack.c.l.b16 %v2969
    %v4611 = vunpack.c.h.b16 %v2969
    %v4612 = vunpack.c.l.b16 %v2970
    %v4613 = vunpack.c.h.b16 %v2970
    %v4614 = vunpack.c.l.b16 %v2971
    %v4615 = vunpack.c.h.b16 %v2971
    %v4616 = vunpack.c.l.b16 %v2972
    %v4617 = vunpack.c.h.b16 %v2972
    %v4618 = vunpack.c.l.b16 %v2973
    %v4619 = vunpack.c.h.b16 %v2973
    %v4620 = vunpack.c.l.b16 %v2974
    %v4621 = vunpack.c.h.b16 %v2974
    %v4622 = vunpack.c.l.b16 %v2975
    %v4623 = vunpack.c.h.b16 %v2975
    %v4624 = vunpack.c.l.b16 %v2976
    %v4625 = vunpack.c.h.b16 %v2976
    %v4626 = vunpack.c.l.b16 %v2977
    %v4627 = vunpack.c.h.b16 %v2977
    %v4628 = vunpack.c.l.b16 %v2978
    %v4629 = vunpack.c.h.b16 %v2978
    %v4630 = vunpack.c.l.b16 %v2979
    %v4631 = vunpack.c.h.b16 %v2979
    %v4632 = vunpack.c.l.b16 %v2980
    %v4633 = vunpack.c.h.b16 %v2980
    %v4634 = vunpack.c.l.b16 %v2981
    %v4635 = vunpack.c.h.b16 %v2981
    %v4636 = vunpack.c.l.b16 %v2982
    %v4637 = vunpack.c.h.b16 %v2982
    %v4638 = vunpack.c.l.b16 %v2983
    %v4639 = vunpack.c.h.b16 %v2983
    %v4640 = vunpack.c.l.b16 %v2984
    %v4641 = vunpack.c.h.b16 %v2984
    %v4642 = vunpack.c.l.b16 %v2985
    %v4643 = vunpack.c.h.b16 %v2985
    %v4644 = vunpack.c.l.b16 %v2986
    %v4645 = vunpack.c.h.b16 %v2986
    %v4646 = vunpack.c.l.b16 %v2987
    %v4647 = vunpack.c.h.b16 %v2987
    %v4648 = vunpack.c.l.b16 %v2988
    %v4649 = vunpack.c.h.b16 %v2988
    %v4650 = vunpack.c.l.b16 %v2989
    %v4651 = vunpack.c.h.b16 %v2989
    %v4652 = vunpack.c.l.b16 %v2990
    %v4653 = vunpack.c.h.b16 %v2990
    %v4654 = vunpack.c.l.b16 %v2991
    %v4655 = vunpack.c.h.b16 %v2991
    %v4656 = vunpack.c.l.b16 %v2992
    %v4657 = vunpack.c.h.b16 %v2992
    %v4658 = vunpack.c.l.b16 %v2993
    %v4659 = vunpack.c.h.b16 %v2993
    %v4660 = vunpack.c.l.b16 %v2994
    %v4661 = vunpack.c.h.b16 %v2994
    %v4662 = vunpack.c.l.b16 %v2995
    %v4663 = vunpack.c.h.b16 %v2995
    %v4664 = vunpack.c.l.b16 %v2996
    %v4665 = vunpack.c.h.b16 %v2996
    %v4666 = vunpack.c.l.b16 %v2997
    %v4667 = vunpack.c.h.b16 %v2997
    %v4668 = vunpack.c.l.b16 %v2998
    %v4669 = vunpack.c.h.b16 %v2998
    %v4670 = vunpack.c.l.b16 %v2999
    %v4671 = vunpack.c.h.b16 %v2999
    %v4672 = vunpack.c.l.b16 %v3000
    %v4673 = vunpack.c.h.b16 %v3000
    %v4674 = vunpack.c.l.b16 %v3001
    %v4675 = vunpack.c.h.b16 %v3001
    %v4676 = vunpack.c.l.b16 %v3002
    %v4677 = vunpack.c.h.b16 %v3002
    %v4678 = vunpack.c.l.b16 %v3003
    %v4679 = vunpack.c.h.b16 %v3003
    %v4680 = vunpack.c.l.b16 %v3004
    %v4681 = vunpack.c.h.b16 %v3004
    %v4682 = vunpack.c.l.b16 %v3005
    %v4683 = vunpack.c.h.b16 %v3005
    %v4684 = vunpack.c.l.b16 %v3006
    %v4685 = vunpack.c.h.b16 %v3006
    %v4686 = vunpack.c.l.b16 %v3007
    %v4687 = vunpack.c.h.b16 %v3007
    %v4688 = vunpack.c.l.b16 %v3008
    %v4689 = vunpack.c.h.b16 %v3008
    %v4690 = vunpack.c.l.b16 %v3009
    %v4691 = vunpack.c.h.b16 %v3009
    %v4692 = vunpack.c.l.b16 %v3010
    %v4693 = vunpack.c.h.b16 %v3010
    %v4694 = vunpack.c.l.b16 %v3011
    %v4695 = vunpack.c.h.b16 %v3011
    %v4696 = vunpack.c.l.b16 %v3012
    %v4697 = vunpack.c.h.b16 %v3012
    %v4698 = vunpack.c.l.b16 %v3013
    %v4699 = vunpack.c.h.b16 %v3013
    %v4700 = vunpack.c.l.b16 %v3014
    %v4701 = vunpack.c.h.b16 %v3014
    %v4702 = vunpack.c.l.b16 %v3015
    %v4703 = vunpack.c.h.b16 %v3015
    %v4704 = vunpack.c.l.b16 %v3016
    %v4705 = vunpack.c.h.b16 %v3016
    %v4706 = vunpack.c.l.b16 %v3017
    %v4707 = vunpack.c.h.b16 %v3017
    %v4708 = vunpack.c.l.b16 %v3018
    %v4709 = vunpack.c.h.b16 %v3018
    %v4710 = vunpack.c.l.b16 %v3019
    %v4711 = vunpack.c.h.b16 %v3019
    %v4712 = vunpack.c.l.b16 %v3020
    %v4713 = vunpack.c.h.b16 %v3020
    %v4714 = vunpack.c.l.b16 %v3021
    %v4715 = vunpack.c.h.b16 %v3021
    %v4716 = vunpack.c.l.b16 %v3022
    %v4717 = vunpack.c.h.b16 %v3022
    %v4718 = vunpack.c.l.b16 %v3023
    %v4719 = vunpack.c.h.b16 %v3023
    %v4720 = vunpack.c.l.b16 %v3024
    %v4721 = vunpack.c.h.b16 %v3024
    %v4722 = vunpack.c.l.b16 %v3025
    %v4723 = vunpack.c.h.b16 %v3025
    %v4724 = vunpack.c.l.b16 %v3026
    %v4725 = vunpack.c.h.b16 %v3026
    %v4726 = vunpack.c.l.b16 %v3027
    %v4727 = vunpack.c.h.b16 %v3027
    %v4728 = vunpack.c.l.b16 %v3028
    %v4729 = vunpack.c.h.b16 %v3028
    %v4730 = vunpack.c.l.b16 %v3029
    %v4731 = vunpack.c.h.b16 %v3029
    %v4732 = vunpack.c.l.b16 %v3030
    %v4733 = vunpack.c.h.b16 %v3030
    %v4734 = vunpack.c.l.b16 %v3031
    %v4735 = vunpack.c.h.b16 %v3031
    %v4736 = vpack.c.b16 %v3744, %v3712
    %v4737 = vpack.c.b16 %v3745, %v3713
    %v4738 = vpack.c.b16 %v3746, %v3714
    %v4739 = vpack.c.b16 %v3747, %v3715
    %v4740 = vpack.c.b16 %v3748, %v3716
    %v4741 = vpack.c.b16 %v3749, %v3717
    %v4742 = vpack.c.b16 %v3750, %v3718
    %v4743 = vpack.c.b16 %v3751, %v3719
    %v4744 = vpack.c.b16 %v3752, %v3720
    %v4745 = vpack.c.b16 %v3753, %v3721
    %v4746 = vpack.c.b16 %v3754, %v3722
    %v4747 = vpack.c.b16 %v3755, %v3723
    %v4748 = vpack.c.b16 %v3756, %v3724
    %v4749 = vpack.c.b16 %v3757, %v3725
    %v4750 = vpack.c.b16 %v3758, %v3726
    %v4751 = vpack.c.b16 %v3759, %v3727
    %v4752 = vpack.c.b16 %v3760, %v3728
    %v4753 = vpack.c.b16 %v3761, %v3729
    %v4754 = vpack.c.b16 %v3762, %v3730
    %v4755 = vpack.c.b16 %v3763, %v3731
    %v4756 = vpack.c.b16 %v3764, %v3732
    %v4757 = vpack.c.b16 %v3765, %v3733
    %v4758 = vpack.c.b16 %v3766, %v3734
    %v4759 = vpack.c.b16 %v3767, %v3735
    %v4760 = vpack.c.b16 %v3768, %v3736
    %v4761 = vpack.c.b16 %v3769, %v3737
    %v4762 = vpack.c.b16 %v3770, %v3738
    %v4763 = vpack.c.b16 %v3771, %v3739
    %v4764 = vpack.c.b16 %v3772, %v3740
    %v4765 = vpack.c.b16 %v3773, %v3741
    %v4766 = vpack.c.b16 %v3774, %v3742
    %v4767 = vpack.c.b16 %v3775, %v3743
    %v4768 = vpack.c.b16 %v3808, %v3776
    %v4769 = vpack.c.b16 %v3809, %v3777
    %v4770 = vpack.c.b16 %v3810, %v3778
    %v4771 = vpack.c.b16 %v3811, %v3779
    %v4772 = vpack.c.b16 %v3812, %v3780
    %v4773 = vpack.c.b16 %v3813, %v3781
    %v4774 = vpack.c.b16 %v3814, %v3782
    %v4775 = vpack.c.b16 %v3815, %v3783
    %v4776 = vpack.c.b16 %v3816, %v3784
    %v4777 = vpack.c.b16 %v3817, %v3785
    %v4778 = vpack.c.b16 %v3818, %v3786
    %v4779 = vpack.c.b16 %v3819, %v3787
    %v4780 = vpack.c.b16 %v3820, %v3788
    %v4781 = vpack.c.b16 %v3821, %v3789
    %v4782 = vpack.c.b16 %v3822, %v3790
    %v4783 = vpack.c.b16 %v3823, %v3791
    %v4784 = vpack.c.b16 %v3824, %v3792
    %v4785 = vpack.c.b16 %v3825, %v3793
    %v4786 = vpack.c.b16 %v3826, %v3794
    %v4787 = vpack.c.b16 %v3827, %v3795
    %v4788 = vpack.c.b16 %v3828, %v3796
    %v4789 = vpack.c.b16 %v3829, %v3797
    %v4790 = vpack.c.b16 %v3830, %v3798
    %v4791 = vpack.c.b16 %v3831, %v3799
    %v4792 = vpack.c.b16 %v3832, %v3800
    %v4793 = vpack.c.b16 %v3833, %v3801
    %v4794 = vpack.c.b16 %v3834, %v3802
    %v4795 = vpack.c.b16 %v3835, %v3803
    %v4796 = vpack.c.b16 %v3836, %v3804
    %v4797 = vpack.c.b16 %v3837, %v3805
    %v4798 = vpack.c.b16 %v3838, %v3806
    %v4799 = vpack.c.b16 %v3839, %v3807
    %v4800 = vpack.c.b16 %v3872, %v3840
    %v4801 = vpack.c.b16 %v3873, %v3841
    %v4802 = vpack.c.b16 %v3874, %v3842
    %v4803 = vpack.c.b16 %v3875, %v3843
    %v4804 = vpack.c.b16 %v3876, %v3844
    %v4805 = vpack.c.b16 %v3877, %v3845
    %v4806 = vpack.c.b16 %v3878, %v3846
    %v4807 = vpack.c.b16 %v3879, %v3847
    %v4808 = vpack.c.b16 %v3880, %v3848
    %v4809 = vpack.c.b16 %v3881, %v3849
    %v4810 = vpack.c.b16 %v3882, %v3850
    %v4811 = vpack.c.b16 %v3883, %v3851
    %v4812 = vpack.c.b16 %v3884, %v3852
    %v4813 = vpack.c.b16 %v3885, %v3853
    %v4814 = vpack.c.b16 %v3886, %v3854
    %v4815 = vpack.c.b16 %v3887, %v3855
    %v4816 = vpack.c.b16 %v3888, %v3856
    %v4817 = vpack.c.b16 %v3889, %v3857
    %v4818 = vpack.c.b16 %v3890, %v3858
    %v4819 = vpack.c.b16 %v3891, %v3859
    %v4820 = vpack.c.b16 %v3892, %v3860
    %v4821 = vpack.c.b16 %v3893, %v3861
    %v4822 = vpack.c.b16 %v3894, %v3862
    %v4823 = vpack.c.b16 %v3895, %v3863
    %v4824 = vpack.c.b16 %v3896, %v3864
    %v4825 = vpack.c.b16 %v3897, %v3865
    %v4826 = vpack.c.b16 %v3898, %v3866
    %v4827 = vpack.c.b16 %v3899, %v3867
    %v4828 = vpack.c.b16 %v3900, %v3868
    %v4829 = vpack.c.b16 %v3901, %v3869
    %v4830 = vpack.c.b16 %v3902, %v3870
    %v4831 = vpack.c.b16 %v3903, %v3871
    %v4832 = vpack.c.b16 %v3936, %v3904
    %v4833 = vpack.c.b16 %v3937, %v3905
    %v4834 = vpack.c.b16 %v3938, %v3906
    %v4835 = vpack.c.b16 %v3939, %v3907
    %v4836 = vpack.c.b16 %v3940, %v3908
    %v4837 = vpack.c.b16 %v3941, %v3909
    %v4838 = vpack.c.b16 %v3942, %v3910
    %v4839 = vpack.c.b16 %v3943, %v3911
    %v4840 = vpack.c.b16 %v3944, %v3912
    %v4841 = vpack.c.b16 %v3945, %v3913
    %v4842 = vpack.c.b16 %v3946, %v3914
    %v4843 = vpack.c.b16 %v3947, %v3915
    %v4844 = vpack.c.b16 %v3948, %v3916
    %v4845 = vpack.c.b16 %v3949, %v3917
    %v4846 = vpack.c.b16 %v3950, %v3918
    %v4847 = vpack.c.b16 %v3951, %v3919
    %v4848 = vpack.c.b16 %v3952, %v3920
    %v4849 = vpack.c.b16 %v3953, %v3921
    %v4850 = vpack.c.b16 %v3954, %v3922
    %v4851 = vpack.c.b16 %v3955, %v3923
    %v4852 = vpack.c.b16 %v3956, %v3924
    %v4853 = vpack.c.b16 %v3957, %v3925
    %v4854 = vpack.c.b16 %v3958, %v3926
    %v4855 = vpack.c.b16 %v3959, %v3927
    %v4856 = vpack.c.b16 %v3960, %v3928
    %v4857 = vpack.c.b16 %v3961, %v3929
    %v4858 = vpack.c.b16 %v3962, %v3930
    %v4859 = vpack.c.b16 %v3963, %v3931
    %v4860 = vpack.c.b16 %v3964, %v3932
    %v4861 = vpack.c.b16 %v3965, %v3933
    %v4862 = vpack.c.b16 %v3966, %v3934
    %v4863 = vpack.c.b16 %v3967, %v3935
    %v4864 = vpack.c.b16 %v4000, %v3968
    %v4865 = vpack.c.b16 %v4001, %v3969
    %v4866 = vpack.c.b16 %v4002, %v3970
    %v4867 = vpack.c.b16 %v4003, %v3971
    %v4868 = vpack.c.b16 %v4004, %v3972
    %v4869 = vpack.c.b16 %v4005, %v3973
    %v4870 = vpack.c.b16 %v4006, %v3974
    %v4871 = vpack.c.b16 %v4007, %v3975
    %v4872 = vpack.c.b16 %v4008, %v3976
    %v4873 = vpack.c.b16 %v4009, %v3977
    %v4874 = vpack.c.b16 %v4010, %v3978
    %v4875 = vpack.c.b16 %v4011, %v3979
    %v4876 = vpack.c.b16 %v4012, %v3980
    %v4877 = vpack.c.b16 %v4013, %v3981
    %v4878 = vpack.c.b16 %v4014, %v3982
    %v4879 = vpack.c.b16 %v4015, %v3983
    %v4880 = vpack.c.b16 %v4016, %v3984
    %v4881 = vpack.c.b16 %v4017, %v3985
    %v4882 = vpack.c.b16 %v4018, %v3986
    %v4883 = vpack.c.b16 %v4019, %v3987
    %v4884 = vpack.c.b16 %v4020, %v3988
    %v4885 = vpack.c.b16 %v4021, %v3989
    %v4886 = vpack.c.b16 %v4022, %v3990
    %v4887 = vpack.c.b16 %v4023, %v3991
    %v4888 = vpack.c.b16 %v4024, %v3992
    %v4889 = vpack.c.b16 %v4025, %v3993
    %v4890 = vpack.c.b16 %v4026, %v3994
    %v4891 = vpack.c.b16 %v4027, %v3995
    %v4892 = vpack.c.b16 %v4028, %v3996
    %v4893 = vpack.c.b16 %v4029, %v3997
    %v4894 = vpack.c.b16 %v4030, %v3998
    %v4895 = vpack.c.b16 %v4031, %v3999
    %v4896 = vpack.c.b16 %v4064, %v4032
    %v4897 = vpack.c.b16 %v4065, %v4033
    %v4898 = vpack.c.b16 %v4066, %v4034
    %v4899 = vpack.c.b16 %v4067, %v4035
    %v4900 = vpack.c.b16 %v4068, %v4036
    %v4901 = vpack.c.b16 %v4069, %v4037
    %v4902 = vpack.c.b16 %v4070, %v4038
    %v4903 = vpack.c.b16 %v4071, %v4039
    %v4904 = vpack.c.b16 %v4072, %v4040
    %v4905 = vpack.c.b16 %v4073, %v4041
    %v4906 = vpack.c.b16 %v4074, %v4042
    %v4907 = vpack.c.b16 %v4075, %v4043
    %v4908 = vpack.c.b16 %v4076, %v4044
    %v4909 = vpack.c.b16 %v4077, %v4045
    %v4910 = vpack.c.b16 %v4078, %v4046
    %v4911 = vpack.c.b16 %v4079, %v4047
    %v4912 = vpack.c.b16 %v4080, %v4048
    %v4913 = vpack.c.b16 %v4081, %v4049
    %v4914 = vpack.c.b16 %v4082, %v4050
    %v4915 = vpack.c.b16 %v4083, %v4051
    %v4916 = vpack.c.b16 %v4084, %v4052
    %v4917 = vpack.c.b16 %v4085, %v4053
    %v4918 = vpack.c.b16 %v4086, %v4054
    %v4919 = vpack.c.b16 %v4087, %v4055
    %v4920 = vpack.c.b16 %v4088, %v4056
    %v4921 = vpack.c.b16 %v4089, %v4057
    %v4922 = vpack.c.b16 %v4090, %v4058
    %v4923 = vpack.c.b16 %v4091, %v4059
    %v4924 = vpack.c.b16 %v4092, %v4060
    %v4925 = vpack.c.b16 %v4093, %v4061
    %v4926 = vpack.c.b16 %v4094, %v4062
    %v4927 = vpack.c.b16 %v4095, %v4063
    %v4928 = vpack.c.b16 %v4128, %v4096
    %v4929 = vpack.c.b16 %v4129, %v4097
    %v4930 = vpack.c.b16 %v4130, %v4098
    %v4931 = vpack.c.b16 %v4131, %v4099
    %v4932 = vpack.c.b16 %v4132, %v4100
    %v4933 = vpack.c.b16 %v4133, %v4101
    %v4934 = vpack.c.b16 %v4134, %v4102
    %v4935 = vpack.c.b16 %v4135, %v4103
    %v4936 = vpack.c.b16 %v4136, %v4104
    %v4937 = vpack.c.b16 %v4137, %v4105
    %v4938 = vpack.c.b16 %v4138, %v4106
    %v4939 = vpack.c.b16 %v4139, %v4107
    %v4940 = vpack.c.b16 %v4140, %v4108
    %v4941 = vpack.c.b16 %v4141, %v4109
    %v4942 = vpack.c.b16 %v4142, %v4110
    %v4943 = vpack.c.b16 %v4143, %v4111
    %v4944 = vpack.c.b16 %v4144, %v4112
    %v4945 = vpack.c.b16 %v4145, %v4113
    %v4946 = vpack.c.b16 %v4146, %v4114
    %v4947 = vpack.c.b16 %v4147, %v4115
    %v4948 = vpack.c.b16 %v4148, %v4116
    %v4949 = vpack.c.b16 %v4149, %v4117
    %v4950 = vpack.c.b16 %v4150, %v4118
    %v4951 = vpack.c.b16 %v4151, %v4119
    %v4952 = vpack.c.b16 %v4152, %v4120
    %v4953 = vpack.c.b16 %v4153, %v4121
    %v4954 = vpack.c.b16 %v4154, %v4122
    %v4955 = vpack.c.b16 %v4155, %v4123
    %v4956 = vpack.c.b16 %v4156, %v4124
    %v4957 = vpack.c.b16 %v4157, %v4125
    %v4958 = vpack.c.b16 %v4158, %v4126
    %v4959 = vpack.c.b16 %v4159, %v4127
    %v4960 = vpack.c.b16 %v4192, %v4160
    %v4961 = vpack.c.b16 %v4193, %v4161
    %v4962 = vpack.c.b16 %v4194, %v4162
    %v4963 = vpack.c.b16 %v4195, %v4163
    %v4964 = vpack.c.b16 %v4196, %v4164
    %v4965 = vpack.c.b16 %v4197, %v4165
    %v4966 = vpack.c.b16 %v4198, %v4166
    %v4967 = vpack.c.b16 %v4199, %v4167
    %v4968 = vpack.c.b16 %v4200, %v4168
    %v4969 = vpack.c.b16 %v4201, %v4169
    %v4970 = vpack.c.b16 %v4202, %v4170
    %v4971 = vpack.c.b16 %v4203, %v4171
    %v4972 = vpack.c.b16 %v4204, %v4172
    %v4973 = vpack.c.b16 %v4205, %v4173
    %v4974 = vpack.c.b16 %v4206, %v4174
    %v4975 = vpack.c.b16 %v4207, %v4175
    %v4976 = vpack.c.b16 %v4208, %v4176
    %v4977 = vpack.c.b16 %v4209, %v4177
    %v4978 = vpack.c.b16 %v4210, %v4178
    %v4979 = vpack.c.b16 %v4211, %v4179
    %v4980 = vpack.c.b16 %v4212, %v4180
    %v4981 = vpack.c.b16 %v4213, %v4181
    %v4982 = vpack.c.b16 %v4214, %v4182
    %v4983 = vpack.c.b16 %v4215, %v4183
    %v4984 = vpack.c.b16 %v4216, %v4184
    %v4985 = vpack.c.b16 %v4217, %v4185
    %v4986 = vpack.c.b16 %v4218, %v4186
    %v4987 = vpack.c.b16 %v4219, %v4187
    %v4988 = vpack.c.b16 %v4220, %v4188
    %v4989 = vpack.c.b16 %v4221, %v4189
    %v4990 = vpack.c.b16 %v4222, %v4190
    %v4991 = vpack.c.b16 %v4223, %v4191
    %v4992 = vpack.c.b16 %v4256, %v4224
    %v4993 = vpack.c.b16 %v4257, %v4225
    %v4994 = vpack.c.b16 %v4258, %v4226
    %v4995 = vpack.c.b16 %v4259, %v4227
    %v4996 = vpack.c.b16 %v4260, %v4228
    %v4997 = vpack.c.b16 %v4261, %v4229
    %v4998 = vpack.c.b16 %v4262, %v4230
    %v4999 = vpack.c.b16 %v4263, %v4231
    %v5000 = vpack.c.b16 %v4264, %v4232
    %v5001 = vpack.c.b16 %v4265, %v4233
    %v5002 = vpack.c.b16 %v4266, %v4234
    %v5003 = vpack.c.b16 %v4267, %v4235
    %v5004 = vpack.c.b16 %v4268, %v4236
    %v5005 = vpack.c.b16 %v4269, %v4237
    %v5006 = vpack.c.b16 %v4270, %v4238
    %v5007 = vpack.c.b16 %v4271, %v4239
    %v5008 = vpack.c.b16 %v4272, %v4240
    %v5009 = vpack.c.b16 %v4273, %v4241
    %v5010 = vpack.c.b16 %v4274, %v4242
    %v5011 = vpack.c.b16 %v4275, %v4243
    %v5012 = vpack.c.b16 %v4276, %v4244
    %v5013 = vpack.c.b16 %v4277, %v4245
    %v5014 = vpack.c.b16 %v4278, %v4246
    %v5015 = vpack.c.b16 %v4279, %v4247
    %v5016 = vpack.c.b16 %v4280, %v4248
    %v5017 = vpack.c.b16 %v4281, %v4249
    %v5018 = vpack.c.b16 %v4282, %v4250
    %v5019 = vpack.c.b16 %v4283, %v4251
    %v5020 = vpack.c.b16 %v4284, %v4252
    %v5021 = vpack.c.b16 %v4285, %v4253
    %v5022 = vpack.c.b16 %v4286, %v4254
    %v5023 = vpack.c.b16 %v4287, %v4255
    %v5024 = vpack.c.b16 %v4320, %v4288
    %v5025 = vpack.c.b16 %v4321, %v4289
    %v5026 = vpack.c.b16 %v4322, %v4290
    %v5027 = vpack.c.b16 %v4323, %v4291
    %v5028 = vpack.c.b16 %v4324, %v4292
    %v5029 = vpack.c.b16 %v4325, %v4293
    %v5030 = vpack.c.b16 %v4326, %v4294
    %v5031 = vpack.c.b16 %v4327, %v4295
    %v5032 = vpack.c.b16 %v4328, %v4296
    %v5033 = vpack.c.b16 %v4329, %v4297
    %v5034 = vpack.c.b16 %v4330, %v4298
    %v5035 = vpack.c.b16 %v4331, %v4299
    %v5036 = vpack.c.b16 %v4332, %v4300
    %v5037 = vpack.c.b16 %v4333, %v4301
    %v5038 = vpack.c.b16 %v4334, %v4302
    %v5039 = vpack.c.b16 %v4335, %v4303
    %v5040 = vpack.c.b16 %v4336, %v4304
    %v5041 = vpack.c.b16 %v4337, %v4305
    %v5042 = vpack.c.b16 %v4338, %v4306
    %v5043 = vpack.c.b16 %v4339, %v4307
    %v5044 = vpack.c.b16 %v4340, %v4308
    %v5045 = vpack.c.b16 %v4341, %v4309
    %v5046 = vpack.c.b16 %v4342, %v4310
    %v5047 = vpack.c.b16 %v4343, %v4311
    %v5048 = vpack.c.b16 %v4344, %v4312
    %v5049 = vpack.c.b16 %v4345, %v4313
    %v5050 = vpack.c.b16 %v4346, %v4314
    %v5051 = vpack.c.b16 %v4347, %v4315
    %v5052 = vpack.c.b16 %v4348, %v4316
    %v5053 = vpack.c.b16 %v4349, %v4317
    %v5054 = vpack.c.b16 %v4350, %v4318
    %v5055 = vpack.c.b16 %v4351, %v4319
    %v5056 = vpack.c.b16 %v4384, %v4352
    %v5057 = vpack.c.b16 %v4385, %v4353
    %v5058 = vpack.c.b16 %v4386, %v4354
    %v5059 = vpack.c.b16 %v4387, %v4355
    %v5060 = vpack.c.b16 %v4388, %v4356
    %v5061 = vpack.c.b16 %v4389, %v4357
    %v5062 = vpack.c.b16 %v4390, %v4358
    %v5063 = vpack.c.b16 %v4391, %v4359
    %v5064 = vpack.c.b16 %v4392, %v4360
    %v5065 = vpack.c.b16 %v4393, %v4361
    %v5066 = vpack.c.b16 %v4394, %v4362
    %v5067 = vpack.c.b16 %v4395, %v4363
    %v5068 = vpack.c.b16 %v4396, %v4364
    %v5069 = vpack.c.b16 %v4397, %v4365
    %v5070 = vpack.c.b16 %v4398, %v4366
    %v5071 = vpack.c.b16 %v4399, %v4367
    %v5072 = vpack.c.b16 %v4400, %v4368
    %v5073 = vpack.c.b16 %v4401, %v4369
    %v5074 = vpack.c.b16 %v4402, %v4370
    %v5075 = vpack.c.b16 %v4403, %v4371
    %v5076 = vpack.c.b16 %v4404, %v4372
    %v5077 = vpack.c.b16 %v4405, %v4373
    %v5078 = vpack.c.b16 %v4406, %v4374
    %v5079 = vpack.c.b16 %v4407, %v4375
    %v5080 = vpack.c.b16 %v4408, %v4376
    %v5081 = vpack.c.b16 %v4409, %v4377
    %v5082 = vpack.c.b16 %v4410, %v4378
    %v5083 = vpack.c.b16 %v4411, %v4379
    %v5084 = vpack.c.b16 %v4412, %v4380
    %v5085 = vpack.c.b16 %v4413, %v4381
    %v5086 = vpack.c.b16 %v4414, %v4382
    %v5087 = vpack.c.b16 %v4415, %v4383
    %v5088 = vpack.c.b16 %v4448, %v4416
    %v5089 = vpack.c.b16 %v4449, %v4417
    %v5090 = vpack.c.b16 %v4450, %v4418
    %v5091 = vpack.c.b16 %v4451, %v4419
    %v5092 = vpack.c.b16 %v4452, %v4420
    %v5093 = vpack.c.b16 %v4453, %v4421
    %v5094 = vpack.c.b16 %v4454, %v4422
    %v5095 = vpack.c.b16 %v4455, %v4423
    %v5096 = vpack.c.b16 %v4456, %v4424
    %v5097 = vpack.c.b16 %v4457, %v4425
    %v5098 = vpack.c.b16 %v4458, %v4426
    %v5099 = vpack.c.b16 %v4459, %v4427
    %v5100 = vpack.c.b16 %v4460, %v4428
    %v5101 = vpack.c.b16 %v4461, %v4429
    %v5102 = vpack.c.b16 %v4462, %v4430
    %v5103 = vpack.c.b16 %v4463, %v4431
    %v5104 = vpack.c.b16 %v4464, %v4432
    %v5105 = vpack.c.b16 %v4465, %v4433
    %v5106 = vpack.c.b16 %v4466, %v4434
    %v5107 = vpack.c.b16 %v4467, %v4435
    %v5108 = vpack.c.b16 %v4468, %v4436
    %v5109 = vpack.c.b16 %v4469, %v4437
    %v5110 = vpack.c.b16 %v4470, %v4438
    %v5111 = vpack.c.b16 %v4471, %v4439
    %v5112 = vpack.c.b16 %v4472, %v4440
    %v5113 = vpack.c.b16 %v4473, %v4441
    %v5114 = vpack.c.b16 %v4474, %v4442
    %v5115 = vpack.c.b16 %v4475, %v4443
    %v5116 = vpack.c.b16 %v4476, %v4444
    %v5117 = vpack.c.b16 %v4477, %v4445
    %v5118 = vpack.c.b16 %v4478, %v4446
    %v5119 = vpack.c.b16 %v4479, %v4447
    %v5120 = vpack.c.b16 %v4512, %v4480
    %v5121 = vpack.c.b16 %v4513, %v4481
    %v5122 = vpack.c.b16 %v4514, %v4482
    %v5123 = vpack.c.b16 %v4515, %v4483
    %v5124 = vpack.c.b16 %v4516, %v4484
    %v5125 = vpack.c.b16 %v4517, %v4485
    %v5126 = vpack.c.b16 %v4518, %v4486
    %v5127 = vpack.c.b16 %v4519, %v4487
    %v5128 = vpack.c.b16 %v4520, %v4488
    %v5129 = vpack.c.b16 %v4521, %v4489
    %v5130 = vpack.c.b16 %v4522, %v4490
    %v5131 = vpack.c.b16 %v4523, %v4491
    %v5132 = vpack.c.b16 %v4524, %v4492
    %v5133 = vpack.c.b16 %v4525, %v4493
    %v5134 = vpack.c.b16 %v4526, %v4494
    %v5135 = vpack.c.b16 %v4527, %v4495
    %v5136 = vpack.c.b16 %v4528, %v4496
    %v5137 = vpack.c.b16 %v4529, %v4497
    %v5138 = vpack.c.b16 %v4530, %v4498
    %v5139 = vpack.c.b16 %v4531, %v4499
    %v5140 = vpack.c.b16 %v4532, %v4500
    %v5141 = vpack.c.b16 %v4533, %v4501
    %v5142 = vpack.c.b16 %v4534, %v4502
    %v5143 = vpack.c.b16 %v4535, %v4503
    %v5144 = vpack.c.b16 %v4536, %v4504
    %v5145 = vpack.c.b16 %v4537, %v4505
    %v5146 = vpack.c.b16 %v4538, %v4506
    %v5147 = vpack.c.b16 %v4539, %v4507
    %v5148 = vpack.c.b16 %v4540, %v4508
    %v5149 = vpack.c.b16 %v4541, %v4509
    %v5150 = vpack.c.b16 %v4542, %v4510
    %v5151 = vpack.c.b16 %v4543, %v4511
    %v5152 = vpack.c.b16 %v4576, %v4544
    %v5153 = vpack.c.b16 %v4577, %v4545
    %v5154 = vpack.c.b16 %v4578, %v4546
    %v5155 = vpack.c.b16 %v4579, %v4547
    %v5156 = vpack.c.b16 %v4580, %v4548
    %v5157 = vpack.c.b16 %v4581, %v4549
    %v5158 = vpack.c.b16 %v4582, %v4550
    %v5159 = vpack.c.b16 %v4583, %v4551
    %v5160 = vpack.c.b16 %v4584, %v4552
    %v5161 = vpack.c.b16 %v4585, %v4553
    %v5162 = vpack.c.b16 %v4586, %v4554
    %v5163 = vpack.c.b16 %v4587, %v4555
    %v5164 = vpack.c.b16 %v4588, %v4556
    %v5165 = vpack.c.b16 %v4589, %v4557
    %v5166 = vpack.c.b16 %v4590, %v4558
    %v5167 = vpack.c.b16 %v4591, %v4559
    %v5168 = vpack.c.b16 %v4592, %v4560
    %v5169 = vpack.c.b16 %v4593, %v4561
    %v5170 = vpack.c.b16 %v4594, %v4562
    %v5171 = vpack.c.b16 %v4595, %v4563
    %v5172 = vpack.c.b16 %v4596, %v4564
    %v5173 = vpack.c.b16 %v4597, %v4565
    %v5174 = vpack.c.b16 %v4598, %v4566
    %v5175 = vpack.c.b16 %v4599, %v4567
    %v5176 = vpack.c.b16 %v4600, %v4568
    %v5177 = vpack.c.b16 %v4601, %v4569
    %v5178 = vpack.c.b16 %v4602, %v4570
    %v5179 = vpack.c.b16 %v4603, %v4571
    %v5180 = vpack.c.b16 %v4604, %v4572
    %v5181 = vpack.c.b16 %v4605, %v4573
    %v5182 = vpack.c.b16 %v4606, %v4574
    %v5183 = vpack.c.b16 %v4607, %v4575
    %v5184 = vpack.c.b16 %v4640, %v4608
    %v5185 = vpack.c.b16 %v4641, %v4609
    %v5186 = vpack.c.b16 %v4642, %v4610
    %v5187 = vpack.c.b16 %v4643, %v4611
    %v5188 = vpack.c.b16 %v4644, %v4612
    %v5189 = vpack.c.b16 %v4645, %v4613
    %v5190 = vpack.c.b16 %v4646, %v4614
    %v5191 = vpack.c.b16 %v4647, %v4615
    %v5192 = vpack.c.b16 %v4648, %v4616
    %v5193 = vpack.c.b16 %v4649, %v4617
    %v5194 = vpack.c.b16 %v4650, %v4618
    %v5195 = vpack.c.b16 %v4651, %v4619
    %v5196 = vpack.c.b16 %v4652, %v4620
    %v5197 = vpack.c.b16 %v4653, %v4621
    %v5198 = vpack.c.b16 %v4654, %v4622
    %v5199 = vpack.c.b16 %v4655, %v4623
    %v5200 = vpack.c.b16 %v4656, %v4624
    %v5201 = vpack.c.b16 %v4657, %v4625
    %v5202 = vpack.c.b16 %v4658, %v4626
    %v5203 = vpack.c.b16 %v4659, %v4627
    %v5204 = vpack.c.b16 %v4660, %v4628
    %v5205 = vpack.c.b16 %v4661, %v4629
    %v5206 = vpack.c.b16 %v4662, %v4630
    %v5207 = vpack.c.b16 %v4663, %v4631
    %v5208 = vpack.c.b16 %v4664, %v4632
    %v5209 = vpack.c.b16 %v4665, %v4633
    %v5210 = vpack.c.b16 %v4666, %v4634
    %v5211 = vpack.c.b16 %v4667, %v4635
    %v5212 = vpack.c.b16 %v4668, %v4636
    %v5213 = vpack.c.b16 %v4669, %v4637
    %v5214 = vpack.c.b16 %v4670, %v4638
    %v5215 = vpack.c.b16 %v4671, %v4639
    %v5216 = vpack.c.b16 %v4704, %v4672
    %v5217 = vpack.c.b16 %v4705, %v4673
    %v5218 = vpack.c.b16 %v4706, %v4674
    %v5219 = vpack.c.b16 %v4707, %v4675
    %v5220 = vpack.c.b16 %v4708, %v4676
    %v5221 = vpack.c.b16 %v4709, %v4677
    %v5222 = vpack.c.b16 %v4710, %v4678
    %v5223 = vpack.c.b16 %v4711, %v4679
    %v5224 = vpack.c.b16 %v4712, %v4680
    %v5225 = vpack.c.b16 %v4713, %v4681
    %v5226 = vpack.c.b16 %v4714, %v4682
    %v5227 = vpack.c.b16 %v4715, %v4683
    %v5228 = vpack.c.b16 %v4716, %v4684
    %v5229 = vpack.c.b16 %v4717, %v4685
    %v5230 = vpack.c.b16 %v4718, %v4686
    %v5231 = vpack.c.b16 %v4719, %v4687
    %v5232 = vpack.c.b16 %v4720, %v4688
    %v5233 = vpack.c.b16 %v4721, %v4689
    %v5234 = vpack.c.b16 %v4722, %v4690
    %v5235 = vpack.c.b16 %v4723, %v4691
    %v5236 = vpack.c.b16 %v4724, %v4692
    %v5237 = vpack.c.b16 %v4725, %v4693
    %v5238 = vpack.c.b16 %v4726, %v4694
    %v5239 = vpack.c.b16 %v4727, %v4695
    %v5240 = vpack.c.b16 %v4728, %v4696
    %v5241 = vpack.c.b16 %v4729, %v4697
    %v5242 = vpack.c.b16 %v4730, %v4698
    %v5243 = vpack.c.b16 %v4731, %v4699
    %v5244 = vpack.c.b16 %v4732, %v4700
    %v5245 = vpack.c.b16 %v4733, %v4701
    %v5246 = vpack.c.b16 %v4734, %v4702
    %v5247 = vpack.c.b16 %v4735, %v4703
    %5760 = vmatprep.subr.bf16.mxu0 %v4961
    %5761 = vmatpush1.bf16.msra.mxu0 %v4960
    %5762 = vmatprep.subr.bf16.mxu0 %v4929
    %5763 = vmatpush1.bf16.msra.mxu0 %v4928
    %5764 = vmatprep.subr.bf16.mxu0 %v4897
    %5765 = vmatpush1.bf16.msra.mxu0 %v4896
    %5766 = vmatprep.subr.bf16.mxu0 %v4865
    %5767 = vmatpush1.bf16.msra.mxu0 %v4864
    %5768 = vmatprep.subr.bf16.mxu0 %v4833
    %5769 = vmatpush1.bf16.msra.mxu0 %v4832
    %5770 = vmatprep.subr.bf16.mxu0 %v4801
    %5771 = vmatpush1.bf16.msra.mxu0 %v4800
    %5772 = vmatprep.subr.bf16.mxu0 %v4769
    %5773 = vmatpush1.bf16.msra.mxu0 %v4768
    %5774 = vmatprep.subr.bf16.mxu0 %v4737
    %5775 = vmatpush1.bf16.msra.mxu0 %v4736
    %5776 = vmatprep.subr.bf16.mxu0 %v5217
    %5777 = vmatpush2.bf16.msra.mxu0 %v5216
    %5778 = vmatprep.subr.bf16.mxu0 %v5185
    %5779 = vmatpush2.bf16.msra.mxu0 %v5184
    %5780 = vmatprep.subr.bf16.mxu0 %v5153
    %5781 = vmatpush2.bf16.msra.mxu0 %v5152
    %5782 = vmatprep.subr.bf16.mxu0 %v5121
    %5783 = vmatpush2.bf16.msra.mxu0 %v5120
    %5784 = vmatprep.subr.bf16.mxu0 %v5089
    %5785 = vmatpush2.bf16.msra.mxu0 %v5088
    %5786 = vmatprep.subr.bf16.mxu0 %v5057
    %5787 = vmatpush2.bf16.msra.mxu0 %v5056
    %5788 = vmatprep.subr.bf16.mxu0 %v5025
    %5789 = vmatpush2.bf16.msra.mxu0 %v5024
    %5790 = vmatprep.subr.bf16.mxu0 %v4993
    %5791 = vmatpush2.bf16.msra.mxu0 %v4992
    %5792 = vmatprep.mubr.bf16.mxu0 %v2519
    %5793 = vmatmul.mubr.bf16.gmra.mxu0 %v2518
    %v5794 = vpop.f32.mrf.mxu0
    %v5795 = vadd.f32 %v3043, %v5794
    %v5796 = vpop.f32.mrf.mxu0
    %v5797 = vadd.f32 %v3047, %v5796
    %v5798 = vpop.f32.mrf.mxu0
    %v5799 = vpop.f32.mrf.mxu0
    %5800 = vdwg.mxu0
    %5801 = vmatprep.subr.bf16.mxu0 %v4963
    %5802 = vmatpush1.bf16.msra.mxu0 %v4962
    %5803 = vmatprep.subr.bf16.mxu0 %v4931
    %5804 = vmatpush1.bf16.msra.mxu0 %v4930
    %5805 = vmatprep.subr.bf16.mxu0 %v4899
    %5806 = vmatpush1.bf16.msra.mxu0 %v4898
    %5807 = vmatprep.subr.bf16.mxu0 %v4867
    %5808 = vmatpush1.bf16.msra.mxu0 %v4866
    %5809 = vmatprep.subr.bf16.mxu0 %v4835
    %5810 = vmatpush1.bf16.msra.mxu0 %v4834
    %5811 = vmatprep.subr.bf16.mxu0 %v4803
    %5812 = vmatpush1.bf16.msra.mxu0 %v4802
    %5813 = vmatprep.subr.bf16.mxu0 %v4771
    %5814 = vmatpush1.bf16.msra.mxu0 %v4770
    %5815 = vmatprep.subr.bf16.mxu0 %v4739
    %5816 = vmatpush1.bf16.msra.mxu0 %v4738
    %5817 = vmatprep.subr.bf16.mxu0 %v5219
    %5818 = vmatpush2.bf16.msra.mxu0 %v5218
    %5819 = vmatprep.subr.bf16.mxu0 %v5187
    %5820 = vmatpush2.bf16.msra.mxu0 %v5186
    %5821 = vmatprep.subr.bf16.mxu0 %v5155
    %5822 = vmatpush2.bf16.msra.mxu0 %v5154
    %5823 = vmatprep.subr.bf16.mxu0 %v5123
    %5824 = vmatpush2.bf16.msra.mxu0 %v5122
    %5825 = vmatprep.subr.bf16.mxu0 %v5091
    %5826 = vmatpush2.bf16.msra.mxu0 %v5090
    %5827 = vmatprep.subr.bf16.mxu0 %v5059
    %5828 = vmatpush2.bf16.msra.mxu0 %v5058
    %5829 = vmatprep.subr.bf16.mxu0 %v5027
    %5830 = vmatpush2.bf16.msra.mxu0 %v5026
    %5831 = vmatprep.subr.bf16.mxu0 %v4995
    %5832 = vmatpush2.bf16.msra.mxu0 %v4994
    %5833 = vmatprep.mubr.bf16.mxu0 %v2519
    %5834 = vmatmul.mubr.bf16.gmra.mxu0 %v2518
    %v5835 = vpop.f32.mrf.mxu0
    %v5836 = vadd.f32 %v3051, %v5835
    %v5837 = vpop.f32.mrf.mxu0
    %v5838 = vadd.f32 %v3055, %v5837
    %v5839 = vpop.f32.mrf.mxu0
    %v5840 = vpop.f32.mrf.mxu0
    %5841 = vdwg.mxu0
    %5842 = vmatprep.subr.bf16.mxu0 %v4965
    %5843 = vmatpush1.bf16.msra.mxu0 %v4964
    %5844 = vmatprep.subr.bf16.mxu0 %v4933
    %5845 = vmatpush1.bf16.msra.mxu0 %v4932
    %5846 = vmatprep.subr.bf16.mxu0 %v4901
    %5847 = vmatpush1.bf16.msra.mxu0 %v4900
    %5848 = vmatprep.subr.bf16.mxu0 %v4869
    %5849 = vmatpush1.bf16.msra.mxu0 %v4868
    %5850 = vmatprep.subr.bf16.mxu0 %v4837
    %5851 = vmatpush1.bf16.msra.mxu0 %v4836
    %5852 = vmatprep.subr.bf16.mxu0 %v4805
    %5853 = vmatpush1.bf16.msra.mxu0 %v4804
    %5854 = vmatprep.subr.bf16.mxu0 %v4773
    %5855 = vmatpush1.bf16.msra.mxu0 %v4772
    %5856 = vmatprep.subr.bf16.mxu0 %v4741
    %5857 = vmatpush1.bf16.msra.mxu0 %v4740
    %5858 = vmatprep.subr.bf16.mxu0 %v5221
    %5859 = vmatpush2.bf16.msra.mxu0 %v5220
    %5860 = vmatprep.subr.bf16.mxu0 %v5189
    %5861 = vmatpush2.bf16.msra.mxu0 %v5188
    %5862 = vmatprep.subr.bf16.mxu0 %v5157
    %5863 = vmatpush2.bf16.msra.mxu0 %v5156
    %5864 = vmatprep.subr.bf16.mxu0 %v5125
    %5865 = vmatpush2.bf16.msra.mxu0 %v5124
    %5866 = vmatprep.subr.bf16.mxu0 %v5093
    %5867 = vmatpush2.bf16.msra.mxu0 %v5092
    %5868 = vmatprep.subr.bf16.mxu0 %v5061
    %5869 = vmatpush2.bf16.msra.mxu0 %v5060
    %5870 = vmatprep.subr.bf16.mxu0 %v5029
    %5871 = vmatpush2.bf16.msra.mxu0 %v5028
    %5872 = vmatprep.subr.bf16.mxu0 %v4997
    %5873 = vmatpush2.bf16.msra.mxu0 %v4996
    %5874 = vmatprep.mubr.bf16.mxu0 %v2519
    %5875 = vmatmul.mubr.bf16.gmra.mxu0 %v2518
    %v5876 = vpop.f32.mrf.mxu0
    %v5877 = vadd.f32 %v3059, %v5876
    %v5878 = vpop.f32.mrf.mxu0
    %v5879 = vadd.f32 %v3063, %v5878
    %v5880 = vpop.f32.mrf.mxu0
    %v5881 = vpop.f32.mrf.mxu0
    %5882 = vdwg.mxu0
    %5883 = vmatprep.subr.bf16.mxu0 %v4967
    %5884 = vmatpush1.bf16.msra.mxu0 %v4966
    %5885 = vmatprep.subr.bf16.mxu0 %v4935
    %5886 = vmatpush1.bf16.msra.mxu0 %v4934
    %5887 = vmatprep.subr.bf16.mxu0 %v4903
    %5888 = vmatpush1.bf16.msra.mxu0 %v4902
    %5889 = vmatprep.subr.bf16.mxu0 %v4871
    %5890 = vmatpush1.bf16.msra.mxu0 %v4870
    %5891 = vmatprep.subr.bf16.mxu0 %v4839
    %5892 = vmatpush1.bf16.msra.mxu0 %v4838
    %5893 = vmatprep.subr.bf16.mxu0 %v4807
    %5894 = vmatpush1.bf16.msra.mxu0 %v4806
    %5895 = vmatprep.subr.bf16.mxu0 %v4775
    %5896 = vmatpush1.bf16.msra.mxu0 %v4774
    %5897 = vmatprep.subr.bf16.mxu0 %v4743
    %5898 = vmatpush1.bf16.msra.mxu0 %v4742
    %5899 = vmatprep.subr.bf16.mxu0 %v5223
    %5900 = vmatpush2.bf16.msra.mxu0 %v5222
    %5901 = vmatprep.subr.bf16.mxu0 %v5191
    %5902 = vmatpush2.bf16.msra.mxu0 %v5190
    %5903 = vmatprep.subr.bf16.mxu0 %v5159
    %5904 = vmatpush2.bf16.msra.mxu0 %v5158
    %5905 = vmatprep.subr.bf16.mxu0 %v5127
    %5906 = vmatpush2.bf16.msra.mxu0 %v5126
    %5907 = vmatprep.subr.bf16.mxu0 %v5095
    %5908 = vmatpush2.bf16.msra.mxu0 %v5094
    %5909 = vmatprep.subr.bf16.mxu0 %v5063
    %5910 = vmatpush2.bf16.msra.mxu0 %v5062
    %5911 = vmatprep.subr.bf16.mxu0 %v5031
    %5912 = vmatpush2.bf16.msra.mxu0 %v5030
    %5913 = vmatprep.subr.bf16.mxu0 %v4999
    %5914 = vmatpush2.bf16.msra.mxu0 %v4998
    %5915 = vmatprep.mubr.bf16.mxu0 %v2519
    %5916 = vmatmul.mubr.bf16.gmra.mxu0 %v2518
    %v5917 = vpop.f32.mrf.mxu0
    %v5918 = vadd.f32 %v3067, %v5917
    %v5919 = vpop.f32.mrf.mxu0
    %v5920 = vadd.f32 %v3071, %v5919
    %v5921 = vpop.f32.mrf.mxu0
    %v5922 = vpop.f32.mrf.mxu0
    %5923 = vdwg.mxu0
    %5924 = vmatprep.subr.bf16.mxu0 %v4969
    %5925 = vmatpush1.bf16.msra.mxu0 %v4968
    %5926 = vmatprep.subr.bf16.mxu0 %v4937
    %5927 = vmatpush1.bf16.msra.mxu0 %v4936
    %5928 = vmatprep.subr.bf16.mxu0 %v4905
    %5929 = vmatpush1.bf16.msra.mxu0 %v4904
    %5930 = vmatprep.subr.bf16.mxu0 %v4873
    %5931 = vmatpush1.bf16.msra.mxu0 %v4872
    %5932 = vmatprep.subr.bf16.mxu0 %v4841
    %5933 = vmatpush1.bf16.msra.mxu0 %v4840
    %5934 = vmatprep.subr.bf16.mxu0 %v4809
    %5935 = vmatpush1.bf16.msra.mxu0 %v4808
    %5936 = vmatprep.subr.bf16.mxu0 %v4777
    %5937 = vmatpush1.bf16.msra.mxu0 %v4776
    %5938 = vmatprep.subr.bf16.mxu0 %v4745
    %5939 = vmatpush1.bf16.msra.mxu0 %v4744
    %5940 = vmatprep.subr.bf16.mxu0 %v5225
    %5941 = vmatpush2.bf16.msra.mxu0 %v5224
    %5942 = vmatprep.subr.bf16.mxu0 %v5193
    %5943 = vmatpush2.bf16.msra.mxu0 %v5192
    %5944 = vmatprep.subr.bf16.mxu0 %v5161
    %5945 = vmatpush2.bf16.msra.mxu0 %v5160
    %5946 = vmatprep.subr.bf16.mxu0 %v5129
    %5947 = vmatpush2.bf16.msra.mxu0 %v5128
    %5948 = vmatprep.subr.bf16.mxu0 %v5097
    %5949 = vmatpush2.bf16.msra.mxu0 %v5096
    %5950 = vmatprep.subr.bf16.mxu0 %v5065
    %5951 = vmatpush2.bf16.msra.mxu0 %v5064
    %5952 = vmatprep.subr.bf16.mxu0 %v5033
    %5953 = vmatpush2.bf16.msra.mxu0 %v5032
    %5954 = vmatprep.subr.bf16.mxu0 %v5001
    %5955 = vmatpush2.bf16.msra.mxu0 %v5000
    %5956 = vmatprep.mubr.bf16.mxu0 %v2519
    %5957 = vmatmul.mubr.bf16.gmra.mxu0 %v2518
    %v5958 = vpop.f32.mrf.mxu0
    %v5959 = vadd.f32 %v3075, %v5958
    %v5960 = vpop.f32.mrf.mxu0
    %v5961 = vadd.f32 %v3079, %v5960
    %v5962 = vpop.f32.mrf.mxu0
    %v5963 = vpop.f32.mrf.mxu0
    %5964 = vdwg.mxu0
    %5965 = vmatprep.subr.bf16.mxu0 %v4971
    %5966 = vmatpush1.bf16.msra.mxu0 %v4970
    %5967 = vmatprep.subr.bf16.mxu0 %v4939
    %5968 = vmatpush1.bf16.msra.mxu0 %v4938
    %5969 = vmatprep.subr.bf16.mxu0 %v4907
    %5970 = vmatpush1.bf16.msra.mxu0 %v4906
    %5971 = vmatprep.subr.bf16.mxu0 %v4875
    %5972 = vmatpush1.bf16.msra.mxu0 %v4874
    %5973 = vmatprep.subr.bf16.mxu0 %v4843
    %5974 = vmatpush1.bf16.msra.mxu0 %v4842
    %5975 = vmatprep.subr.bf16.mxu0 %v4811
    %5976 = vmatpush1.bf16.msra.mxu0 %v4810
    %5977 = vmatprep.subr.bf16.mxu0 %v4779
    %5978 = vmatpush1.bf16.msra.mxu0 %v4778
    %5979 = vmatprep.subr.bf16.mxu0 %v4747
    %5980 = vmatpush1.bf16.msra.mxu0 %v4746
    %5981 = vmatprep.subr.bf16.mxu0 %v5227
    %5982 = vmatpush2.bf16.msra.mxu0 %v5226
    %5983 = vmatprep.subr.bf16.mxu0 %v5195
    %5984 = vmatpush2.bf16.msra.mxu0 %v5194
    %5985 = vmatprep.subr.bf16.mxu0 %v5163
    %5986 = vmatpush2.bf16.msra.mxu0 %v5162
    %5987 = vmatprep.subr.bf16.mxu0 %v5131
    %5988 = vmatpush2.bf16.msra.mxu0 %v5130
    %5989 = vmatprep.subr.bf16.mxu0 %v5099
    %5990 = vmatpush2.bf16.msra.mxu0 %v5098
    %5991 = vmatprep.subr.bf16.mxu0 %v5067
    %5992 = vmatpush2.bf16.msra.mxu0 %v5066
    %5993 = vmatprep.subr.bf16.mxu0 %v5035
    %5994 = vmatpush2.bf16.msra.mxu0 %v5034
    %5995 = vmatprep.subr.bf16.mxu0 %v5003
    %5996 = vmatpush2.bf16.msra.mxu0 %v5002
    %5997 = vmatprep.mubr.bf16.mxu0 %v2519
    %5998 = vmatmul.mubr.bf16.gmra.mxu0 %v2518
    %v5999 = vpop.f32.mrf.mxu0
    %v6000 = vadd.f32 %v3083, %v5999
    %v6001 = vpop.f32.mrf.mxu0
    %v6002 = vadd.f32 %v3087, %v6001
    %v6003 = vpop.f32.mrf.mxu0
    %v6004 = vpop.f32.mrf.mxu0
    %6005 = vdwg.mxu0
    %6006 = vmatprep.subr.bf16.mxu0 %v4973
    %6007 = vmatpush1.bf16.msra.mxu0 %v4972
    %6008 = vmatprep.subr.bf16.mxu0 %v4941
    %6009 = vmatpush1.bf16.msra.mxu0 %v4940
    %6010 = vmatprep.subr.bf16.mxu0 %v4909
    %6011 = vmatpush1.bf16.msra.mxu0 %v4908
    %6012 = vmatprep.subr.bf16.mxu0 %v4877
    %6013 = vmatpush1.bf16.msra.mxu0 %v4876
    %6014 = vmatprep.subr.bf16.mxu0 %v4845
    %6015 = vmatpush1.bf16.msra.mxu0 %v4844
    %6016 = vmatprep.subr.bf16.mxu0 %v4813
    %6017 = vmatpush1.bf16.msra.mxu0 %v4812
    %6018 = vmatprep.subr.bf16.mxu0 %v4781
    %6019 = vmatpush1.bf16.msra.mxu0 %v4780
    %6020 = vmatprep.subr.bf16.mxu0 %v4749
    %6021 = vmatpush1.bf16.msra.mxu0 %v4748
    %6022 = vmatprep.subr.bf16.mxu0 %v5229
    %6023 = vmatpush2.bf16.msra.mxu0 %v5228
    %6024 = vmatprep.subr.bf16.mxu0 %v5197
    %6025 = vmatpush2.bf16.msra.mxu0 %v5196
    %6026 = vmatprep.subr.bf16.mxu0 %v5165
    %6027 = vmatpush2.bf16.msra.mxu0 %v5164
    %6028 = vmatprep.subr.bf16.mxu0 %v5133
    %6029 = vmatpush2.bf16.msra.mxu0 %v5132
    %6030 = vmatprep.subr.bf16.mxu0 %v5101
    %6031 = vmatpush2.bf16.msra.mxu0 %v5100
    %6032 = vmatprep.subr.bf16.mxu0 %v5069
    %6033 = vmatpush2.bf16.msra.mxu0 %v5068
    %6034 = vmatprep.subr.bf16.mxu0 %v5037
    %6035 = vmatpush2.bf16.msra.mxu0 %v5036
    %6036 = vmatprep.subr.bf16.mxu0 %v5005
    %6037 = vmatpush2.bf16.msra.mxu0 %v5004
    %6038 = vmatprep.mubr.bf16.mxu0 %v2519
    %6039 = vmatmul.mubr.bf16.gmra.mxu0 %v2518
    %v6040 = vpop.f32.mrf.mxu0
    %v6041 = vadd.f32 %v3091, %v6040
    %v6042 = vpop.f32.mrf.mxu0
    %v6043 = vadd.f32 %v3095, %v6042
    %v6044 = vpop.f32.mrf.mxu0
    %v6045 = vpop.f32.mrf.mxu0
    %6046 = vdwg.mxu0
    %6047 = vmatprep.subr.bf16.mxu0 %v4975
    %6048 = vmatpush1.bf16.msra.mxu0 %v4974
    %6049 = vmatprep.subr.bf16.mxu0 %v4943
    %6050 = vmatpush1.bf16.msra.mxu0 %v4942
    %6051 = vmatprep.subr.bf16.mxu0 %v4911
    %6052 = vmatpush1.bf16.msra.mxu0 %v4910
    %6053 = vmatprep.subr.bf16.mxu0 %v4879
    %6054 = vmatpush1.bf16.msra.mxu0 %v4878
    %6055 = vmatprep.subr.bf16.mxu0 %v4847
    %6056 = vmatpush1.bf16.msra.mxu0 %v4846
    %6057 = vmatprep.subr.bf16.mxu0 %v4815
    %6058 = vmatpush1.bf16.msra.mxu0 %v4814
    %6059 = vmatprep.subr.bf16.mxu0 %v4783
    %6060 = vmatpush1.bf16.msra.mxu0 %v4782
    %6061 = vmatprep.subr.bf16.mxu0 %v4751
    %6062 = vmatpush1.bf16.msra.mxu0 %v4750
    %6063 = vmatprep.subr.bf16.mxu0 %v5231
    %6064 = vmatpush2.bf16.msra.mxu0 %v5230
    %6065 = vmatprep.subr.bf16.mxu0 %v5199
    %6066 = vmatpush2.bf16.msra.mxu0 %v5198
    %6067 = vmatprep.subr.bf16.mxu0 %v5167
    %6068 = vmatpush2.bf16.msra.mxu0 %v5166
    %6069 = vmatprep.subr.bf16.mxu0 %v5135
    %6070 = vmatpush2.bf16.msra.mxu0 %v5134
    %6071 = vmatprep.subr.bf16.mxu0 %v5103
    %6072 = vmatpush2.bf16.msra.mxu0 %v5102
    %6073 = vmatprep.subr.bf16.mxu0 %v5071
    %6074 = vmatpush2.bf16.msra.mxu0 %v5070
    %6075 = vmatprep.subr.bf16.mxu0 %v5039
    %6076 = vmatpush2.bf16.msra.mxu0 %v5038
    %6077 = vmatprep.subr.bf16.mxu0 %v5007
    %6078 = vmatpush2.bf16.msra.mxu0 %v5006
    %6079 = vmatprep.mubr.bf16.mxu0 %v2519
    %6080 = vmatmul.mubr.bf16.gmra.mxu0 %v2518
    %v6081 = vpop.f32.mrf.mxu0
    %v6082 = vadd.f32 %v3099, %v6081
    %v6083 = vpop.f32.mrf.mxu0
    %v6084 = vadd.f32 %v3103, %v6083
    %v6085 = vpop.f32.mrf.mxu0
    %v6086 = vpop.f32.mrf.mxu0
    %6087 = vdwg.mxu0
    %6088 = vmatprep.subr.bf16.mxu0 %v4977
    %6089 = vmatpush1.bf16.msra.mxu0 %v4976
    %6090 = vmatprep.subr.bf16.mxu0 %v4945
    %6091 = vmatpush1.bf16.msra.mxu0 %v4944
    %6092 = vmatprep.subr.bf16.mxu0 %v4913
    %6093 = vmatpush1.bf16.msra.mxu0 %v4912
    %6094 = vmatprep.subr.bf16.mxu0 %v4881
    %6095 = vmatpush1.bf16.msra.mxu0 %v4880
    %6096 = vmatprep.subr.bf16.mxu0 %v4849
    %6097 = vmatpush1.bf16.msra.mxu0 %v4848
    %6098 = vmatprep.subr.bf16.mxu0 %v4817
    %6099 = vmatpush1.bf16.msra.mxu0 %v4816
    %6100 = vmatprep.subr.bf16.mxu0 %v4785
    %6101 = vmatpush1.bf16.msra.mxu0 %v4784
    %6102 = vmatprep.subr.bf16.mxu0 %v4753
    %6103 = vmatpush1.bf16.msra.mxu0 %v4752
    %6104 = vmatprep.subr.bf16.mxu0 %v5233
    %6105 = vmatpush2.bf16.msra.mxu0 %v5232
    %6106 = vmatprep.subr.bf16.mxu0 %v5201
    %6107 = vmatpush2.bf16.msra.mxu0 %v5200
    %6108 = vmatprep.subr.bf16.mxu0 %v5169
    %6109 = vmatpush2.bf16.msra.mxu0 %v5168
    %6110 = vmatprep.subr.bf16.mxu0 %v5137
    %6111 = vmatpush2.bf16.msra.mxu0 %v5136
    %6112 = vmatprep.subr.bf16.mxu0 %v5105
    %6113 = vmatpush2.bf16.msra.mxu0 %v5104
    %6114 = vmatprep.subr.bf16.mxu0 %v5073
    %6115 = vmatpush2.bf16.msra.mxu0 %v5072
    %6116 = vmatprep.subr.bf16.mxu0 %v5041
    %6117 = vmatpush2.bf16.msra.mxu0 %v5040
    %6118 = vmatprep.subr.bf16.mxu0 %v5009
    %6119 = vmatpush2.bf16.msra.mxu0 %v5008
    %6120 = vmatprep.mubr.bf16.mxu0 %v2519
    %6121 = vmatmul.mubr.bf16.gmra.mxu0 %v2518
    %v6122 = vpop.f32.mrf.mxu0
    %v6123 = vadd.f32 %v3107, %v6122
    %v6124 = vpop.f32.mrf.mxu0
    %v6125 = vadd.f32 %v3111, %v6124
    %v6126 = vpop.f32.mrf.mxu0
    %v6127 = vpop.f32.mrf.mxu0
    %6128 = vdwg.mxu0
    %6129 = vmatprep.subr.bf16.mxu0 %v4979
    %6130 = vmatpush1.bf16.msra.mxu0 %v4978
    %6131 = vmatprep.subr.bf16.mxu0 %v4947
    %6132 = vmatpush1.bf16.msra.mxu0 %v4946
    %6133 = vmatprep.subr.bf16.mxu0 %v4915
    %6134 = vmatpush1.bf16.msra.mxu0 %v4914
    %6135 = vmatprep.subr.bf16.mxu0 %v4883
    %6136 = vmatpush1.bf16.msra.mxu0 %v4882
    %6137 = vmatprep.subr.bf16.mxu0 %v4851
    %6138 = vmatpush1.bf16.msra.mxu0 %v4850
    %6139 = vmatprep.subr.bf16.mxu0 %v4819
    %6140 = vmatpush1.bf16.msra.mxu0 %v4818
    %6141 = vmatprep.subr.bf16.mxu0 %v4787
    %6142 = vmatpush1.bf16.msra.mxu0 %v4786
    %6143 = vmatprep.subr.bf16.mxu0 %v4755
    %6144 = vmatpush1.bf16.msra.mxu0 %v4754
    %6145 = vmatprep.subr.bf16.mxu0 %v5235
    %6146 = vmatpush2.bf16.msra.mxu0 %v5234
    %6147 = vmatprep.subr.bf16.mxu0 %v5203
    %6148 = vmatpush2.bf16.msra.mxu0 %v5202
    %6149 = vmatprep.subr.bf16.mxu0 %v5171
    %6150 = vmatpush2.bf16.msra.mxu0 %v5170
    %6151 = vmatprep.subr.bf16.mxu0 %v5139
    %6152 = vmatpush2.bf16.msra.mxu0 %v5138
    %6153 = vmatprep.subr.bf16.mxu0 %v5107
    %6154 = vmatpush2.bf16.msra.mxu0 %v5106
    %6155 = vmatprep.subr.bf16.mxu0 %v5075
    %6156 = vmatpush2.bf16.msra.mxu0 %v5074
    %6157 = vmatprep.subr.bf16.mxu0 %v5043
    %6158 = vmatpush2.bf16.msra.mxu0 %v5042
    %6159 = vmatprep.subr.bf16.mxu0 %v5011
    %6160 = vmatpush2.bf16.msra.mxu0 %v5010
    %6161 = vmatprep.mubr.bf16.mxu0 %v2519
    %6162 = vmatmul.mubr.bf16.gmra.mxu0 %v2518
    %v6163 = vpop.f32.mrf.mxu0
    %v6164 = vadd.f32 %v3115, %v6163
    %v6165 = vpop.f32.mrf.mxu0
    %v6166 = vadd.f32 %v3119, %v6165
    %v6167 = vpop.f32.mrf.mxu0
    %v6168 = vpop.f32.mrf.mxu0
    %6169 = vdwg.mxu0
    %6170 = vmatprep.subr.bf16.mxu0 %v4981
    %6171 = vmatpush1.bf16.msra.mxu0 %v4980
    %6172 = vmatprep.subr.bf16.mxu0 %v4949
    %6173 = vmatpush1.bf16.msra.mxu0 %v4948
    %6174 = vmatprep.subr.bf16.mxu0 %v4917
    %6175 = vmatpush1.bf16.msra.mxu0 %v4916
    %6176 = vmatprep.subr.bf16.mxu0 %v4885
    %6177 = vmatpush1.bf16.msra.mxu0 %v4884
    %6178 = vmatprep.subr.bf16.mxu0 %v4853
    %6179 = vmatpush1.bf16.msra.mxu0 %v4852
    %6180 = vmatprep.subr.bf16.mxu0 %v4821
    %6181 = vmatpush1.bf16.msra.mxu0 %v4820
    %6182 = vmatprep.subr.bf16.mxu0 %v4789
    %6183 = vmatpush1.bf16.msra.mxu0 %v4788
    %6184 = vmatprep.subr.bf16.mxu0 %v4757
    %6185 = vmatpush1.bf16.msra.mxu0 %v4756
    %6186 = vmatprep.subr.bf16.mxu0 %v5237
    %6187 = vmatpush2.bf16.msra.mxu0 %v5236
    %6188 = vmatprep.subr.bf16.mxu0 %v5205
    %6189 = vmatpush2.bf16.msra.mxu0 %v5204
    %6190 = vmatprep.subr.bf16.mxu0 %v5173
    %6191 = vmatpush2.bf16.msra.mxu0 %v5172
    %6192 = vmatprep.subr.bf16.mxu0 %v5141
    %6193 = vmatpush2.bf16.msra.mxu0 %v5140
    %6194 = vmatprep.subr.bf16.mxu0 %v5109
    %6195 = vmatpush2.bf16.msra.mxu0 %v5108
    %6196 = vmatprep.subr.bf16.mxu0 %v5077
    %6197 = vmatpush2.bf16.msra.mxu0 %v5076
    %6198 = vmatprep.subr.bf16.mxu0 %v5045
    %6199 = vmatpush2.bf16.msra.mxu0 %v5044
    %6200 = vmatprep.subr.bf16.mxu0 %v5013
    %6201 = vmatpush2.bf16.msra.mxu0 %v5012
    %6202 = vmatprep.mubr.bf16.mxu0 %v2519
    %6203 = vmatmul.mubr.bf16.gmra.mxu0 %v2518
    %v6204 = vpop.f32.mrf.mxu0
    %v6205 = vadd.f32 %v3123, %v6204
    %v6206 = vpop.f32.mrf.mxu0
    %v6207 = vadd.f32 %v3127, %v6206
    %v6208 = vpop.f32.mrf.mxu0
    %v6209 = vpop.f32.mrf.mxu0
    %6210 = vdwg.mxu0
    %6211 = vmatprep.subr.bf16.mxu0 %v4983
    %6212 = vmatpush1.bf16.msra.mxu0 %v4982
    %6213 = vmatprep.subr.bf16.mxu0 %v4951
    %6214 = vmatpush1.bf16.msra.mxu0 %v4950
    %6215 = vmatprep.subr.bf16.mxu0 %v4919
    %6216 = vmatpush1.bf16.msra.mxu0 %v4918
    %6217 = vmatprep.subr.bf16.mxu0 %v4887
    %6218 = vmatpush1.bf16.msra.mxu0 %v4886
    %6219 = vmatprep.subr.bf16.mxu0 %v4855
    %6220 = vmatpush1.bf16.msra.mxu0 %v4854
    %6221 = vmatprep.subr.bf16.mxu0 %v4823
    %6222 = vmatpush1.bf16.msra.mxu0 %v4822
    %6223 = vmatprep.subr.bf16.mxu0 %v4791
    %6224 = vmatpush1.bf16.msra.mxu0 %v4790
    %6225 = vmatprep.subr.bf16.mxu0 %v4759
    %6226 = vmatpush1.bf16.msra.mxu0 %v4758
    %6227 = vmatprep.subr.bf16.mxu0 %v5239
    %6228 = vmatpush2.bf16.msra.mxu0 %v5238
    %6229 = vmatprep.subr.bf16.mxu0 %v5207
    %6230 = vmatpush2.bf16.msra.mxu0 %v5206
    %6231 = vmatprep.subr.bf16.mxu0 %v5175
    %6232 = vmatpush2.bf16.msra.mxu0 %v5174
    %6233 = vmatprep.subr.bf16.mxu0 %v5143
    %6234 = vmatpush2.bf16.msra.mxu0 %v5142
    %6235 = vmatprep.subr.bf16.mxu0 %v5111
    %6236 = vmatpush2.bf16.msra.mxu0 %v5110
    %6237 = vmatprep.subr.bf16.mxu0 %v5079
    %6238 = vmatpush2.bf16.msra.mxu0 %v5078
    %6239 = vmatprep.subr.bf16.mxu0 %v5047
    %6240 = vmatpush2.bf16.msra.mxu0 %v5046
    %6241 = vmatprep.subr.bf16.mxu0 %v5015
    %6242 = vmatpush2.bf16.msra.mxu0 %v5014
    %6243 = vmatprep.mubr.bf16.mxu0 %v2519
    %6244 = vmatmul.mubr.bf16.gmra.mxu0 %v2518
    %v6245 = vpop.f32.mrf.mxu0
    %v6246 = vadd.f32 %v3131, %v6245
    %v6247 = vpop.f32.mrf.mxu0
    %v6248 = vadd.f32 %v3135, %v6247
    %v6249 = vpop.f32.mrf.mxu0
    %v6250 = vpop.f32.mrf.mxu0
    %6251 = vdwg.mxu0
    %6252 = vmatprep.subr.bf16.mxu0 %v4985
    %6253 = vmatpush1.bf16.msra.mxu0 %v4984
    %6254 = vmatprep.subr.bf16.mxu0 %v4953
    %6255 = vmatpush1.bf16.msra.mxu0 %v4952
    %6256 = vmatprep.subr.bf16.mxu0 %v4921
    %6257 = vmatpush1.bf16.msra.mxu0 %v4920
    %6258 = vmatprep.subr.bf16.mxu0 %v4889
    %6259 = vmatpush1.bf16.msra.mxu0 %v4888
    %6260 = vmatprep.subr.bf16.mxu0 %v4857
    %6261 = vmatpush1.bf16.msra.mxu0 %v4856
    %6262 = vmatprep.subr.bf16.mxu0 %v4825
    %6263 = vmatpush1.bf16.msra.mxu0 %v4824
    %6264 = vmatprep.subr.bf16.mxu0 %v4793
    %6265 = vmatpush1.bf16.msra.mxu0 %v4792
    %6266 = vmatprep.subr.bf16.mxu0 %v4761
    %6267 = vmatpush1.bf16.msra.mxu0 %v4760
    %6268 = vmatprep.subr.bf16.mxu0 %v5241
    %6269 = vmatpush2.bf16.msra.mxu0 %v5240
    %6270 = vmatprep.subr.bf16.mxu0 %v5209
    %6271 = vmatpush2.bf16.msra.mxu0 %v5208
    %6272 = vmatprep.subr.bf16.mxu0 %v5177
    %6273 = vmatpush2.bf16.msra.mxu0 %v5176
    %6274 = vmatprep.subr.bf16.mxu0 %v5145
    %6275 = vmatpush2.bf16.msra.mxu0 %v5144
    %6276 = vmatprep.subr.bf16.mxu0 %v5113
    %6277 = vmatpush2.bf16.msra.mxu0 %v5112
    %6278 = vmatprep.subr.bf16.mxu0 %v5081
    %6279 = vmatpush2.bf16.msra.mxu0 %v5080
    %6280 = vmatprep.subr.bf16.mxu0 %v5049
    %6281 = vmatpush2.bf16.msra.mxu0 %v5048
    %6282 = vmatprep.subr.bf16.mxu0 %v5017
    %6283 = vmatpush2.bf16.msra.mxu0 %v5016
    %6284 = vmatprep.mubr.bf16.mxu0 %v2519
    %6285 = vmatmul.mubr.bf16.gmra.mxu0 %v2518
    %v6286 = vpop.f32.mrf.mxu0
    %v6287 = vadd.f32 %v3139, %v6286
    %v6288 = vpop.f32.mrf.mxu0
    %v6289 = vadd.f32 %v3143, %v6288
    %v6290 = vpop.f32.mrf.mxu0
    %v6291 = vpop.f32.mrf.mxu0
    %6292 = vdwg.mxu0
    %6293 = vmatprep.subr.bf16.mxu0 %v4987
    %6294 = vmatpush1.bf16.msra.mxu0 %v4986
    %6295 = vmatprep.subr.bf16.mxu0 %v4955
    %6296 = vmatpush1.bf16.msra.mxu0 %v4954
    %6297 = vmatprep.subr.bf16.mxu0 %v4923
    %6298 = vmatpush1.bf16.msra.mxu0 %v4922
    %6299 = vmatprep.subr.bf16.mxu0 %v4891
    %6300 = vmatpush1.bf16.msra.mxu0 %v4890
    %6301 = vmatprep.subr.bf16.mxu0 %v4859
    %6302 = vmatpush1.bf16.msra.mxu0 %v4858
    %6303 = vmatprep.subr.bf16.mxu0 %v4827
    %6304 = vmatpush1.bf16.msra.mxu0 %v4826
    %6305 = vmatprep.subr.bf16.mxu0 %v4795
    %6306 = vmatpush1.bf16.msra.mxu0 %v4794
    %6307 = vmatprep.subr.bf16.mxu0 %v4763
    %6308 = vmatpush1.bf16.msra.mxu0 %v4762
    %6309 = vmatprep.subr.bf16.mxu0 %v5243
    %6310 = vmatpush2.bf16.msra.mxu0 %v5242
    %6311 = vmatprep.subr.bf16.mxu0 %v5211
    %6312 = vmatpush2.bf16.msra.mxu0 %v5210
    %6313 = vmatprep.subr.bf16.mxu0 %v5179
    %6314 = vmatpush2.bf16.msra.mxu0 %v5178
    %6315 = vmatprep.subr.bf16.mxu0 %v5147
    %6316 = vmatpush2.bf16.msra.mxu0 %v5146
    %6317 = vmatprep.subr.bf16.mxu0 %v5115
    %6318 = vmatpush2.bf16.msra.mxu0 %v5114
    %6319 = vmatprep.subr.bf16.mxu0 %v5083
    %6320 = vmatpush2.bf16.msra.mxu0 %v5082
    %6321 = vmatprep.subr.bf16.mxu0 %v5051
    %6322 = vmatpush2.bf16.msra.mxu0 %v5050
    %6323 = vmatprep.subr.bf16.mxu0 %v5019
    %6324 = vmatpush2.bf16.msra.mxu0 %v5018
    %6325 = vmatprep.mubr.bf16.mxu0 %v2519
    %6326 = vmatmul.mubr.bf16.gmra.mxu0 %v2518
    %v6327 = vpop.f32.mrf.mxu0
    %v6328 = vadd.f32 %v3147, %v6327
    %v6329 = vpop.f32.mrf.mxu0
    %v6330 = vadd.f32 %v3151, %v6329
    %v6331 = vpop.f32.mrf.mxu0
    %v6332 = vpop.f32.mrf.mxu0
    %6333 = vdwg.mxu0
    %6334 = vmatprep.subr.bf16.mxu0 %v4989
    %6335 = vmatpush1.bf16.msra.mxu0 %v4988
    %6336 = vmatprep.subr.bf16.mxu0 %v4957
    %6337 = vmatpush1.bf16.msra.mxu0 %v4956
    %6338 = vmatprep.subr.bf16.mxu0 %v4925
    %6339 = vmatpush1.bf16.msra.mxu0 %v4924
    %6340 = vmatprep.subr.bf16.mxu0 %v4893
    %6341 = vmatpush1.bf16.msra.mxu0 %v4892
    %6342 = vmatprep.subr.bf16.mxu0 %v4861
    %6343 = vmatpush1.bf16.msra.mxu0 %v4860
    %6344 = vmatprep.subr.bf16.mxu0 %v4829
    %6345 = vmatpush1.bf16.msra.mxu0 %v4828
    %6346 = vmatprep.subr.bf16.mxu0 %v4797
    %6347 = vmatpush1.bf16.msra.mxu0 %v4796
    %6348 = vmatprep.subr.bf16.mxu0 %v4765
    %6349 = vmatpush1.bf16.msra.mxu0 %v4764
    %6350 = vmatprep.subr.bf16.mxu0 %v5245
    %6351 = vmatpush2.bf16.msra.mxu0 %v5244
    %6352 = vmatprep.subr.bf16.mxu0 %v5213
    %6353 = vmatpush2.bf16.msra.mxu0 %v5212
    %6354 = vmatprep.subr.bf16.mxu0 %v5181
    %6355 = vmatpush2.bf16.msra.mxu0 %v5180
    %6356 = vmatprep.subr.bf16.mxu0 %v5149
    %6357 = vmatpush2.bf16.msra.mxu0 %v5148
    %6358 = vmatprep.subr.bf16.mxu0 %v5117
    %6359 = vmatpush2.bf16.msra.mxu0 %v5116
    %6360 = vmatprep.subr.bf16.mxu0 %v5085
    %6361 = vmatpush2.bf16.msra.mxu0 %v5084
    %6362 = vmatprep.subr.bf16.mxu0 %v5053
    %6363 = vmatpush2.bf16.msra.mxu0 %v5052
    %6364 = vmatprep.subr.bf16.mxu0 %v5021
    %6365 = vmatpush2.bf16.msra.mxu0 %v5020
    %6366 = vmatprep.mubr.bf16.mxu0 %v2519
    %6367 = vmatmul.mubr.bf16.gmra.mxu0 %v2518
    %v6368 = vpop.f32.mrf.mxu0
    %v6369 = vadd.f32 %v3155, %v6368
    %v6370 = vpop.f32.mrf.mxu0
    %v6371 = vadd.f32 %v3159, %v6370
    %v6372 = vpop.f32.mrf.mxu0
    %v6373 = vpop.f32.mrf.mxu0
    %6374 = vdwg.mxu0
    %6375 = vmatprep.subr.bf16.mxu0 %v4991
    %6376 = vmatpush1.bf16.msra.mxu0 %v4990
    %6377 = vmatprep.subr.bf16.mxu0 %v4959
    %6378 = vmatpush1.bf16.msra.mxu0 %v4958
    %6379 = vmatprep.subr.bf16.mxu0 %v4927
    %6380 = vmatpush1.bf16.msra.mxu0 %v4926
    %6381 = vmatprep.subr.bf16.mxu0 %v4895
    %6382 = vmatpush1.bf16.msra.mxu0 %v4894
    %6383 = vmatprep.subr.bf16.mxu0 %v4863
    %6384 = vmatpush1.bf16.msra.mxu0 %v4862
    %6385 = vmatprep.subr.bf16.mxu0 %v4831
    %6386 = vmatpush1.bf16.msra.mxu0 %v4830
    %6387 = vmatprep.subr.bf16.mxu0 %v4799
    %6388 = vmatpush1.bf16.msra.mxu0 %v4798
    %6389 = vmatprep.subr.bf16.mxu0 %v4767
    %6390 = vmatpush1.bf16.msra.mxu0 %v4766
    %6391 = vmatprep.subr.bf16.mxu0 %v5247
    %6392 = vmatpush2.bf16.msra.mxu0 %v5246
    %6393 = vmatprep.subr.bf16.mxu0 %v5215
    %6394 = vmatpush2.bf16.msra.mxu0 %v5214
    %6395 = vmatprep.subr.bf16.mxu0 %v5183
    %6396 = vmatpush2.bf16.msra.mxu0 %v5182
    %6397 = vmatprep.subr.bf16.mxu0 %v5151
    %6398 = vmatpush2.bf16.msra.mxu0 %v5150
    %6399 = vmatprep.subr.bf16.mxu0 %v5119
    %6400 = vmatpush2.bf16.msra.mxu0 %v5118
    %6401 = vmatprep.subr.bf16.mxu0 %v5087
    %6402 = vmatpush2.bf16.msra.mxu0 %v5086
    %6403 = vmatprep.subr.bf16.mxu0 %v5055
    %6404 = vmatpush2.bf16.msra.mxu0 %v5054
    %6405 = vmatprep.subr.bf16.mxu0 %v5023
    %6406 = vmatpush2.bf16.msra.mxu0 %v5022
    %6407 = vmatprep.mubr.bf16.mxu0 %v2519
    %6408 = vmatmul.mubr.bf16.gmra.mxu0 %v2518
    %v6409 = vpop.f32.mrf.mxu0
    %v6410 = vadd.f32 %v3163, %v6409
    %v6411 = vpop.f32.mrf.mxu0
    %v6412 = vadd.f32 %v3167, %v6411
    %v6413 = vpop.f32.mrf.mxu0
    %v6414 = vpop.f32.mrf.mxu0
    %6415 = vdwg.mxu0
    %v6448 = vcombine.low %v5795, %v5797
    %v6449 = vcombine.low %v5836, %v5838
    %v6451 = vunpack.c.l.s4 1983009808
    %v6452 = vunpack.c.0.s8 %v6451
    %v6453 = vlaneseq
    %v6454 = vshrl.u32 %v6453, 7
    %v6455 = vsub.s32 %v6452, %v6454
    %v6456 = vrot.slane %v6448, %v6455
    %v6458 = vunpack.c.l.s4 1983009808
    %v6459 = vunpack.c.0.s8 %v6458
    %v6460 = vlaneseq
    %v6461 = vshrl.u32 %v6460, 7
    %v6462 = vsub.s32 %v6459, %v6461
    %v6463 = vrot.slane %v6449, %v6462
    %v6464 = vcombine.low %v6456, %v6463
    %v6465 = vcombine.low %v5877, %v5879
    %v6466 = vcombine.low %v5918, %v5920
    %v6468 = vunpack.c.l.s4 1983009808
    %v6469 = vunpack.c.0.s8 %v6468
    %v6470 = vlaneseq
    %v6471 = vshrl.u32 %v6470, 7
    %v6472 = vsub.s32 %v6469, %v6471
    %v6473 = vrot.slane %v6465, %v6472
    %v6475 = vunpack.c.l.s4 1983009808
    %v6476 = vunpack.c.0.s8 %v6475
    %v6477 = vlaneseq
    %v6478 = vshrl.u32 %v6477, 7
    %v6479 = vsub.s32 %v6476, %v6478
    %v6480 = vrot.slane %v6466, %v6479
    %v6481 = vcombine.low %v6473, %v6480
    %v6482 = vcombine.low %v5959, %v5961
    %v6483 = vcombine.low %v6000, %v6002
    %v6485 = vunpack.c.l.s4 1983009808
    %v6486 = vunpack.c.0.s8 %v6485
    %v6487 = vlaneseq
    %v6488 = vshrl.u32 %v6487, 7
    %v6489 = vsub.s32 %v6486, %v6488
    %v6490 = vrot.slane %v6482, %v6489
    %v6492 = vunpack.c.l.s4 1983009808
    %v6493 = vunpack.c.0.s8 %v6492
    %v6494 = vlaneseq
    %v6495 = vshrl.u32 %v6494, 7
    %v6496 = vsub.s32 %v6493, %v6495
    %v6497 = vrot.slane %v6483, %v6496
    %v6498 = vcombine.low %v6490, %v6497
    %v6499 = vcombine.low %v6041, %v6043
    %v6500 = vcombine.low %v6082, %v6084
    %v6502 = vunpack.c.l.s4 1983009808
    %v6503 = vunpack.c.0.s8 %v6502
    %v6504 = vlaneseq
    %v6505 = vshrl.u32 %v6504, 7
    %v6506 = vsub.s32 %v6503, %v6505
    %v6507 = vrot.slane %v6499, %v6506
    %v6509 = vunpack.c.l.s4 1983009808
    %v6510 = vunpack.c.0.s8 %v6509
    %v6511 = vlaneseq
    %v6512 = vshrl.u32 %v6511, 7
    %v6513 = vsub.s32 %v6510, %v6512
    %v6514 = vrot.slane %v6500, %v6513
    %v6515 = vcombine.low %v6507, %v6514
    %v6516 = vcombine.low %v6123, %v6125
    %v6517 = vcombine.low %v6164, %v6166
    %v6519 = vunpack.c.l.s4 1983009808
    %v6520 = vunpack.c.0.s8 %v6519
    %v6521 = vlaneseq
    %v6522 = vshrl.u32 %v6521, 7
    %v6523 = vsub.s32 %v6520, %v6522
    %v6524 = vrot.slane %v6516, %v6523
    %v6526 = vunpack.c.l.s4 1983009808
    %v6527 = vunpack.c.0.s8 %v6526
    %v6528 = vlaneseq
    %v6529 = vshrl.u32 %v6528, 7
    %v6530 = vsub.s32 %v6527, %v6529
    %v6531 = vrot.slane %v6517, %v6530
    %v6532 = vcombine.low %v6524, %v6531
    %v6533 = vcombine.low %v6205, %v6207
    %v6534 = vcombine.low %v6246, %v6248
    %v6536 = vunpack.c.l.s4 1983009808
    %v6537 = vunpack.c.0.s8 %v6536
    %v6538 = vlaneseq
    %v6539 = vshrl.u32 %v6538, 7
    %v6540 = vsub.s32 %v6537, %v6539
    %v6541 = vrot.slane %v6533, %v6540
    %v6543 = vunpack.c.l.s4 1983009808
    %v6544 = vunpack.c.0.s8 %v6543
    %v6545 = vlaneseq
    %v6546 = vshrl.u32 %v6545, 7
    %v6547 = vsub.s32 %v6544, %v6546
    %v6548 = vrot.slane %v6534, %v6547
    %v6549 = vcombine.low %v6541, %v6548
    %v6550 = vcombine.low %v6287, %v6289
    %v6551 = vcombine.low %v6328, %v6330
    %v6553 = vunpack.c.l.s4 1983009808
    %v6554 = vunpack.c.0.s8 %v6553
    %v6555 = vlaneseq
    %v6556 = vshrl.u32 %v6555, 7
    %v6557 = vsub.s32 %v6554, %v6556
    %v6558 = vrot.slane %v6550, %v6557
    %v6560 = vunpack.c.l.s4 1983009808
    %v6561 = vunpack.c.0.s8 %v6560
    %v6562 = vlaneseq
    %v6563 = vshrl.u32 %v6562, 7
    %v6564 = vsub.s32 %v6561, %v6563
    %v6565 = vrot.slane %v6551, %v6564
    %v6566 = vcombine.low %v6558, %v6565
    %v6567 = vcombine.low %v6369, %v6371
    %v6568 = vcombine.low %v6410, %v6412
    %v6570 = vunpack.c.l.s4 1983009808
    %v6571 = vunpack.c.0.s8 %v6570
    %v6572 = vlaneseq
    %v6573 = vshrl.u32 %v6572, 7
    %v6574 = vsub.s32 %v6571, %v6573
    %v6575 = vrot.slane %v6567, %v6574
    %v6577 = vunpack.c.l.s4 1983009808
    %v6578 = vunpack.c.0.s8 %v6577
    %v6579 = vlaneseq
    %v6580 = vshrl.u32 %v6579, 7
    %v6581 = vsub.s32 %v6578, %v6580
    %v6582 = vrot.slane %v6568, %v6581
    %v6583 = vcombine.low %v6575, %v6582
    %6592 = vst [vmem:[%s7] sm:$0xff] %v6464
    %6593 = vst [vmem:[%s7 + $0x8] sm:$0xff] %v6481
    %6594 = vst [vmem:[%s7 + $0x10] sm:$0xff] %v6498
    %6595 = vst [vmem:[%s7 + $0x18] sm:$0xff] %v6515
    %6596 = vst [vmem:[%s7 + $0x20] sm:$0xff] %v6532
    %6597 = vst [vmem:[%s7 + $0x28] sm:$0xff] %v6549
    %6598 = vst [vmem:[%s7 + $0x30] sm:$0xff] %v6566
    %6599 = vst [vmem:[%s7 + $0x38] sm:$0xff] %v6583
    // Predicated region
    $region50: #{stnkd_forward.3} parent=1 // pred_check
      _
    $region51: #{stnkd_forward.3} parent=1 // pred_check_branch
      %6601 = sbr.rel (0) target = $region53
    $region52: #{stnkd_forward.3} parent=1 // pred_region
      _
    $region53: #{stnkd_forward.3} parent=1 // pred_fallthru
      _
    // Predicated region
    $region54: #{stnkd_forward.3} parent=1 // pred_check
      _
    $region55: #{stnkd_forward.3} parent=1 // pred_check_branch
      %6603 = sbr.rel (0) target = $region57
    $region56: #{stnkd_forward.3} parent=1 // pred_region
      _
    $region57: #{stnkd_forward.3} parent=1 // pred_fallthru
      _
    %6604 = vsyncpa [#allocation3], 1
    %6605 = vsyncpa [#allocation5], 1
    %6606 = vsyncpa [#allocation8], 1

</llo_original>
